<compile_context>
chip_gen: v6e
topology: v6e:2x2x1
jax: 0.10.0
libtpu: 0.0.40
codegen_flags: <defaults>
</compile_context>

<pallas_src>
import functools
import math

import numpy as np
import jax
import jax.numpy as jnp
from jax.experimental import pallas as pl
from jax.experimental.pallas import tpu as pltpu


def _complex_loss_kernel(c_ref, basis_ref, out_ref, *, bs, n_sec, n_half, lanes,
                         n_freq):
    # c_ref     : (rows, ncp)      rows = 2*bs*n_half ; coefficients (one-hot per half)
    # basis_ref : (ncp, n_sec*4*lanes + lanes)  host-built polynomial basis
    # One MXU matmul evaluates B_re/B_im/A_re/A_im for every (filter, section, bin)
    # plus the per-section Nyquist values.  f32-accurate (precision=HIGHEST).
    P = jnp.dot(c_ref[...], basis_ref[...],
                preferred_element_type=jnp.float32,
                precision=jax.lax.Precision.HIGHEST)

    rows = c_ref.shape[0]
    half = rows // 2                      # input rows | target rows
    sec_w = 4 * lanes                     # columns per section block
    nyq_off = n_sec * sec_w               # start of the Nyquist column block

    # Section 0 initialises the running cascade products (all slices lane-aligned,
    # each a full (rows, 128) vreg).
    num_re = P[:, 0 * lanes:1 * lanes]
    num_im = P[:, 1 * lanes:2 * lanes]
    den_re = P[:, 2 * lanes:3 * lanes]
    den_im = P[:, 3 * lanes:4 * lanes]
    num_nyq = P[:, nyq_off + 0:nyq_off + 1]
    den_nyq = P[:, nyq_off + 1:nyq_off + 2]

    for s in range(1, n_sec):             # static unroll; n_sec is small
        base = s * sec_w
        B_re = P[:, base + 0 * lanes: base + 1 * lanes]
        B_im = P[:, base + 1 * lanes: base + 2 * lanes]
        A_re = P[:, base + 2 * lanes: base + 3 * lanes]
        A_im = P[:, base + 3 * lanes: base + 4 * lanes]
        num_re, num_im = (num_re * B_re - num_im * B_im,
                          num_re * B_im + num_im * B_re)
        den_re, den_im = (den_re * A_re - den_im * A_im,
                          den_re * A_im + den_im * A_re)
        num_nyq = num_nyq * P[:, nyq_off + 2 * s: nyq_off + 2 * s + 1]
        den_nyq = den_nyq * P[:, nyq_off + 2 * s + 1: nyq_off + 2 * s + 2]

    # Single complex division at the end:  H = num * conj(den) / |den|^2.
    d = den_re * den_re + den_im * den_im
    inv = pl.reciprocal(d, approx=True)
    inv = inv * (2.0 - d * inv)           # one Newton step -> ~f32 accuracy
    h_re = (num_re * den_re + num_im * den_im) * inv
    h_im = (num_im * den_re - num_re * den_im) * inv
    h_nyq = num_nyq / den_nyq             # purely real at w = pi (tiny, exact divide)

    # input-vs-target differences: rows [0:half] are input, [half:rows] are target.
    dr = h_re[0:half, :] - h_re[half:rows, :]
    di = h_im[0:half, :] - h_im[half:rows, :]
    dn = h_nyq[0:half, :] - h_nyq[half:rows, :]

    # Nyquist values are duplicated once per half -> scale its sum by 1/n_half.
    sum_sq = jnp.sum(dr * dr + di * di) + jnp.sum(dn * dn) * (1.0 / float(n_half))
    out_ref[0, 0] = sum_sq * (1.0 / float(bs * n_freq))


def complex_loss(in_sos, tgt_sos, n_fft: int = 512):
    """Pallas implementation of ComplexLoss.forward (log=False path)."""
    bs, n_sec, six = in_sos.shape
    assert six == 6 and tgt_sos.shape == in_sos.shape
    n_freq = n_fft // 2 + 1               # 257
    n_main = n_freq - 1                   # 256 bins on the vector path
    lanes = 128
    assert n_main % lanes == 0
    n_half = n_main // lanes              # 2 lane-tile halves
    assert 2 * n_sec <= lanes             # Nyquist block fits in one lane tile
    n_filt = 2 * bs                       # input filters then target filters
    rows = n_filt * n_half                # 8 for bs=2  (one full sublane tile)

    sec_w = 4 * lanes                     # B_re | B_im | A_re | A_im per section
    nyq_off = n_sec * sec_w
    out_cols = nyq_off + lanes            # trailing 128-wide Nyquist block

    nc = n_sec * n_half * 8               # coefficient columns: (section, half, 8)
    ncp = ((nc + lanes - 1) // lanes) * lanes   # pad contraction dim to 128

    # ---- coefficient matrix C (rows, ncp); row = filter*n_half + half -------
    sos = jnp.concatenate([in_sos, tgt_sos], axis=0).astype(jnp.float32)  # (n_filt,n_sec,6)
    coef8 = jnp.pad(sos, ((0, 0), (0, 0), (0, 2)))                        # (n_filt,n_sec,8)
    # One-hot place each row's coefficients in its own half block so the shared
    # basis can carry half-dependent twiddles (pure broadcast-multiply, exact).
    hot = jnp.eye(n_half, dtype=jnp.float32)[None, :, None, :, None]      # (1,h,1,g,1)
    C = (coef8[:, None, :, None, :] * hot).reshape(rows, nc)              # (rows, nc)
    C = jnp.pad(C, ((0, 0), (0, ncp - nc)))

    # ---- host-precomputed polynomial basis (compile-time constant data) -----
    basis = np.zeros((ncp, out_cols), dtype=np.float64)
    for s in range(n_sec):
        for h in range(n_half):
            w = 2.0 * math.pi * (np.arange(lanes) + h * lanes) / float(n_fft)
            c1, s1 = np.cos(w), np.sin(w)
            c2, s2 = np.cos(2.0 * w), np.sin(2.0 * w)
            r = (s * n_half + h) * 8
            c0 = s * sec_w
            # B(w) = b0 + b1 e^{-jw} + b2 e^{-j2w}
            basis[r + 0, c0 + 0 * lanes: c0 + 1 * lanes] = 1.0
            basis[r + 1, c0 + 0 * lanes: c0 + 1 * lanes] = c1
            basis[r + 2, c0 + 0 * lanes: c0 + 1 * lanes] = c2
            basis[r + 1, c0 + 1 * lanes: c0 + 2 * lanes] = -s1
            basis[r + 2, c0 + 1 * lanes: c0 + 2 * lanes] = -s2
            # A(w) = a0 + a1 e^{-jw} + a2 e^{-j2w}
            basis[r + 3, c0 + 2 * lanes: c0 + 3 * lanes] = 1.0
            basis[r + 4, c0 + 2 * lanes: c0 + 3 * lanes] = c1
            basis[r + 5, c0 + 2 * lanes: c0 + 3 * lanes] = c2
            basis[r + 4, c0 + 3 * lanes: c0 + 4 * lanes] = -s1
            basis[r + 5, c0 + 3 * lanes: c0 + 4 * lanes] = -s2
            # Nyquist (w = pi): B = b0 - b1 + b2, A = a0 - a1 + a2 (real)
            basis[r + 0, nyq_off + 2 * s] = 1.0
            basis[r + 1, nyq_off + 2 * s] = -1.0
            basis[r + 2, nyq_off + 2 * s] = 1.0
            basis[r + 3, nyq_off + 2 * s + 1] = 1.0
            basis[r + 4, nyq_off + 2 * s + 1] = -1.0
            basis[r + 5, nyq_off + 2 * s + 1] = 1.0
    basis = jnp.asarray(basis.astype(np.float32))                         # (ncp, out_cols)

    kernel = functools.partial(_complex_loss_kernel, bs=bs, n_sec=n_sec,
                               n_half=n_half, lanes=lanes, n_freq=n_freq)

    out = pl.pallas_call(
        kernel,
        out_shape=jax.ShapeDtypeStruct((1, 1), jnp.float32),
        in_specs=[
            pl.BlockSpec(memory_space=pltpu.MemorySpace.VMEM),   # C
            pl.BlockSpec(memory_space=pltpu.MemorySpace.VMEM),   # basis
        ],
        out_specs=pl.BlockSpec(memory_space=pltpu.MemorySpace.SMEM),
    )(C, basis)
    return out[0, 0]


def _reference_loss(in_sos, tgt_sos, n_fft: int = 512):
    """Pure-JAX reference mirroring iirnet.signal.sosfreqz(log=False) + MSE."""
    def resp(sos):
        B = jnp.fft.rfft(sos[..., :3], n=n_fft, axis=-1)    # (bs, n_sec, 257)
        A = jnp.fft.rfft(sos[..., 3:], n=n_fft, axis=-1)
        return jnp.prod(B / A, axis=-2)                       # (bs, 257)
    hi = resp(in_sos)
    ht = resp(tgt_sos)
    return (jnp.mean((hi.real - ht.real) ** 2)
            + jnp.mean((hi.imag - ht.imag) ** 2))


if __name__ == "__main__":
    bs, n_sec = 2, 4
    key = jax.random.PRNGKey(0)
    k1, k2, k3, k4 = jax.random.split(key, 4)

    def make_sos(kb, ka):
        # numerator coeffs anywhere, denominator kept well-conditioned (a0=1)
        b = jax.random.uniform(kb, (bs, n_sec, 3), minval=-1.0, maxval=1.0)
        a12 = jax.random.uniform(ka, (bs, n_sec, 2), minval=-0.4, maxval=0.4)
        a0 = jnp.ones((bs, n_sec, 1))
        return jnp.concatenate([b, a0, a12], axis=-1).astype(jnp.float32)

    input_sos = make_sos(k1, k2)
    target_sos = make_sos(k3, k4)

    loss = complex_loss(input_sos, target_sos)
    jax.block_until_ready(loss)

    ref = _reference_loss(input_sos, target_sos)
    assert jnp.allclose(loss, ref, rtol=1e-3, atol=1e-3), (loss, ref)

    print("KERNEL_OK")
</pallas_src>

<mosaic_0001>
module attributes {stable_mosaic.version = 11 : i64} {
  func.func @_complex_loss_kernel(%arg0: memref<8x128xf32, #tpu.memory_space<vmem>>, %arg1: memref<128x2176xf32, #tpu.memory_space<vmem>>, %arg2: memref<1x1xf32, #tpu.memory_space<smem>>) attributes {dimension_semantics = [], scalar_prefetch = 0 : i64, scratch_operands = 0 : i64, tpu.core_type = #tpu.core_type<tc>} {
    %c0 = arith.constant 0 : index
    %c0_0 = arith.constant 0 : index
    %0 = vector.load %arg0[%c0, %c0_0] : memref<8x128xf32, #tpu.memory_space<vmem>>, vector<8x128xf32>
    %c0_1 = arith.constant 0 : index
    %c0_2 = arith.constant 0 : index
    %1 = vector.load %arg1[%c0_1, %c0_2] : memref<128x2176xf32, #tpu.memory_space<vmem>>, vector<128x2176xf32>
    %cst = arith.constant dense<0.000000e+00> : vector<8x2176xf32>
    %2 = tpu.matmul %0, %1, %cst {dimension_numbers = #tpu.dot_dimension_numbers<[1], [0], [0], [1], [0, 0, 1, 1], [], []>, precision = #tpu.contract_precision<fp32>} : vector<8x128xf32>, vector<128x2176xf32>, vector<8x2176xf32> -> vector<8x2176xf32>
    %3 = vector.extract_strided_slice %2 {offsets = [0, 0], sizes = [8, 128], strides = [1, 1]} : vector<8x2176xf32> to vector<8x128xf32>
    %4 = vector.extract_strided_slice %2 {offsets = [0, 128], sizes = [8, 128], strides = [1, 1]} : vector<8x2176xf32> to vector<8x128xf32>
    %5 = vector.extract_strided_slice %2 {offsets = [0, 256], sizes = [8, 128], strides = [1, 1]} : vector<8x2176xf32> to vector<8x128xf32>
    %6 = vector.extract_strided_slice %2 {offsets = [0, 384], sizes = [8, 128], strides = [1, 1]} : vector<8x2176xf32> to vector<8x128xf32>
    %7 = vector.extract_strided_slice %2 {offsets = [0, 2048], sizes = [8, 1], strides = [1, 1]} : vector<8x2176xf32> to vector<8x1xf32>
    %8 = vector.extract_strided_slice %2 {offsets = [0, 2049], sizes = [8, 1], strides = [1, 1]} : vector<8x2176xf32> to vector<8x1xf32>
    %9 = vector.extract_strided_slice %2 {offsets = [0, 512], sizes = [8, 128], strides = [1, 1]} : vector<8x2176xf32> to vector<8x128xf32>
    %10 = vector.extract_strided_slice %2 {offsets = [0, 640], sizes = [8, 128], strides = [1, 1]} : vector<8x2176xf32> to vector<8x128xf32>
    %11 = vector.extract_strided_slice %2 {offsets = [0, 768], sizes = [8, 128], strides = [1, 1]} : vector<8x2176xf32> to vector<8x128xf32>
    %12 = vector.extract_strided_slice %2 {offsets = [0, 896], sizes = [8, 128], strides = [1, 1]} : vector<8x2176xf32> to vector<8x128xf32>
    %13 = arith.mulf %3, %9 : vector<8x128xf32>
    %14 = arith.mulf %4, %10 : vector<8x128xf32>
    %15 = arith.subf %13, %14 : vector<8x128xf32>
    %16 = arith.mulf %3, %10 : vector<8x128xf32>
    %17 = arith.mulf %4, %9 : vector<8x128xf32>
    %18 = arith.addf %16, %17 : vector<8x128xf32>
    %19 = arith.mulf %5, %11 : vector<8x128xf32>
    %20 = arith.mulf %6, %12 : vector<8x128xf32>
    %21 = arith.subf %19, %20 : vector<8x128xf32>
    %22 = arith.mulf %5, %12 : vector<8x128xf32>
    %23 = arith.mulf %6, %11 : vector<8x128xf32>
    %24 = arith.addf %22, %23 : vector<8x128xf32>
    %25 = vector.extract_strided_slice %2 {offsets = [0, 2050], sizes = [8, 1], strides = [1, 1]} : vector<8x2176xf32> to vector<8x1xf32>
    %26 = arith.mulf %7, %25 : vector<8x1xf32>
    %27 = vector.extract_strided_slice %2 {offsets = [0, 2051], sizes = [8, 1], strides = [1, 1]} : vector<8x2176xf32> to vector<8x1xf32>
    %28 = arith.mulf %8, %27 : vector<8x1xf32>
    %29 = vector.extract_strided_slice %2 {offsets = [0, 1024], sizes = [8, 128], strides = [1, 1]} : vector<8x2176xf32> to vector<8x128xf32>
    %30 = vector.extract_strided_slice %2 {offsets = [0, 1152], sizes = [8, 128], strides = [1, 1]} : vector<8x2176xf32> to vector<8x128xf32>
    %31 = vector.extract_strided_slice %2 {offsets = [0, 1280], sizes = [8, 128], strides = [1, 1]} : vector<8x2176xf32> to vector<8x128xf32>
    %32 = vector.extract_strided_slice %2 {offsets = [0, 1408], sizes = [8, 128], strides = [1, 1]} : vector<8x2176xf32> to vector<8x128xf32>
    %33 = arith.mulf %15, %29 : vector<8x128xf32>
    %34 = arith.mulf %18, %30 : vector<8x128xf32>
    %35 = arith.subf %33, %34 : vector<8x128xf32>
    %36 = arith.mulf %15, %30 : vector<8x128xf32>
    %37 = arith.mulf %18, %29 : vector<8x128xf32>
    %38 = arith.addf %36, %37 : vector<8x128xf32>
    %39 = arith.mulf %21, %31 : vector<8x128xf32>
    %40 = arith.mulf %24, %32 : vector<8x128xf32>
    %41 = arith.subf %39, %40 : vector<8x128xf32>
    %42 = arith.mulf %21, %32 : vector<8x128xf32>
    %43 = arith.mulf %24, %31 : vector<8x128xf32>
    %44 = arith.addf %42, %43 : vector<8x128xf32>
    %45 = vector.extract_strided_slice %2 {offsets = [0, 2052], sizes = [8, 1], strides = [1, 1]} : vector<8x2176xf32> to vector<8x1xf32>
    %46 = arith.mulf %26, %45 : vector<8x1xf32>
    %47 = vector.extract_strided_slice %2 {offsets = [0, 2053], sizes = [8, 1], strides = [1, 1]} : vector<8x2176xf32> to vector<8x1xf32>
    %48 = arith.mulf %28, %47 : vector<8x1xf32>
    %49 = vector.extract_strided_slice %2 {offsets = [0, 1536], sizes = [8, 128], strides = [1, 1]} : vector<8x2176xf32> to vector<8x128xf32>
    %50 = vector.extract_strided_slice %2 {offsets = [0, 1664], sizes = [8, 128], strides = [1, 1]} : vector<8x2176xf32> to vector<8x128xf32>
    %51 = vector.extract_strided_slice %2 {offsets = [0, 1792], sizes = [8, 128], strides = [1, 1]} : vector<8x2176xf32> to vector<8x128xf32>
    %52 = vector.extract_strided_slice %2 {offsets = [0, 1920], sizes = [8, 128], strides = [1, 1]} : vector<8x2176xf32> to vector<8x128xf32>
    %53 = arith.mulf %35, %49 : vector<8x128xf32>
    %54 = arith.mulf %38, %50 : vector<8x128xf32>
    %55 = arith.subf %53, %54 : vector<8x128xf32>
    %56 = arith.mulf %35, %50 : vector<8x128xf32>
    %57 = arith.mulf %38, %49 : vector<8x128xf32>
    %58 = arith.addf %56, %57 : vector<8x128xf32>
    %59 = arith.mulf %41, %51 : vector<8x128xf32>
    %60 = arith.mulf %44, %52 : vector<8x128xf32>
    %61 = arith.subf %59, %60 : vector<8x128xf32>
    %62 = arith.mulf %41, %52 : vector<8x128xf32>
    %63 = arith.mulf %44, %51 : vector<8x128xf32>
    %64 = arith.addf %62, %63 : vector<8x128xf32>
    %65 = vector.extract_strided_slice %2 {offsets = [0, 2054], sizes = [8, 1], strides = [1, 1]} : vector<8x2176xf32> to vector<8x1xf32>
    %66 = arith.mulf %46, %65 : vector<8x1xf32>
    %67 = vector.extract_strided_slice %2 {offsets = [0, 2055], sizes = [8, 1], strides = [1, 1]} : vector<8x2176xf32> to vector<8x1xf32>
    %68 = arith.mulf %48, %67 : vector<8x1xf32>
    %69 = arith.mulf %61, %61 : vector<8x128xf32>
    %70 = arith.mulf %64, %64 : vector<8x128xf32>
    %71 = arith.addf %69, %70 : vector<8x128xf32>
    %72 = tpu.reciprocal %71 {approx = true} : vector<8x128xf32> -> vector<8x128xf32>
    %73 = arith.mulf %71, %72 : vector<8x128xf32>
    %cst_3 = arith.constant 2.000000e+00 : f32
    %74 = vector.broadcast %cst_3 : f32 to vector<8x128xf32>
    %75 = arith.subf %74, %73 : vector<8x128xf32>
    %76 = arith.mulf %72, %75 : vector<8x128xf32>
    %77 = arith.mulf %55, %61 : vector<8x128xf32>
    %78 = arith.mulf %58, %64 : vector<8x128xf32>
    %79 = arith.addf %77, %78 : vector<8x128xf32>
    %80 = arith.mulf %79, %76 : vector<8x128xf32>
    %81 = arith.mulf %58, %61 : vector<8x128xf32>
    %82 = arith.mulf %55, %64 : vector<8x128xf32>
    %83 = arith.subf %81, %82 : vector<8x128xf32>
    %84 = arith.mulf %83, %76 : vector<8x128xf32>
    %85 = arith.divf %66, %68 : vector<8x1xf32>
    %86 = vector.extract_strided_slice %80 {offsets = [0, 0], sizes = [4, 128], strides = [1, 1]} : vector<8x128xf32> to vector<4x128xf32>
    %87 = vector.extract_strided_slice %80 {offsets = [4, 0], sizes = [4, 128], strides = [1, 1]} : vector<8x128xf32> to vector<4x128xf32>
    %88 = arith.subf %86, %87 : vector<4x128xf32>
    %89 = vector.extract_strided_slice %84 {offsets = [0, 0], sizes = [4, 128], strides = [1, 1]} : vector<8x128xf32> to vector<4x128xf32>
    %90 = vector.extract_strided_slice %84 {offsets = [4, 0], sizes = [4, 128], strides = [1, 1]} : vector<8x128xf32> to vector<4x128xf32>
    %91 = arith.subf %89, %90 : vector<4x128xf32>
    %92 = vector.extract_strided_slice %85 {offsets = [0, 0], sizes = [4, 1], strides = [1, 1]} : vector<8x1xf32> to vector<4x1xf32>
    %93 = vector.extract_strided_slice %85 {offsets = [4, 0], sizes = [4, 1], strides = [1, 1]} : vector<8x1xf32> to vector<4x1xf32>
    %94 = arith.subf %92, %93 : vector<4x1xf32>
    %95 = arith.mulf %88, %88 : vector<4x128xf32>
    %96 = arith.mulf %91, %91 : vector<4x128xf32>
    %97 = arith.addf %95, %96 : vector<4x128xf32>
    %98 = vector.shape_cast %97 : vector<4x128xf32> to vector<1x4x128xf32>
    %cst_4 = arith.constant dense<0.000000e+00> : vector<1xf32>
    %99 = vector.multi_reduction <add>, %98, %cst_4 [1, 2] : vector<1x4x128xf32> to vector<1xf32>
    %100 = vector.shape_cast %99 : vector<1xf32> to vector<1x1x1xf32>
    %101 = vector.extract %100[0, 0, 0] : f32 from vector<1x1x1xf32>
    %102 = arith.mulf %94, %94 : vector<4x1xf32>
    %103 = vector.shape_cast %102 : vector<4x1xf32> to vector<1x4x1xf32>
    %cst_5 = arith.constant dense<0.000000e+00> : vector<1xf32>
    %104 = vector.multi_reduction <add>, %103, %cst_5 [1, 2] : vector<1x4x1xf32> to vector<1xf32>
    %105 = vector.shape_cast %104 : vector<1xf32> to vector<1x1x1xf32>
    %106 = vector.extract %105[0, 0, 0] : f32 from vector<1x1x1xf32>
    %cst_6 = arith.constant 5.000000e-01 : f32
    %107 = arith.mulf %106, %cst_6 : f32
    %108 = arith.addf %101, %107 : f32
    %cst_7 = arith.constant 0.00194552529 : f32
    %109 = arith.mulf %108, %cst_7 : f32
    %c0_8 = arith.constant 0 : index
    %c0_9 = arith.constant 0 : index
    %110 = memref.load %arg2[%c0_8, %c0_9] : memref<1x1xf32, #tpu.memory_space<smem>>
    memref.store %109, %arg2[%c0_8, %c0_9] : memref<1x1xf32, #tpu.memory_space<smem>>
    return
  }
}

</mosaic_0001>

<llo_original>
// kernel: tpu_custom_call.1
$region0: #{tpu_custom_call.1}
  #allocation0 [shape = 'u32[]', space=smem, size = 0x4, offset = 0x4, fixed_abs, tag = 'smem constant byte address 0x4 - core index']
  #allocation1 [shape = 'u32[144,128]{1,0:T(1,128)}', space=vmem, size = 0x12000, scoped, tag = 'internal scratch']
  %s0 = inlined_call_operand.hbm [shape: f32[8,128], index: 0, kind: input, shape index: {}]
  %s1 = inlined_call_operand.hbm [shape: f32[128,2176], index: 1, kind: input, shape index: {}]
  %s2 = inlined_call_operand.hbm [shape: f32[1,1], index: 2, kind: output, shape index: {}]
  %s3 = sld [smem:[#allocation0]]
  $region26: #{tpu_custom_call.1} parent=0
    _
  %s5 = ssub.s32 1, %s3
  %s6 = scalar_select 0, %s5, %s3
  $region1: #{tpu_custom_call.1} parent=0
    #allocation2 [shape = 'u8[4096]{0}', space=vmem, size = 0x1000, scoped, tag = 'input window, operand 0, single buffered']
    #allocation3 [shape = 's32[1]{0}', space=sflag, size = 0x4, scoped, tag = 'scoped memory for tpu_custom_call.1']
    #allocation4 [shape = 's32[1]{0}', space=sflag, size = 0x4, scoped, tag = 'scoped memory for tpu_custom_call.1']
    #allocation5 [shape = 'u8[1114112]{0}', space=vmem, size = 0x110000, scoped, tag = 'input window, operand 1, single buffered']
    #allocation6 [shape = 's32[1]{0}', space=sflag, size = 0x4, scoped, tag = 'scoped memory for tpu_custom_call.1']
    #allocation7 [shape = 'u8[512]{0}', space=smem, size = 0x200, scoped, tag = 'output window, operand 0, single buffered']
    %7 = vsyncpa [#allocation3], 0
    %8 = vsyncpa [#allocation6], 0
    %9 = vsyncpa [#allocation4], 0
    // Predicated region
    $region2: #{tpu_custom_call.1} parent=1 // pred_check
      _
    $region3: #{tpu_custom_call.1} parent=1 // pred_check_branch
      %11 = sbr.rel (0) target = $region5
    $region4: #{tpu_custom_call.1} parent=1 // pred_region
      %s13 = ssub.s32 128, 128
      %14 = vsyncadd [#allocation3], %s13
      %s16 = sshll.u32 [#allocation2], 4
      %s17 = int_to_ptr.vmem [resolvable:$true] %s16
      %19 = dma.hbm_to_vmem [thread:$0]  %s0, 128, %s17, [#allocation3]
    $region5: #{tpu_custom_call.1} parent=1 // pred_fallthru
      _
    // Predicated region
    $region6: #{tpu_custom_call.1} parent=1 // pred_check
      _
    $region7: #{tpu_custom_call.1} parent=1 // pred_check_branch
      %21 = sbr.rel (0) target = $region9
    $region8: #{tpu_custom_call.1} parent=1 // pred_region
      %s23 = ssub.s32 34816, 34816
      %24 = vsyncadd [#allocation6], %s23
      %s25 = sshll.u32 [#allocation5], 4
      %s26 = int_to_ptr.vmem [resolvable:$true] %s25
      %31 = dma.hbm_to_vmem [thread:$0]  %s1, 34816, %s26, [#allocation6], 2176, 2176, 136
    $region9: #{tpu_custom_call.1} parent=1 // pred_fallthru
      _
    // Predicated region
    $region10: #{tpu_custom_call.1} parent=1 // pred_check
      _
    $region11: #{tpu_custom_call.1} parent=1 // pred_check_branch
      %33 = sbr.rel (0) target = $region13
    $region12: #{tpu_custom_call.1} parent=1 // pred_region
      %34 = dma.done [#allocation3], 128
    $region13: #{tpu_custom_call.1} parent=1 // pred_fallthru
      _
    // Predicated region
    $region14: #{tpu_custom_call.1} parent=1 // pred_check
      _
    $region15: #{tpu_custom_call.1} parent=1 // pred_check_branch
      %36 = sbr.rel (0) target = $region17
    $region16: #{tpu_custom_call.1} parent=1 // pred_region
      %37 = dma.done [#allocation6], 34816
    $region17: #{tpu_custom_call.1} parent=1 // pred_fallthru
      _
    %v38 = vld [vmem:[#allocation2] sm:$0xff]
    %v39 = vld [vmem:[#allocation5] sm:$0xff]
    %v40 = vld [vmem:[#allocation5 + $0x8] sm:$0xff]
    %v41 = vld [vmem:[#allocation5 + $0x10] sm:$0xff]
    %v42 = vld [vmem:[#allocation5 + $0x18] sm:$0xff]
    %v43 = vld [vmem:[#allocation5 + $0x20] sm:$0xff]
    %v44 = vld [vmem:[#allocation5 + $0x28] sm:$0xff]
    %v45 = vld [vmem:[#allocation5 + $0x30] sm:$0xff]
    %v46 = vld [vmem:[#allocation5 + $0x38] sm:$0xff]
    %v47 = vld [vmem:[#allocation5 + $0x40] sm:$0xff]
    %v48 = vld [vmem:[#allocation5 + $0x48] sm:$0xff]
    %v49 = vld [vmem:[#allocation5 + $0x50] sm:$0xff]
    %v50 = vld [vmem:[#allocation5 + $0x58] sm:$0xff]
    %v51 = vld [vmem:[#allocation5 + $0x60] sm:$0xff]
    %v52 = vld [vmem:[#allocation5 + $0x68] sm:$0xff]
    %v53 = vld [vmem:[#allocation5 + $0x70] sm:$0xff]
    %v54 = vld [vmem:[#allocation5 + $0x78] sm:$0xff]
    %v55 = vld [vmem:[#allocation5 + $0x80] sm:$0xff]
    %v56 = vld [vmem:[#allocation5 + $0x88] sm:$0xff]
    %v57 = vld [vmem:[#allocation5 + $0x90] sm:$0xff]
    %v58 = vld [vmem:[#allocation5 + $0x98] sm:$0xff]
    %v59 = vld [vmem:[#allocation5 + $0xa0] sm:$0xff]
    %v60 = vld [vmem:[#allocation5 + $0xa8] sm:$0xff]
    %v61 = vld [vmem:[#allocation5 + $0xb0] sm:$0xff]
    %v62 = vld [vmem:[#allocation5 + $0xb8] sm:$0xff]
    %v63 = vld [vmem:[#allocation5 + $0xc0] sm:$0xff]
    %v64 = vld [vmem:[#allocation5 + $0xc8] sm:$0xff]
    %v65 = vld [vmem:[#allocation5 + $0xd0] sm:$0xff]
    %v66 = vld [vmem:[#allocation5 + $0xd8] sm:$0xff]
    %v67 = vld [vmem:[#allocation5 + $0xe0] sm:$0xff]
    %v68 = vld [vmem:[#allocation5 + $0xe8] sm:$0xff]
    %v69 = vld [vmem:[#allocation5 + $0xf0] sm:$0xff]
    %v70 = vld [vmem:[#allocation5 + $0xf8] sm:$0xff]
    %v71 = vld [vmem:[#allocation5 + $0x100] sm:$0xff]
    %v72 = vld [vmem:[#allocation5 + $0x108] sm:$0xff]
    %v73 = vld [vmem:[#allocation5 + $0x110] sm:$0xff]
    %v74 = vld [vmem:[#allocation5 + $0x118] sm:$0xff]
    %v75 = vld [vmem:[#allocation5 + $0x120] sm:$0xff]
    %v76 = vld [vmem:[#allocation5 + $0x128] sm:$0xff]
    %v77 = vld [vmem:[#allocation5 + $0x130] sm:$0xff]
    %v78 = vld [vmem:[#allocation5 + $0x138] sm:$0xff]
    %v79 = vld [vmem:[#allocation5 + $0x140] sm:$0xff]
    %v80 = vld [vmem:[#allocation5 + $0x148] sm:$0xff]
    %v81 = vld [vmem:[#allocation5 + $0x150] sm:$0xff]
    %v82 = vld [vmem:[#allocation5 + $0x158] sm:$0xff]
    %v83 = vld [vmem:[#allocation5 + $0x160] sm:$0xff]
    %v84 = vld [vmem:[#allocation5 + $0x168] sm:$0xff]
    %v85 = vld [vmem:[#allocation5 + $0x170] sm:$0xff]
    %v86 = vld [vmem:[#allocation5 + $0x178] sm:$0xff]
    %v87 = vld [vmem:[#allocation5 + $0x180] sm:$0xff]
    %v88 = vld [vmem:[#allocation5 + $0x188] sm:$0xff]
    %v89 = vld [vmem:[#allocation5 + $0x190] sm:$0xff]
    %v90 = vld [vmem:[#allocation5 + $0x198] sm:$0xff]
    %v91 = vld [vmem:[#allocation5 + $0x1a0] sm:$0xff]
    %v92 = vld [vmem:[#allocation5 + $0x1a8] sm:$0xff]
    %v93 = vld [vmem:[#allocation5 + $0x1b0] sm:$0xff]
    %v94 = vld [vmem:[#allocation5 + $0x1b8] sm:$0xff]
    %v95 = vld [vmem:[#allocation5 + $0x1c0] sm:$0xff]
    %v96 = vld [vmem:[#allocation5 + $0x1c8] sm:$0xff]
    %v97 = vld [vmem:[#allocation5 + $0x1d0] sm:$0xff]
    %v98 = vld [vmem:[#allocation5 + $0x1d8] sm:$0xff]
    %v99 = vld [vmem:[#allocation5 + $0x1e0] sm:$0xff]
    %v100 = vld [vmem:[#allocation5 + $0x1e8] sm:$0xff]
    %v101 = vld [vmem:[#allocation5 + $0x1f0] sm:$0xff]
    %v102 = vld [vmem:[#allocation5 + $0x1f8] sm:$0xff]
    %v103 = vld [vmem:[#allocation5 + $0x200] sm:$0xff]
    %v104 = vld [vmem:[#allocation5 + $0x208] sm:$0xff]
    %v105 = vld [vmem:[#allocation5 + $0x210] sm:$0xff]
    %v106 = vld [vmem:[#allocation5 + $0x218] sm:$0xff]
    %v107 = vld [vmem:[#allocation5 + $0x220] sm:$0xff]
    %v108 = vld [vmem:[#allocation5 + $0x228] sm:$0xff]
    %v109 = vld [vmem:[#allocation5 + $0x230] sm:$0xff]
    %v110 = vld [vmem:[#allocation5 + $0x238] sm:$0xff]
    %v111 = vld [vmem:[#allocation5 + $0x240] sm:$0xff]
    %v112 = vld [vmem:[#allocation5 + $0x248] sm:$0xff]
    %v113 = vld [vmem:[#allocation5 + $0x250] sm:$0xff]
    %v114 = vld [vmem:[#allocation5 + $0x258] sm:$0xff]
    %v115 = vld [vmem:[#allocation5 + $0x260] sm:$0xff]
    %v116 = vld [vmem:[#allocation5 + $0x268] sm:$0xff]
    %v117 = vld [vmem:[#allocation5 + $0x270] sm:$0xff]
    %v118 = vld [vmem:[#allocation5 + $0x278] sm:$0xff]
    %v119 = vld [vmem:[#allocation5 + $0x280] sm:$0xff]
    %v120 = vld [vmem:[#allocation5 + $0x288] sm:$0xff]
    %v121 = vld [vmem:[#allocation5 + $0x290] sm:$0xff]
    %v122 = vld [vmem:[#allocation5 + $0x298] sm:$0xff]
    %v123 = vld [vmem:[#allocation5 + $0x2a0] sm:$0xff]
    %v124 = vld [vmem:[#allocation5 + $0x2a8] sm:$0xff]
    %v125 = vld [vmem:[#allocation5 + $0x2b0] sm:$0xff]
    %v126 = vld [vmem:[#allocation5 + $0x2b8] sm:$0xff]
    %v127 = vld [vmem:[#allocation5 + $0x2c0] sm:$0xff]
    %v128 = vld [vmem:[#allocation5 + $0x2c8] sm:$0xff]
    %v129 = vld [vmem:[#allocation5 + $0x2d0] sm:$0xff]
    %v130 = vld [vmem:[#allocation5 + $0x2d8] sm:$0xff]
    %v131 = vld [vmem:[#allocation5 + $0x2e0] sm:$0xff]
    %v132 = vld [vmem:[#allocation5 + $0x2e8] sm:$0xff]
    %v133 = vld [vmem:[#allocation5 + $0x2f0] sm:$0xff]
    %v134 = vld [vmem:[#allocation5 + $0x2f8] sm:$0xff]
    %v135 = vld [vmem:[#allocation5 + $0x300] sm:$0xff]
    %v136 = vld [vmem:[#allocation5 + $0x308] sm:$0xff]
    %v137 = vld [vmem:[#allocation5 + $0x310] sm:$0xff]
    %v138 = vld [vmem:[#allocation5 + $0x318] sm:$0xff]
    %v139 = vld [vmem:[#allocation5 + $0x320] sm:$0xff]
    %v140 = vld [vmem:[#allocation5 + $0x328] sm:$0xff]
    %v141 = vld [vmem:[#allocation5 + $0x330] sm:$0xff]
    %v142 = vld [vmem:[#allocation5 + $0x338] sm:$0xff]
    %v143 = vld [vmem:[#allocation5 + $0x340] sm:$0xff]
    %v144 = vld [vmem:[#allocation5 + $0x348] sm:$0xff]
    %v145 = vld [vmem:[#allocation5 + $0x350] sm:$0xff]
    %v146 = vld [vmem:[#allocation5 + $0x358] sm:$0xff]
    %v147 = vld [vmem:[#allocation5 + $0x360] sm:$0xff]
    %v148 = vld [vmem:[#allocation5 + $0x368] sm:$0xff]
    %v149 = vld [vmem:[#allocation5 + $0x370] sm:$0xff]
    %v150 = vld [vmem:[#allocation5 + $0x378] sm:$0xff]
    %v151 = vld [vmem:[#allocation5 + $0x380] sm:$0xff]
    %v152 = vld [vmem:[#allocation5 + $0x388] sm:$0xff]
    %v153 = vld [vmem:[#allocation5 + $0x390] sm:$0xff]
    %v154 = vld [vmem:[#allocation5 + $0x398] sm:$0xff]
    %v155 = vld [vmem:[#allocation5 + $0x3a0] sm:$0xff]
    %v156 = vld [vmem:[#allocation5 + $0x3a8] sm:$0xff]
    %v157 = vld [vmem:[#allocation5 + $0x3b0] sm:$0xff]
    %v158 = vld [vmem:[#allocation5 + $0x3b8] sm:$0xff]
    %v159 = vld [vmem:[#allocation5 + $0x3c0] sm:$0xff]
    %v160 = vld [vmem:[#allocation5 + $0x3c8] sm:$0xff]
    %v161 = vld [vmem:[#allocation5 + $0x3d0] sm:$0xff]
    %v162 = vld [vmem:[#allocation5 + $0x3d8] sm:$0xff]
    %v163 = vld [vmem:[#allocation5 + $0x3e0] sm:$0xff]
    %v164 = vld [vmem:[#allocation5 + $0x3e8] sm:$0xff]
    %v165 = vld [vmem:[#allocation5 + $0x3f0] sm:$0xff]
    %v166 = vld [vmem:[#allocation5 + $0x3f8] sm:$0xff]
    %v167 = vld [vmem:[#allocation5 + $0x400] sm:$0xff]
    %v168 = vld [vmem:[#allocation5 + $0x408] sm:$0xff]
    %v169 = vld [vmem:[#allocation5 + $0x410] sm:$0xff]
    %v170 = vld [vmem:[#allocation5 + $0x418] sm:$0xff]
    %v171 = vld [vmem:[#allocation5 + $0x420] sm:$0xff]
    %v172 = vld [vmem:[#allocation5 + $0x428] sm:$0xff]
    %v173 = vld [vmem:[#allocation5 + $0x430] sm:$0xff]
    %v174 = vld [vmem:[#allocation5 + $0x438] sm:$0xff]
    %v175 = vld [vmem:[#allocation5 + $0x440] sm:$0xff]
    %v176 = vld [vmem:[#allocation5 + $0x448] sm:$0xff]
    %v177 = vld [vmem:[#allocation5 + $0x450] sm:$0xff]
    %v178 = vld [vmem:[#allocation5 + $0x458] sm:$0xff]
    %v179 = vld [vmem:[#allocation5 + $0x460] sm:$0xff]
    %v180 = vld [vmem:[#allocation5 + $0x468] sm:$0xff]
    %v181 = vld [vmem:[#allocation5 + $0x470] sm:$0xff]
    %v182 = vld [vmem:[#allocation5 + $0x478] sm:$0xff]
    %v183 = vld [vmem:[#allocation5 + $0x480] sm:$0xff]
    %v184 = vld [vmem:[#allocation5 + $0x488] sm:$0xff]
    %v185 = vld [vmem:[#allocation5 + $0x490] sm:$0xff]
    %v186 = vld [vmem:[#allocation5 + $0x498] sm:$0xff]
    %v187 = vld [vmem:[#allocation5 + $0x4a0] sm:$0xff]
    %v188 = vld [vmem:[#allocation5 + $0x4a8] sm:$0xff]
    %v189 = vld [vmem:[#allocation5 + $0x4b0] sm:$0xff]
    %v190 = vld [vmem:[#allocation5 + $0x4b8] sm:$0xff]
    %v191 = vld [vmem:[#allocation5 + $0x4c0] sm:$0xff]
    %v192 = vld [vmem:[#allocation5 + $0x4c8] sm:$0xff]
    %v193 = vld [vmem:[#allocation5 + $0x4d0] sm:$0xff]
    %v194 = vld [vmem:[#allocation5 + $0x4d8] sm:$0xff]
    %v195 = vld [vmem:[#allocation5 + $0x4e0] sm:$0xff]
    %v196 = vld [vmem:[#allocation5 + $0x4e8] sm:$0xff]
    %v197 = vld [vmem:[#allocation5 + $0x4f0] sm:$0xff]
    %v198 = vld [vmem:[#allocation5 + $0x4f8] sm:$0xff]
    %v199 = vld [vmem:[#allocation5 + $0x500] sm:$0xff]
    %v200 = vld [vmem:[#allocation5 + $0x508] sm:$0xff]
    %v201 = vld [vmem:[#allocation5 + $0x510] sm:$0xff]
    %v202 = vld [vmem:[#allocation5 + $0x518] sm:$0xff]
    %v203 = vld [vmem:[#allocation5 + $0x520] sm:$0xff]
    %v204 = vld [vmem:[#allocation5 + $0x528] sm:$0xff]
    %v205 = vld [vmem:[#allocation5 + $0x530] sm:$0xff]
    %v206 = vld [vmem:[#allocation5 + $0x538] sm:$0xff]
    %v207 = vld [vmem:[#allocation5 + $0x540] sm:$0xff]
    %v208 = vld [vmem:[#allocation5 + $0x548] sm:$0xff]
    %v209 = vld [vmem:[#allocation5 + $0x550] sm:$0xff]
    %v210 = vld [vmem:[#allocation5 + $0x558] sm:$0xff]
    %v211 = vld [vmem:[#allocation5 + $0x560] sm:$0xff]
    %v212 = vld [vmem:[#allocation5 + $0x568] sm:$0xff]
    %v213 = vld [vmem:[#allocation5 + $0x570] sm:$0xff]
    %v214 = vld [vmem:[#allocation5 + $0x578] sm:$0xff]
    %v215 = vld [vmem:[#allocation5 + $0x580] sm:$0xff]
    %v216 = vld [vmem:[#allocation5 + $0x588] sm:$0xff]
    %v217 = vld [vmem:[#allocation5 + $0x590] sm:$0xff]
    %v218 = vld [vmem:[#allocation5 + $0x598] sm:$0xff]
    %v219 = vld [vmem:[#allocation5 + $0x5a0] sm:$0xff]
    %v220 = vld [vmem:[#allocation5 + $0x5a8] sm:$0xff]
    %v221 = vld [vmem:[#allocation5 + $0x5b0] sm:$0xff]
    %v222 = vld [vmem:[#allocation5 + $0x5b8] sm:$0xff]
    %v223 = vld [vmem:[#allocation5 + $0x5c0] sm:$0xff]
    %v224 = vld [vmem:[#allocation5 + $0x5c8] sm:$0xff]
    %v225 = vld [vmem:[#allocation5 + $0x5d0] sm:$0xff]
    %v226 = vld [vmem:[#allocation5 + $0x5d8] sm:$0xff]
    %v227 = vld [vmem:[#allocation5 + $0x5e0] sm:$0xff]
    %v228 = vld [vmem:[#allocation5 + $0x5e8] sm:$0xff]
    %v229 = vld [vmem:[#allocation5 + $0x5f0] sm:$0xff]
    %v230 = vld [vmem:[#allocation5 + $0x5f8] sm:$0xff]
    %v231 = vld [vmem:[#allocation5 + $0x600] sm:$0xff]
    %v232 = vld [vmem:[#allocation5 + $0x608] sm:$0xff]
    %v233 = vld [vmem:[#allocation5 + $0x610] sm:$0xff]
    %v234 = vld [vmem:[#allocation5 + $0x618] sm:$0xff]
    %v235 = vld [vmem:[#allocation5 + $0x620] sm:$0xff]
    %v236 = vld [vmem:[#allocation5 + $0x628] sm:$0xff]
    %v237 = vld [vmem:[#allocation5 + $0x630] sm:$0xff]
    %v238 = vld [vmem:[#allocation5 + $0x638] sm:$0xff]
    %v239 = vld [vmem:[#allocation5 + $0x640] sm:$0xff]
    %v240 = vld [vmem:[#allocation5 + $0x648] sm:$0xff]
    %v241 = vld [vmem:[#allocation5 + $0x650] sm:$0xff]
    %v242 = vld [vmem:[#allocation5 + $0x658] sm:$0xff]
    %v243 = vld [vmem:[#allocation5 + $0x660] sm:$0xff]
    %v244 = vld [vmem:[#allocation5 + $0x668] sm:$0xff]
    %v245 = vld [vmem:[#allocation5 + $0x670] sm:$0xff]
    %v246 = vld [vmem:[#allocation5 + $0x678] sm:$0xff]
    %v247 = vld [vmem:[#allocation5 + $0x680] sm:$0xff]
    %v248 = vld [vmem:[#allocation5 + $0x688] sm:$0xff]
    %v249 = vld [vmem:[#allocation5 + $0x690] sm:$0xff]
    %v250 = vld [vmem:[#allocation5 + $0x698] sm:$0xff]
    %v251 = vld [vmem:[#allocation5 + $0x6a0] sm:$0xff]
    %v252 = vld [vmem:[#allocation5 + $0x6a8] sm:$0xff]
    %v253 = vld [vmem:[#allocation5 + $0x6b0] sm:$0xff]
    %v254 = vld [vmem:[#allocation5 + $0x6b8] sm:$0xff]
    %v255 = vld [vmem:[#allocation5 + $0x6c0] sm:$0xff]
    %v256 = vld [vmem:[#allocation5 + $0x6c8] sm:$0xff]
    %v257 = vld [vmem:[#allocation5 + $0x6d0] sm:$0xff]
    %v258 = vld [vmem:[#allocation5 + $0x6d8] sm:$0xff]
    %v259 = vld [vmem:[#allocation5 + $0x6e0] sm:$0xff]
    %v260 = vld [vmem:[#allocation5 + $0x6e8] sm:$0xff]
    %v261 = vld [vmem:[#allocation5 + $0x6f0] sm:$0xff]
    %v262 = vld [vmem:[#allocation5 + $0x6f8] sm:$0xff]
    %v263 = vld [vmem:[#allocation5 + $0x700] sm:$0xff]
    %v264 = vld [vmem:[#allocation5 + $0x708] sm:$0xff]
    %v265 = vld [vmem:[#allocation5 + $0x710] sm:$0xff]
    %v266 = vld [vmem:[#allocation5 + $0x718] sm:$0xff]
    %v267 = vld [vmem:[#allocation5 + $0x720] sm:$0xff]
    %v268 = vld [vmem:[#allocation5 + $0x728] sm:$0xff]
    %v269 = vld [vmem:[#allocation5 + $0x730] sm:$0xff]
    %v270 = vld [vmem:[#allocation5 + $0x738] sm:$0xff]
    %v271 = vld [vmem:[#allocation5 + $0x740] sm:$0xff]
    %v272 = vld [vmem:[#allocation5 + $0x748] sm:$0xff]
    %v273 = vld [vmem:[#allocation5 + $0x750] sm:$0xff]
    %v274 = vld [vmem:[#allocation5 + $0x758] sm:$0xff]
    %v275 = vld [vmem:[#allocation5 + $0x760] sm:$0xff]
    %v276 = vld [vmem:[#allocation5 + $0x768] sm:$0xff]
    %v277 = vld [vmem:[#allocation5 + $0x770] sm:$0xff]
    %v278 = vld [vmem:[#allocation5 + $0x778] sm:$0xff]
    %v279 = vld [vmem:[#allocation5 + $0x780] sm:$0xff]
    %v280 = vld [vmem:[#allocation5 + $0x788] sm:$0xff]
    %v281 = vld [vmem:[#allocation5 + $0x790] sm:$0xff]
    %v282 = vld [vmem:[#allocation5 + $0x798] sm:$0xff]
    %v283 = vld [vmem:[#allocation5 + $0x7a0] sm:$0xff]
    %v284 = vld [vmem:[#allocation5 + $0x7a8] sm:$0xff]
    %v285 = vld [vmem:[#allocation5 + $0x7b0] sm:$0xff]
    %v286 = vld [vmem:[#allocation5 + $0x7b8] sm:$0xff]
    %v287 = vld [vmem:[#allocation5 + $0x7c0] sm:$0xff]
    %v288 = vld [vmem:[#allocation5 + $0x7c8] sm:$0xff]
    %v289 = vld [vmem:[#allocation5 + $0x7d0] sm:$0xff]
    %v290 = vld [vmem:[#allocation5 + $0x7d8] sm:$0xff]
    %v291 = vld [vmem:[#allocation5 + $0x7e0] sm:$0xff]
    %v292 = vld [vmem:[#allocation5 + $0x7e8] sm:$0xff]
    %v293 = vld [vmem:[#allocation5 + $0x7f0] sm:$0xff]
    %v294 = vld [vmem:[#allocation5 + $0x7f8] sm:$0xff]
    %v295 = vld [vmem:[#allocation5 + $0x800] sm:$0xff]
    %v296 = vld [vmem:[#allocation5 + $0x808] sm:$0xff]
    %v297 = vld [vmem:[#allocation5 + $0x810] sm:$0xff]
    %v298 = vld [vmem:[#allocation5 + $0x818] sm:$0xff]
    %v299 = vld [vmem:[#allocation5 + $0x820] sm:$0xff]
    %v300 = vld [vmem:[#allocation5 + $0x828] sm:$0xff]
    %v301 = vld [vmem:[#allocation5 + $0x830] sm:$0xff]
    %v302 = vld [vmem:[#allocation5 + $0x838] sm:$0xff]
    %v303 = vld [vmem:[#allocation5 + $0x840] sm:$0xff]
    %v304 = vld [vmem:[#allocation5 + $0x848] sm:$0xff]
    %v305 = vld [vmem:[#allocation5 + $0x850] sm:$0xff]
    %v306 = vld [vmem:[#allocation5 + $0x858] sm:$0xff]
    %v307 = vld [vmem:[#allocation5 + $0x860] sm:$0xff]
    %v308 = vld [vmem:[#allocation5 + $0x868] sm:$0xff]
    %v309 = vld [vmem:[#allocation5 + $0x870] sm:$0xff]
    %v310 = vld [vmem:[#allocation5 + $0x878] sm:$0xff]
    %v311 = vand.u32 %v295, 4294901760
    %312 = vmatprep.subr.mxu0 %v311
    %v313 = vand.u32 %v294, 4294901760
    %314 = vmatpush1.msra.mxu0 %v313
    %v315 = vand.u32 %v278, 4294901760
    %316 = vmatprep.subr.mxu0 %v315
    %v317 = vand.u32 %v277, 4294901760
    %318 = vmatpush1.msra.mxu0 %v317
    %v319 = vand.u32 %v261, 4294901760
    %320 = vmatprep.subr.mxu0 %v319
    %v321 = vand.u32 %v260, 4294901760
    %322 = vmatpush1.msra.mxu0 %v321
    %v323 = vand.u32 %v244, 4294901760
    %324 = vmatprep.subr.mxu0 %v323
    %v325 = vand.u32 %v243, 4294901760
    %326 = vmatpush1.msra.mxu0 %v325
    %v327 = vand.u32 %v227, 4294901760
    %328 = vmatprep.subr.mxu0 %v327
    %v329 = vand.u32 %v226, 4294901760
    %330 = vmatpush1.msra.mxu0 %v329
    %v331 = vand.u32 %v210, 4294901760
    %332 = vmatprep.subr.mxu0 %v331
    %v333 = vand.u32 %v209, 4294901760
    %334 = vmatpush1.msra.mxu0 %v333
    %v335 = vand.u32 %v193, 4294901760
    %336 = vmatprep.subr.mxu0 %v335
    %v337 = vand.u32 %v192, 4294901760
    %338 = vmatpush1.msra.mxu0 %v337
    %v339 = vand.u32 %v176, 4294901760
    %340 = vmatprep.subr.mxu0 %v339
    %v341 = vand.u32 %v175, 4294901760
    %342 = vmatpush1.msra.mxu0 %v341
    %v343 = vand.u32 %v159, 4294901760
    %344 = vmatprep.subr.mxu0 %v343
    %v345 = vand.u32 %v158, 4294901760
    %346 = vmatpush1.msra.mxu0 %v345
    %v347 = vand.u32 %v142, 4294901760
    %348 = vmatprep.subr.mxu0 %v347
    %v349 = vand.u32 %v141, 4294901760
    %350 = vmatpush1.msra.mxu0 %v349
    %v351 = vand.u32 %v125, 4294901760
    %352 = vmatprep.subr.mxu0 %v351
    %v353 = vand.u32 %v124, 4294901760
    %354 = vmatpush1.msra.mxu0 %v353
    %v355 = vand.u32 %v108, 4294901760
    %356 = vmatprep.subr.mxu0 %v355
    %v357 = vand.u32 %v107, 4294901760
    %358 = vmatpush1.msra.mxu0 %v357
    %v359 = vand.u32 %v91, 4294901760
    %360 = vmatprep.subr.mxu0 %v359
    %v361 = vand.u32 %v90, 4294901760
    %362 = vmatpush1.msra.mxu0 %v361
    %v363 = vand.u32 %v74, 4294901760
    %364 = vmatprep.subr.mxu0 %v363
    %v365 = vand.u32 %v73, 4294901760
    %366 = vmatpush1.msra.mxu0 %v365
    %v367 = vand.u32 %v57, 4294901760
    %368 = vmatprep.subr.mxu0 %v367
    %v369 = vand.u32 %v56, 4294901760
    %370 = vmatpush1.msra.mxu0 %v369
    %v371 = vand.u32 %v40, 4294901760
    %372 = vmatprep.subr.mxu0 %v371
    %v373 = vand.u32 %v39, 4294901760
    %374 = vmatpush1.msra.mxu0 %v373
    %375 = vmatprep.subr.mxu0 0.0
    %376 = vmatpush2.msra.mxu0 0.0
    %377 = vmatprep.subr.mxu0 0.0
    %378 = vmatpush2.msra.mxu0 0.0
    %379 = vmatprep.subr.mxu0 0.0
    %380 = vmatpush2.msra.mxu0 0.0
    %381 = vmatprep.subr.mxu0 0.0
    %382 = vmatpush2.msra.mxu0 0.0
    %383 = vmatprep.subr.mxu0 0.0
    %384 = vmatpush2.msra.mxu0 0.0
    %385 = vmatprep.subr.mxu0 0.0
    %386 = vmatpush2.msra.mxu0 0.0
    %387 = vmatprep.subr.mxu0 0.0
    %388 = vmatpush2.msra.mxu0 0.0
    %389 = vmatprep.subr.mxu0 0.0
    %390 = vmatpush2.msra.mxu0 0.0
    %391 = vmatprep.subr.mxu0 0.0
    %392 = vmatpush2.msra.mxu0 0.0
    %393 = vmatprep.subr.mxu0 0.0
    %394 = vmatpush2.msra.mxu0 0.0
    %395 = vmatprep.subr.mxu0 0.0
    %396 = vmatpush2.msra.mxu0 0.0
    %397 = vmatprep.subr.mxu0 0.0
    %398 = vmatpush2.msra.mxu0 0.0
    %399 = vmatprep.subr.mxu0 0.0
    %400 = vmatpush2.msra.mxu0 0.0
    %401 = vmatprep.subr.mxu0 0.0
    %402 = vmatpush2.msra.mxu0 0.0
    %403 = vmatprep.subr.mxu0 0.0
    %404 = vmatpush2.msra.mxu0 0.0
    %405 = vmatprep.subr.mxu0 0.0
    %406 = vmatpush2.msra.mxu0 0.0
    %407 = vmatprep.mubr.f32.mxu0 0.0
    %v408 = vand.u32 %v38, 4294901760
    %v409 = vsub.f32 %v38, %v408
    %v410 = vand.u32 %v409, 4294901760
    %v411 = vsub.f32 %v409, %v410
    %v412 = vand.u32 %v411, 4294901760
    %413 = vmatmul.mubr.f32.gmra.mxu0 %v412
    %v414 = vpop.f32.mrf.mxu0
    %v415 = vadd.f32 0.0, %v414
    %v416 = vpop.f32.mrf.mxu0
    %v417 = vadd.f32 0.0, %v416
    %418 = vdwg.mxu0
    %v419 = vand.u32 %v295, 4294901760
    %v420 = vsub.f32 %v295, %v419
    %v421 = vand.u32 %v420, 4294901760
    %v422 = vsub.f32 %v420, %v421
    %v423 = vand.u32 %v422, 4294901760
    %424 = vmatprep.subr.mxu0 %v423
    %v425 = vand.u32 %v294, 4294901760
    %v426 = vsub.f32 %v294, %v425
    %v427 = vand.u32 %v426, 4294901760
    %v428 = vsub.f32 %v426, %v427
    %v429 = vand.u32 %v428, 4294901760
    %430 = vmatpush1.msra.mxu0 %v429
    %v431 = vand.u32 %v278, 4294901760
    %v432 = vsub.f32 %v278, %v431
    %v433 = vand.u32 %v432, 4294901760
    %v434 = vsub.f32 %v432, %v433
    %v435 = vand.u32 %v434, 4294901760
    %436 = vmatprep.subr.mxu0 %v435
    %v437 = vand.u32 %v277, 4294901760
    %v438 = vsub.f32 %v277, %v437
    %v439 = vand.u32 %v438, 4294901760
    %v440 = vsub.f32 %v438, %v439
    %v441 = vand.u32 %v440, 4294901760
    %442 = vmatpush1.msra.mxu0 %v441
    %v443 = vand.u32 %v261, 4294901760
    %v444 = vsub.f32 %v261, %v443
    %v445 = vand.u32 %v444, 4294901760
    %v446 = vsub.f32 %v444, %v445
    %v447 = vand.u32 %v446, 4294901760
    %448 = vmatprep.subr.mxu0 %v447
    %v449 = vand.u32 %v260, 4294901760
    %v450 = vsub.f32 %v260, %v449
    %v451 = vand.u32 %v450, 4294901760
    %v452 = vsub.f32 %v450, %v451
    %v453 = vand.u32 %v452, 4294901760
    %454 = vmatpush1.msra.mxu0 %v453
    %v455 = vand.u32 %v244, 4294901760
    %v456 = vsub.f32 %v244, %v455
    %v457 = vand.u32 %v456, 4294901760
    %v458 = vsub.f32 %v456, %v457
    %v459 = vand.u32 %v458, 4294901760
    %460 = vmatprep.subr.mxu0 %v459
    %v461 = vand.u32 %v243, 4294901760
    %v462 = vsub.f32 %v243, %v461
    %v463 = vand.u32 %v462, 4294901760
    %v464 = vsub.f32 %v462, %v463
    %v465 = vand.u32 %v464, 4294901760
    %466 = vmatpush1.msra.mxu0 %v465
    %v467 = vand.u32 %v227, 4294901760
    %v468 = vsub.f32 %v227, %v467
    %v469 = vand.u32 %v468, 4294901760
    %v470 = vsub.f32 %v468, %v469
    %v471 = vand.u32 %v470, 4294901760
    %472 = vmatprep.subr.mxu0 %v471
    %v473 = vand.u32 %v226, 4294901760
    %v474 = vsub.f32 %v226, %v473
    %v475 = vand.u32 %v474, 4294901760
    %v476 = vsub.f32 %v474, %v475
    %v477 = vand.u32 %v476, 4294901760
    %478 = vmatpush1.msra.mxu0 %v477
    %v479 = vand.u32 %v210, 4294901760
    %v480 = vsub.f32 %v210, %v479
    %v481 = vand.u32 %v480, 4294901760
    %v482 = vsub.f32 %v480, %v481
    %v483 = vand.u32 %v482, 4294901760
    %484 = vmatprep.subr.mxu0 %v483
    %v485 = vand.u32 %v209, 4294901760
    %v486 = vsub.f32 %v209, %v485
    %v487 = vand.u32 %v486, 4294901760
    %v488 = vsub.f32 %v486, %v487
    %v489 = vand.u32 %v488, 4294901760
    %490 = vmatpush1.msra.mxu0 %v489
    %v491 = vand.u32 %v193, 4294901760
    %v492 = vsub.f32 %v193, %v491
    %v493 = vand.u32 %v492, 4294901760
    %v494 = vsub.f32 %v492, %v493
    %v495 = vand.u32 %v494, 4294901760
    %496 = vmatprep.subr.mxu0 %v495
    %v497 = vand.u32 %v192, 4294901760
    %v498 = vsub.f32 %v192, %v497
    %v499 = vand.u32 %v498, 4294901760
    %v500 = vsub.f32 %v498, %v499
    %v501 = vand.u32 %v500, 4294901760
    %502 = vmatpush1.msra.mxu0 %v501
    %v503 = vand.u32 %v176, 4294901760
    %v504 = vsub.f32 %v176, %v503
    %v505 = vand.u32 %v504, 4294901760
    %v506 = vsub.f32 %v504, %v505
    %v507 = vand.u32 %v506, 4294901760
    %508 = vmatprep.subr.mxu0 %v507
    %v509 = vand.u32 %v175, 4294901760
    %v510 = vsub.f32 %v175, %v509
    %v511 = vand.u32 %v510, 4294901760
    %v512 = vsub.f32 %v510, %v511
    %v513 = vand.u32 %v512, 4294901760
    %514 = vmatpush1.msra.mxu0 %v513
    %v515 = vand.u32 %v159, 4294901760
    %v516 = vsub.f32 %v159, %v515
    %v517 = vand.u32 %v516, 4294901760
    %v518 = vsub.f32 %v516, %v517
    %v519 = vand.u32 %v518, 4294901760
    %520 = vmatprep.subr.mxu0 %v519
    %v521 = vand.u32 %v158, 4294901760
    %v522 = vsub.f32 %v158, %v521
    %v523 = vand.u32 %v522, 4294901760
    %v524 = vsub.f32 %v522, %v523
    %v525 = vand.u32 %v524, 4294901760
    %526 = vmatpush1.msra.mxu0 %v525
    %v527 = vand.u32 %v142, 4294901760
    %v528 = vsub.f32 %v142, %v527
    %v529 = vand.u32 %v528, 4294901760
    %v530 = vsub.f32 %v528, %v529
    %v531 = vand.u32 %v530, 4294901760
    %532 = vmatprep.subr.mxu0 %v531
    %v533 = vand.u32 %v141, 4294901760
    %v534 = vsub.f32 %v141, %v533
    %v535 = vand.u32 %v534, 4294901760
    %v536 = vsub.f32 %v534, %v535
    %v537 = vand.u32 %v536, 4294901760
    %538 = vmatpush1.msra.mxu0 %v537
    %v539 = vand.u32 %v125, 4294901760
    %v540 = vsub.f32 %v125, %v539
    %v541 = vand.u32 %v540, 4294901760
    %v542 = vsub.f32 %v540, %v541
    %v543 = vand.u32 %v542, 4294901760
    %544 = vmatprep.subr.mxu0 %v543
    %v545 = vand.u32 %v124, 4294901760
    %v546 = vsub.f32 %v124, %v545
    %v547 = vand.u32 %v546, 4294901760
    %v548 = vsub.f32 %v546, %v547
    %v549 = vand.u32 %v548, 4294901760
    %550 = vmatpush1.msra.mxu0 %v549
    %v551 = vand.u32 %v108, 4294901760
    %v552 = vsub.f32 %v108, %v551
    %v553 = vand.u32 %v552, 4294901760
    %v554 = vsub.f32 %v552, %v553
    %v555 = vand.u32 %v554, 4294901760
    %556 = vmatprep.subr.mxu0 %v555
    %v557 = vand.u32 %v107, 4294901760
    %v558 = vsub.f32 %v107, %v557
    %v559 = vand.u32 %v558, 4294901760
    %v560 = vsub.f32 %v558, %v559
    %v561 = vand.u32 %v560, 4294901760
    %562 = vmatpush1.msra.mxu0 %v561
    %v563 = vand.u32 %v91, 4294901760
    %v564 = vsub.f32 %v91, %v563
    %v565 = vand.u32 %v564, 4294901760
    %v566 = vsub.f32 %v564, %v565
    %v567 = vand.u32 %v566, 4294901760
    %568 = vmatprep.subr.mxu0 %v567
    %v569 = vand.u32 %v90, 4294901760
    %v570 = vsub.f32 %v90, %v569
    %v571 = vand.u32 %v570, 4294901760
    %v572 = vsub.f32 %v570, %v571
    %v573 = vand.u32 %v572, 4294901760
    %574 = vmatpush1.msra.mxu0 %v573
    %v575 = vand.u32 %v74, 4294901760
    %v576 = vsub.f32 %v74, %v575
    %v577 = vand.u32 %v576, 4294901760
    %v578 = vsub.f32 %v576, %v577
    %v579 = vand.u32 %v578, 4294901760
    %580 = vmatprep.subr.mxu0 %v579
    %v581 = vand.u32 %v73, 4294901760
    %v582 = vsub.f32 %v73, %v581
    %v583 = vand.u32 %v582, 4294901760
    %v584 = vsub.f32 %v582, %v583
    %v585 = vand.u32 %v584, 4294901760
    %586 = vmatpush1.msra.mxu0 %v585
    %v587 = vand.u32 %v57, 4294901760
    %v588 = vsub.f32 %v57, %v587
    %v589 = vand.u32 %v588, 4294901760
    %v590 = vsub.f32 %v588, %v589
    %v591 = vand.u32 %v590, 4294901760
    %592 = vmatprep.subr.mxu0 %v591
    %v593 = vand.u32 %v56, 4294901760
    %v594 = vsub.f32 %v56, %v593
    %v595 = vand.u32 %v594, 4294901760
    %v596 = vsub.f32 %v594, %v595
    %v597 = vand.u32 %v596, 4294901760
    %598 = vmatpush1.msra.mxu0 %v597
    %v599 = vand.u32 %v40, 4294901760
    %v600 = vsub.f32 %v40, %v599
    %v601 = vand.u32 %v600, 4294901760
    %v602 = vsub.f32 %v600, %v601
    %v603 = vand.u32 %v602, 4294901760
    %604 = vmatprep.subr.mxu0 %v603
    %v605 = vand.u32 %v39, 4294901760
    %v606 = vsub.f32 %v39, %v605
    %v607 = vand.u32 %v606, 4294901760
    %v608 = vsub.f32 %v606, %v607
    %v609 = vand.u32 %v608, 4294901760
    %610 = vmatpush1.msra.mxu0 %v609
    %611 = vmatprep.subr.mxu0 0.0
    %612 = vmatpush2.msra.mxu0 0.0
    %613 = vmatprep.subr.mxu0 0.0
    %614 = vmatpush2.msra.mxu0 0.0
    %615 = vmatprep.subr.mxu0 0.0
    %616 = vmatpush2.msra.mxu0 0.0
    %617 = vmatprep.subr.mxu0 0.0
    %618 = vmatpush2.msra.mxu0 0.0
    %619 = vmatprep.subr.mxu0 0.0
    %620 = vmatpush2.msra.mxu0 0.0
    %621 = vmatprep.subr.mxu0 0.0
    %622 = vmatpush2.msra.mxu0 0.0
    %623 = vmatprep.subr.mxu0 0.0
    %624 = vmatpush2.msra.mxu0 0.0
    %625 = vmatprep.subr.mxu0 0.0
    %626 = vmatpush2.msra.mxu0 0.0
    %627 = vmatprep.subr.mxu0 0.0
    %628 = vmatpush2.msra.mxu0 0.0
    %629 = vmatprep.subr.mxu0 0.0
    %630 = vmatpush2.msra.mxu0 0.0
    %631 = vmatprep.subr.mxu0 0.0
    %632 = vmatpush2.msra.mxu0 0.0
    %633 = vmatprep.subr.mxu0 0.0
    %634 = vmatpush2.msra.mxu0 0.0
    %635 = vmatprep.subr.mxu0 0.0
    %636 = vmatpush2.msra.mxu0 0.0
    %637 = vmatprep.subr.mxu0 0.0
    %638 = vmatpush2.msra.mxu0 0.0
    %639 = vmatprep.subr.mxu0 0.0
    %640 = vmatpush2.msra.mxu0 0.0
    %641 = vmatprep.subr.mxu0 0.0
    %642 = vmatpush2.msra.mxu0 0.0
    %643 = vmatprep.mubr.f32.mxu0 0.0
    %v644 = vand.u32 %v38, 4294901760
    %645 = vmatmul.mubr.f32.gmra.mxu0 %v644
    %v646 = vpop.f32.mrf.mxu0
    %v647 = vadd.f32 %v415, %v646
    %v648 = vpop.f32.mrf.mxu0
    %v649 = vadd.f32 %v417, %v648
    %650 = vdwg.mxu0
    %v651 = vand.u32 %v295, 4294901760
    %v652 = vsub.f32 %v295, %v651
    %653 = vmatprep.subr.mxu0 %v652
    %v654 = vand.u32 %v294, 4294901760
    %v655 = vsub.f32 %v294, %v654
    %656 = vmatpush1.msra.mxu0 %v655
    %v657 = vand.u32 %v278, 4294901760
    %v658 = vsub.f32 %v278, %v657
    %659 = vmatprep.subr.mxu0 %v658
    %v660 = vand.u32 %v277, 4294901760
    %v661 = vsub.f32 %v277, %v660
    %662 = vmatpush1.msra.mxu0 %v661
    %v663 = vand.u32 %v261, 4294901760
    %v664 = vsub.f32 %v261, %v663
    %665 = vmatprep.subr.mxu0 %v664
    %v666 = vand.u32 %v260, 4294901760
    %v667 = vsub.f32 %v260, %v666
    %668 = vmatpush1.msra.mxu0 %v667
    %v669 = vand.u32 %v244, 4294901760
    %v670 = vsub.f32 %v244, %v669
    %671 = vmatprep.subr.mxu0 %v670
    %v672 = vand.u32 %v243, 4294901760
    %v673 = vsub.f32 %v243, %v672
    %674 = vmatpush1.msra.mxu0 %v673
    %v675 = vand.u32 %v227, 4294901760
    %v676 = vsub.f32 %v227, %v675
    %677 = vmatprep.subr.mxu0 %v676
    %v678 = vand.u32 %v226, 4294901760
    %v679 = vsub.f32 %v226, %v678
    %680 = vmatpush1.msra.mxu0 %v679
    %v681 = vand.u32 %v210, 4294901760
    %v682 = vsub.f32 %v210, %v681
    %683 = vmatprep.subr.mxu0 %v682
    %v684 = vand.u32 %v209, 4294901760
    %v685 = vsub.f32 %v209, %v684
    %686 = vmatpush1.msra.mxu0 %v685
    %v687 = vand.u32 %v193, 4294901760
    %v688 = vsub.f32 %v193, %v687
    %689 = vmatprep.subr.mxu0 %v688
    %v690 = vand.u32 %v192, 4294901760
    %v691 = vsub.f32 %v192, %v690
    %692 = vmatpush1.msra.mxu0 %v691
    %v693 = vand.u32 %v176, 4294901760
    %v694 = vsub.f32 %v176, %v693
    %695 = vmatprep.subr.mxu0 %v694
    %v696 = vand.u32 %v175, 4294901760
    %v697 = vsub.f32 %v175, %v696
    %698 = vmatpush1.msra.mxu0 %v697
    %v699 = vand.u32 %v159, 4294901760
    %v700 = vsub.f32 %v159, %v699
    %701 = vmatprep.subr.mxu0 %v700
    %v702 = vand.u32 %v158, 4294901760
    %v703 = vsub.f32 %v158, %v702
    %704 = vmatpush1.msra.mxu0 %v703
    %v705 = vand.u32 %v142, 4294901760
    %v706 = vsub.f32 %v142, %v705
    %707 = vmatprep.subr.mxu0 %v706
    %v708 = vand.u32 %v141, 4294901760
    %v709 = vsub.f32 %v141, %v708
    %710 = vmatpush1.msra.mxu0 %v709
    %v711 = vand.u32 %v125, 4294901760
    %v712 = vsub.f32 %v125, %v711
    %713 = vmatprep.subr.mxu0 %v712
    %v714 = vand.u32 %v124, 4294901760
    %v715 = vsub.f32 %v124, %v714
    %716 = vmatpush1.msra.mxu0 %v715
    %v717 = vand.u32 %v108, 4294901760
    %v718 = vsub.f32 %v108, %v717
    %719 = vmatprep.subr.mxu0 %v718
    %v720 = vand.u32 %v107, 4294901760
    %v721 = vsub.f32 %v107, %v720
    %722 = vmatpush1.msra.mxu0 %v721
    %v723 = vand.u32 %v91, 4294901760
    %v724 = vsub.f32 %v91, %v723
    %725 = vmatprep.subr.mxu0 %v724
    %v726 = vand.u32 %v90, 4294901760
    %v727 = vsub.f32 %v90, %v726
    %728 = vmatpush1.msra.mxu0 %v727
    %v729 = vand.u32 %v74, 4294901760
    %v730 = vsub.f32 %v74, %v729
    %731 = vmatprep.subr.mxu0 %v730
    %v732 = vand.u32 %v73, 4294901760
    %v733 = vsub.f32 %v73, %v732
    %734 = vmatpush1.msra.mxu0 %v733
    %v735 = vand.u32 %v57, 4294901760
    %v736 = vsub.f32 %v57, %v735
    %737 = vmatprep.subr.mxu0 %v736
    %v738 = vand.u32 %v56, 4294901760
    %v739 = vsub.f32 %v56, %v738
    %740 = vmatpush1.msra.mxu0 %v739
    %v741 = vand.u32 %v40, 4294901760
    %v742 = vsub.f32 %v40, %v741
    %743 = vmatprep.subr.mxu0 %v742
    %v744 = vand.u32 %v39, 4294901760
    %v745 = vsub.f32 %v39, %v744
    %746 = vmatpush1.msra.mxu0 %v745
    %747 = vmatprep.subr.mxu0 0.0
    %748 = vmatpush2.msra.mxu0 0.0
    %749 = vmatprep.subr.mxu0 0.0
    %750 = vmatpush2.msra.mxu0 0.0
    %751 = vmatprep.subr.mxu0 0.0
    %752 = vmatpush2.msra.mxu0 0.0
    %753 = vmatprep.subr.mxu0 0.0
    %754 = vmatpush2.msra.mxu0 0.0
    %755 = vmatprep.subr.mxu0 0.0
    %756 = vmatpush2.msra.mxu0 0.0
    %757 = vmatprep.subr.mxu0 0.0
    %758 = vmatpush2.msra.mxu0 0.0
    %759 = vmatprep.subr.mxu0 0.0
    %760 = vmatpush2.msra.mxu0 0.0
    %761 = vmatprep.subr.mxu0 0.0
    %762 = vmatpush2.msra.mxu0 0.0
    %763 = vmatprep.subr.mxu0 0.0
    %764 = vmatpush2.msra.mxu0 0.0
    %765 = vmatprep.subr.mxu0 0.0
    %766 = vmatpush2.msra.mxu0 0.0
    %767 = vmatprep.subr.mxu0 0.0
    %768 = vmatpush2.msra.mxu0 0.0
    %769 = vmatprep.subr.mxu0 0.0
    %770 = vmatpush2.msra.mxu0 0.0
    %771 = vmatprep.subr.mxu0 0.0
    %772 = vmatpush2.msra.mxu0 0.0
    %773 = vmatprep.subr.mxu0 0.0
    %774 = vmatpush2.msra.mxu0 0.0
    %775 = vmatprep.subr.mxu0 0.0
    %776 = vmatpush2.msra.mxu0 0.0
    %777 = vmatprep.subr.mxu0 0.0
    %778 = vmatpush2.msra.mxu0 0.0
    %779 = vmatprep.mubr.f32.mxu0 0.0
    %v780 = vand.u32 %v38, 4294901760
    %v781 = vsub.f32 %v38, %v780
    %782 = vmatmul.mubr.f32.gmra.mxu0 %v781
    %v783 = vpop.f32.mrf.mxu0
    %v784 = vadd.f32 %v647, %v783
    %v785 = vpop.f32.mrf.mxu0
    %v786 = vadd.f32 %v649, %v785
    %787 = vdwg.mxu0
    %v788 = vand.u32 %v295, 4294901760
    %789 = vmatprep.subr.mxu0 %v788
    %v790 = vand.u32 %v294, 4294901760
    %791 = vmatpush1.msra.mxu0 %v790
    %v792 = vand.u32 %v278, 4294901760
    %793 = vmatprep.subr.mxu0 %v792
    %v794 = vand.u32 %v277, 4294901760
    %795 = vmatpush1.msra.mxu0 %v794
    %v796 = vand.u32 %v261, 4294901760
    %797 = vmatprep.subr.mxu0 %v796
    %v798 = vand.u32 %v260, 4294901760
    %799 = vmatpush1.msra.mxu0 %v798
    %v800 = vand.u32 %v244, 4294901760
    %801 = vmatprep.subr.mxu0 %v800
    %v802 = vand.u32 %v243, 4294901760
    %803 = vmatpush1.msra.mxu0 %v802
    %v804 = vand.u32 %v227, 4294901760
    %805 = vmatprep.subr.mxu0 %v804
    %v806 = vand.u32 %v226, 4294901760
    %807 = vmatpush1.msra.mxu0 %v806
    %v808 = vand.u32 %v210, 4294901760
    %809 = vmatprep.subr.mxu0 %v808
    %v810 = vand.u32 %v209, 4294901760
    %811 = vmatpush1.msra.mxu0 %v810
    %v812 = vand.u32 %v193, 4294901760
    %813 = vmatprep.subr.mxu0 %v812
    %v814 = vand.u32 %v192, 4294901760
    %815 = vmatpush1.msra.mxu0 %v814
    %v816 = vand.u32 %v176, 4294901760
    %817 = vmatprep.subr.mxu0 %v816
    %v818 = vand.u32 %v175, 4294901760
    %819 = vmatpush1.msra.mxu0 %v818
    %v820 = vand.u32 %v159, 4294901760
    %821 = vmatprep.subr.mxu0 %v820
    %v822 = vand.u32 %v158, 4294901760
    %823 = vmatpush1.msra.mxu0 %v822
    %v824 = vand.u32 %v142, 4294901760
    %825 = vmatprep.subr.mxu0 %v824
    %v826 = vand.u32 %v141, 4294901760
    %827 = vmatpush1.msra.mxu0 %v826
    %v828 = vand.u32 %v125, 4294901760
    %829 = vmatprep.subr.mxu0 %v828
    %v830 = vand.u32 %v124, 4294901760
    %831 = vmatpush1.msra.mxu0 %v830
    %v832 = vand.u32 %v108, 4294901760
    %833 = vmatprep.subr.mxu0 %v832
    %v834 = vand.u32 %v107, 4294901760
    %835 = vmatpush1.msra.mxu0 %v834
    %v836 = vand.u32 %v91, 4294901760
    %837 = vmatprep.subr.mxu0 %v836
    %v838 = vand.u32 %v90, 4294901760
    %839 = vmatpush1.msra.mxu0 %v838
    %v840 = vand.u32 %v74, 4294901760
    %841 = vmatprep.subr.mxu0 %v840
    %v842 = vand.u32 %v73, 4294901760
    %843 = vmatpush1.msra.mxu0 %v842
    %v844 = vand.u32 %v57, 4294901760
    %845 = vmatprep.subr.mxu0 %v844
    %v846 = vand.u32 %v56, 4294901760
    %847 = vmatpush1.msra.mxu0 %v846
    %v848 = vand.u32 %v40, 4294901760
    %849 = vmatprep.subr.mxu0 %v848
    %v850 = vand.u32 %v39, 4294901760
    %851 = vmatpush1.msra.mxu0 %v850
    %852 = vmatprep.subr.mxu0 0.0
    %853 = vmatpush2.msra.mxu0 0.0
    %854 = vmatprep.subr.mxu0 0.0
    %855 = vmatpush2.msra.mxu0 0.0
    %856 = vmatprep.subr.mxu0 0.0
    %857 = vmatpush2.msra.mxu0 0.0
    %858 = vmatprep.subr.mxu0 0.0
    %859 = vmatpush2.msra.mxu0 0.0
    %860 = vmatprep.subr.mxu0 0.0
    %861 = vmatpush2.msra.mxu0 0.0
    %862 = vmatprep.subr.mxu0 0.0
    %863 = vmatpush2.msra.mxu0 0.0
    %864 = vmatprep.subr.mxu0 0.0
    %865 = vmatpush2.msra.mxu0 0.0
    %866 = vmatprep.subr.mxu0 0.0
    %867 = vmatpush2.msra.mxu0 0.0
    %868 = vmatprep.subr.mxu0 0.0
    %869 = vmatpush2.msra.mxu0 0.0
    %870 = vmatprep.subr.mxu0 0.0
    %871 = vmatpush2.msra.mxu0 0.0
    %872 = vmatprep.subr.mxu0 0.0
    %873 = vmatpush2.msra.mxu0 0.0
    %874 = vmatprep.subr.mxu0 0.0
    %875 = vmatpush2.msra.mxu0 0.0
    %876 = vmatprep.subr.mxu0 0.0
    %877 = vmatpush2.msra.mxu0 0.0
    %878 = vmatprep.subr.mxu0 0.0
    %879 = vmatpush2.msra.mxu0 0.0
    %880 = vmatprep.subr.mxu0 0.0
    %881 = vmatpush2.msra.mxu0 0.0
    %882 = vmatprep.subr.mxu0 0.0
    %883 = vmatpush2.msra.mxu0 0.0
    %884 = vmatprep.mubr.f32.mxu0 0.0
    %v885 = vand.u32 %v38, 4294901760
    %v886 = vsub.f32 %v38, %v885
    %v887 = vand.u32 %v886, 4294901760
    %888 = vmatmul.mubr.f32.gmra.mxu0 %v887
    %v889 = vpop.f32.mrf.mxu0
    %v890 = vadd.f32 %v784, %v889
    %v891 = vpop.f32.mrf.mxu0
    %v892 = vadd.f32 %v786, %v891
    %893 = vdwg.mxu0
    %v894 = vand.u32 %v295, 4294901760
    %v895 = vsub.f32 %v295, %v894
    %v896 = vand.u32 %v895, 4294901760
    %897 = vmatprep.subr.mxu0 %v896
    %v898 = vand.u32 %v294, 4294901760
    %v899 = vsub.f32 %v294, %v898
    %v900 = vand.u32 %v899, 4294901760
    %901 = vmatpush1.msra.mxu0 %v900
    %v902 = vand.u32 %v278, 4294901760
    %v903 = vsub.f32 %v278, %v902
    %v904 = vand.u32 %v903, 4294901760
    %905 = vmatprep.subr.mxu0 %v904
    %v906 = vand.u32 %v277, 4294901760
    %v907 = vsub.f32 %v277, %v906
    %v908 = vand.u32 %v907, 4294901760
    %909 = vmatpush1.msra.mxu0 %v908
    %v910 = vand.u32 %v261, 4294901760
    %v911 = vsub.f32 %v261, %v910
    %v912 = vand.u32 %v911, 4294901760
    %913 = vmatprep.subr.mxu0 %v912
    %v914 = vand.u32 %v260, 4294901760
    %v915 = vsub.f32 %v260, %v914
    %v916 = vand.u32 %v915, 4294901760
    %917 = vmatpush1.msra.mxu0 %v916
    %v918 = vand.u32 %v244, 4294901760
    %v919 = vsub.f32 %v244, %v918
    %v920 = vand.u32 %v919, 4294901760
    %921 = vmatprep.subr.mxu0 %v920
    %v922 = vand.u32 %v243, 4294901760
    %v923 = vsub.f32 %v243, %v922
    %v924 = vand.u32 %v923, 4294901760
    %925 = vmatpush1.msra.mxu0 %v924
    %v926 = vand.u32 %v227, 4294901760
    %v927 = vsub.f32 %v227, %v926
    %v928 = vand.u32 %v927, 4294901760
    %929 = vmatprep.subr.mxu0 %v928
    %v930 = vand.u32 %v226, 4294901760
    %v931 = vsub.f32 %v226, %v930
    %v932 = vand.u32 %v931, 4294901760
    %933 = vmatpush1.msra.mxu0 %v932
    %v934 = vand.u32 %v210, 4294901760
    %v935 = vsub.f32 %v210, %v934
    %v936 = vand.u32 %v935, 4294901760
    %937 = vmatprep.subr.mxu0 %v936
    %v938 = vand.u32 %v209, 4294901760
    %v939 = vsub.f32 %v209, %v938
    %v940 = vand.u32 %v939, 4294901760
    %941 = vmatpush1.msra.mxu0 %v940
    %v942 = vand.u32 %v193, 4294901760
    %v943 = vsub.f32 %v193, %v942
    %v944 = vand.u32 %v943, 4294901760
    %945 = vmatprep.subr.mxu0 %v944
    %v946 = vand.u32 %v192, 4294901760
    %v947 = vsub.f32 %v192, %v946
    %v948 = vand.u32 %v947, 4294901760
    %949 = vmatpush1.msra.mxu0 %v948
    %v950 = vand.u32 %v176, 4294901760
    %v951 = vsub.f32 %v176, %v950
    %v952 = vand.u32 %v951, 4294901760
    %953 = vmatprep.subr.mxu0 %v952
    %v954 = vand.u32 %v175, 4294901760
    %v955 = vsub.f32 %v175, %v954
    %v956 = vand.u32 %v955, 4294901760
    %957 = vmatpush1.msra.mxu0 %v956
    %v958 = vand.u32 %v159, 4294901760
    %v959 = vsub.f32 %v159, %v958
    %v960 = vand.u32 %v959, 4294901760
    %961 = vmatprep.subr.mxu0 %v960
    %v962 = vand.u32 %v158, 4294901760
    %v963 = vsub.f32 %v158, %v962
    %v964 = vand.u32 %v963, 4294901760
    %965 = vmatpush1.msra.mxu0 %v964
    %v966 = vand.u32 %v142, 4294901760
    %v967 = vsub.f32 %v142, %v966
    %v968 = vand.u32 %v967, 4294901760
    %969 = vmatprep.subr.mxu0 %v968
    %v970 = vand.u32 %v141, 4294901760
    %v971 = vsub.f32 %v141, %v970
    %v972 = vand.u32 %v971, 4294901760
    %973 = vmatpush1.msra.mxu0 %v972
    %v974 = vand.u32 %v125, 4294901760
    %v975 = vsub.f32 %v125, %v974
    %v976 = vand.u32 %v975, 4294901760
    %977 = vmatprep.subr.mxu0 %v976
    %v978 = vand.u32 %v124, 4294901760
    %v979 = vsub.f32 %v124, %v978
    %v980 = vand.u32 %v979, 4294901760
    %981 = vmatpush1.msra.mxu0 %v980
    %v982 = vand.u32 %v108, 4294901760
    %v983 = vsub.f32 %v108, %v982
    %v984 = vand.u32 %v983, 4294901760
    %985 = vmatprep.subr.mxu0 %v984
    %v986 = vand.u32 %v107, 4294901760
    %v987 = vsub.f32 %v107, %v986
    %v988 = vand.u32 %v987, 4294901760
    %989 = vmatpush1.msra.mxu0 %v988
    %v990 = vand.u32 %v91, 4294901760
    %v991 = vsub.f32 %v91, %v990
    %v992 = vand.u32 %v991, 4294901760
    %993 = vmatprep.subr.mxu0 %v992
    %v994 = vand.u32 %v90, 4294901760
    %v995 = vsub.f32 %v90, %v994
    %v996 = vand.u32 %v995, 4294901760
    %997 = vmatpush1.msra.mxu0 %v996
    %v998 = vand.u32 %v74, 4294901760
    %v999 = vsub.f32 %v74, %v998
    %v1000 = vand.u32 %v999, 4294901760
    %1001 = vmatprep.subr.mxu0 %v1000
    %v1002 = vand.u32 %v73, 4294901760
    %v1003 = vsub.f32 %v73, %v1002
    %v1004 = vand.u32 %v1003, 4294901760
    %1005 = vmatpush1.msra.mxu0 %v1004
    %v1006 = vand.u32 %v57, 4294901760
    %v1007 = vsub.f32 %v57, %v1006
    %v1008 = vand.u32 %v1007, 4294901760
    %1009 = vmatprep.subr.mxu0 %v1008
    %v1010 = vand.u32 %v56, 4294901760
    %v1011 = vsub.f32 %v56, %v1010
    %v1012 = vand.u32 %v1011, 4294901760
    %1013 = vmatpush1.msra.mxu0 %v1012
    %v1014 = vand.u32 %v40, 4294901760
    %v1015 = vsub.f32 %v40, %v1014
    %v1016 = vand.u32 %v1015, 4294901760
    %1017 = vmatprep.subr.mxu0 %v1016
    %v1018 = vand.u32 %v39, 4294901760
    %v1019 = vsub.f32 %v39, %v1018
    %v1020 = vand.u32 %v1019, 4294901760
    %1021 = vmatpush1.msra.mxu0 %v1020
    %1022 = vmatprep.subr.mxu0 0.0
    %1023 = vmatpush2.msra.mxu0 0.0
    %1024 = vmatprep.subr.mxu0 0.0
    %1025 = vmatpush2.msra.mxu0 0.0
    %1026 = vmatprep.subr.mxu0 0.0
    %1027 = vmatpush2.msra.mxu0 0.0
    %1028 = vmatprep.subr.mxu0 0.0
    %1029 = vmatpush2.msra.mxu0 0.0
    %1030 = vmatprep.subr.mxu0 0.0
    %1031 = vmatpush2.msra.mxu0 0.0
    %1032 = vmatprep.subr.mxu0 0.0
    %1033 = vmatpush2.msra.mxu0 0.0
    %1034 = vmatprep.subr.mxu0 0.0
    %1035 = vmatpush2.msra.mxu0 0.0
    %1036 = vmatprep.subr.mxu0 0.0
    %1037 = vmatpush2.msra.mxu0 0.0
    %1038 = vmatprep.subr.mxu0 0.0
    %1039 = vmatpush2.msra.mxu0 0.0
    %1040 = vmatprep.subr.mxu0 0.0
    %1041 = vmatpush2.msra.mxu0 0.0
    %1042 = vmatprep.subr.mxu0 0.0
    %1043 = vmatpush2.msra.mxu0 0.0
    %1044 = vmatprep.subr.mxu0 0.0
    %1045 = vmatpush2.msra.mxu0 0.0
    %1046 = vmatprep.subr.mxu0 0.0
    %1047 = vmatpush2.msra.mxu0 0.0
    %1048 = vmatprep.subr.mxu0 0.0
    %1049 = vmatpush2.msra.mxu0 0.0
    %1050 = vmatprep.subr.mxu0 0.0
    %1051 = vmatpush2.msra.mxu0 0.0
    %1052 = vmatprep.subr.mxu0 0.0
    %1053 = vmatpush2.msra.mxu0 0.0
    %1054 = vmatprep.mubr.f32.mxu0 0.0
    %v1055 = vand.u32 %v38, 4294901760
    %1056 = vmatmul.mubr.f32.gmra.mxu0 %v1055
    %v1057 = vpop.f32.mrf.mxu0
    %v1058 = vadd.f32 %v890, %v1057
    %v1059 = vpop.f32.mrf.mxu0
    %v1060 = vadd.f32 %v892, %v1059
    %1061 = vdwg.mxu0
    %v1062 = vand.u32 %v295, 4294901760
    %1063 = vmatprep.subr.mxu0 %v1062
    %v1064 = vand.u32 %v294, 4294901760
    %1065 = vmatpush1.msra.mxu0 %v1064
    %v1066 = vand.u32 %v278, 4294901760
    %1067 = vmatprep.subr.mxu0 %v1066
    %v1068 = vand.u32 %v277, 4294901760
    %1069 = vmatpush1.msra.mxu0 %v1068
    %v1070 = vand.u32 %v261, 4294901760
    %1071 = vmatprep.subr.mxu0 %v1070
    %v1072 = vand.u32 %v260, 4294901760
    %1073 = vmatpush1.msra.mxu0 %v1072
    %v1074 = vand.u32 %v244, 4294901760
    %1075 = vmatprep.subr.mxu0 %v1074
    %v1076 = vand.u32 %v243, 4294901760
    %1077 = vmatpush1.msra.mxu0 %v1076
    %v1078 = vand.u32 %v227, 4294901760
    %1079 = vmatprep.subr.mxu0 %v1078
    %v1080 = vand.u32 %v226, 4294901760
    %1081 = vmatpush1.msra.mxu0 %v1080
    %v1082 = vand.u32 %v210, 4294901760
    %1083 = vmatprep.subr.mxu0 %v1082
    %v1084 = vand.u32 %v209, 4294901760
    %1085 = vmatpush1.msra.mxu0 %v1084
    %v1086 = vand.u32 %v193, 4294901760
    %1087 = vmatprep.subr.mxu0 %v1086
    %v1088 = vand.u32 %v192, 4294901760
    %1089 = vmatpush1.msra.mxu0 %v1088
    %v1090 = vand.u32 %v176, 4294901760
    %1091 = vmatprep.subr.mxu0 %v1090
    %v1092 = vand.u32 %v175, 4294901760
    %1093 = vmatpush1.msra.mxu0 %v1092
    %v1094 = vand.u32 %v159, 4294901760
    %1095 = vmatprep.subr.mxu0 %v1094
    %v1096 = vand.u32 %v158, 4294901760
    %1097 = vmatpush1.msra.mxu0 %v1096
    %v1098 = vand.u32 %v142, 4294901760
    %1099 = vmatprep.subr.mxu0 %v1098
    %v1100 = vand.u32 %v141, 4294901760
    %1101 = vmatpush1.msra.mxu0 %v1100
    %v1102 = vand.u32 %v125, 4294901760
    %1103 = vmatprep.subr.mxu0 %v1102
    %v1104 = vand.u32 %v124, 4294901760
    %1105 = vmatpush1.msra.mxu0 %v1104
    %v1106 = vand.u32 %v108, 4294901760
    %1107 = vmatprep.subr.mxu0 %v1106
    %v1108 = vand.u32 %v107, 4294901760
    %1109 = vmatpush1.msra.mxu0 %v1108
    %v1110 = vand.u32 %v91, 4294901760
    %1111 = vmatprep.subr.mxu0 %v1110
    %v1112 = vand.u32 %v90, 4294901760
    %1113 = vmatpush1.msra.mxu0 %v1112
    %v1114 = vand.u32 %v74, 4294901760
    %1115 = vmatprep.subr.mxu0 %v1114
    %v1116 = vand.u32 %v73, 4294901760
    %1117 = vmatpush1.msra.mxu0 %v1116
    %v1118 = vand.u32 %v57, 4294901760
    %1119 = vmatprep.subr.mxu0 %v1118
    %v1120 = vand.u32 %v56, 4294901760
    %1121 = vmatpush1.msra.mxu0 %v1120
    %v1122 = vand.u32 %v40, 4294901760
    %1123 = vmatprep.subr.mxu0 %v1122
    %v1124 = vand.u32 %v39, 4294901760
    %1125 = vmatpush1.msra.mxu0 %v1124
    %1126 = vmatprep.subr.mxu0 0.0
    %1127 = vmatpush2.msra.mxu0 0.0
    %1128 = vmatprep.subr.mxu0 0.0
    %1129 = vmatpush2.msra.mxu0 0.0
    %1130 = vmatprep.subr.mxu0 0.0
    %1131 = vmatpush2.msra.mxu0 0.0
    %1132 = vmatprep.subr.mxu0 0.0
    %1133 = vmatpush2.msra.mxu0 0.0
    %1134 = vmatprep.subr.mxu0 0.0
    %1135 = vmatpush2.msra.mxu0 0.0
    %1136 = vmatprep.subr.mxu0 0.0
    %1137 = vmatpush2.msra.mxu0 0.0
    %1138 = vmatprep.subr.mxu0 0.0
    %1139 = vmatpush2.msra.mxu0 0.0
    %1140 = vmatprep.subr.mxu0 0.0
    %1141 = vmatpush2.msra.mxu0 0.0
    %1142 = vmatprep.subr.mxu0 0.0
    %1143 = vmatpush2.msra.mxu0 0.0
    %1144 = vmatprep.subr.mxu0 0.0
    %1145 = vmatpush2.msra.mxu0 0.0
    %1146 = vmatprep.subr.mxu0 0.0
    %1147 = vmatpush2.msra.mxu0 0.0
    %1148 = vmatprep.subr.mxu0 0.0
    %1149 = vmatpush2.msra.mxu0 0.0
    %1150 = vmatprep.subr.mxu0 0.0
    %1151 = vmatpush2.msra.mxu0 0.0
    %1152 = vmatprep.subr.mxu0 0.0
    %1153 = vmatpush2.msra.mxu0 0.0
    %1154 = vmatprep.subr.mxu0 0.0
    %1155 = vmatpush2.msra.mxu0 0.0
    %1156 = vmatprep.subr.mxu0 0.0
    %1157 = vmatpush2.msra.mxu0 0.0
    %1158 = vmatprep.mubr.f32.mxu0 0.0
    %v1159 = vand.u32 %v38, 4294901760
    %1160 = vmatmul.mubr.f32.gmra.mxu0 %v1159
    %v1161 = vpop.f32.mrf.mxu0
    %v1162 = vadd.f32 %v1058, %v1161
    %v1163 = vpop.f32.mrf.mxu0
    %v1164 = vadd.f32 %v1060, %v1163
    %1165 = vdwg.mxu0
    %v1166 = vand.u32 %v297, 4294901760
    %1167 = vmatprep.subr.mxu0 %v1166
    %v1168 = vand.u32 %v296, 4294901760
    %1169 = vmatpush1.msra.mxu0 %v1168
    %v1170 = vand.u32 %v280, 4294901760
    %1171 = vmatprep.subr.mxu0 %v1170
    %v1172 = vand.u32 %v279, 4294901760
    %1173 = vmatpush1.msra.mxu0 %v1172
    %v1174 = vand.u32 %v263, 4294901760
    %1175 = vmatprep.subr.mxu0 %v1174
    %v1176 = vand.u32 %v262, 4294901760
    %1177 = vmatpush1.msra.mxu0 %v1176
    %v1178 = vand.u32 %v246, 4294901760
    %1179 = vmatprep.subr.mxu0 %v1178
    %v1180 = vand.u32 %v245, 4294901760
    %1181 = vmatpush1.msra.mxu0 %v1180
    %v1182 = vand.u32 %v229, 4294901760
    %1183 = vmatprep.subr.mxu0 %v1182
    %v1184 = vand.u32 %v228, 4294901760
    %1185 = vmatpush1.msra.mxu0 %v1184
    %v1186 = vand.u32 %v212, 4294901760
    %1187 = vmatprep.subr.mxu0 %v1186
    %v1188 = vand.u32 %v211, 4294901760
    %1189 = vmatpush1.msra.mxu0 %v1188
    %v1190 = vand.u32 %v195, 4294901760
    %1191 = vmatprep.subr.mxu0 %v1190
    %v1192 = vand.u32 %v194, 4294901760
    %1193 = vmatpush1.msra.mxu0 %v1192
    %v1194 = vand.u32 %v178, 4294901760
    %1195 = vmatprep.subr.mxu0 %v1194
    %v1196 = vand.u32 %v177, 4294901760
    %1197 = vmatpush1.msra.mxu0 %v1196
    %v1198 = vand.u32 %v161, 4294901760
    %1199 = vmatprep.subr.mxu0 %v1198
    %v1200 = vand.u32 %v160, 4294901760
    %1201 = vmatpush1.msra.mxu0 %v1200
    %v1202 = vand.u32 %v144, 4294901760
    %1203 = vmatprep.subr.mxu0 %v1202
    %v1204 = vand.u32 %v143, 4294901760
    %1205 = vmatpush1.msra.mxu0 %v1204
    %v1206 = vand.u32 %v127, 4294901760
    %1207 = vmatprep.subr.mxu0 %v1206
    %v1208 = vand.u32 %v126, 4294901760
    %1209 = vmatpush1.msra.mxu0 %v1208
    %v1210 = vand.u32 %v110, 4294901760
    %1211 = vmatprep.subr.mxu0 %v1210
    %v1212 = vand.u32 %v109, 4294901760
    %1213 = vmatpush1.msra.mxu0 %v1212
    %v1214 = vand.u32 %v93, 4294901760
    %1215 = vmatprep.subr.mxu0 %v1214
    %v1216 = vand.u32 %v92, 4294901760
    %1217 = vmatpush1.msra.mxu0 %v1216
    %v1218 = vand.u32 %v76, 4294901760
    %1219 = vmatprep.subr.mxu0 %v1218
    %v1220 = vand.u32 %v75, 4294901760
    %1221 = vmatpush1.msra.mxu0 %v1220
    %v1222 = vand.u32 %v59, 4294901760
    %1223 = vmatprep.subr.mxu0 %v1222
    %v1224 = vand.u32 %v58, 4294901760
    %1225 = vmatpush1.msra.mxu0 %v1224
    %v1226 = vand.u32 %v42, 4294901760
    %1227 = vmatprep.subr.mxu0 %v1226
    %v1228 = vand.u32 %v41, 4294901760
    %1229 = vmatpush1.msra.mxu0 %v1228
    %1230 = vmatprep.subr.mxu0 0.0
    %1231 = vmatpush2.msra.mxu0 0.0
    %1232 = vmatprep.subr.mxu0 0.0
    %1233 = vmatpush2.msra.mxu0 0.0
    %1234 = vmatprep.subr.mxu0 0.0
    %1235 = vmatpush2.msra.mxu0 0.0
    %1236 = vmatprep.subr.mxu0 0.0
    %1237 = vmatpush2.msra.mxu0 0.0
    %1238 = vmatprep.subr.mxu0 0.0
    %1239 = vmatpush2.msra.mxu0 0.0
    %1240 = vmatprep.subr.mxu0 0.0
    %1241 = vmatpush2.msra.mxu0 0.0
    %1242 = vmatprep.subr.mxu0 0.0
    %1243 = vmatpush2.msra.mxu0 0.0
    %1244 = vmatprep.subr.mxu0 0.0
    %1245 = vmatpush2.msra.mxu0 0.0
    %1246 = vmatprep.subr.mxu0 0.0
    %1247 = vmatpush2.msra.mxu0 0.0
    %1248 = vmatprep.subr.mxu0 0.0
    %1249 = vmatpush2.msra.mxu0 0.0
    %1250 = vmatprep.subr.mxu0 0.0
    %1251 = vmatpush2.msra.mxu0 0.0
    %1252 = vmatprep.subr.mxu0 0.0
    %1253 = vmatpush2.msra.mxu0 0.0
    %1254 = vmatprep.subr.mxu0 0.0
    %1255 = vmatpush2.msra.mxu0 0.0
    %1256 = vmatprep.subr.mxu0 0.0
    %1257 = vmatpush2.msra.mxu0 0.0
    %1258 = vmatprep.subr.mxu0 0.0
    %1259 = vmatpush2.msra.mxu0 0.0
    %1260 = vmatprep.subr.mxu0 0.0
    %1261 = vmatpush2.msra.mxu0 0.0
    %1262 = vmatprep.mubr.f32.mxu0 0.0
    %v1263 = vand.u32 %v38, 4294901760
    %v1264 = vsub.f32 %v38, %v1263
    %v1265 = vand.u32 %v1264, 4294901760
    %v1266 = vsub.f32 %v1264, %v1265
    %v1267 = vand.u32 %v1266, 4294901760
    %1268 = vmatmul.mubr.f32.gmra.mxu0 %v1267
    %v1269 = vpop.f32.mrf.mxu0
    %v1270 = vadd.f32 0.0, %v1269
    %v1271 = vpop.f32.mrf.mxu0
    %v1272 = vadd.f32 0.0, %v1271
    %1273 = vdwg.mxu0
    %v1274 = vand.u32 %v297, 4294901760
    %v1275 = vsub.f32 %v297, %v1274
    %v1276 = vand.u32 %v1275, 4294901760
    %v1277 = vsub.f32 %v1275, %v1276
    %v1278 = vand.u32 %v1277, 4294901760
    %1279 = vmatprep.subr.mxu0 %v1278
    %v1280 = vand.u32 %v296, 4294901760
    %v1281 = vsub.f32 %v296, %v1280
    %v1282 = vand.u32 %v1281, 4294901760
    %v1283 = vsub.f32 %v1281, %v1282
    %v1284 = vand.u32 %v1283, 4294901760
    %1285 = vmatpush1.msra.mxu0 %v1284
    %v1286 = vand.u32 %v280, 4294901760
    %v1287 = vsub.f32 %v280, %v1286
    %v1288 = vand.u32 %v1287, 4294901760
    %v1289 = vsub.f32 %v1287, %v1288
    %v1290 = vand.u32 %v1289, 4294901760
    %1291 = vmatprep.subr.mxu0 %v1290
    %v1292 = vand.u32 %v279, 4294901760
    %v1293 = vsub.f32 %v279, %v1292
    %v1294 = vand.u32 %v1293, 4294901760
    %v1295 = vsub.f32 %v1293, %v1294
    %v1296 = vand.u32 %v1295, 4294901760
    %1297 = vmatpush1.msra.mxu0 %v1296
    %v1298 = vand.u32 %v263, 4294901760
    %v1299 = vsub.f32 %v263, %v1298
    %v1300 = vand.u32 %v1299, 4294901760
    %v1301 = vsub.f32 %v1299, %v1300
    %v1302 = vand.u32 %v1301, 4294901760
    %1303 = vmatprep.subr.mxu0 %v1302
    %v1304 = vand.u32 %v262, 4294901760
    %v1305 = vsub.f32 %v262, %v1304
    %v1306 = vand.u32 %v1305, 4294901760
    %v1307 = vsub.f32 %v1305, %v1306
    %v1308 = vand.u32 %v1307, 4294901760
    %1309 = vmatpush1.msra.mxu0 %v1308
    %v1310 = vand.u32 %v246, 4294901760
    %v1311 = vsub.f32 %v246, %v1310
    %v1312 = vand.u32 %v1311, 4294901760
    %v1313 = vsub.f32 %v1311, %v1312
    %v1314 = vand.u32 %v1313, 4294901760
    %1315 = vmatprep.subr.mxu0 %v1314
    %v1316 = vand.u32 %v245, 4294901760
    %v1317 = vsub.f32 %v245, %v1316
    %v1318 = vand.u32 %v1317, 4294901760
    %v1319 = vsub.f32 %v1317, %v1318
    %v1320 = vand.u32 %v1319, 4294901760
    %1321 = vmatpush1.msra.mxu0 %v1320
    %v1322 = vand.u32 %v229, 4294901760
    %v1323 = vsub.f32 %v229, %v1322
    %v1324 = vand.u32 %v1323, 4294901760
    %v1325 = vsub.f32 %v1323, %v1324
    %v1326 = vand.u32 %v1325, 4294901760
    %1327 = vmatprep.subr.mxu0 %v1326
    %v1328 = vand.u32 %v228, 4294901760
    %v1329 = vsub.f32 %v228, %v1328
    %v1330 = vand.u32 %v1329, 4294901760
    %v1331 = vsub.f32 %v1329, %v1330
    %v1332 = vand.u32 %v1331, 4294901760
    %1333 = vmatpush1.msra.mxu0 %v1332
    %v1334 = vand.u32 %v212, 4294901760
    %v1335 = vsub.f32 %v212, %v1334
    %v1336 = vand.u32 %v1335, 4294901760
    %v1337 = vsub.f32 %v1335, %v1336
    %v1338 = vand.u32 %v1337, 4294901760
    %1339 = vmatprep.subr.mxu0 %v1338
    %v1340 = vand.u32 %v211, 4294901760
    %v1341 = vsub.f32 %v211, %v1340
    %v1342 = vand.u32 %v1341, 4294901760
    %v1343 = vsub.f32 %v1341, %v1342
    %v1344 = vand.u32 %v1343, 4294901760
    %1345 = vmatpush1.msra.mxu0 %v1344
    %v1346 = vand.u32 %v195, 4294901760
    %v1347 = vsub.f32 %v195, %v1346
    %v1348 = vand.u32 %v1347, 4294901760
    %v1349 = vsub.f32 %v1347, %v1348
    %v1350 = vand.u32 %v1349, 4294901760
    %1351 = vmatprep.subr.mxu0 %v1350
    %v1352 = vand.u32 %v194, 4294901760
    %v1353 = vsub.f32 %v194, %v1352
    %v1354 = vand.u32 %v1353, 4294901760
    %v1355 = vsub.f32 %v1353, %v1354
    %v1356 = vand.u32 %v1355, 4294901760
    %1357 = vmatpush1.msra.mxu0 %v1356
    %v1358 = vand.u32 %v178, 4294901760
    %v1359 = vsub.f32 %v178, %v1358
    %v1360 = vand.u32 %v1359, 4294901760
    %v1361 = vsub.f32 %v1359, %v1360
    %v1362 = vand.u32 %v1361, 4294901760
    %1363 = vmatprep.subr.mxu0 %v1362
    %v1364 = vand.u32 %v177, 4294901760
    %v1365 = vsub.f32 %v177, %v1364
    %v1366 = vand.u32 %v1365, 4294901760
    %v1367 = vsub.f32 %v1365, %v1366
    %v1368 = vand.u32 %v1367, 4294901760
    %1369 = vmatpush1.msra.mxu0 %v1368
    %v1370 = vand.u32 %v161, 4294901760
    %v1371 = vsub.f32 %v161, %v1370
    %v1372 = vand.u32 %v1371, 4294901760
    %v1373 = vsub.f32 %v1371, %v1372
    %v1374 = vand.u32 %v1373, 4294901760
    %1375 = vmatprep.subr.mxu0 %v1374
    %v1376 = vand.u32 %v160, 4294901760
    %v1377 = vsub.f32 %v160, %v1376
    %v1378 = vand.u32 %v1377, 4294901760
    %v1379 = vsub.f32 %v1377, %v1378
    %v1380 = vand.u32 %v1379, 4294901760
    %1381 = vmatpush1.msra.mxu0 %v1380
    %v1382 = vand.u32 %v144, 4294901760
    %v1383 = vsub.f32 %v144, %v1382
    %v1384 = vand.u32 %v1383, 4294901760
    %v1385 = vsub.f32 %v1383, %v1384
    %v1386 = vand.u32 %v1385, 4294901760
    %1387 = vmatprep.subr.mxu0 %v1386
    %v1388 = vand.u32 %v143, 4294901760
    %v1389 = vsub.f32 %v143, %v1388
    %v1390 = vand.u32 %v1389, 4294901760
    %v1391 = vsub.f32 %v1389, %v1390
    %v1392 = vand.u32 %v1391, 4294901760
    %1393 = vmatpush1.msra.mxu0 %v1392
    %v1394 = vand.u32 %v127, 4294901760
    %v1395 = vsub.f32 %v127, %v1394
    %v1396 = vand.u32 %v1395, 4294901760
    %v1397 = vsub.f32 %v1395, %v1396
    %v1398 = vand.u32 %v1397, 4294901760
    %1399 = vmatprep.subr.mxu0 %v1398
    %v1400 = vand.u32 %v126, 4294901760
    %v1401 = vsub.f32 %v126, %v1400
    %v1402 = vand.u32 %v1401, 4294901760
    %v1403 = vsub.f32 %v1401, %v1402
    %v1404 = vand.u32 %v1403, 4294901760
    %1405 = vmatpush1.msra.mxu0 %v1404
    %v1406 = vand.u32 %v110, 4294901760
    %v1407 = vsub.f32 %v110, %v1406
    %v1408 = vand.u32 %v1407, 4294901760
    %v1409 = vsub.f32 %v1407, %v1408
    %v1410 = vand.u32 %v1409, 4294901760
    %1411 = vmatprep.subr.mxu0 %v1410
    %v1412 = vand.u32 %v109, 4294901760
    %v1413 = vsub.f32 %v109, %v1412
    %v1414 = vand.u32 %v1413, 4294901760
    %v1415 = vsub.f32 %v1413, %v1414
    %v1416 = vand.u32 %v1415, 4294901760
    %1417 = vmatpush1.msra.mxu0 %v1416
    %v1418 = vand.u32 %v93, 4294901760
    %v1419 = vsub.f32 %v93, %v1418
    %v1420 = vand.u32 %v1419, 4294901760
    %v1421 = vsub.f32 %v1419, %v1420
    %v1422 = vand.u32 %v1421, 4294901760
    %1423 = vmatprep.subr.mxu0 %v1422
    %v1424 = vand.u32 %v92, 4294901760
    %v1425 = vsub.f32 %v92, %v1424
    %v1426 = vand.u32 %v1425, 4294901760
    %v1427 = vsub.f32 %v1425, %v1426
    %v1428 = vand.u32 %v1427, 4294901760
    %1429 = vmatpush1.msra.mxu0 %v1428
    %v1430 = vand.u32 %v76, 4294901760
    %v1431 = vsub.f32 %v76, %v1430
    %v1432 = vand.u32 %v1431, 4294901760
    %v1433 = vsub.f32 %v1431, %v1432
    %v1434 = vand.u32 %v1433, 4294901760
    %1435 = vmatprep.subr.mxu0 %v1434
    %v1436 = vand.u32 %v75, 4294901760
    %v1437 = vsub.f32 %v75, %v1436
    %v1438 = vand.u32 %v1437, 4294901760
    %v1439 = vsub.f32 %v1437, %v1438
    %v1440 = vand.u32 %v1439, 4294901760
    %1441 = vmatpush1.msra.mxu0 %v1440
    %v1442 = vand.u32 %v59, 4294901760
    %v1443 = vsub.f32 %v59, %v1442
    %v1444 = vand.u32 %v1443, 4294901760
    %v1445 = vsub.f32 %v1443, %v1444
    %v1446 = vand.u32 %v1445, 4294901760
    %1447 = vmatprep.subr.mxu0 %v1446
    %v1448 = vand.u32 %v58, 4294901760
    %v1449 = vsub.f32 %v58, %v1448
    %v1450 = vand.u32 %v1449, 4294901760
    %v1451 = vsub.f32 %v1449, %v1450
    %v1452 = vand.u32 %v1451, 4294901760
    %1453 = vmatpush1.msra.mxu0 %v1452
    %v1454 = vand.u32 %v42, 4294901760
    %v1455 = vsub.f32 %v42, %v1454
    %v1456 = vand.u32 %v1455, 4294901760
    %v1457 = vsub.f32 %v1455, %v1456
    %v1458 = vand.u32 %v1457, 4294901760
    %1459 = vmatprep.subr.mxu0 %v1458
    %v1460 = vand.u32 %v41, 4294901760
    %v1461 = vsub.f32 %v41, %v1460
    %v1462 = vand.u32 %v1461, 4294901760
    %v1463 = vsub.f32 %v1461, %v1462
    %v1464 = vand.u32 %v1463, 4294901760
    %1465 = vmatpush1.msra.mxu0 %v1464
    %1466 = vmatprep.subr.mxu0 0.0
    %1467 = vmatpush2.msra.mxu0 0.0
    %1468 = vmatprep.subr.mxu0 0.0
    %1469 = vmatpush2.msra.mxu0 0.0
    %1470 = vmatprep.subr.mxu0 0.0
    %1471 = vmatpush2.msra.mxu0 0.0
    %1472 = vmatprep.subr.mxu0 0.0
    %1473 = vmatpush2.msra.mxu0 0.0
    %1474 = vmatprep.subr.mxu0 0.0
    %1475 = vmatpush2.msra.mxu0 0.0
    %1476 = vmatprep.subr.mxu0 0.0
    %1477 = vmatpush2.msra.mxu0 0.0
    %1478 = vmatprep.subr.mxu0 0.0
    %1479 = vmatpush2.msra.mxu0 0.0
    %1480 = vmatprep.subr.mxu0 0.0
    %1481 = vmatpush2.msra.mxu0 0.0
    %1482 = vmatprep.subr.mxu0 0.0
    %1483 = vmatpush2.msra.mxu0 0.0
    %1484 = vmatprep.subr.mxu0 0.0
    %1485 = vmatpush2.msra.mxu0 0.0
    %1486 = vmatprep.subr.mxu0 0.0
    %1487 = vmatpush2.msra.mxu0 0.0
    %1488 = vmatprep.subr.mxu0 0.0
    %1489 = vmatpush2.msra.mxu0 0.0
    %1490 = vmatprep.subr.mxu0 0.0
    %1491 = vmatpush2.msra.mxu0 0.0
    %1492 = vmatprep.subr.mxu0 0.0
    %1493 = vmatpush2.msra.mxu0 0.0
    %1494 = vmatprep.subr.mxu0 0.0
    %1495 = vmatpush2.msra.mxu0 0.0
    %1496 = vmatprep.subr.mxu0 0.0
    %1497 = vmatpush2.msra.mxu0 0.0
    %1498 = vmatprep.mubr.f32.mxu0 0.0
    %v1499 = vand.u32 %v38, 4294901760
    %1500 = vmatmul.mubr.f32.gmra.mxu0 %v1499
    %v1501 = vpop.f32.mrf.mxu0
    %v1502 = vadd.f32 %v1270, %v1501
    %v1503 = vpop.f32.mrf.mxu0
    %v1504 = vadd.f32 %v1272, %v1503
    %1505 = vdwg.mxu0
    %v1506 = vand.u32 %v297, 4294901760
    %v1507 = vsub.f32 %v297, %v1506
    %1508 = vmatprep.subr.mxu0 %v1507
    %v1509 = vand.u32 %v296, 4294901760
    %v1510 = vsub.f32 %v296, %v1509
    %1511 = vmatpush1.msra.mxu0 %v1510
    %v1512 = vand.u32 %v280, 4294901760
    %v1513 = vsub.f32 %v280, %v1512
    %1514 = vmatprep.subr.mxu0 %v1513
    %v1515 = vand.u32 %v279, 4294901760
    %v1516 = vsub.f32 %v279, %v1515
    %1517 = vmatpush1.msra.mxu0 %v1516
    %v1518 = vand.u32 %v263, 4294901760
    %v1519 = vsub.f32 %v263, %v1518
    %1520 = vmatprep.subr.mxu0 %v1519
    %v1521 = vand.u32 %v262, 4294901760
    %v1522 = vsub.f32 %v262, %v1521
    %1523 = vmatpush1.msra.mxu0 %v1522
    %v1524 = vand.u32 %v246, 4294901760
    %v1525 = vsub.f32 %v246, %v1524
    %1526 = vmatprep.subr.mxu0 %v1525
    %v1527 = vand.u32 %v245, 4294901760
    %v1528 = vsub.f32 %v245, %v1527
    %1529 = vmatpush1.msra.mxu0 %v1528
    %v1530 = vand.u32 %v229, 4294901760
    %v1531 = vsub.f32 %v229, %v1530
    %1532 = vmatprep.subr.mxu0 %v1531
    %v1533 = vand.u32 %v228, 4294901760
    %v1534 = vsub.f32 %v228, %v1533
    %1535 = vmatpush1.msra.mxu0 %v1534
    %v1536 = vand.u32 %v212, 4294901760
    %v1537 = vsub.f32 %v212, %v1536
    %1538 = vmatprep.subr.mxu0 %v1537
    %v1539 = vand.u32 %v211, 4294901760
    %v1540 = vsub.f32 %v211, %v1539
    %1541 = vmatpush1.msra.mxu0 %v1540
    %v1542 = vand.u32 %v195, 4294901760
    %v1543 = vsub.f32 %v195, %v1542
    %1544 = vmatprep.subr.mxu0 %v1543
    %v1545 = vand.u32 %v194, 4294901760
    %v1546 = vsub.f32 %v194, %v1545
    %1547 = vmatpush1.msra.mxu0 %v1546
    %v1548 = vand.u32 %v178, 4294901760
    %v1549 = vsub.f32 %v178, %v1548
    %1550 = vmatprep.subr.mxu0 %v1549
    %v1551 = vand.u32 %v177, 4294901760
    %v1552 = vsub.f32 %v177, %v1551
    %1553 = vmatpush1.msra.mxu0 %v1552
    %v1554 = vand.u32 %v161, 4294901760
    %v1555 = vsub.f32 %v161, %v1554
    %1556 = vmatprep.subr.mxu0 %v1555
    %v1557 = vand.u32 %v160, 4294901760
    %v1558 = vsub.f32 %v160, %v1557
    %1559 = vmatpush1.msra.mxu0 %v1558
    %v1560 = vand.u32 %v144, 4294901760
    %v1561 = vsub.f32 %v144, %v1560
    %1562 = vmatprep.subr.mxu0 %v1561
    %v1563 = vand.u32 %v143, 4294901760
    %v1564 = vsub.f32 %v143, %v1563
    %1565 = vmatpush1.msra.mxu0 %v1564
    %v1566 = vand.u32 %v127, 4294901760
    %v1567 = vsub.f32 %v127, %v1566
    %1568 = vmatprep.subr.mxu0 %v1567
    %v1569 = vand.u32 %v126, 4294901760
    %v1570 = vsub.f32 %v126, %v1569
    %1571 = vmatpush1.msra.mxu0 %v1570
    %v1572 = vand.u32 %v110, 4294901760
    %v1573 = vsub.f32 %v110, %v1572
    %1574 = vmatprep.subr.mxu0 %v1573
    %v1575 = vand.u32 %v109, 4294901760
    %v1576 = vsub.f32 %v109, %v1575
    %1577 = vmatpush1.msra.mxu0 %v1576
    %v1578 = vand.u32 %v93, 4294901760
    %v1579 = vsub.f32 %v93, %v1578
    %1580 = vmatprep.subr.mxu0 %v1579
    %v1581 = vand.u32 %v92, 4294901760
    %v1582 = vsub.f32 %v92, %v1581
    %1583 = vmatpush1.msra.mxu0 %v1582
    %v1584 = vand.u32 %v76, 4294901760
    %v1585 = vsub.f32 %v76, %v1584
    %1586 = vmatprep.subr.mxu0 %v1585
    %v1587 = vand.u32 %v75, 4294901760
    %v1588 = vsub.f32 %v75, %v1587
    %1589 = vmatpush1.msra.mxu0 %v1588
    %v1590 = vand.u32 %v59, 4294901760
    %v1591 = vsub.f32 %v59, %v1590
    %1592 = vmatprep.subr.mxu0 %v1591
    %v1593 = vand.u32 %v58, 4294901760
    %v1594 = vsub.f32 %v58, %v1593
    %1595 = vmatpush1.msra.mxu0 %v1594
    %v1596 = vand.u32 %v42, 4294901760
    %v1597 = vsub.f32 %v42, %v1596
    %1598 = vmatprep.subr.mxu0 %v1597
    %v1599 = vand.u32 %v41, 4294901760
    %v1600 = vsub.f32 %v41, %v1599
    %1601 = vmatpush1.msra.mxu0 %v1600
    %1602 = vmatprep.subr.mxu0 0.0
    %1603 = vmatpush2.msra.mxu0 0.0
    %1604 = vmatprep.subr.mxu0 0.0
    %1605 = vmatpush2.msra.mxu0 0.0
    %1606 = vmatprep.subr.mxu0 0.0
    %1607 = vmatpush2.msra.mxu0 0.0
    %1608 = vmatprep.subr.mxu0 0.0
    %1609 = vmatpush2.msra.mxu0 0.0
    %1610 = vmatprep.subr.mxu0 0.0
    %1611 = vmatpush2.msra.mxu0 0.0
    %1612 = vmatprep.subr.mxu0 0.0
    %1613 = vmatpush2.msra.mxu0 0.0
    %1614 = vmatprep.subr.mxu0 0.0
    %1615 = vmatpush2.msra.mxu0 0.0
    %1616 = vmatprep.subr.mxu0 0.0
    %1617 = vmatpush2.msra.mxu0 0.0
    %1618 = vmatprep.subr.mxu0 0.0
    %1619 = vmatpush2.msra.mxu0 0.0
    %1620 = vmatprep.subr.mxu0 0.0
    %1621 = vmatpush2.msra.mxu0 0.0
    %1622 = vmatprep.subr.mxu0 0.0
    %1623 = vmatpush2.msra.mxu0 0.0
    %1624 = vmatprep.subr.mxu0 0.0
    %1625 = vmatpush2.msra.mxu0 0.0
    %1626 = vmatprep.subr.mxu0 0.0
    %1627 = vmatpush2.msra.mxu0 0.0
    %1628 = vmatprep.subr.mxu0 0.0
    %1629 = vmatpush2.msra.mxu0 0.0
    %1630 = vmatprep.subr.mxu0 0.0
    %1631 = vmatpush2.msra.mxu0 0.0
    %1632 = vmatprep.subr.mxu0 0.0
    %1633 = vmatpush2.msra.mxu0 0.0
    %1634 = vmatprep.mubr.f32.mxu0 0.0
    %v1635 = vand.u32 %v38, 4294901760
    %v1636 = vsub.f32 %v38, %v1635
    %1637 = vmatmul.mubr.f32.gmra.mxu0 %v1636
    %v1638 = vpop.f32.mrf.mxu0
    %v1639 = vadd.f32 %v1502, %v1638
    %v1640 = vpop.f32.mrf.mxu0
    %v1641 = vadd.f32 %v1504, %v1640
    %1642 = vdwg.mxu0
    %v1643 = vand.u32 %v297, 4294901760
    %1644 = vmatprep.subr.mxu0 %v1643
    %v1645 = vand.u32 %v296, 4294901760
    %1646 = vmatpush1.msra.mxu0 %v1645
    %v1647 = vand.u32 %v280, 4294901760
    %1648 = vmatprep.subr.mxu0 %v1647
    %v1649 = vand.u32 %v279, 4294901760
    %1650 = vmatpush1.msra.mxu0 %v1649
    %v1651 = vand.u32 %v263, 4294901760
    %1652 = vmatprep.subr.mxu0 %v1651
    %v1653 = vand.u32 %v262, 4294901760
    %1654 = vmatpush1.msra.mxu0 %v1653
    %v1655 = vand.u32 %v246, 4294901760
    %1656 = vmatprep.subr.mxu0 %v1655
    %v1657 = vand.u32 %v245, 4294901760
    %1658 = vmatpush1.msra.mxu0 %v1657
    %v1659 = vand.u32 %v229, 4294901760
    %1660 = vmatprep.subr.mxu0 %v1659
    %v1661 = vand.u32 %v228, 4294901760
    %1662 = vmatpush1.msra.mxu0 %v1661
    %v1663 = vand.u32 %v212, 4294901760
    %1664 = vmatprep.subr.mxu0 %v1663
    %v1665 = vand.u32 %v211, 4294901760
    %1666 = vmatpush1.msra.mxu0 %v1665
    %v1667 = vand.u32 %v195, 4294901760
    %1668 = vmatprep.subr.mxu0 %v1667
    %v1669 = vand.u32 %v194, 4294901760
    %1670 = vmatpush1.msra.mxu0 %v1669
    %v1671 = vand.u32 %v178, 4294901760
    %1672 = vmatprep.subr.mxu0 %v1671
    %v1673 = vand.u32 %v177, 4294901760
    %1674 = vmatpush1.msra.mxu0 %v1673
    %v1675 = vand.u32 %v161, 4294901760
    %1676 = vmatprep.subr.mxu0 %v1675
    %v1677 = vand.u32 %v160, 4294901760
    %1678 = vmatpush1.msra.mxu0 %v1677
    %v1679 = vand.u32 %v144, 4294901760
    %1680 = vmatprep.subr.mxu0 %v1679
    %v1681 = vand.u32 %v143, 4294901760
    %1682 = vmatpush1.msra.mxu0 %v1681
    %v1683 = vand.u32 %v127, 4294901760
    %1684 = vmatprep.subr.mxu0 %v1683
    %v1685 = vand.u32 %v126, 4294901760
    %1686 = vmatpush1.msra.mxu0 %v1685
    %v1687 = vand.u32 %v110, 4294901760
    %1688 = vmatprep.subr.mxu0 %v1687
    %v1689 = vand.u32 %v109, 4294901760
    %1690 = vmatpush1.msra.mxu0 %v1689
    %v1691 = vand.u32 %v93, 4294901760
    %1692 = vmatprep.subr.mxu0 %v1691
    %v1693 = vand.u32 %v92, 4294901760
    %1694 = vmatpush1.msra.mxu0 %v1693
    %v1695 = vand.u32 %v76, 4294901760
    %1696 = vmatprep.subr.mxu0 %v1695
    %v1697 = vand.u32 %v75, 4294901760
    %1698 = vmatpush1.msra.mxu0 %v1697
    %v1699 = vand.u32 %v59, 4294901760
    %1700 = vmatprep.subr.mxu0 %v1699
    %v1701 = vand.u32 %v58, 4294901760
    %1702 = vmatpush1.msra.mxu0 %v1701
    %v1703 = vand.u32 %v42, 4294901760
    %1704 = vmatprep.subr.mxu0 %v1703
    %v1705 = vand.u32 %v41, 4294901760
    %1706 = vmatpush1.msra.mxu0 %v1705
    %1707 = vmatprep.subr.mxu0 0.0
    %1708 = vmatpush2.msra.mxu0 0.0
    %1709 = vmatprep.subr.mxu0 0.0
    %1710 = vmatpush2.msra.mxu0 0.0
    %1711 = vmatprep.subr.mxu0 0.0
    %1712 = vmatpush2.msra.mxu0 0.0
    %1713 = vmatprep.subr.mxu0 0.0
    %1714 = vmatpush2.msra.mxu0 0.0
    %1715 = vmatprep.subr.mxu0 0.0
    %1716 = vmatpush2.msra.mxu0 0.0
    %1717 = vmatprep.subr.mxu0 0.0
    %1718 = vmatpush2.msra.mxu0 0.0
    %1719 = vmatprep.subr.mxu0 0.0
    %1720 = vmatpush2.msra.mxu0 0.0
    %1721 = vmatprep.subr.mxu0 0.0
    %1722 = vmatpush2.msra.mxu0 0.0
    %1723 = vmatprep.subr.mxu0 0.0
    %1724 = vmatpush2.msra.mxu0 0.0
    %1725 = vmatprep.subr.mxu0 0.0
    %1726 = vmatpush2.msra.mxu0 0.0
    %1727 = vmatprep.subr.mxu0 0.0
    %1728 = vmatpush2.msra.mxu0 0.0
    %1729 = vmatprep.subr.mxu0 0.0
    %1730 = vmatpush2.msra.mxu0 0.0
    %1731 = vmatprep.subr.mxu0 0.0
    %1732 = vmatpush2.msra.mxu0 0.0
    %1733 = vmatprep.subr.mxu0 0.0
    %1734 = vmatpush2.msra.mxu0 0.0
    %1735 = vmatprep.subr.mxu0 0.0
    %1736 = vmatpush2.msra.mxu0 0.0
    %1737 = vmatprep.subr.mxu0 0.0
    %1738 = vmatpush2.msra.mxu0 0.0
    %1739 = vmatprep.mubr.f32.mxu0 0.0
    %v1740 = vand.u32 %v38, 4294901760
    %v1741 = vsub.f32 %v38, %v1740
    %v1742 = vand.u32 %v1741, 4294901760
    %1743 = vmatmul.mubr.f32.gmra.mxu0 %v1742
    %v1744 = vpop.f32.mrf.mxu0
    %v1745 = vadd.f32 %v1639, %v1744
    %v1746 = vpop.f32.mrf.mxu0
    %v1747 = vadd.f32 %v1641, %v1746
    %1748 = vdwg.mxu0
    %v1749 = vand.u32 %v297, 4294901760
    %v1750 = vsub.f32 %v297, %v1749
    %v1751 = vand.u32 %v1750, 4294901760
    %1752 = vmatprep.subr.mxu0 %v1751
    %v1753 = vand.u32 %v296, 4294901760
    %v1754 = vsub.f32 %v296, %v1753
    %v1755 = vand.u32 %v1754, 4294901760
    %1756 = vmatpush1.msra.mxu0 %v1755
    %v1757 = vand.u32 %v280, 4294901760
    %v1758 = vsub.f32 %v280, %v1757
    %v1759 = vand.u32 %v1758, 4294901760
    %1760 = vmatprep.subr.mxu0 %v1759
    %v1761 = vand.u32 %v279, 4294901760
    %v1762 = vsub.f32 %v279, %v1761
    %v1763 = vand.u32 %v1762, 4294901760
    %1764 = vmatpush1.msra.mxu0 %v1763
    %v1765 = vand.u32 %v263, 4294901760
    %v1766 = vsub.f32 %v263, %v1765
    %v1767 = vand.u32 %v1766, 4294901760
    %1768 = vmatprep.subr.mxu0 %v1767
    %v1769 = vand.u32 %v262, 4294901760
    %v1770 = vsub.f32 %v262, %v1769
    %v1771 = vand.u32 %v1770, 4294901760
    %1772 = vmatpush1.msra.mxu0 %v1771
    %v1773 = vand.u32 %v246, 4294901760
    %v1774 = vsub.f32 %v246, %v1773
    %v1775 = vand.u32 %v1774, 4294901760
    %1776 = vmatprep.subr.mxu0 %v1775
    %v1777 = vand.u32 %v245, 4294901760
    %v1778 = vsub.f32 %v245, %v1777
    %v1779 = vand.u32 %v1778, 4294901760
    %1780 = vmatpush1.msra.mxu0 %v1779
    %v1781 = vand.u32 %v229, 4294901760
    %v1782 = vsub.f32 %v229, %v1781
    %v1783 = vand.u32 %v1782, 4294901760
    %1784 = vmatprep.subr.mxu0 %v1783
    %v1785 = vand.u32 %v228, 4294901760
    %v1786 = vsub.f32 %v228, %v1785
    %v1787 = vand.u32 %v1786, 4294901760
    %1788 = vmatpush1.msra.mxu0 %v1787
    %v1789 = vand.u32 %v212, 4294901760
    %v1790 = vsub.f32 %v212, %v1789
    %v1791 = vand.u32 %v1790, 4294901760
    %1792 = vmatprep.subr.mxu0 %v1791
    %v1793 = vand.u32 %v211, 4294901760
    %v1794 = vsub.f32 %v211, %v1793
    %v1795 = vand.u32 %v1794, 4294901760
    %1796 = vmatpush1.msra.mxu0 %v1795
    %v1797 = vand.u32 %v195, 4294901760
    %v1798 = vsub.f32 %v195, %v1797
    %v1799 = vand.u32 %v1798, 4294901760
    %1800 = vmatprep.subr.mxu0 %v1799
    %v1801 = vand.u32 %v194, 4294901760
    %v1802 = vsub.f32 %v194, %v1801
    %v1803 = vand.u32 %v1802, 4294901760
    %1804 = vmatpush1.msra.mxu0 %v1803
    %v1805 = vand.u32 %v178, 4294901760
    %v1806 = vsub.f32 %v178, %v1805
    %v1807 = vand.u32 %v1806, 4294901760
    %1808 = vmatprep.subr.mxu0 %v1807
    %v1809 = vand.u32 %v177, 4294901760
    %v1810 = vsub.f32 %v177, %v1809
    %v1811 = vand.u32 %v1810, 4294901760
    %1812 = vmatpush1.msra.mxu0 %v1811
    %v1813 = vand.u32 %v161, 4294901760
    %v1814 = vsub.f32 %v161, %v1813
    %v1815 = vand.u32 %v1814, 4294901760
    %1816 = vmatprep.subr.mxu0 %v1815
    %v1817 = vand.u32 %v160, 4294901760
    %v1818 = vsub.f32 %v160, %v1817
    %v1819 = vand.u32 %v1818, 4294901760
    %1820 = vmatpush1.msra.mxu0 %v1819
    %v1821 = vand.u32 %v144, 4294901760
    %v1822 = vsub.f32 %v144, %v1821
    %v1823 = vand.u32 %v1822, 4294901760
    %1824 = vmatprep.subr.mxu0 %v1823
    %v1825 = vand.u32 %v143, 4294901760
    %v1826 = vsub.f32 %v143, %v1825
    %v1827 = vand.u32 %v1826, 4294901760
    %1828 = vmatpush1.msra.mxu0 %v1827
    %v1829 = vand.u32 %v127, 4294901760
    %v1830 = vsub.f32 %v127, %v1829
    %v1831 = vand.u32 %v1830, 4294901760
    %1832 = vmatprep.subr.mxu0 %v1831
    %v1833 = vand.u32 %v126, 4294901760
    %v1834 = vsub.f32 %v126, %v1833
    %v1835 = vand.u32 %v1834, 4294901760
    %1836 = vmatpush1.msra.mxu0 %v1835
    %v1837 = vand.u32 %v110, 4294901760
    %v1838 = vsub.f32 %v110, %v1837
    %v1839 = vand.u32 %v1838, 4294901760
    %1840 = vmatprep.subr.mxu0 %v1839
    %v1841 = vand.u32 %v109, 4294901760
    %v1842 = vsub.f32 %v109, %v1841
    %v1843 = vand.u32 %v1842, 4294901760
    %1844 = vmatpush1.msra.mxu0 %v1843
    %v1845 = vand.u32 %v93, 4294901760
    %v1846 = vsub.f32 %v93, %v1845
    %v1847 = vand.u32 %v1846, 4294901760
    %1848 = vmatprep.subr.mxu0 %v1847
    %v1849 = vand.u32 %v92, 4294901760
    %v1850 = vsub.f32 %v92, %v1849
    %v1851 = vand.u32 %v1850, 4294901760
    %1852 = vmatpush1.msra.mxu0 %v1851
    %v1853 = vand.u32 %v76, 4294901760
    %v1854 = vsub.f32 %v76, %v1853
    %v1855 = vand.u32 %v1854, 4294901760
    %1856 = vmatprep.subr.mxu0 %v1855
    %v1857 = vand.u32 %v75, 4294901760
    %v1858 = vsub.f32 %v75, %v1857
    %v1859 = vand.u32 %v1858, 4294901760
    %1860 = vmatpush1.msra.mxu0 %v1859
    %v1861 = vand.u32 %v59, 4294901760
    %v1862 = vsub.f32 %v59, %v1861
    %v1863 = vand.u32 %v1862, 4294901760
    %1864 = vmatprep.subr.mxu0 %v1863
    %v1865 = vand.u32 %v58, 4294901760
    %v1866 = vsub.f32 %v58, %v1865
    %v1867 = vand.u32 %v1866, 4294901760
    %1868 = vmatpush1.msra.mxu0 %v1867
    %v1869 = vand.u32 %v42, 4294901760
    %v1870 = vsub.f32 %v42, %v1869
    %v1871 = vand.u32 %v1870, 4294901760
    %1872 = vmatprep.subr.mxu0 %v1871
    %v1873 = vand.u32 %v41, 4294901760
    %v1874 = vsub.f32 %v41, %v1873
    %v1875 = vand.u32 %v1874, 4294901760
    %1876 = vmatpush1.msra.mxu0 %v1875
    %1877 = vmatprep.subr.mxu0 0.0
    %1878 = vmatpush2.msra.mxu0 0.0
    %1879 = vmatprep.subr.mxu0 0.0
    %1880 = vmatpush2.msra.mxu0 0.0
    %1881 = vmatprep.subr.mxu0 0.0
    %1882 = vmatpush2.msra.mxu0 0.0
    %1883 = vmatprep.subr.mxu0 0.0
    %1884 = vmatpush2.msra.mxu0 0.0
    %1885 = vmatprep.subr.mxu0 0.0
    %1886 = vmatpush2.msra.mxu0 0.0
    %1887 = vmatprep.subr.mxu0 0.0
    %1888 = vmatpush2.msra.mxu0 0.0
    %1889 = vmatprep.subr.mxu0 0.0
    %1890 = vmatpush2.msra.mxu0 0.0
    %1891 = vmatprep.subr.mxu0 0.0
    %1892 = vmatpush2.msra.mxu0 0.0
    %1893 = vmatprep.subr.mxu0 0.0
    %1894 = vmatpush2.msra.mxu0 0.0
    %1895 = vmatprep.subr.mxu0 0.0
    %1896 = vmatpush2.msra.mxu0 0.0
    %1897 = vmatprep.subr.mxu0 0.0
    %1898 = vmatpush2.msra.mxu0 0.0
    %1899 = vmatprep.subr.mxu0 0.0
    %1900 = vmatpush2.msra.mxu0 0.0
    %1901 = vmatprep.subr.mxu0 0.0
    %1902 = vmatpush2.msra.mxu0 0.0
    %1903 = vmatprep.subr.mxu0 0.0
    %1904 = vmatpush2.msra.mxu0 0.0
    %1905 = vmatprep.subr.mxu0 0.0
    %1906 = vmatpush2.msra.mxu0 0.0
    %1907 = vmatprep.subr.mxu0 0.0
    %1908 = vmatpush2.msra.mxu0 0.0
    %1909 = vmatprep.mubr.f32.mxu0 0.0
    %v1910 = vand.u32 %v38, 4294901760
    %1911 = vmatmul.mubr.f32.gmra.mxu0 %v1910
    %v1912 = vpop.f32.mrf.mxu0
    %v1913 = vadd.f32 %v1745, %v1912
    %v1914 = vpop.f32.mrf.mxu0
    %v1915 = vadd.f32 %v1747, %v1914
    %1916 = vdwg.mxu0
    %v1917 = vand.u32 %v297, 4294901760
    %1918 = vmatprep.subr.mxu0 %v1917
    %v1919 = vand.u32 %v296, 4294901760
    %1920 = vmatpush1.msra.mxu0 %v1919
    %v1921 = vand.u32 %v280, 4294901760
    %1922 = vmatprep.subr.mxu0 %v1921
    %v1923 = vand.u32 %v279, 4294901760
    %1924 = vmatpush1.msra.mxu0 %v1923
    %v1925 = vand.u32 %v263, 4294901760
    %1926 = vmatprep.subr.mxu0 %v1925
    %v1927 = vand.u32 %v262, 4294901760
    %1928 = vmatpush1.msra.mxu0 %v1927
    %v1929 = vand.u32 %v246, 4294901760
    %1930 = vmatprep.subr.mxu0 %v1929
    %v1931 = vand.u32 %v245, 4294901760
    %1932 = vmatpush1.msra.mxu0 %v1931
    %v1933 = vand.u32 %v229, 4294901760
    %1934 = vmatprep.subr.mxu0 %v1933
    %v1935 = vand.u32 %v228, 4294901760
    %1936 = vmatpush1.msra.mxu0 %v1935
    %v1937 = vand.u32 %v212, 4294901760
    %1938 = vmatprep.subr.mxu0 %v1937
    %v1939 = vand.u32 %v211, 4294901760
    %1940 = vmatpush1.msra.mxu0 %v1939
    %v1941 = vand.u32 %v195, 4294901760
    %1942 = vmatprep.subr.mxu0 %v1941
    %v1943 = vand.u32 %v194, 4294901760
    %1944 = vmatpush1.msra.mxu0 %v1943
    %v1945 = vand.u32 %v178, 4294901760
    %1946 = vmatprep.subr.mxu0 %v1945
    %v1947 = vand.u32 %v177, 4294901760
    %1948 = vmatpush1.msra.mxu0 %v1947
    %v1949 = vand.u32 %v161, 4294901760
    %1950 = vmatprep.subr.mxu0 %v1949
    %v1951 = vand.u32 %v160, 4294901760
    %1952 = vmatpush1.msra.mxu0 %v1951
    %v1953 = vand.u32 %v144, 4294901760
    %1954 = vmatprep.subr.mxu0 %v1953
    %v1955 = vand.u32 %v143, 4294901760
    %1956 = vmatpush1.msra.mxu0 %v1955
    %v1957 = vand.u32 %v127, 4294901760
    %1958 = vmatprep.subr.mxu0 %v1957
    %v1959 = vand.u32 %v126, 4294901760
    %1960 = vmatpush1.msra.mxu0 %v1959
    %v1961 = vand.u32 %v110, 4294901760
    %1962 = vmatprep.subr.mxu0 %v1961
    %v1963 = vand.u32 %v109, 4294901760
    %1964 = vmatpush1.msra.mxu0 %v1963
    %v1965 = vand.u32 %v93, 4294901760
    %1966 = vmatprep.subr.mxu0 %v1965
    %v1967 = vand.u32 %v92, 4294901760
    %1968 = vmatpush1.msra.mxu0 %v1967
    %v1969 = vand.u32 %v76, 4294901760
    %1970 = vmatprep.subr.mxu0 %v1969
    %v1971 = vand.u32 %v75, 4294901760
    %1972 = vmatpush1.msra.mxu0 %v1971
    %v1973 = vand.u32 %v59, 4294901760
    %1974 = vmatprep.subr.mxu0 %v1973
    %v1975 = vand.u32 %v58, 4294901760
    %1976 = vmatpush1.msra.mxu0 %v1975
    %v1977 = vand.u32 %v42, 4294901760
    %1978 = vmatprep.subr.mxu0 %v1977
    %v1979 = vand.u32 %v41, 4294901760
    %1980 = vmatpush1.msra.mxu0 %v1979
    %1981 = vmatprep.subr.mxu0 0.0
    %1982 = vmatpush2.msra.mxu0 0.0
    %1983 = vmatprep.subr.mxu0 0.0
    %1984 = vmatpush2.msra.mxu0 0.0
    %1985 = vmatprep.subr.mxu0 0.0
    %1986 = vmatpush2.msra.mxu0 0.0
    %1987 = vmatprep.subr.mxu0 0.0
    %1988 = vmatpush2.msra.mxu0 0.0
    %1989 = vmatprep.subr.mxu0 0.0
    %1990 = vmatpush2.msra.mxu0 0.0
    %1991 = vmatprep.subr.mxu0 0.0
    %1992 = vmatpush2.msra.mxu0 0.0
    %1993 = vmatprep.subr.mxu0 0.0
    %1994 = vmatpush2.msra.mxu0 0.0
    %1995 = vmatprep.subr.mxu0 0.0
    %1996 = vmatpush2.msra.mxu0 0.0
    %1997 = vmatprep.subr.mxu0 0.0
    %1998 = vmatpush2.msra.mxu0 0.0
    %1999 = vmatprep.subr.mxu0 0.0
    %2000 = vmatpush2.msra.mxu0 0.0
    %2001 = vmatprep.subr.mxu0 0.0
    %2002 = vmatpush2.msra.mxu0 0.0
    %2003 = vmatprep.subr.mxu0 0.0
    %2004 = vmatpush2.msra.mxu0 0.0
    %2005 = vmatprep.subr.mxu0 0.0
    %2006 = vmatpush2.msra.mxu0 0.0
    %2007 = vmatprep.subr.mxu0 0.0
    %2008 = vmatpush2.msra.mxu0 0.0
    %2009 = vmatprep.subr.mxu0 0.0
    %2010 = vmatpush2.msra.mxu0 0.0
    %2011 = vmatprep.subr.mxu0 0.0
    %2012 = vmatpush2.msra.mxu0 0.0
    %2013 = vmatprep.mubr.f32.mxu0 0.0
    %v2014 = vand.u32 %v38, 4294901760
    %2015 = vmatmul.mubr.f32.gmra.mxu0 %v2014
    %v2016 = vpop.f32.mrf.mxu0
    %v2017 = vadd.f32 %v1913, %v2016
    %v2018 = vpop.f32.mrf.mxu0
    %v2019 = vadd.f32 %v1915, %v2018
    %2020 = vdwg.mxu0
    %v2021 = vand.u32 %v299, 4294901760
    %2022 = vmatprep.subr.mxu0 %v2021
    %v2023 = vand.u32 %v298, 4294901760
    %2024 = vmatpush1.msra.mxu0 %v2023
    %v2025 = vand.u32 %v282, 4294901760
    %2026 = vmatprep.subr.mxu0 %v2025
    %v2027 = vand.u32 %v281, 4294901760
    %2028 = vmatpush1.msra.mxu0 %v2027
    %v2029 = vand.u32 %v265, 4294901760
    %2030 = vmatprep.subr.mxu0 %v2029
    %v2031 = vand.u32 %v264, 4294901760
    %2032 = vmatpush1.msra.mxu0 %v2031
    %v2033 = vand.u32 %v248, 4294901760
    %2034 = vmatprep.subr.mxu0 %v2033
    %v2035 = vand.u32 %v247, 4294901760
    %2036 = vmatpush1.msra.mxu0 %v2035
    %v2037 = vand.u32 %v231, 4294901760
    %2038 = vmatprep.subr.mxu0 %v2037
    %v2039 = vand.u32 %v230, 4294901760
    %2040 = vmatpush1.msra.mxu0 %v2039
    %v2041 = vand.u32 %v214, 4294901760
    %2042 = vmatprep.subr.mxu0 %v2041
    %v2043 = vand.u32 %v213, 4294901760
    %2044 = vmatpush1.msra.mxu0 %v2043
    %v2045 = vand.u32 %v197, 4294901760
    %2046 = vmatprep.subr.mxu0 %v2045
    %v2047 = vand.u32 %v196, 4294901760
    %2048 = vmatpush1.msra.mxu0 %v2047
    %v2049 = vand.u32 %v180, 4294901760
    %2050 = vmatprep.subr.mxu0 %v2049
    %v2051 = vand.u32 %v179, 4294901760
    %2052 = vmatpush1.msra.mxu0 %v2051
    %v2053 = vand.u32 %v163, 4294901760
    %2054 = vmatprep.subr.mxu0 %v2053
    %v2055 = vand.u32 %v162, 4294901760
    %2056 = vmatpush1.msra.mxu0 %v2055
    %v2057 = vand.u32 %v146, 4294901760
    %2058 = vmatprep.subr.mxu0 %v2057
    %v2059 = vand.u32 %v145, 4294901760
    %2060 = vmatpush1.msra.mxu0 %v2059
    %v2061 = vand.u32 %v129, 4294901760
    %2062 = vmatprep.subr.mxu0 %v2061
    %v2063 = vand.u32 %v128, 4294901760
    %2064 = vmatpush1.msra.mxu0 %v2063
    %v2065 = vand.u32 %v112, 4294901760
    %2066 = vmatprep.subr.mxu0 %v2065
    %v2067 = vand.u32 %v111, 4294901760
    %2068 = vmatpush1.msra.mxu0 %v2067
    %v2069 = vand.u32 %v95, 4294901760
    %2070 = vmatprep.subr.mxu0 %v2069
    %v2071 = vand.u32 %v94, 4294901760
    %2072 = vmatpush1.msra.mxu0 %v2071
    %v2073 = vand.u32 %v78, 4294901760
    %2074 = vmatprep.subr.mxu0 %v2073
    %v2075 = vand.u32 %v77, 4294901760
    %2076 = vmatpush1.msra.mxu0 %v2075
    %v2077 = vand.u32 %v61, 4294901760
    %2078 = vmatprep.subr.mxu0 %v2077
    %v2079 = vand.u32 %v60, 4294901760
    %2080 = vmatpush1.msra.mxu0 %v2079
    %v2081 = vand.u32 %v44, 4294901760
    %2082 = vmatprep.subr.mxu0 %v2081
    %v2083 = vand.u32 %v43, 4294901760
    %2084 = vmatpush1.msra.mxu0 %v2083
    %2085 = vmatprep.subr.mxu0 0.0
    %2086 = vmatpush2.msra.mxu0 0.0
    %2087 = vmatprep.subr.mxu0 0.0
    %2088 = vmatpush2.msra.mxu0 0.0
    %2089 = vmatprep.subr.mxu0 0.0
    %2090 = vmatpush2.msra.mxu0 0.0
    %2091 = vmatprep.subr.mxu0 0.0
    %2092 = vmatpush2.msra.mxu0 0.0
    %2093 = vmatprep.subr.mxu0 0.0
    %2094 = vmatpush2.msra.mxu0 0.0
    %2095 = vmatprep.subr.mxu0 0.0
    %2096 = vmatpush2.msra.mxu0 0.0
    %2097 = vmatprep.subr.mxu0 0.0
    %2098 = vmatpush2.msra.mxu0 0.0
    %2099 = vmatprep.subr.mxu0 0.0
    %2100 = vmatpush2.msra.mxu0 0.0
    %2101 = vmatprep.subr.mxu0 0.0
    %2102 = vmatpush2.msra.mxu0 0.0
    %2103 = vmatprep.subr.mxu0 0.0
    %2104 = vmatpush2.msra.mxu0 0.0
    %2105 = vmatprep.subr.mxu0 0.0
    %2106 = vmatpush2.msra.mxu0 0.0
    %2107 = vmatprep.subr.mxu0 0.0
    %2108 = vmatpush2.msra.mxu0 0.0
    %2109 = vmatprep.subr.mxu0 0.0
    %2110 = vmatpush2.msra.mxu0 0.0
    %2111 = vmatprep.subr.mxu0 0.0
    %2112 = vmatpush2.msra.mxu0 0.0
    %2113 = vmatprep.subr.mxu0 0.0
    %2114 = vmatpush2.msra.mxu0 0.0
    %2115 = vmatprep.subr.mxu0 0.0
    %2116 = vmatpush2.msra.mxu0 0.0
    %2117 = vmatprep.mubr.f32.mxu0 0.0
    %v2118 = vand.u32 %v38, 4294901760
    %v2119 = vsub.f32 %v38, %v2118
    %v2120 = vand.u32 %v2119, 4294901760
    %v2121 = vsub.f32 %v2119, %v2120
    %v2122 = vand.u32 %v2121, 4294901760
    %2123 = vmatmul.mubr.f32.gmra.mxu0 %v2122
    %v2124 = vpop.f32.mrf.mxu0
    %v2125 = vadd.f32 0.0, %v2124
    %v2126 = vpop.f32.mrf.mxu0
    %v2127 = vadd.f32 0.0, %v2126
    %2128 = vdwg.mxu0
    %v2129 = vand.u32 %v299, 4294901760
    %v2130 = vsub.f32 %v299, %v2129
    %v2131 = vand.u32 %v2130, 4294901760
    %v2132 = vsub.f32 %v2130, %v2131
    %v2133 = vand.u32 %v2132, 4294901760
    %2134 = vmatprep.subr.mxu0 %v2133
    %v2135 = vand.u32 %v298, 4294901760
    %v2136 = vsub.f32 %v298, %v2135
    %v2137 = vand.u32 %v2136, 4294901760
    %v2138 = vsub.f32 %v2136, %v2137
    %v2139 = vand.u32 %v2138, 4294901760
    %2140 = vmatpush1.msra.mxu0 %v2139
    %v2141 = vand.u32 %v282, 4294901760
    %v2142 = vsub.f32 %v282, %v2141
    %v2143 = vand.u32 %v2142, 4294901760
    %v2144 = vsub.f32 %v2142, %v2143
    %v2145 = vand.u32 %v2144, 4294901760
    %2146 = vmatprep.subr.mxu0 %v2145
    %v2147 = vand.u32 %v281, 4294901760
    %v2148 = vsub.f32 %v281, %v2147
    %v2149 = vand.u32 %v2148, 4294901760
    %v2150 = vsub.f32 %v2148, %v2149
    %v2151 = vand.u32 %v2150, 4294901760
    %2152 = vmatpush1.msra.mxu0 %v2151
    %v2153 = vand.u32 %v265, 4294901760
    %v2154 = vsub.f32 %v265, %v2153
    %v2155 = vand.u32 %v2154, 4294901760
    %v2156 = vsub.f32 %v2154, %v2155
    %v2157 = vand.u32 %v2156, 4294901760
    %2158 = vmatprep.subr.mxu0 %v2157
    %v2159 = vand.u32 %v264, 4294901760
    %v2160 = vsub.f32 %v264, %v2159
    %v2161 = vand.u32 %v2160, 4294901760
    %v2162 = vsub.f32 %v2160, %v2161
    %v2163 = vand.u32 %v2162, 4294901760
    %2164 = vmatpush1.msra.mxu0 %v2163
    %v2165 = vand.u32 %v248, 4294901760
    %v2166 = vsub.f32 %v248, %v2165
    %v2167 = vand.u32 %v2166, 4294901760
    %v2168 = vsub.f32 %v2166, %v2167
    %v2169 = vand.u32 %v2168, 4294901760
    %2170 = vmatprep.subr.mxu0 %v2169
    %v2171 = vand.u32 %v247, 4294901760
    %v2172 = vsub.f32 %v247, %v2171
    %v2173 = vand.u32 %v2172, 4294901760
    %v2174 = vsub.f32 %v2172, %v2173
    %v2175 = vand.u32 %v2174, 4294901760
    %2176 = vmatpush1.msra.mxu0 %v2175
    %v2177 = vand.u32 %v231, 4294901760
    %v2178 = vsub.f32 %v231, %v2177
    %v2179 = vand.u32 %v2178, 4294901760
    %v2180 = vsub.f32 %v2178, %v2179
    %v2181 = vand.u32 %v2180, 4294901760
    %2182 = vmatprep.subr.mxu0 %v2181
    %v2183 = vand.u32 %v230, 4294901760
    %v2184 = vsub.f32 %v230, %v2183
    %v2185 = vand.u32 %v2184, 4294901760
    %v2186 = vsub.f32 %v2184, %v2185
    %v2187 = vand.u32 %v2186, 4294901760
    %2188 = vmatpush1.msra.mxu0 %v2187
    %v2189 = vand.u32 %v214, 4294901760
    %v2190 = vsub.f32 %v214, %v2189
    %v2191 = vand.u32 %v2190, 4294901760
    %v2192 = vsub.f32 %v2190, %v2191
    %v2193 = vand.u32 %v2192, 4294901760
    %2194 = vmatprep.subr.mxu0 %v2193
    %v2195 = vand.u32 %v213, 4294901760
    %v2196 = vsub.f32 %v213, %v2195
    %v2197 = vand.u32 %v2196, 4294901760
    %v2198 = vsub.f32 %v2196, %v2197
    %v2199 = vand.u32 %v2198, 4294901760
    %2200 = vmatpush1.msra.mxu0 %v2199
    %v2201 = vand.u32 %v197, 4294901760
    %v2202 = vsub.f32 %v197, %v2201
    %v2203 = vand.u32 %v2202, 4294901760
    %v2204 = vsub.f32 %v2202, %v2203
    %v2205 = vand.u32 %v2204, 4294901760
    %2206 = vmatprep.subr.mxu0 %v2205
    %v2207 = vand.u32 %v196, 4294901760
    %v2208 = vsub.f32 %v196, %v2207
    %v2209 = vand.u32 %v2208, 4294901760
    %v2210 = vsub.f32 %v2208, %v2209
    %v2211 = vand.u32 %v2210, 4294901760
    %2212 = vmatpush1.msra.mxu0 %v2211
    %v2213 = vand.u32 %v180, 4294901760
    %v2214 = vsub.f32 %v180, %v2213
    %v2215 = vand.u32 %v2214, 4294901760
    %v2216 = vsub.f32 %v2214, %v2215
    %v2217 = vand.u32 %v2216, 4294901760
    %2218 = vmatprep.subr.mxu0 %v2217
    %v2219 = vand.u32 %v179, 4294901760
    %v2220 = vsub.f32 %v179, %v2219
    %v2221 = vand.u32 %v2220, 4294901760
    %v2222 = vsub.f32 %v2220, %v2221
    %v2223 = vand.u32 %v2222, 4294901760
    %2224 = vmatpush1.msra.mxu0 %v2223
    %v2225 = vand.u32 %v163, 4294901760
    %v2226 = vsub.f32 %v163, %v2225
    %v2227 = vand.u32 %v2226, 4294901760
    %v2228 = vsub.f32 %v2226, %v2227
    %v2229 = vand.u32 %v2228, 4294901760
    %2230 = vmatprep.subr.mxu0 %v2229
    %v2231 = vand.u32 %v162, 4294901760
    %v2232 = vsub.f32 %v162, %v2231
    %v2233 = vand.u32 %v2232, 4294901760
    %v2234 = vsub.f32 %v2232, %v2233
    %v2235 = vand.u32 %v2234, 4294901760
    %2236 = vmatpush1.msra.mxu0 %v2235
    %v2237 = vand.u32 %v146, 4294901760
    %v2238 = vsub.f32 %v146, %v2237
    %v2239 = vand.u32 %v2238, 4294901760
    %v2240 = vsub.f32 %v2238, %v2239
    %v2241 = vand.u32 %v2240, 4294901760
    %2242 = vmatprep.subr.mxu0 %v2241
    %v2243 = vand.u32 %v145, 4294901760
    %v2244 = vsub.f32 %v145, %v2243
    %v2245 = vand.u32 %v2244, 4294901760
    %v2246 = vsub.f32 %v2244, %v2245
    %v2247 = vand.u32 %v2246, 4294901760
    %2248 = vmatpush1.msra.mxu0 %v2247
    %v2249 = vand.u32 %v129, 4294901760
    %v2250 = vsub.f32 %v129, %v2249
    %v2251 = vand.u32 %v2250, 4294901760
    %v2252 = vsub.f32 %v2250, %v2251
    %v2253 = vand.u32 %v2252, 4294901760
    %2254 = vmatprep.subr.mxu0 %v2253
    %v2255 = vand.u32 %v128, 4294901760
    %v2256 = vsub.f32 %v128, %v2255
    %v2257 = vand.u32 %v2256, 4294901760
    %v2258 = vsub.f32 %v2256, %v2257
    %v2259 = vand.u32 %v2258, 4294901760
    %2260 = vmatpush1.msra.mxu0 %v2259
    %v2261 = vand.u32 %v112, 4294901760
    %v2262 = vsub.f32 %v112, %v2261
    %v2263 = vand.u32 %v2262, 4294901760
    %v2264 = vsub.f32 %v2262, %v2263
    %v2265 = vand.u32 %v2264, 4294901760
    %2266 = vmatprep.subr.mxu0 %v2265
    %v2267 = vand.u32 %v111, 4294901760
    %v2268 = vsub.f32 %v111, %v2267
    %v2269 = vand.u32 %v2268, 4294901760
    %v2270 = vsub.f32 %v2268, %v2269
    %v2271 = vand.u32 %v2270, 4294901760
    %2272 = vmatpush1.msra.mxu0 %v2271
    %v2273 = vand.u32 %v95, 4294901760
    %v2274 = vsub.f32 %v95, %v2273
    %v2275 = vand.u32 %v2274, 4294901760
    %v2276 = vsub.f32 %v2274, %v2275
    %v2277 = vand.u32 %v2276, 4294901760
    %2278 = vmatprep.subr.mxu0 %v2277
    %v2279 = vand.u32 %v94, 4294901760
    %v2280 = vsub.f32 %v94, %v2279
    %v2281 = vand.u32 %v2280, 4294901760
    %v2282 = vsub.f32 %v2280, %v2281
    %v2283 = vand.u32 %v2282, 4294901760
    %2284 = vmatpush1.msra.mxu0 %v2283
    %v2285 = vand.u32 %v78, 4294901760
    %v2286 = vsub.f32 %v78, %v2285
    %v2287 = vand.u32 %v2286, 4294901760
    %v2288 = vsub.f32 %v2286, %v2287
    %v2289 = vand.u32 %v2288, 4294901760
    %2290 = vmatprep.subr.mxu0 %v2289
    %v2291 = vand.u32 %v77, 4294901760
    %v2292 = vsub.f32 %v77, %v2291
    %v2293 = vand.u32 %v2292, 4294901760
    %v2294 = vsub.f32 %v2292, %v2293
    %v2295 = vand.u32 %v2294, 4294901760
    %2296 = vmatpush1.msra.mxu0 %v2295
    %v2297 = vand.u32 %v61, 4294901760
    %v2298 = vsub.f32 %v61, %v2297
    %v2299 = vand.u32 %v2298, 4294901760
    %v2300 = vsub.f32 %v2298, %v2299
    %v2301 = vand.u32 %v2300, 4294901760
    %2302 = vmatprep.subr.mxu0 %v2301
    %v2303 = vand.u32 %v60, 4294901760
    %v2304 = vsub.f32 %v60, %v2303
    %v2305 = vand.u32 %v2304, 4294901760
    %v2306 = vsub.f32 %v2304, %v2305
    %v2307 = vand.u32 %v2306, 4294901760
    %2308 = vmatpush1.msra.mxu0 %v2307
    %v2309 = vand.u32 %v44, 4294901760
    %v2310 = vsub.f32 %v44, %v2309
    %v2311 = vand.u32 %v2310, 4294901760
    %v2312 = vsub.f32 %v2310, %v2311
    %v2313 = vand.u32 %v2312, 4294901760
    %2314 = vmatprep.subr.mxu0 %v2313
    %v2315 = vand.u32 %v43, 4294901760
    %v2316 = vsub.f32 %v43, %v2315
    %v2317 = vand.u32 %v2316, 4294901760
    %v2318 = vsub.f32 %v2316, %v2317
    %v2319 = vand.u32 %v2318, 4294901760
    %2320 = vmatpush1.msra.mxu0 %v2319
    %2321 = vmatprep.subr.mxu0 0.0
    %2322 = vmatpush2.msra.mxu0 0.0
    %2323 = vmatprep.subr.mxu0 0.0
    %2324 = vmatpush2.msra.mxu0 0.0
    %2325 = vmatprep.subr.mxu0 0.0
    %2326 = vmatpush2.msra.mxu0 0.0
    %2327 = vmatprep.subr.mxu0 0.0
    %2328 = vmatpush2.msra.mxu0 0.0
    %2329 = vmatprep.subr.mxu0 0.0
    %2330 = vmatpush2.msra.mxu0 0.0
    %2331 = vmatprep.subr.mxu0 0.0
    %2332 = vmatpush2.msra.mxu0 0.0
    %2333 = vmatprep.subr.mxu0 0.0
    %2334 = vmatpush2.msra.mxu0 0.0
    %2335 = vmatprep.subr.mxu0 0.0
    %2336 = vmatpush2.msra.mxu0 0.0
    %2337 = vmatprep.subr.mxu0 0.0
    %2338 = vmatpush2.msra.mxu0 0.0
    %2339 = vmatprep.subr.mxu0 0.0
    %2340 = vmatpush2.msra.mxu0 0.0
    %2341 = vmatprep.subr.mxu0 0.0
    %2342 = vmatpush2.msra.mxu0 0.0
    %2343 = vmatprep.subr.mxu0 0.0
    %2344 = vmatpush2.msra.mxu0 0.0
    %2345 = vmatprep.subr.mxu0 0.0
    %2346 = vmatpush2.msra.mxu0 0.0
    %2347 = vmatprep.subr.mxu0 0.0
    %2348 = vmatpush2.msra.mxu0 0.0
    %2349 = vmatprep.subr.mxu0 0.0
    %2350 = vmatpush2.msra.mxu0 0.0
    %2351 = vmatprep.subr.mxu0 0.0
    %2352 = vmatpush2.msra.mxu0 0.0
    %2353 = vmatprep.mubr.f32.mxu0 0.0
    %v2354 = vand.u32 %v38, 4294901760
    %2355 = vmatmul.mubr.f32.gmra.mxu0 %v2354
    %v2356 = vpop.f32.mrf.mxu0
    %v2357 = vadd.f32 %v2125, %v2356
    %v2358 = vpop.f32.mrf.mxu0
    %v2359 = vadd.f32 %v2127, %v2358
    %2360 = vdwg.mxu0
    %v2361 = vand.u32 %v299, 4294901760
    %v2362 = vsub.f32 %v299, %v2361
    %2363 = vmatprep.subr.mxu0 %v2362
    %v2364 = vand.u32 %v298, 4294901760
    %v2365 = vsub.f32 %v298, %v2364
    %2366 = vmatpush1.msra.mxu0 %v2365
    %v2367 = vand.u32 %v282, 4294901760
    %v2368 = vsub.f32 %v282, %v2367
    %2369 = vmatprep.subr.mxu0 %v2368
    %v2370 = vand.u32 %v281, 4294901760
    %v2371 = vsub.f32 %v281, %v2370
    %2372 = vmatpush1.msra.mxu0 %v2371
    %v2373 = vand.u32 %v265, 4294901760
    %v2374 = vsub.f32 %v265, %v2373
    %2375 = vmatprep.subr.mxu0 %v2374
    %v2376 = vand.u32 %v264, 4294901760
    %v2377 = vsub.f32 %v264, %v2376
    %2378 = vmatpush1.msra.mxu0 %v2377
    %v2379 = vand.u32 %v248, 4294901760
    %v2380 = vsub.f32 %v248, %v2379
    %2381 = vmatprep.subr.mxu0 %v2380
    %v2382 = vand.u32 %v247, 4294901760
    %v2383 = vsub.f32 %v247, %v2382
    %2384 = vmatpush1.msra.mxu0 %v2383
    %v2385 = vand.u32 %v231, 4294901760
    %v2386 = vsub.f32 %v231, %v2385
    %2387 = vmatprep.subr.mxu0 %v2386
    %v2388 = vand.u32 %v230, 4294901760
    %v2389 = vsub.f32 %v230, %v2388
    %2390 = vmatpush1.msra.mxu0 %v2389
    %v2391 = vand.u32 %v214, 4294901760
    %v2392 = vsub.f32 %v214, %v2391
    %2393 = vmatprep.subr.mxu0 %v2392
    %v2394 = vand.u32 %v213, 4294901760
    %v2395 = vsub.f32 %v213, %v2394
    %2396 = vmatpush1.msra.mxu0 %v2395
    %v2397 = vand.u32 %v197, 4294901760
    %v2398 = vsub.f32 %v197, %v2397
    %2399 = vmatprep.subr.mxu0 %v2398
    %v2400 = vand.u32 %v196, 4294901760
    %v2401 = vsub.f32 %v196, %v2400
    %2402 = vmatpush1.msra.mxu0 %v2401
    %v2403 = vand.u32 %v180, 4294901760
    %v2404 = vsub.f32 %v180, %v2403
    %2405 = vmatprep.subr.mxu0 %v2404
    %v2406 = vand.u32 %v179, 4294901760
    %v2407 = vsub.f32 %v179, %v2406
    %2408 = vmatpush1.msra.mxu0 %v2407
    %v2409 = vand.u32 %v163, 4294901760
    %v2410 = vsub.f32 %v163, %v2409
    %2411 = vmatprep.subr.mxu0 %v2410
    %v2412 = vand.u32 %v162, 4294901760
    %v2413 = vsub.f32 %v162, %v2412
    %2414 = vmatpush1.msra.mxu0 %v2413
    %v2415 = vand.u32 %v146, 4294901760
    %v2416 = vsub.f32 %v146, %v2415
    %2417 = vmatprep.subr.mxu0 %v2416
    %v2418 = vand.u32 %v145, 4294901760
    %v2419 = vsub.f32 %v145, %v2418
    %2420 = vmatpush1.msra.mxu0 %v2419
    %v2421 = vand.u32 %v129, 4294901760
    %v2422 = vsub.f32 %v129, %v2421
    %2423 = vmatprep.subr.mxu0 %v2422
    %v2424 = vand.u32 %v128, 4294901760
    %v2425 = vsub.f32 %v128, %v2424
    %2426 = vmatpush1.msra.mxu0 %v2425
    %v2427 = vand.u32 %v112, 4294901760
    %v2428 = vsub.f32 %v112, %v2427
    %2429 = vmatprep.subr.mxu0 %v2428
    %v2430 = vand.u32 %v111, 4294901760
    %v2431 = vsub.f32 %v111, %v2430
    %2432 = vmatpush1.msra.mxu0 %v2431
    %v2433 = vand.u32 %v95, 4294901760
    %v2434 = vsub.f32 %v95, %v2433
    %2435 = vmatprep.subr.mxu0 %v2434
    %v2436 = vand.u32 %v94, 4294901760
    %v2437 = vsub.f32 %v94, %v2436
    %2438 = vmatpush1.msra.mxu0 %v2437
    %v2439 = vand.u32 %v78, 4294901760
    %v2440 = vsub.f32 %v78, %v2439
    %2441 = vmatprep.subr.mxu0 %v2440
    %v2442 = vand.u32 %v77, 4294901760
    %v2443 = vsub.f32 %v77, %v2442
    %2444 = vmatpush1.msra.mxu0 %v2443
    %v2445 = vand.u32 %v61, 4294901760
    %v2446 = vsub.f32 %v61, %v2445
    %2447 = vmatprep.subr.mxu0 %v2446
    %v2448 = vand.u32 %v60, 4294901760
    %v2449 = vsub.f32 %v60, %v2448
    %2450 = vmatpush1.msra.mxu0 %v2449
    %v2451 = vand.u32 %v44, 4294901760
    %v2452 = vsub.f32 %v44, %v2451
    %2453 = vmatprep.subr.mxu0 %v2452
    %v2454 = vand.u32 %v43, 4294901760
    %v2455 = vsub.f32 %v43, %v2454
    %2456 = vmatpush1.msra.mxu0 %v2455
    %2457 = vmatprep.subr.mxu0 0.0
    %2458 = vmatpush2.msra.mxu0 0.0
    %2459 = vmatprep.subr.mxu0 0.0
    %2460 = vmatpush2.msra.mxu0 0.0
    %2461 = vmatprep.subr.mxu0 0.0
    %2462 = vmatpush2.msra.mxu0 0.0
    %2463 = vmatprep.subr.mxu0 0.0
    %2464 = vmatpush2.msra.mxu0 0.0
    %2465 = vmatprep.subr.mxu0 0.0
    %2466 = vmatpush2.msra.mxu0 0.0
    %2467 = vmatprep.subr.mxu0 0.0
    %2468 = vmatpush2.msra.mxu0 0.0
    %2469 = vmatprep.subr.mxu0 0.0
    %2470 = vmatpush2.msra.mxu0 0.0
    %2471 = vmatprep.subr.mxu0 0.0
    %2472 = vmatpush2.msra.mxu0 0.0
    %2473 = vmatprep.subr.mxu0 0.0
    %2474 = vmatpush2.msra.mxu0 0.0
    %2475 = vmatprep.subr.mxu0 0.0
    %2476 = vmatpush2.msra.mxu0 0.0
    %2477 = vmatprep.subr.mxu0 0.0
    %2478 = vmatpush2.msra.mxu0 0.0
    %2479 = vmatprep.subr.mxu0 0.0
    %2480 = vmatpush2.msra.mxu0 0.0
    %2481 = vmatprep.subr.mxu0 0.0
    %2482 = vmatpush2.msra.mxu0 0.0
    %2483 = vmatprep.subr.mxu0 0.0
    %2484 = vmatpush2.msra.mxu0 0.0
    %2485 = vmatprep.subr.mxu0 0.0
    %2486 = vmatpush2.msra.mxu0 0.0
    %2487 = vmatprep.subr.mxu0 0.0
    %2488 = vmatpush2.msra.mxu0 0.0
    %2489 = vmatprep.mubr.f32.mxu0 0.0
    %v2490 = vand.u32 %v38, 4294901760
    %v2491 = vsub.f32 %v38, %v2490
    %2492 = vmatmul.mubr.f32.gmra.mxu0 %v2491
    %v2493 = vpop.f32.mrf.mxu0
    %v2494 = vadd.f32 %v2357, %v2493
    %v2495 = vpop.f32.mrf.mxu0
    %v2496 = vadd.f32 %v2359, %v2495
    %2497 = vdwg.mxu0
    %v2498 = vand.u32 %v299, 4294901760
    %2499 = vmatprep.subr.mxu0 %v2498
    %v2500 = vand.u32 %v298, 4294901760
    %2501 = vmatpush1.msra.mxu0 %v2500
    %v2502 = vand.u32 %v282, 4294901760
    %2503 = vmatprep.subr.mxu0 %v2502
    %v2504 = vand.u32 %v281, 4294901760
    %2505 = vmatpush1.msra.mxu0 %v2504
    %v2506 = vand.u32 %v265, 4294901760
    %2507 = vmatprep.subr.mxu0 %v2506
    %v2508 = vand.u32 %v264, 4294901760
    %2509 = vmatpush1.msra.mxu0 %v2508
    %v2510 = vand.u32 %v248, 4294901760
    %2511 = vmatprep.subr.mxu0 %v2510
    %v2512 = vand.u32 %v247, 4294901760
    %2513 = vmatpush1.msra.mxu0 %v2512
    %v2514 = vand.u32 %v231, 4294901760
    %2515 = vmatprep.subr.mxu0 %v2514
    %v2516 = vand.u32 %v230, 4294901760
    %2517 = vmatpush1.msra.mxu0 %v2516
    %v2518 = vand.u32 %v214, 4294901760
    %2519 = vmatprep.subr.mxu0 %v2518
    %v2520 = vand.u32 %v213, 4294901760
    %2521 = vmatpush1.msra.mxu0 %v2520
    %v2522 = vand.u32 %v197, 4294901760
    %2523 = vmatprep.subr.mxu0 %v2522
    %v2524 = vand.u32 %v196, 4294901760
    %2525 = vmatpush1.msra.mxu0 %v2524
    %v2526 = vand.u32 %v180, 4294901760
    %2527 = vmatprep.subr.mxu0 %v2526
    %v2528 = vand.u32 %v179, 4294901760
    %2529 = vmatpush1.msra.mxu0 %v2528
    %v2530 = vand.u32 %v163, 4294901760
    %2531 = vmatprep.subr.mxu0 %v2530
    %v2532 = vand.u32 %v162, 4294901760
    %2533 = vmatpush1.msra.mxu0 %v2532
    %v2534 = vand.u32 %v146, 4294901760
    %2535 = vmatprep.subr.mxu0 %v2534
    %v2536 = vand.u32 %v145, 4294901760
    %2537 = vmatpush1.msra.mxu0 %v2536
    %v2538 = vand.u32 %v129, 4294901760
    %2539 = vmatprep.subr.mxu0 %v2538
    %v2540 = vand.u32 %v128, 4294901760
    %2541 = vmatpush1.msra.mxu0 %v2540
    %v2542 = vand.u32 %v112, 4294901760
    %2543 = vmatprep.subr.mxu0 %v2542
    %v2544 = vand.u32 %v111, 4294901760
    %2545 = vmatpush1.msra.mxu0 %v2544
    %v2546 = vand.u32 %v95, 4294901760
    %2547 = vmatprep.subr.mxu0 %v2546
    %v2548 = vand.u32 %v94, 4294901760
    %2549 = vmatpush1.msra.mxu0 %v2548
    %v2550 = vand.u32 %v78, 4294901760
    %2551 = vmatprep.subr.mxu0 %v2550
    %v2552 = vand.u32 %v77, 4294901760
    %2553 = vmatpush1.msra.mxu0 %v2552
    %v2554 = vand.u32 %v61, 4294901760
    %2555 = vmatprep.subr.mxu0 %v2554
    %v2556 = vand.u32 %v60, 4294901760
    %2557 = vmatpush1.msra.mxu0 %v2556
    %v2558 = vand.u32 %v44, 4294901760
    %2559 = vmatprep.subr.mxu0 %v2558
    %v2560 = vand.u32 %v43, 4294901760
    %2561 = vmatpush1.msra.mxu0 %v2560
    %2562 = vmatprep.subr.mxu0 0.0
    %2563 = vmatpush2.msra.mxu0 0.0
    %2564 = vmatprep.subr.mxu0 0.0
    %2565 = vmatpush2.msra.mxu0 0.0
    %2566 = vmatprep.subr.mxu0 0.0
    %2567 = vmatpush2.msra.mxu0 0.0
    %2568 = vmatprep.subr.mxu0 0.0
    %2569 = vmatpush2.msra.mxu0 0.0
    %2570 = vmatprep.subr.mxu0 0.0
    %2571 = vmatpush2.msra.mxu0 0.0
    %2572 = vmatprep.subr.mxu0 0.0
    %2573 = vmatpush2.msra.mxu0 0.0
    %2574 = vmatprep.subr.mxu0 0.0
    %2575 = vmatpush2.msra.mxu0 0.0
    %2576 = vmatprep.subr.mxu0 0.0
    %2577 = vmatpush2.msra.mxu0 0.0
    %2578 = vmatprep.subr.mxu0 0.0
    %2579 = vmatpush2.msra.mxu0 0.0
    %2580 = vmatprep.subr.mxu0 0.0
    %2581 = vmatpush2.msra.mxu0 0.0
    %2582 = vmatprep.subr.mxu0 0.0
    %2583 = vmatpush2.msra.mxu0 0.0
    %2584 = vmatprep.subr.mxu0 0.0
    %2585 = vmatpush2.msra.mxu0 0.0
    %2586 = vmatprep.subr.mxu0 0.0
    %2587 = vmatpush2.msra.mxu0 0.0
    %2588 = vmatprep.subr.mxu0 0.0
    %2589 = vmatpush2.msra.mxu0 0.0
    %2590 = vmatprep.subr.mxu0 0.0
    %2591 = vmatpush2.msra.mxu0 0.0
    %2592 = vmatprep.subr.mxu0 0.0
    %2593 = vmatpush2.msra.mxu0 0.0
    %2594 = vmatprep.mubr.f32.mxu0 0.0
    %v2595 = vand.u32 %v38, 4294901760
    %v2596 = vsub.f32 %v38, %v2595
    %v2597 = vand.u32 %v2596, 4294901760
    %2598 = vmatmul.mubr.f32.gmra.mxu0 %v2597
    %v2599 = vpop.f32.mrf.mxu0
    %v2600 = vadd.f32 %v2494, %v2599
    %v2601 = vpop.f32.mrf.mxu0
    %v2602 = vadd.f32 %v2496, %v2601
    %2603 = vdwg.mxu0
    %v2604 = vand.u32 %v299, 4294901760
    %v2605 = vsub.f32 %v299, %v2604
    %v2606 = vand.u32 %v2605, 4294901760
    %2607 = vmatprep.subr.mxu0 %v2606
    %v2608 = vand.u32 %v298, 4294901760
    %v2609 = vsub.f32 %v298, %v2608
    %v2610 = vand.u32 %v2609, 4294901760
    %2611 = vmatpush1.msra.mxu0 %v2610
    %v2612 = vand.u32 %v282, 4294901760
    %v2613 = vsub.f32 %v282, %v2612
    %v2614 = vand.u32 %v2613, 4294901760
    %2615 = vmatprep.subr.mxu0 %v2614
    %v2616 = vand.u32 %v281, 4294901760
    %v2617 = vsub.f32 %v281, %v2616
    %v2618 = vand.u32 %v2617, 4294901760
    %2619 = vmatpush1.msra.mxu0 %v2618
    %v2620 = vand.u32 %v265, 4294901760
    %v2621 = vsub.f32 %v265, %v2620
    %v2622 = vand.u32 %v2621, 4294901760
    %2623 = vmatprep.subr.mxu0 %v2622
    %v2624 = vand.u32 %v264, 4294901760
    %v2625 = vsub.f32 %v264, %v2624
    %v2626 = vand.u32 %v2625, 4294901760
    %2627 = vmatpush1.msra.mxu0 %v2626
    %v2628 = vand.u32 %v248, 4294901760
    %v2629 = vsub.f32 %v248, %v2628
    %v2630 = vand.u32 %v2629, 4294901760
    %2631 = vmatprep.subr.mxu0 %v2630
    %v2632 = vand.u32 %v247, 4294901760
    %v2633 = vsub.f32 %v247, %v2632
    %v2634 = vand.u32 %v2633, 4294901760
    %2635 = vmatpush1.msra.mxu0 %v2634
    %v2636 = vand.u32 %v231, 4294901760
    %v2637 = vsub.f32 %v231, %v2636
    %v2638 = vand.u32 %v2637, 4294901760
    %2639 = vmatprep.subr.mxu0 %v2638
    %v2640 = vand.u32 %v230, 4294901760
    %v2641 = vsub.f32 %v230, %v2640
    %v2642 = vand.u32 %v2641, 4294901760
    %2643 = vmatpush1.msra.mxu0 %v2642
    %v2644 = vand.u32 %v214, 4294901760
    %v2645 = vsub.f32 %v214, %v2644
    %v2646 = vand.u32 %v2645, 4294901760
    %2647 = vmatprep.subr.mxu0 %v2646
    %v2648 = vand.u32 %v213, 4294901760
    %v2649 = vsub.f32 %v213, %v2648
    %v2650 = vand.u32 %v2649, 4294901760
    %2651 = vmatpush1.msra.mxu0 %v2650
    %v2652 = vand.u32 %v197, 4294901760
    %v2653 = vsub.f32 %v197, %v2652
    %v2654 = vand.u32 %v2653, 4294901760
    %2655 = vmatprep.subr.mxu0 %v2654
    %v2656 = vand.u32 %v196, 4294901760
    %v2657 = vsub.f32 %v196, %v2656
    %v2658 = vand.u32 %v2657, 4294901760
    %2659 = vmatpush1.msra.mxu0 %v2658
    %v2660 = vand.u32 %v180, 4294901760
    %v2661 = vsub.f32 %v180, %v2660
    %v2662 = vand.u32 %v2661, 4294901760
    %2663 = vmatprep.subr.mxu0 %v2662
    %v2664 = vand.u32 %v179, 4294901760
    %v2665 = vsub.f32 %v179, %v2664
    %v2666 = vand.u32 %v2665, 4294901760
    %2667 = vmatpush1.msra.mxu0 %v2666
    %v2668 = vand.u32 %v163, 4294901760
    %v2669 = vsub.f32 %v163, %v2668
    %v2670 = vand.u32 %v2669, 4294901760
    %2671 = vmatprep.subr.mxu0 %v2670
    %v2672 = vand.u32 %v162, 4294901760
    %v2673 = vsub.f32 %v162, %v2672
    %v2674 = vand.u32 %v2673, 4294901760
    %2675 = vmatpush1.msra.mxu0 %v2674
    %v2676 = vand.u32 %v146, 4294901760
    %v2677 = vsub.f32 %v146, %v2676
    %v2678 = vand.u32 %v2677, 4294901760
    %2679 = vmatprep.subr.mxu0 %v2678
    %v2680 = vand.u32 %v145, 4294901760
    %v2681 = vsub.f32 %v145, %v2680
    %v2682 = vand.u32 %v2681, 4294901760
    %2683 = vmatpush1.msra.mxu0 %v2682
    %v2684 = vand.u32 %v129, 4294901760
    %v2685 = vsub.f32 %v129, %v2684
    %v2686 = vand.u32 %v2685, 4294901760
    %2687 = vmatprep.subr.mxu0 %v2686
    %v2688 = vand.u32 %v128, 4294901760
    %v2689 = vsub.f32 %v128, %v2688
    %v2690 = vand.u32 %v2689, 4294901760
    %2691 = vmatpush1.msra.mxu0 %v2690
    %v2692 = vand.u32 %v112, 4294901760
    %v2693 = vsub.f32 %v112, %v2692
    %v2694 = vand.u32 %v2693, 4294901760
    %2695 = vmatprep.subr.mxu0 %v2694
    %v2696 = vand.u32 %v111, 4294901760
    %v2697 = vsub.f32 %v111, %v2696
    %v2698 = vand.u32 %v2697, 4294901760
    %2699 = vmatpush1.msra.mxu0 %v2698
    %v2700 = vand.u32 %v95, 4294901760
    %v2701 = vsub.f32 %v95, %v2700
    %v2702 = vand.u32 %v2701, 4294901760
    %2703 = vmatprep.subr.mxu0 %v2702
    %v2704 = vand.u32 %v94, 4294901760
    %v2705 = vsub.f32 %v94, %v2704
    %v2706 = vand.u32 %v2705, 4294901760
    %2707 = vmatpush1.msra.mxu0 %v2706
    %v2708 = vand.u32 %v78, 4294901760
    %v2709 = vsub.f32 %v78, %v2708
    %v2710 = vand.u32 %v2709, 4294901760
    %2711 = vmatprep.subr.mxu0 %v2710
    %v2712 = vand.u32 %v77, 4294901760
    %v2713 = vsub.f32 %v77, %v2712
    %v2714 = vand.u32 %v2713, 4294901760
    %2715 = vmatpush1.msra.mxu0 %v2714
    %v2716 = vand.u32 %v61, 4294901760
    %v2717 = vsub.f32 %v61, %v2716
    %v2718 = vand.u32 %v2717, 4294901760
    %2719 = vmatprep.subr.mxu0 %v2718
    %v2720 = vand.u32 %v60, 4294901760
    %v2721 = vsub.f32 %v60, %v2720
    %v2722 = vand.u32 %v2721, 4294901760
    %2723 = vmatpush1.msra.mxu0 %v2722
    %v2724 = vand.u32 %v44, 4294901760
    %v2725 = vsub.f32 %v44, %v2724
    %v2726 = vand.u32 %v2725, 4294901760
    %2727 = vmatprep.subr.mxu0 %v2726
    %v2728 = vand.u32 %v43, 4294901760
    %v2729 = vsub.f32 %v43, %v2728
    %v2730 = vand.u32 %v2729, 4294901760
    %2731 = vmatpush1.msra.mxu0 %v2730
    %2732 = vmatprep.subr.mxu0 0.0
    %2733 = vmatpush2.msra.mxu0 0.0
    %2734 = vmatprep.subr.mxu0 0.0
    %2735 = vmatpush2.msra.mxu0 0.0
    %2736 = vmatprep.subr.mxu0 0.0
    %2737 = vmatpush2.msra.mxu0 0.0
    %2738 = vmatprep.subr.mxu0 0.0
    %2739 = vmatpush2.msra.mxu0 0.0
    %2740 = vmatprep.subr.mxu0 0.0
    %2741 = vmatpush2.msra.mxu0 0.0
    %2742 = vmatprep.subr.mxu0 0.0
    %2743 = vmatpush2.msra.mxu0 0.0
    %2744 = vmatprep.subr.mxu0 0.0
    %2745 = vmatpush2.msra.mxu0 0.0
    %2746 = vmatprep.subr.mxu0 0.0
    %2747 = vmatpush2.msra.mxu0 0.0
    %2748 = vmatprep.subr.mxu0 0.0
    %2749 = vmatpush2.msra.mxu0 0.0
    %2750 = vmatprep.subr.mxu0 0.0
    %2751 = vmatpush2.msra.mxu0 0.0
    %2752 = vmatprep.subr.mxu0 0.0
    %2753 = vmatpush2.msra.mxu0 0.0
    %2754 = vmatprep.subr.mxu0 0.0
    %2755 = vmatpush2.msra.mxu0 0.0
    %2756 = vmatprep.subr.mxu0 0.0
    %2757 = vmatpush2.msra.mxu0 0.0
    %2758 = vmatprep.subr.mxu0 0.0
    %2759 = vmatpush2.msra.mxu0 0.0
    %2760 = vmatprep.subr.mxu0 0.0
    %2761 = vmatpush2.msra.mxu0 0.0
    %2762 = vmatprep.subr.mxu0 0.0
    %2763 = vmatpush2.msra.mxu0 0.0
    %2764 = vmatprep.mubr.f32.mxu0 0.0
    %v2765 = vand.u32 %v38, 4294901760
    %2766 = vmatmul.mubr.f32.gmra.mxu0 %v2765
    %v2767 = vpop.f32.mrf.mxu0
    %v2768 = vadd.f32 %v2600, %v2767
    %v2769 = vpop.f32.mrf.mxu0
    %v2770 = vadd.f32 %v2602, %v2769
    %2771 = vdwg.mxu0
    %v2772 = vand.u32 %v299, 4294901760
    %2773 = vmatprep.subr.mxu0 %v2772
    %v2774 = vand.u32 %v298, 4294901760
    %2775 = vmatpush1.msra.mxu0 %v2774
    %v2776 = vand.u32 %v282, 4294901760
    %2777 = vmatprep.subr.mxu0 %v2776
    %v2778 = vand.u32 %v281, 4294901760
    %2779 = vmatpush1.msra.mxu0 %v2778
    %v2780 = vand.u32 %v265, 4294901760
    %2781 = vmatprep.subr.mxu0 %v2780
    %v2782 = vand.u32 %v264, 4294901760
    %2783 = vmatpush1.msra.mxu0 %v2782
    %v2784 = vand.u32 %v248, 4294901760
    %2785 = vmatprep.subr.mxu0 %v2784
    %v2786 = vand.u32 %v247, 4294901760
    %2787 = vmatpush1.msra.mxu0 %v2786
    %v2788 = vand.u32 %v231, 4294901760
    %2789 = vmatprep.subr.mxu0 %v2788
    %v2790 = vand.u32 %v230, 4294901760
    %2791 = vmatpush1.msra.mxu0 %v2790
    %v2792 = vand.u32 %v214, 4294901760
    %2793 = vmatprep.subr.mxu0 %v2792
    %v2794 = vand.u32 %v213, 4294901760
    %2795 = vmatpush1.msra.mxu0 %v2794
    %v2796 = vand.u32 %v197, 4294901760
    %2797 = vmatprep.subr.mxu0 %v2796
    %v2798 = vand.u32 %v196, 4294901760
    %2799 = vmatpush1.msra.mxu0 %v2798
    %v2800 = vand.u32 %v180, 4294901760
    %2801 = vmatprep.subr.mxu0 %v2800
    %v2802 = vand.u32 %v179, 4294901760
    %2803 = vmatpush1.msra.mxu0 %v2802
    %v2804 = vand.u32 %v163, 4294901760
    %2805 = vmatprep.subr.mxu0 %v2804
    %v2806 = vand.u32 %v162, 4294901760
    %2807 = vmatpush1.msra.mxu0 %v2806
    %v2808 = vand.u32 %v146, 4294901760
    %2809 = vmatprep.subr.mxu0 %v2808
    %v2810 = vand.u32 %v145, 4294901760
    %2811 = vmatpush1.msra.mxu0 %v2810
    %v2812 = vand.u32 %v129, 4294901760
    %2813 = vmatprep.subr.mxu0 %v2812
    %v2814 = vand.u32 %v128, 4294901760
    %2815 = vmatpush1.msra.mxu0 %v2814
    %v2816 = vand.u32 %v112, 4294901760
    %2817 = vmatprep.subr.mxu0 %v2816
    %v2818 = vand.u32 %v111, 4294901760
    %2819 = vmatpush1.msra.mxu0 %v2818
    %v2820 = vand.u32 %v95, 4294901760
    %2821 = vmatprep.subr.mxu0 %v2820
    %v2822 = vand.u32 %v94, 4294901760
    %2823 = vmatpush1.msra.mxu0 %v2822
    %v2824 = vand.u32 %v78, 4294901760
    %2825 = vmatprep.subr.mxu0 %v2824
    %v2826 = vand.u32 %v77, 4294901760
    %2827 = vmatpush1.msra.mxu0 %v2826
    %v2828 = vand.u32 %v61, 4294901760
    %2829 = vmatprep.subr.mxu0 %v2828
    %v2830 = vand.u32 %v60, 4294901760
    %2831 = vmatpush1.msra.mxu0 %v2830
    %v2832 = vand.u32 %v44, 4294901760
    %2833 = vmatprep.subr.mxu0 %v2832
    %v2834 = vand.u32 %v43, 4294901760
    %2835 = vmatpush1.msra.mxu0 %v2834
    %2836 = vmatprep.subr.mxu0 0.0
    %2837 = vmatpush2.msra.mxu0 0.0
    %2838 = vmatprep.subr.mxu0 0.0
    %2839 = vmatpush2.msra.mxu0 0.0
    %2840 = vmatprep.subr.mxu0 0.0
    %2841 = vmatpush2.msra.mxu0 0.0
    %2842 = vmatprep.subr.mxu0 0.0
    %2843 = vmatpush2.msra.mxu0 0.0
    %2844 = vmatprep.subr.mxu0 0.0
    %2845 = vmatpush2.msra.mxu0 0.0
    %2846 = vmatprep.subr.mxu0 0.0
    %2847 = vmatpush2.msra.mxu0 0.0
    %2848 = vmatprep.subr.mxu0 0.0
    %2849 = vmatpush2.msra.mxu0 0.0
    %2850 = vmatprep.subr.mxu0 0.0
    %2851 = vmatpush2.msra.mxu0 0.0
    %2852 = vmatprep.subr.mxu0 0.0
    %2853 = vmatpush2.msra.mxu0 0.0
    %2854 = vmatprep.subr.mxu0 0.0
    %2855 = vmatpush2.msra.mxu0 0.0
    %2856 = vmatprep.subr.mxu0 0.0
    %2857 = vmatpush2.msra.mxu0 0.0
    %2858 = vmatprep.subr.mxu0 0.0
    %2859 = vmatpush2.msra.mxu0 0.0
    %2860 = vmatprep.subr.mxu0 0.0
    %2861 = vmatpush2.msra.mxu0 0.0
    %2862 = vmatprep.subr.mxu0 0.0
    %2863 = vmatpush2.msra.mxu0 0.0
    %2864 = vmatprep.subr.mxu0 0.0
    %2865 = vmatpush2.msra.mxu0 0.0
    %2866 = vmatprep.subr.mxu0 0.0
    %2867 = vmatpush2.msra.mxu0 0.0
    %2868 = vmatprep.mubr.f32.mxu0 0.0
    %v2869 = vand.u32 %v38, 4294901760
    %2870 = vmatmul.mubr.f32.gmra.mxu0 %v2869
    %v2871 = vpop.f32.mrf.mxu0
    %v2872 = vadd.f32 %v2768, %v2871
    %v2873 = vpop.f32.mrf.mxu0
    %v2874 = vadd.f32 %v2770, %v2873
    %2875 = vdwg.mxu0
    %v2876 = vand.u32 %v301, 4294901760
    %2877 = vmatprep.subr.mxu0 %v2876
    %v2878 = vand.u32 %v300, 4294901760
    %2879 = vmatpush1.msra.mxu0 %v2878
    %v2880 = vand.u32 %v284, 4294901760
    %2881 = vmatprep.subr.mxu0 %v2880
    %v2882 = vand.u32 %v283, 4294901760
    %2883 = vmatpush1.msra.mxu0 %v2882
    %v2884 = vand.u32 %v267, 4294901760
    %2885 = vmatprep.subr.mxu0 %v2884
    %v2886 = vand.u32 %v266, 4294901760
    %2887 = vmatpush1.msra.mxu0 %v2886
    %v2888 = vand.u32 %v250, 4294901760
    %2889 = vmatprep.subr.mxu0 %v2888
    %v2890 = vand.u32 %v249, 4294901760
    %2891 = vmatpush1.msra.mxu0 %v2890
    %v2892 = vand.u32 %v233, 4294901760
    %2893 = vmatprep.subr.mxu0 %v2892
    %v2894 = vand.u32 %v232, 4294901760
    %2895 = vmatpush1.msra.mxu0 %v2894
    %v2896 = vand.u32 %v216, 4294901760
    %2897 = vmatprep.subr.mxu0 %v2896
    %v2898 = vand.u32 %v215, 4294901760
    %2899 = vmatpush1.msra.mxu0 %v2898
    %v2900 = vand.u32 %v199, 4294901760
    %2901 = vmatprep.subr.mxu0 %v2900
    %v2902 = vand.u32 %v198, 4294901760
    %2903 = vmatpush1.msra.mxu0 %v2902
    %v2904 = vand.u32 %v182, 4294901760
    %2905 = vmatprep.subr.mxu0 %v2904
    %v2906 = vand.u32 %v181, 4294901760
    %2907 = vmatpush1.msra.mxu0 %v2906
    %v2908 = vand.u32 %v165, 4294901760
    %2909 = vmatprep.subr.mxu0 %v2908
    %v2910 = vand.u32 %v164, 4294901760
    %2911 = vmatpush1.msra.mxu0 %v2910
    %v2912 = vand.u32 %v148, 4294901760
    %2913 = vmatprep.subr.mxu0 %v2912
    %v2914 = vand.u32 %v147, 4294901760
    %2915 = vmatpush1.msra.mxu0 %v2914
    %v2916 = vand.u32 %v131, 4294901760
    %2917 = vmatprep.subr.mxu0 %v2916
    %v2918 = vand.u32 %v130, 4294901760
    %2919 = vmatpush1.msra.mxu0 %v2918
    %v2920 = vand.u32 %v114, 4294901760
    %2921 = vmatprep.subr.mxu0 %v2920
    %v2922 = vand.u32 %v113, 4294901760
    %2923 = vmatpush1.msra.mxu0 %v2922
    %v2924 = vand.u32 %v97, 4294901760
    %2925 = vmatprep.subr.mxu0 %v2924
    %v2926 = vand.u32 %v96, 4294901760
    %2927 = vmatpush1.msra.mxu0 %v2926
    %v2928 = vand.u32 %v80, 4294901760
    %2929 = vmatprep.subr.mxu0 %v2928
    %v2930 = vand.u32 %v79, 4294901760
    %2931 = vmatpush1.msra.mxu0 %v2930
    %v2932 = vand.u32 %v63, 4294901760
    %2933 = vmatprep.subr.mxu0 %v2932
    %v2934 = vand.u32 %v62, 4294901760
    %2935 = vmatpush1.msra.mxu0 %v2934
    %v2936 = vand.u32 %v46, 4294901760
    %2937 = vmatprep.subr.mxu0 %v2936
    %v2938 = vand.u32 %v45, 4294901760
    %2939 = vmatpush1.msra.mxu0 %v2938
    %2940 = vmatprep.subr.mxu0 0.0
    %2941 = vmatpush2.msra.mxu0 0.0
    %2942 = vmatprep.subr.mxu0 0.0
    %2943 = vmatpush2.msra.mxu0 0.0
    %2944 = vmatprep.subr.mxu0 0.0
    %2945 = vmatpush2.msra.mxu0 0.0
    %2946 = vmatprep.subr.mxu0 0.0
    %2947 = vmatpush2.msra.mxu0 0.0
    %2948 = vmatprep.subr.mxu0 0.0
    %2949 = vmatpush2.msra.mxu0 0.0
    %2950 = vmatprep.subr.mxu0 0.0
    %2951 = vmatpush2.msra.mxu0 0.0
    %2952 = vmatprep.subr.mxu0 0.0
    %2953 = vmatpush2.msra.mxu0 0.0
    %2954 = vmatprep.subr.mxu0 0.0
    %2955 = vmatpush2.msra.mxu0 0.0
    %2956 = vmatprep.subr.mxu0 0.0
    %2957 = vmatpush2.msra.mxu0 0.0
    %2958 = vmatprep.subr.mxu0 0.0
    %2959 = vmatpush2.msra.mxu0 0.0
    %2960 = vmatprep.subr.mxu0 0.0
    %2961 = vmatpush2.msra.mxu0 0.0
    %2962 = vmatprep.subr.mxu0 0.0
    %2963 = vmatpush2.msra.mxu0 0.0
    %2964 = vmatprep.subr.mxu0 0.0
    %2965 = vmatpush2.msra.mxu0 0.0
    %2966 = vmatprep.subr.mxu0 0.0
    %2967 = vmatpush2.msra.mxu0 0.0
    %2968 = vmatprep.subr.mxu0 0.0
    %2969 = vmatpush2.msra.mxu0 0.0
    %2970 = vmatprep.subr.mxu0 0.0
    %2971 = vmatpush2.msra.mxu0 0.0
    %2972 = vmatprep.mubr.f32.mxu0 0.0
    %v2973 = vand.u32 %v38, 4294901760
    %v2974 = vsub.f32 %v38, %v2973
    %v2975 = vand.u32 %v2974, 4294901760
    %v2976 = vsub.f32 %v2974, %v2975
    %v2977 = vand.u32 %v2976, 4294901760
    %2978 = vmatmul.mubr.f32.gmra.mxu0 %v2977
    %v2979 = vpop.f32.mrf.mxu0
    %v2980 = vadd.f32 0.0, %v2979
    %v2981 = vpop.f32.mrf.mxu0
    %v2982 = vadd.f32 0.0, %v2981
    %2983 = vdwg.mxu0
    %v2984 = vand.u32 %v301, 4294901760
    %v2985 = vsub.f32 %v301, %v2984
    %v2986 = vand.u32 %v2985, 4294901760
    %v2987 = vsub.f32 %v2985, %v2986
    %v2988 = vand.u32 %v2987, 4294901760
    %2989 = vmatprep.subr.mxu0 %v2988
    %v2990 = vand.u32 %v300, 4294901760
    %v2991 = vsub.f32 %v300, %v2990
    %v2992 = vand.u32 %v2991, 4294901760
    %v2993 = vsub.f32 %v2991, %v2992
    %v2994 = vand.u32 %v2993, 4294901760
    %2995 = vmatpush1.msra.mxu0 %v2994
    %v2996 = vand.u32 %v284, 4294901760
    %v2997 = vsub.f32 %v284, %v2996
    %v2998 = vand.u32 %v2997, 4294901760
    %v2999 = vsub.f32 %v2997, %v2998
    %v3000 = vand.u32 %v2999, 4294901760
    %3001 = vmatprep.subr.mxu0 %v3000
    %v3002 = vand.u32 %v283, 4294901760
    %v3003 = vsub.f32 %v283, %v3002
    %v3004 = vand.u32 %v3003, 4294901760
    %v3005 = vsub.f32 %v3003, %v3004
    %v3006 = vand.u32 %v3005, 4294901760
    %3007 = vmatpush1.msra.mxu0 %v3006
    %v3008 = vand.u32 %v267, 4294901760
    %v3009 = vsub.f32 %v267, %v3008
    %v3010 = vand.u32 %v3009, 4294901760
    %v3011 = vsub.f32 %v3009, %v3010
    %v3012 = vand.u32 %v3011, 4294901760
    %3013 = vmatprep.subr.mxu0 %v3012
    %v3014 = vand.u32 %v266, 4294901760
    %v3015 = vsub.f32 %v266, %v3014
    %v3016 = vand.u32 %v3015, 4294901760
    %v3017 = vsub.f32 %v3015, %v3016
    %v3018 = vand.u32 %v3017, 4294901760
    %3019 = vmatpush1.msra.mxu0 %v3018
    %v3020 = vand.u32 %v250, 4294901760
    %v3021 = vsub.f32 %v250, %v3020
    %v3022 = vand.u32 %v3021, 4294901760
    %v3023 = vsub.f32 %v3021, %v3022
    %v3024 = vand.u32 %v3023, 4294901760
    %3025 = vmatprep.subr.mxu0 %v3024
    %v3026 = vand.u32 %v249, 4294901760
    %v3027 = vsub.f32 %v249, %v3026
    %v3028 = vand.u32 %v3027, 4294901760
    %v3029 = vsub.f32 %v3027, %v3028
    %v3030 = vand.u32 %v3029, 4294901760
    %3031 = vmatpush1.msra.mxu0 %v3030
    %v3032 = vand.u32 %v233, 4294901760
    %v3033 = vsub.f32 %v233, %v3032
    %v3034 = vand.u32 %v3033, 4294901760
    %v3035 = vsub.f32 %v3033, %v3034
    %v3036 = vand.u32 %v3035, 4294901760
    %3037 = vmatprep.subr.mxu0 %v3036
    %v3038 = vand.u32 %v232, 4294901760
    %v3039 = vsub.f32 %v232, %v3038
    %v3040 = vand.u32 %v3039, 4294901760
    %v3041 = vsub.f32 %v3039, %v3040
    %v3042 = vand.u32 %v3041, 4294901760
    %3043 = vmatpush1.msra.mxu0 %v3042
    %v3044 = vand.u32 %v216, 4294901760
    %v3045 = vsub.f32 %v216, %v3044
    %v3046 = vand.u32 %v3045, 4294901760
    %v3047 = vsub.f32 %v3045, %v3046
    %v3048 = vand.u32 %v3047, 4294901760
    %3049 = vmatprep.subr.mxu0 %v3048
    %v3050 = vand.u32 %v215, 4294901760
    %v3051 = vsub.f32 %v215, %v3050
    %v3052 = vand.u32 %v3051, 4294901760
    %v3053 = vsub.f32 %v3051, %v3052
    %v3054 = vand.u32 %v3053, 4294901760
    %3055 = vmatpush1.msra.mxu0 %v3054
    %v3056 = vand.u32 %v199, 4294901760
    %v3057 = vsub.f32 %v199, %v3056
    %v3058 = vand.u32 %v3057, 4294901760
    %v3059 = vsub.f32 %v3057, %v3058
    %v3060 = vand.u32 %v3059, 4294901760
    %3061 = vmatprep.subr.mxu0 %v3060
    %v3062 = vand.u32 %v198, 4294901760
    %v3063 = vsub.f32 %v198, %v3062
    %v3064 = vand.u32 %v3063, 4294901760
    %v3065 = vsub.f32 %v3063, %v3064
    %v3066 = vand.u32 %v3065, 4294901760
    %3067 = vmatpush1.msra.mxu0 %v3066
    %v3068 = vand.u32 %v182, 4294901760
    %v3069 = vsub.f32 %v182, %v3068
    %v3070 = vand.u32 %v3069, 4294901760
    %v3071 = vsub.f32 %v3069, %v3070
    %v3072 = vand.u32 %v3071, 4294901760
    %3073 = vmatprep.subr.mxu0 %v3072
    %v3074 = vand.u32 %v181, 4294901760
    %v3075 = vsub.f32 %v181, %v3074
    %v3076 = vand.u32 %v3075, 4294901760
    %v3077 = vsub.f32 %v3075, %v3076
    %v3078 = vand.u32 %v3077, 4294901760
    %3079 = vmatpush1.msra.mxu0 %v3078
    %v3080 = vand.u32 %v165, 4294901760
    %v3081 = vsub.f32 %v165, %v3080
    %v3082 = vand.u32 %v3081, 4294901760
    %v3083 = vsub.f32 %v3081, %v3082
    %v3084 = vand.u32 %v3083, 4294901760
    %3085 = vmatprep.subr.mxu0 %v3084
    %v3086 = vand.u32 %v164, 4294901760
    %v3087 = vsub.f32 %v164, %v3086
    %v3088 = vand.u32 %v3087, 4294901760
    %v3089 = vsub.f32 %v3087, %v3088
    %v3090 = vand.u32 %v3089, 4294901760
    %3091 = vmatpush1.msra.mxu0 %v3090
    %v3092 = vand.u32 %v148, 4294901760
    %v3093 = vsub.f32 %v148, %v3092
    %v3094 = vand.u32 %v3093, 4294901760
    %v3095 = vsub.f32 %v3093, %v3094
    %v3096 = vand.u32 %v3095, 4294901760
    %3097 = vmatprep.subr.mxu0 %v3096
    %v3098 = vand.u32 %v147, 4294901760
    %v3099 = vsub.f32 %v147, %v3098
    %v3100 = vand.u32 %v3099, 4294901760
    %v3101 = vsub.f32 %v3099, %v3100
    %v3102 = vand.u32 %v3101, 4294901760
    %3103 = vmatpush1.msra.mxu0 %v3102
    %v3104 = vand.u32 %v131, 4294901760
    %v3105 = vsub.f32 %v131, %v3104
    %v3106 = vand.u32 %v3105, 4294901760
    %v3107 = vsub.f32 %v3105, %v3106
    %v3108 = vand.u32 %v3107, 4294901760
    %3109 = vmatprep.subr.mxu0 %v3108
    %v3110 = vand.u32 %v130, 4294901760
    %v3111 = vsub.f32 %v130, %v3110
    %v3112 = vand.u32 %v3111, 4294901760
    %v3113 = vsub.f32 %v3111, %v3112
    %v3114 = vand.u32 %v3113, 4294901760
    %3115 = vmatpush1.msra.mxu0 %v3114
    %v3116 = vand.u32 %v114, 4294901760
    %v3117 = vsub.f32 %v114, %v3116
    %v3118 = vand.u32 %v3117, 4294901760
    %v3119 = vsub.f32 %v3117, %v3118
    %v3120 = vand.u32 %v3119, 4294901760
    %3121 = vmatprep.subr.mxu0 %v3120
    %v3122 = vand.u32 %v113, 4294901760
    %v3123 = vsub.f32 %v113, %v3122
    %v3124 = vand.u32 %v3123, 4294901760
    %v3125 = vsub.f32 %v3123, %v3124
    %v3126 = vand.u32 %v3125, 4294901760
    %3127 = vmatpush1.msra.mxu0 %v3126
    %v3128 = vand.u32 %v97, 4294901760
    %v3129 = vsub.f32 %v97, %v3128
    %v3130 = vand.u32 %v3129, 4294901760
    %v3131 = vsub.f32 %v3129, %v3130
    %v3132 = vand.u32 %v3131, 4294901760
    %3133 = vmatprep.subr.mxu0 %v3132
    %v3134 = vand.u32 %v96, 4294901760
    %v3135 = vsub.f32 %v96, %v3134
    %v3136 = vand.u32 %v3135, 4294901760
    %v3137 = vsub.f32 %v3135, %v3136
    %v3138 = vand.u32 %v3137, 4294901760
    %3139 = vmatpush1.msra.mxu0 %v3138
    %v3140 = vand.u32 %v80, 4294901760
    %v3141 = vsub.f32 %v80, %v3140
    %v3142 = vand.u32 %v3141, 4294901760
    %v3143 = vsub.f32 %v3141, %v3142
    %v3144 = vand.u32 %v3143, 4294901760
    %3145 = vmatprep.subr.mxu0 %v3144
    %v3146 = vand.u32 %v79, 4294901760
    %v3147 = vsub.f32 %v79, %v3146
    %v3148 = vand.u32 %v3147, 4294901760
    %v3149 = vsub.f32 %v3147, %v3148
    %v3150 = vand.u32 %v3149, 4294901760
    %3151 = vmatpush1.msra.mxu0 %v3150
    %v3152 = vand.u32 %v63, 4294901760
    %v3153 = vsub.f32 %v63, %v3152
    %v3154 = vand.u32 %v3153, 4294901760
    %v3155 = vsub.f32 %v3153, %v3154
    %v3156 = vand.u32 %v3155, 4294901760
    %3157 = vmatprep.subr.mxu0 %v3156
    %v3158 = vand.u32 %v62, 4294901760
    %v3159 = vsub.f32 %v62, %v3158
    %v3160 = vand.u32 %v3159, 4294901760
    %v3161 = vsub.f32 %v3159, %v3160
    %v3162 = vand.u32 %v3161, 4294901760
    %3163 = vmatpush1.msra.mxu0 %v3162
    %v3164 = vand.u32 %v46, 4294901760
    %v3165 = vsub.f32 %v46, %v3164
    %v3166 = vand.u32 %v3165, 4294901760
    %v3167 = vsub.f32 %v3165, %v3166
    %v3168 = vand.u32 %v3167, 4294901760
    %3169 = vmatprep.subr.mxu0 %v3168
    %v3170 = vand.u32 %v45, 4294901760
    %v3171 = vsub.f32 %v45, %v3170
    %v3172 = vand.u32 %v3171, 4294901760
    %v3173 = vsub.f32 %v3171, %v3172
    %v3174 = vand.u32 %v3173, 4294901760
    %3175 = vmatpush1.msra.mxu0 %v3174
    %3176 = vmatprep.subr.mxu0 0.0
    %3177 = vmatpush2.msra.mxu0 0.0
    %3178 = vmatprep.subr.mxu0 0.0
    %3179 = vmatpush2.msra.mxu0 0.0
    %3180 = vmatprep.subr.mxu0 0.0
    %3181 = vmatpush2.msra.mxu0 0.0
    %3182 = vmatprep.subr.mxu0 0.0
    %3183 = vmatpush2.msra.mxu0 0.0
    %3184 = vmatprep.subr.mxu0 0.0
    %3185 = vmatpush2.msra.mxu0 0.0
    %3186 = vmatprep.subr.mxu0 0.0
    %3187 = vmatpush2.msra.mxu0 0.0
    %3188 = vmatprep.subr.mxu0 0.0
    %3189 = vmatpush2.msra.mxu0 0.0
    %3190 = vmatprep.subr.mxu0 0.0
    %3191 = vmatpush2.msra.mxu0 0.0
    %3192 = vmatprep.subr.mxu0 0.0
    %3193 = vmatpush2.msra.mxu0 0.0
    %3194 = vmatprep.subr.mxu0 0.0
    %3195 = vmatpush2.msra.mxu0 0.0
    %3196 = vmatprep.subr.mxu0 0.0
    %3197 = vmatpush2.msra.mxu0 0.0
    %3198 = vmatprep.subr.mxu0 0.0
    %3199 = vmatpush2.msra.mxu0 0.0
    %3200 = vmatprep.subr.mxu0 0.0
    %3201 = vmatpush2.msra.mxu0 0.0
    %3202 = vmatprep.subr.mxu0 0.0
    %3203 = vmatpush2.msra.mxu0 0.0
    %3204 = vmatprep.subr.mxu0 0.0
    %3205 = vmatpush2.msra.mxu0 0.0
    %3206 = vmatprep.subr.mxu0 0.0
    %3207 = vmatpush2.msra.mxu0 0.0
    %3208 = vmatprep.mubr.f32.mxu0 0.0
    %v3209 = vand.u32 %v38, 4294901760
    %3210 = vmatmul.mubr.f32.gmra.mxu0 %v3209
    %v3211 = vpop.f32.mrf.mxu0
    %v3212 = vadd.f32 %v2980, %v3211
    %v3213 = vpop.f32.mrf.mxu0
    %v3214 = vadd.f32 %v2982, %v3213
    %3215 = vdwg.mxu0
    %v3216 = vand.u32 %v301, 4294901760
    %v3217 = vsub.f32 %v301, %v3216
    %3218 = vmatprep.subr.mxu0 %v3217
    %v3219 = vand.u32 %v300, 4294901760
    %v3220 = vsub.f32 %v300, %v3219
    %3221 = vmatpush1.msra.mxu0 %v3220
    %v3222 = vand.u32 %v284, 4294901760
    %v3223 = vsub.f32 %v284, %v3222
    %3224 = vmatprep.subr.mxu0 %v3223
    %v3225 = vand.u32 %v283, 4294901760
    %v3226 = vsub.f32 %v283, %v3225
    %3227 = vmatpush1.msra.mxu0 %v3226
    %v3228 = vand.u32 %v267, 4294901760
    %v3229 = vsub.f32 %v267, %v3228
    %3230 = vmatprep.subr.mxu0 %v3229
    %v3231 = vand.u32 %v266, 4294901760
    %v3232 = vsub.f32 %v266, %v3231
    %3233 = vmatpush1.msra.mxu0 %v3232
    %v3234 = vand.u32 %v250, 4294901760
    %v3235 = vsub.f32 %v250, %v3234
    %3236 = vmatprep.subr.mxu0 %v3235
    %v3237 = vand.u32 %v249, 4294901760
    %v3238 = vsub.f32 %v249, %v3237
    %3239 = vmatpush1.msra.mxu0 %v3238
    %v3240 = vand.u32 %v233, 4294901760
    %v3241 = vsub.f32 %v233, %v3240
    %3242 = vmatprep.subr.mxu0 %v3241
    %v3243 = vand.u32 %v232, 4294901760
    %v3244 = vsub.f32 %v232, %v3243
    %3245 = vmatpush1.msra.mxu0 %v3244
    %v3246 = vand.u32 %v216, 4294901760
    %v3247 = vsub.f32 %v216, %v3246
    %3248 = vmatprep.subr.mxu0 %v3247
    %v3249 = vand.u32 %v215, 4294901760
    %v3250 = vsub.f32 %v215, %v3249
    %3251 = vmatpush1.msra.mxu0 %v3250
    %v3252 = vand.u32 %v199, 4294901760
    %v3253 = vsub.f32 %v199, %v3252
    %3254 = vmatprep.subr.mxu0 %v3253
    %v3255 = vand.u32 %v198, 4294901760
    %v3256 = vsub.f32 %v198, %v3255
    %3257 = vmatpush1.msra.mxu0 %v3256
    %v3258 = vand.u32 %v182, 4294901760
    %v3259 = vsub.f32 %v182, %v3258
    %3260 = vmatprep.subr.mxu0 %v3259
    %v3261 = vand.u32 %v181, 4294901760
    %v3262 = vsub.f32 %v181, %v3261
    %3263 = vmatpush1.msra.mxu0 %v3262
    %v3264 = vand.u32 %v165, 4294901760
    %v3265 = vsub.f32 %v165, %v3264
    %3266 = vmatprep.subr.mxu0 %v3265
    %v3267 = vand.u32 %v164, 4294901760
    %v3268 = vsub.f32 %v164, %v3267
    %3269 = vmatpush1.msra.mxu0 %v3268
    %v3270 = vand.u32 %v148, 4294901760
    %v3271 = vsub.f32 %v148, %v3270
    %3272 = vmatprep.subr.mxu0 %v3271
    %v3273 = vand.u32 %v147, 4294901760
    %v3274 = vsub.f32 %v147, %v3273
    %3275 = vmatpush1.msra.mxu0 %v3274
    %v3276 = vand.u32 %v131, 4294901760
    %v3277 = vsub.f32 %v131, %v3276
    %3278 = vmatprep.subr.mxu0 %v3277
    %v3279 = vand.u32 %v130, 4294901760
    %v3280 = vsub.f32 %v130, %v3279
    %3281 = vmatpush1.msra.mxu0 %v3280
    %v3282 = vand.u32 %v114, 4294901760
    %v3283 = vsub.f32 %v114, %v3282
    %3284 = vmatprep.subr.mxu0 %v3283
    %v3285 = vand.u32 %v113, 4294901760
    %v3286 = vsub.f32 %v113, %v3285
    %3287 = vmatpush1.msra.mxu0 %v3286
    %v3288 = vand.u32 %v97, 4294901760
    %v3289 = vsub.f32 %v97, %v3288
    %3290 = vmatprep.subr.mxu0 %v3289
    %v3291 = vand.u32 %v96, 4294901760
    %v3292 = vsub.f32 %v96, %v3291
    %3293 = vmatpush1.msra.mxu0 %v3292
    %v3294 = vand.u32 %v80, 4294901760
    %v3295 = vsub.f32 %v80, %v3294
    %3296 = vmatprep.subr.mxu0 %v3295
    %v3297 = vand.u32 %v79, 4294901760
    %v3298 = vsub.f32 %v79, %v3297
    %3299 = vmatpush1.msra.mxu0 %v3298
    %v3300 = vand.u32 %v63, 4294901760
    %v3301 = vsub.f32 %v63, %v3300
    %3302 = vmatprep.subr.mxu0 %v3301
    %v3303 = vand.u32 %v62, 4294901760
    %v3304 = vsub.f32 %v62, %v3303
    %3305 = vmatpush1.msra.mxu0 %v3304
    %v3306 = vand.u32 %v46, 4294901760
    %v3307 = vsub.f32 %v46, %v3306
    %3308 = vmatprep.subr.mxu0 %v3307
    %v3309 = vand.u32 %v45, 4294901760
    %v3310 = vsub.f32 %v45, %v3309
    %3311 = vmatpush1.msra.mxu0 %v3310
    %3312 = vmatprep.subr.mxu0 0.0
    %3313 = vmatpush2.msra.mxu0 0.0
    %3314 = vmatprep.subr.mxu0 0.0
    %3315 = vmatpush2.msra.mxu0 0.0
    %3316 = vmatprep.subr.mxu0 0.0
    %3317 = vmatpush2.msra.mxu0 0.0
    %3318 = vmatprep.subr.mxu0 0.0
    %3319 = vmatpush2.msra.mxu0 0.0
    %3320 = vmatprep.subr.mxu0 0.0
    %3321 = vmatpush2.msra.mxu0 0.0
    %3322 = vmatprep.subr.mxu0 0.0
    %3323 = vmatpush2.msra.mxu0 0.0
    %3324 = vmatprep.subr.mxu0 0.0
    %3325 = vmatpush2.msra.mxu0 0.0
    %3326 = vmatprep.subr.mxu0 0.0
    %3327 = vmatpush2.msra.mxu0 0.0
    %3328 = vmatprep.subr.mxu0 0.0
    %3329 = vmatpush2.msra.mxu0 0.0
    %3330 = vmatprep.subr.mxu0 0.0
    %3331 = vmatpush2.msra.mxu0 0.0
    %3332 = vmatprep.subr.mxu0 0.0
    %3333 = vmatpush2.msra.mxu0 0.0
    %3334 = vmatprep.subr.mxu0 0.0
    %3335 = vmatpush2.msra.mxu0 0.0
    %3336 = vmatprep.subr.mxu0 0.0
    %3337 = vmatpush2.msra.mxu0 0.0
    %3338 = vmatprep.subr.mxu0 0.0
    %3339 = vmatpush2.msra.mxu0 0.0
    %3340 = vmatprep.subr.mxu0 0.0
    %3341 = vmatpush2.msra.mxu0 0.0
    %3342 = vmatprep.subr.mxu0 0.0
    %3343 = vmatpush2.msra.mxu0 0.0
    %3344 = vmatprep.mubr.f32.mxu0 0.0
    %v3345 = vand.u32 %v38, 4294901760
    %v3346 = vsub.f32 %v38, %v3345
    %3347 = vmatmul.mubr.f32.gmra.mxu0 %v3346
    %v3348 = vpop.f32.mrf.mxu0
    %v3349 = vadd.f32 %v3212, %v3348
    %v3350 = vpop.f32.mrf.mxu0
    %v3351 = vadd.f32 %v3214, %v3350
    %3352 = vdwg.mxu0
    %v3353 = vand.u32 %v301, 4294901760
    %3354 = vmatprep.subr.mxu0 %v3353
    %v3355 = vand.u32 %v300, 4294901760
    %3356 = vmatpush1.msra.mxu0 %v3355
    %v3357 = vand.u32 %v284, 4294901760
    %3358 = vmatprep.subr.mxu0 %v3357
    %v3359 = vand.u32 %v283, 4294901760
    %3360 = vmatpush1.msra.mxu0 %v3359
    %v3361 = vand.u32 %v267, 4294901760
    %3362 = vmatprep.subr.mxu0 %v3361
    %v3363 = vand.u32 %v266, 4294901760
    %3364 = vmatpush1.msra.mxu0 %v3363
    %v3365 = vand.u32 %v250, 4294901760
    %3366 = vmatprep.subr.mxu0 %v3365
    %v3367 = vand.u32 %v249, 4294901760
    %3368 = vmatpush1.msra.mxu0 %v3367
    %v3369 = vand.u32 %v233, 4294901760
    %3370 = vmatprep.subr.mxu0 %v3369
    %v3371 = vand.u32 %v232, 4294901760
    %3372 = vmatpush1.msra.mxu0 %v3371
    %v3373 = vand.u32 %v216, 4294901760
    %3374 = vmatprep.subr.mxu0 %v3373
    %v3375 = vand.u32 %v215, 4294901760
    %3376 = vmatpush1.msra.mxu0 %v3375
    %v3377 = vand.u32 %v199, 4294901760
    %3378 = vmatprep.subr.mxu0 %v3377
    %v3379 = vand.u32 %v198, 4294901760
    %3380 = vmatpush1.msra.mxu0 %v3379
    %v3381 = vand.u32 %v182, 4294901760
    %3382 = vmatprep.subr.mxu0 %v3381
    %v3383 = vand.u32 %v181, 4294901760
    %3384 = vmatpush1.msra.mxu0 %v3383
    %v3385 = vand.u32 %v165, 4294901760
    %3386 = vmatprep.subr.mxu0 %v3385
    %v3387 = vand.u32 %v164, 4294901760
    %3388 = vmatpush1.msra.mxu0 %v3387
    %v3389 = vand.u32 %v148, 4294901760
    %3390 = vmatprep.subr.mxu0 %v3389
    %v3391 = vand.u32 %v147, 4294901760
    %3392 = vmatpush1.msra.mxu0 %v3391
    %v3393 = vand.u32 %v131, 4294901760
    %3394 = vmatprep.subr.mxu0 %v3393
    %v3395 = vand.u32 %v130, 4294901760
    %3396 = vmatpush1.msra.mxu0 %v3395
    %v3397 = vand.u32 %v114, 4294901760
    %3398 = vmatprep.subr.mxu0 %v3397
    %v3399 = vand.u32 %v113, 4294901760
    %3400 = vmatpush1.msra.mxu0 %v3399
    %v3401 = vand.u32 %v97, 4294901760
    %3402 = vmatprep.subr.mxu0 %v3401
    %v3403 = vand.u32 %v96, 4294901760
    %3404 = vmatpush1.msra.mxu0 %v3403
    %v3405 = vand.u32 %v80, 4294901760
    %3406 = vmatprep.subr.mxu0 %v3405
    %v3407 = vand.u32 %v79, 4294901760
    %3408 = vmatpush1.msra.mxu0 %v3407
    %v3409 = vand.u32 %v63, 4294901760
    %3410 = vmatprep.subr.mxu0 %v3409
    %v3411 = vand.u32 %v62, 4294901760
    %3412 = vmatpush1.msra.mxu0 %v3411
    %v3413 = vand.u32 %v46, 4294901760
    %3414 = vmatprep.subr.mxu0 %v3413
    %v3415 = vand.u32 %v45, 4294901760
    %3416 = vmatpush1.msra.mxu0 %v3415
    %3417 = vmatprep.subr.mxu0 0.0
    %3418 = vmatpush2.msra.mxu0 0.0
    %3419 = vmatprep.subr.mxu0 0.0
    %3420 = vmatpush2.msra.mxu0 0.0
    %3421 = vmatprep.subr.mxu0 0.0
    %3422 = vmatpush2.msra.mxu0 0.0
    %3423 = vmatprep.subr.mxu0 0.0
    %3424 = vmatpush2.msra.mxu0 0.0
    %3425 = vmatprep.subr.mxu0 0.0
    %3426 = vmatpush2.msra.mxu0 0.0
    %3427 = vmatprep.subr.mxu0 0.0
    %3428 = vmatpush2.msra.mxu0 0.0
    %3429 = vmatprep.subr.mxu0 0.0
    %3430 = vmatpush2.msra.mxu0 0.0
    %3431 = vmatprep.subr.mxu0 0.0
    %3432 = vmatpush2.msra.mxu0 0.0
    %3433 = vmatprep.subr.mxu0 0.0
    %3434 = vmatpush2.msra.mxu0 0.0
    %3435 = vmatprep.subr.mxu0 0.0
    %3436 = vmatpush2.msra.mxu0 0.0
    %3437 = vmatprep.subr.mxu0 0.0
    %3438 = vmatpush2.msra.mxu0 0.0
    %3439 = vmatprep.subr.mxu0 0.0
    %3440 = vmatpush2.msra.mxu0 0.0
    %3441 = vmatprep.subr.mxu0 0.0
    %3442 = vmatpush2.msra.mxu0 0.0
    %3443 = vmatprep.subr.mxu0 0.0
    %3444 = vmatpush2.msra.mxu0 0.0
    %3445 = vmatprep.subr.mxu0 0.0
    %3446 = vmatpush2.msra.mxu0 0.0
    %3447 = vmatprep.subr.mxu0 0.0
    %3448 = vmatpush2.msra.mxu0 0.0
    %3449 = vmatprep.mubr.f32.mxu0 0.0
    %v3450 = vand.u32 %v38, 4294901760
    %v3451 = vsub.f32 %v38, %v3450
    %v3452 = vand.u32 %v3451, 4294901760
    %3453 = vmatmul.mubr.f32.gmra.mxu0 %v3452
    %v3454 = vpop.f32.mrf.mxu0
    %v3455 = vadd.f32 %v3349, %v3454
    %v3456 = vpop.f32.mrf.mxu0
    %v3457 = vadd.f32 %v3351, %v3456
    %3458 = vdwg.mxu0
    %v3459 = vand.u32 %v301, 4294901760
    %v3460 = vsub.f32 %v301, %v3459
    %v3461 = vand.u32 %v3460, 4294901760
    %3462 = vmatprep.subr.mxu0 %v3461
    %v3463 = vand.u32 %v300, 4294901760
    %v3464 = vsub.f32 %v300, %v3463
    %v3465 = vand.u32 %v3464, 4294901760
    %3466 = vmatpush1.msra.mxu0 %v3465
    %v3467 = vand.u32 %v284, 4294901760
    %v3468 = vsub.f32 %v284, %v3467
    %v3469 = vand.u32 %v3468, 4294901760
    %3470 = vmatprep.subr.mxu0 %v3469
    %v3471 = vand.u32 %v283, 4294901760
    %v3472 = vsub.f32 %v283, %v3471
    %v3473 = vand.u32 %v3472, 4294901760
    %3474 = vmatpush1.msra.mxu0 %v3473
    %v3475 = vand.u32 %v267, 4294901760
    %v3476 = vsub.f32 %v267, %v3475
    %v3477 = vand.u32 %v3476, 4294901760
    %3478 = vmatprep.subr.mxu0 %v3477
    %v3479 = vand.u32 %v266, 4294901760
    %v3480 = vsub.f32 %v266, %v3479
    %v3481 = vand.u32 %v3480, 4294901760
    %3482 = vmatpush1.msra.mxu0 %v3481
    %v3483 = vand.u32 %v250, 4294901760
    %v3484 = vsub.f32 %v250, %v3483
    %v3485 = vand.u32 %v3484, 4294901760
    %3486 = vmatprep.subr.mxu0 %v3485
    %v3487 = vand.u32 %v249, 4294901760
    %v3488 = vsub.f32 %v249, %v3487
    %v3489 = vand.u32 %v3488, 4294901760
    %3490 = vmatpush1.msra.mxu0 %v3489
    %v3491 = vand.u32 %v233, 4294901760
    %v3492 = vsub.f32 %v233, %v3491
    %v3493 = vand.u32 %v3492, 4294901760
    %3494 = vmatprep.subr.mxu0 %v3493
    %v3495 = vand.u32 %v232, 4294901760
    %v3496 = vsub.f32 %v232, %v3495
    %v3497 = vand.u32 %v3496, 4294901760
    %3498 = vmatpush1.msra.mxu0 %v3497
    %v3499 = vand.u32 %v216, 4294901760
    %v3500 = vsub.f32 %v216, %v3499
    %v3501 = vand.u32 %v3500, 4294901760
    %3502 = vmatprep.subr.mxu0 %v3501
    %v3503 = vand.u32 %v215, 4294901760
    %v3504 = vsub.f32 %v215, %v3503
    %v3505 = vand.u32 %v3504, 4294901760
    %3506 = vmatpush1.msra.mxu0 %v3505
    %v3507 = vand.u32 %v199, 4294901760
    %v3508 = vsub.f32 %v199, %v3507
    %v3509 = vand.u32 %v3508, 4294901760
    %3510 = vmatprep.subr.mxu0 %v3509
    %v3511 = vand.u32 %v198, 4294901760
    %v3512 = vsub.f32 %v198, %v3511
    %v3513 = vand.u32 %v3512, 4294901760
    %3514 = vmatpush1.msra.mxu0 %v3513
    %v3515 = vand.u32 %v182, 4294901760
    %v3516 = vsub.f32 %v182, %v3515
    %v3517 = vand.u32 %v3516, 4294901760
    %3518 = vmatprep.subr.mxu0 %v3517
    %v3519 = vand.u32 %v181, 4294901760
    %v3520 = vsub.f32 %v181, %v3519
    %v3521 = vand.u32 %v3520, 4294901760
    %3522 = vmatpush1.msra.mxu0 %v3521
    %v3523 = vand.u32 %v165, 4294901760
    %v3524 = vsub.f32 %v165, %v3523
    %v3525 = vand.u32 %v3524, 4294901760
    %3526 = vmatprep.subr.mxu0 %v3525
    %v3527 = vand.u32 %v164, 4294901760
    %v3528 = vsub.f32 %v164, %v3527
    %v3529 = vand.u32 %v3528, 4294901760
    %3530 = vmatpush1.msra.mxu0 %v3529
    %v3531 = vand.u32 %v148, 4294901760
    %v3532 = vsub.f32 %v148, %v3531
    %v3533 = vand.u32 %v3532, 4294901760
    %3534 = vmatprep.subr.mxu0 %v3533
    %v3535 = vand.u32 %v147, 4294901760
    %v3536 = vsub.f32 %v147, %v3535
    %v3537 = vand.u32 %v3536, 4294901760
    %3538 = vmatpush1.msra.mxu0 %v3537
    %v3539 = vand.u32 %v131, 4294901760
    %v3540 = vsub.f32 %v131, %v3539
    %v3541 = vand.u32 %v3540, 4294901760
    %3542 = vmatprep.subr.mxu0 %v3541
    %v3543 = vand.u32 %v130, 4294901760
    %v3544 = vsub.f32 %v130, %v3543
    %v3545 = vand.u32 %v3544, 4294901760
    %3546 = vmatpush1.msra.mxu0 %v3545
    %v3547 = vand.u32 %v114, 4294901760
    %v3548 = vsub.f32 %v114, %v3547
    %v3549 = vand.u32 %v3548, 4294901760
    %3550 = vmatprep.subr.mxu0 %v3549
    %v3551 = vand.u32 %v113, 4294901760
    %v3552 = vsub.f32 %v113, %v3551
    %v3553 = vand.u32 %v3552, 4294901760
    %3554 = vmatpush1.msra.mxu0 %v3553
    %v3555 = vand.u32 %v97, 4294901760
    %v3556 = vsub.f32 %v97, %v3555
    %v3557 = vand.u32 %v3556, 4294901760
    %3558 = vmatprep.subr.mxu0 %v3557
    %v3559 = vand.u32 %v96, 4294901760
    %v3560 = vsub.f32 %v96, %v3559
    %v3561 = vand.u32 %v3560, 4294901760
    %3562 = vmatpush1.msra.mxu0 %v3561
    %v3563 = vand.u32 %v80, 4294901760
    %v3564 = vsub.f32 %v80, %v3563
    %v3565 = vand.u32 %v3564, 4294901760
    %3566 = vmatprep.subr.mxu0 %v3565
    %v3567 = vand.u32 %v79, 4294901760
    %v3568 = vsub.f32 %v79, %v3567
    %v3569 = vand.u32 %v3568, 4294901760
    %3570 = vmatpush1.msra.mxu0 %v3569
    %v3571 = vand.u32 %v63, 4294901760
    %v3572 = vsub.f32 %v63, %v3571
    %v3573 = vand.u32 %v3572, 4294901760
    %3574 = vmatprep.subr.mxu0 %v3573
    %v3575 = vand.u32 %v62, 4294901760
    %v3576 = vsub.f32 %v62, %v3575
    %v3577 = vand.u32 %v3576, 4294901760
    %3578 = vmatpush1.msra.mxu0 %v3577
    %v3579 = vand.u32 %v46, 4294901760
    %v3580 = vsub.f32 %v46, %v3579
    %v3581 = vand.u32 %v3580, 4294901760
    %3582 = vmatprep.subr.mxu0 %v3581
    %v3583 = vand.u32 %v45, 4294901760
    %v3584 = vsub.f32 %v45, %v3583
    %v3585 = vand.u32 %v3584, 4294901760
    %3586 = vmatpush1.msra.mxu0 %v3585
    %3587 = vmatprep.subr.mxu0 0.0
    %3588 = vmatpush2.msra.mxu0 0.0
    %3589 = vmatprep.subr.mxu0 0.0
    %3590 = vmatpush2.msra.mxu0 0.0
    %3591 = vmatprep.subr.mxu0 0.0
    %3592 = vmatpush2.msra.mxu0 0.0
    %3593 = vmatprep.subr.mxu0 0.0
    %3594 = vmatpush2.msra.mxu0 0.0
    %3595 = vmatprep.subr.mxu0 0.0
    %3596 = vmatpush2.msra.mxu0 0.0
    %3597 = vmatprep.subr.mxu0 0.0
    %3598 = vmatpush2.msra.mxu0 0.0
    %3599 = vmatprep.subr.mxu0 0.0
    %3600 = vmatpush2.msra.mxu0 0.0
    %3601 = vmatprep.subr.mxu0 0.0
    %3602 = vmatpush2.msra.mxu0 0.0
    %3603 = vmatprep.subr.mxu0 0.0
    %3604 = vmatpush2.msra.mxu0 0.0
    %3605 = vmatprep.subr.mxu0 0.0
    %3606 = vmatpush2.msra.mxu0 0.0
    %3607 = vmatprep.subr.mxu0 0.0
    %3608 = vmatpush2.msra.mxu0 0.0
    %3609 = vmatprep.subr.mxu0 0.0
    %3610 = vmatpush2.msra.mxu0 0.0
    %3611 = vmatprep.subr.mxu0 0.0
    %3612 = vmatpush2.msra.mxu0 0.0
    %3613 = vmatprep.subr.mxu0 0.0
    %3614 = vmatpush2.msra.mxu0 0.0
    %3615 = vmatprep.subr.mxu0 0.0
    %3616 = vmatpush2.msra.mxu0 0.0
    %3617 = vmatprep.subr.mxu0 0.0
    %3618 = vmatpush2.msra.mxu0 0.0
    %3619 = vmatprep.mubr.f32.mxu0 0.0
    %v3620 = vand.u32 %v38, 4294901760
    %3621 = vmatmul.mubr.f32.gmra.mxu0 %v3620
    %v3622 = vpop.f32.mrf.mxu0
    %v3623 = vadd.f32 %v3455, %v3622
    %v3624 = vpop.f32.mrf.mxu0
    %v3625 = vadd.f32 %v3457, %v3624
    %3626 = vdwg.mxu0
    %v3627 = vand.u32 %v301, 4294901760
    %3628 = vmatprep.subr.mxu0 %v3627
    %v3629 = vand.u32 %v300, 4294901760
    %3630 = vmatpush1.msra.mxu0 %v3629
    %v3631 = vand.u32 %v284, 4294901760
    %3632 = vmatprep.subr.mxu0 %v3631
    %v3633 = vand.u32 %v283, 4294901760
    %3634 = vmatpush1.msra.mxu0 %v3633
    %v3635 = vand.u32 %v267, 4294901760
    %3636 = vmatprep.subr.mxu0 %v3635
    %v3637 = vand.u32 %v266, 4294901760
    %3638 = vmatpush1.msra.mxu0 %v3637
    %v3639 = vand.u32 %v250, 4294901760
    %3640 = vmatprep.subr.mxu0 %v3639
    %v3641 = vand.u32 %v249, 4294901760
    %3642 = vmatpush1.msra.mxu0 %v3641
    %v3643 = vand.u32 %v233, 4294901760
    %3644 = vmatprep.subr.mxu0 %v3643
    %v3645 = vand.u32 %v232, 4294901760
    %3646 = vmatpush1.msra.mxu0 %v3645
    %v3647 = vand.u32 %v216, 4294901760
    %3648 = vmatprep.subr.mxu0 %v3647
    %v3649 = vand.u32 %v215, 4294901760
    %3650 = vmatpush1.msra.mxu0 %v3649
    %v3651 = vand.u32 %v199, 4294901760
    %3652 = vmatprep.subr.mxu0 %v3651
    %v3653 = vand.u32 %v198, 4294901760
    %3654 = vmatpush1.msra.mxu0 %v3653
    %v3655 = vand.u32 %v182, 4294901760
    %3656 = vmatprep.subr.mxu0 %v3655
    %v3657 = vand.u32 %v181, 4294901760
    %3658 = vmatpush1.msra.mxu0 %v3657
    %v3659 = vand.u32 %v165, 4294901760
    %3660 = vmatprep.subr.mxu0 %v3659
    %v3661 = vand.u32 %v164, 4294901760
    %3662 = vmatpush1.msra.mxu0 %v3661
    %v3663 = vand.u32 %v148, 4294901760
    %3664 = vmatprep.subr.mxu0 %v3663
    %v3665 = vand.u32 %v147, 4294901760
    %3666 = vmatpush1.msra.mxu0 %v3665
    %v3667 = vand.u32 %v131, 4294901760
    %3668 = vmatprep.subr.mxu0 %v3667
    %v3669 = vand.u32 %v130, 4294901760
    %3670 = vmatpush1.msra.mxu0 %v3669
    %v3671 = vand.u32 %v114, 4294901760
    %3672 = vmatprep.subr.mxu0 %v3671
    %v3673 = vand.u32 %v113, 4294901760
    %3674 = vmatpush1.msra.mxu0 %v3673
    %v3675 = vand.u32 %v97, 4294901760
    %3676 = vmatprep.subr.mxu0 %v3675
    %v3677 = vand.u32 %v96, 4294901760
    %3678 = vmatpush1.msra.mxu0 %v3677
    %v3679 = vand.u32 %v80, 4294901760
    %3680 = vmatprep.subr.mxu0 %v3679
    %v3681 = vand.u32 %v79, 4294901760
    %3682 = vmatpush1.msra.mxu0 %v3681
    %v3683 = vand.u32 %v63, 4294901760
    %3684 = vmatprep.subr.mxu0 %v3683
    %v3685 = vand.u32 %v62, 4294901760
    %3686 = vmatpush1.msra.mxu0 %v3685
    %v3687 = vand.u32 %v46, 4294901760
    %3688 = vmatprep.subr.mxu0 %v3687
    %v3689 = vand.u32 %v45, 4294901760
    %3690 = vmatpush1.msra.mxu0 %v3689
    %3691 = vmatprep.subr.mxu0 0.0
    %3692 = vmatpush2.msra.mxu0 0.0
    %3693 = vmatprep.subr.mxu0 0.0
    %3694 = vmatpush2.msra.mxu0 0.0
    %3695 = vmatprep.subr.mxu0 0.0
    %3696 = vmatpush2.msra.mxu0 0.0
    %3697 = vmatprep.subr.mxu0 0.0
    %3698 = vmatpush2.msra.mxu0 0.0
    %3699 = vmatprep.subr.mxu0 0.0
    %3700 = vmatpush2.msra.mxu0 0.0
    %3701 = vmatprep.subr.mxu0 0.0
    %3702 = vmatpush2.msra.mxu0 0.0
    %3703 = vmatprep.subr.mxu0 0.0
    %3704 = vmatpush2.msra.mxu0 0.0
    %3705 = vmatprep.subr.mxu0 0.0
    %3706 = vmatpush2.msra.mxu0 0.0
    %3707 = vmatprep.subr.mxu0 0.0
    %3708 = vmatpush2.msra.mxu0 0.0
    %3709 = vmatprep.subr.mxu0 0.0
    %3710 = vmatpush2.msra.mxu0 0.0
    %3711 = vmatprep.subr.mxu0 0.0
    %3712 = vmatpush2.msra.mxu0 0.0
    %3713 = vmatprep.subr.mxu0 0.0
    %3714 = vmatpush2.msra.mxu0 0.0
    %3715 = vmatprep.subr.mxu0 0.0
    %3716 = vmatpush2.msra.mxu0 0.0
    %3717 = vmatprep.subr.mxu0 0.0
    %3718 = vmatpush2.msra.mxu0 0.0
    %3719 = vmatprep.subr.mxu0 0.0
    %3720 = vmatpush2.msra.mxu0 0.0
    %3721 = vmatprep.subr.mxu0 0.0
    %3722 = vmatpush2.msra.mxu0 0.0
    %3723 = vmatprep.mubr.f32.mxu0 0.0
    %v3724 = vand.u32 %v38, 4294901760
    %3725 = vmatmul.mubr.f32.gmra.mxu0 %v3724
    %v3726 = vpop.f32.mrf.mxu0
    %v3727 = vadd.f32 %v3623, %v3726
    %v3728 = vpop.f32.mrf.mxu0
    %v3729 = vadd.f32 %v3625, %v3728
    %3730 = vdwg.mxu0
    %v3731 = vand.u32 %v303, 4294901760
    %3732 = vmatprep.subr.mxu0 %v3731
    %v3733 = vand.u32 %v302, 4294901760
    %3734 = vmatpush1.msra.mxu0 %v3733
    %v3735 = vand.u32 %v286, 4294901760
    %3736 = vmatprep.subr.mxu0 %v3735
    %v3737 = vand.u32 %v285, 4294901760
    %3738 = vmatpush1.msra.mxu0 %v3737
    %v3739 = vand.u32 %v269, 4294901760
    %3740 = vmatprep.subr.mxu0 %v3739
    %v3741 = vand.u32 %v268, 4294901760
    %3742 = vmatpush1.msra.mxu0 %v3741
    %v3743 = vand.u32 %v252, 4294901760
    %3744 = vmatprep.subr.mxu0 %v3743
    %v3745 = vand.u32 %v251, 4294901760
    %3746 = vmatpush1.msra.mxu0 %v3745
    %v3747 = vand.u32 %v235, 4294901760
    %3748 = vmatprep.subr.mxu0 %v3747
    %v3749 = vand.u32 %v234, 4294901760
    %3750 = vmatpush1.msra.mxu0 %v3749
    %v3751 = vand.u32 %v218, 4294901760
    %3752 = vmatprep.subr.mxu0 %v3751
    %v3753 = vand.u32 %v217, 4294901760
    %3754 = vmatpush1.msra.mxu0 %v3753
    %v3755 = vand.u32 %v201, 4294901760
    %3756 = vmatprep.subr.mxu0 %v3755
    %v3757 = vand.u32 %v200, 4294901760
    %3758 = vmatpush1.msra.mxu0 %v3757
    %v3759 = vand.u32 %v184, 4294901760
    %3760 = vmatprep.subr.mxu0 %v3759
    %v3761 = vand.u32 %v183, 4294901760
    %3762 = vmatpush1.msra.mxu0 %v3761
    %v3763 = vand.u32 %v167, 4294901760
    %3764 = vmatprep.subr.mxu0 %v3763
    %v3765 = vand.u32 %v166, 4294901760
    %3766 = vmatpush1.msra.mxu0 %v3765
    %v3767 = vand.u32 %v150, 4294901760
    %3768 = vmatprep.subr.mxu0 %v3767
    %v3769 = vand.u32 %v149, 4294901760
    %3770 = vmatpush1.msra.mxu0 %v3769
    %v3771 = vand.u32 %v133, 4294901760
    %3772 = vmatprep.subr.mxu0 %v3771
    %v3773 = vand.u32 %v132, 4294901760
    %3774 = vmatpush1.msra.mxu0 %v3773
    %v3775 = vand.u32 %v116, 4294901760
    %3776 = vmatprep.subr.mxu0 %v3775
    %v3777 = vand.u32 %v115, 4294901760
    %3778 = vmatpush1.msra.mxu0 %v3777
    %v3779 = vand.u32 %v99, 4294901760
    %3780 = vmatprep.subr.mxu0 %v3779
    %v3781 = vand.u32 %v98, 4294901760
    %3782 = vmatpush1.msra.mxu0 %v3781
    %v3783 = vand.u32 %v82, 4294901760
    %3784 = vmatprep.subr.mxu0 %v3783
    %v3785 = vand.u32 %v81, 4294901760
    %3786 = vmatpush1.msra.mxu0 %v3785
    %v3787 = vand.u32 %v65, 4294901760
    %3788 = vmatprep.subr.mxu0 %v3787
    %v3789 = vand.u32 %v64, 4294901760
    %3790 = vmatpush1.msra.mxu0 %v3789
    %v3791 = vand.u32 %v48, 4294901760
    %3792 = vmatprep.subr.mxu0 %v3791
    %v3793 = vand.u32 %v47, 4294901760
    %3794 = vmatpush1.msra.mxu0 %v3793
    %3795 = vmatprep.subr.mxu0 0.0
    %3796 = vmatpush2.msra.mxu0 0.0
    %3797 = vmatprep.subr.mxu0 0.0
    %3798 = vmatpush2.msra.mxu0 0.0
    %3799 = vmatprep.subr.mxu0 0.0
    %3800 = vmatpush2.msra.mxu0 0.0
    %3801 = vmatprep.subr.mxu0 0.0
    %3802 = vmatpush2.msra.mxu0 0.0
    %3803 = vmatprep.subr.mxu0 0.0
    %3804 = vmatpush2.msra.mxu0 0.0
    %3805 = vmatprep.subr.mxu0 0.0
    %3806 = vmatpush2.msra.mxu0 0.0
    %3807 = vmatprep.subr.mxu0 0.0
    %3808 = vmatpush2.msra.mxu0 0.0
    %3809 = vmatprep.subr.mxu0 0.0
    %3810 = vmatpush2.msra.mxu0 0.0
    %3811 = vmatprep.subr.mxu0 0.0
    %3812 = vmatpush2.msra.mxu0 0.0
    %3813 = vmatprep.subr.mxu0 0.0
    %3814 = vmatpush2.msra.mxu0 0.0
    %3815 = vmatprep.subr.mxu0 0.0
    %3816 = vmatpush2.msra.mxu0 0.0
    %3817 = vmatprep.subr.mxu0 0.0
    %3818 = vmatpush2.msra.mxu0 0.0
    %3819 = vmatprep.subr.mxu0 0.0
    %3820 = vmatpush2.msra.mxu0 0.0
    %3821 = vmatprep.subr.mxu0 0.0
    %3822 = vmatpush2.msra.mxu0 0.0
    %3823 = vmatprep.subr.mxu0 0.0
    %3824 = vmatpush2.msra.mxu0 0.0
    %3825 = vmatprep.subr.mxu0 0.0
    %3826 = vmatpush2.msra.mxu0 0.0
    %3827 = vmatprep.mubr.f32.mxu0 0.0
    %v3828 = vand.u32 %v38, 4294901760
    %v3829 = vsub.f32 %v38, %v3828
    %v3830 = vand.u32 %v3829, 4294901760
    %v3831 = vsub.f32 %v3829, %v3830
    %v3832 = vand.u32 %v3831, 4294901760
    %3833 = vmatmul.mubr.f32.gmra.mxu0 %v3832
    %v3834 = vpop.f32.mrf.mxu0
    %v3835 = vadd.f32 0.0, %v3834
    %v3836 = vpop.f32.mrf.mxu0
    %v3837 = vadd.f32 0.0, %v3836
    %3838 = vdwg.mxu0
    %v3839 = vand.u32 %v303, 4294901760
    %v3840 = vsub.f32 %v303, %v3839
    %v3841 = vand.u32 %v3840, 4294901760
    %v3842 = vsub.f32 %v3840, %v3841
    %v3843 = vand.u32 %v3842, 4294901760
    %3844 = vmatprep.subr.mxu0 %v3843
    %v3845 = vand.u32 %v302, 4294901760
    %v3846 = vsub.f32 %v302, %v3845
    %v3847 = vand.u32 %v3846, 4294901760
    %v3848 = vsub.f32 %v3846, %v3847
    %v3849 = vand.u32 %v3848, 4294901760
    %3850 = vmatpush1.msra.mxu0 %v3849
    %v3851 = vand.u32 %v286, 4294901760
    %v3852 = vsub.f32 %v286, %v3851
    %v3853 = vand.u32 %v3852, 4294901760
    %v3854 = vsub.f32 %v3852, %v3853
    %v3855 = vand.u32 %v3854, 4294901760
    %3856 = vmatprep.subr.mxu0 %v3855
    %v3857 = vand.u32 %v285, 4294901760
    %v3858 = vsub.f32 %v285, %v3857
    %v3859 = vand.u32 %v3858, 4294901760
    %v3860 = vsub.f32 %v3858, %v3859
    %v3861 = vand.u32 %v3860, 4294901760
    %3862 = vmatpush1.msra.mxu0 %v3861
    %v3863 = vand.u32 %v269, 4294901760
    %v3864 = vsub.f32 %v269, %v3863
    %v3865 = vand.u32 %v3864, 4294901760
    %v3866 = vsub.f32 %v3864, %v3865
    %v3867 = vand.u32 %v3866, 4294901760
    %3868 = vmatprep.subr.mxu0 %v3867
    %v3869 = vand.u32 %v268, 4294901760
    %v3870 = vsub.f32 %v268, %v3869
    %v3871 = vand.u32 %v3870, 4294901760
    %v3872 = vsub.f32 %v3870, %v3871
    %v3873 = vand.u32 %v3872, 4294901760
    %3874 = vmatpush1.msra.mxu0 %v3873
    %v3875 = vand.u32 %v252, 4294901760
    %v3876 = vsub.f32 %v252, %v3875
    %v3877 = vand.u32 %v3876, 4294901760
    %v3878 = vsub.f32 %v3876, %v3877
    %v3879 = vand.u32 %v3878, 4294901760
    %3880 = vmatprep.subr.mxu0 %v3879
    %v3881 = vand.u32 %v251, 4294901760
    %v3882 = vsub.f32 %v251, %v3881
    %v3883 = vand.u32 %v3882, 4294901760
    %v3884 = vsub.f32 %v3882, %v3883
    %v3885 = vand.u32 %v3884, 4294901760
    %3886 = vmatpush1.msra.mxu0 %v3885
    %v3887 = vand.u32 %v235, 4294901760
    %v3888 = vsub.f32 %v235, %v3887
    %v3889 = vand.u32 %v3888, 4294901760
    %v3890 = vsub.f32 %v3888, %v3889
    %v3891 = vand.u32 %v3890, 4294901760
    %3892 = vmatprep.subr.mxu0 %v3891
    %v3893 = vand.u32 %v234, 4294901760
    %v3894 = vsub.f32 %v234, %v3893
    %v3895 = vand.u32 %v3894, 4294901760
    %v3896 = vsub.f32 %v3894, %v3895
    %v3897 = vand.u32 %v3896, 4294901760
    %3898 = vmatpush1.msra.mxu0 %v3897
    %v3899 = vand.u32 %v218, 4294901760
    %v3900 = vsub.f32 %v218, %v3899
    %v3901 = vand.u32 %v3900, 4294901760
    %v3902 = vsub.f32 %v3900, %v3901
    %v3903 = vand.u32 %v3902, 4294901760
    %3904 = vmatprep.subr.mxu0 %v3903
    %v3905 = vand.u32 %v217, 4294901760
    %v3906 = vsub.f32 %v217, %v3905
    %v3907 = vand.u32 %v3906, 4294901760
    %v3908 = vsub.f32 %v3906, %v3907
    %v3909 = vand.u32 %v3908, 4294901760
    %3910 = vmatpush1.msra.mxu0 %v3909
    %v3911 = vand.u32 %v201, 4294901760
    %v3912 = vsub.f32 %v201, %v3911
    %v3913 = vand.u32 %v3912, 4294901760
    %v3914 = vsub.f32 %v3912, %v3913
    %v3915 = vand.u32 %v3914, 4294901760
    %3916 = vmatprep.subr.mxu0 %v3915
    %v3917 = vand.u32 %v200, 4294901760
    %v3918 = vsub.f32 %v200, %v3917
    %v3919 = vand.u32 %v3918, 4294901760
    %v3920 = vsub.f32 %v3918, %v3919
    %v3921 = vand.u32 %v3920, 4294901760
    %3922 = vmatpush1.msra.mxu0 %v3921
    %v3923 = vand.u32 %v184, 4294901760
    %v3924 = vsub.f32 %v184, %v3923
    %v3925 = vand.u32 %v3924, 4294901760
    %v3926 = vsub.f32 %v3924, %v3925
    %v3927 = vand.u32 %v3926, 4294901760
    %3928 = vmatprep.subr.mxu0 %v3927
    %v3929 = vand.u32 %v183, 4294901760
    %v3930 = vsub.f32 %v183, %v3929
    %v3931 = vand.u32 %v3930, 4294901760
    %v3932 = vsub.f32 %v3930, %v3931
    %v3933 = vand.u32 %v3932, 4294901760
    %3934 = vmatpush1.msra.mxu0 %v3933
    %v3935 = vand.u32 %v167, 4294901760
    %v3936 = vsub.f32 %v167, %v3935
    %v3937 = vand.u32 %v3936, 4294901760
    %v3938 = vsub.f32 %v3936, %v3937
    %v3939 = vand.u32 %v3938, 4294901760
    %3940 = vmatprep.subr.mxu0 %v3939
    %v3941 = vand.u32 %v166, 4294901760
    %v3942 = vsub.f32 %v166, %v3941
    %v3943 = vand.u32 %v3942, 4294901760
    %v3944 = vsub.f32 %v3942, %v3943
    %v3945 = vand.u32 %v3944, 4294901760
    %3946 = vmatpush1.msra.mxu0 %v3945
    %v3947 = vand.u32 %v150, 4294901760
    %v3948 = vsub.f32 %v150, %v3947
    %v3949 = vand.u32 %v3948, 4294901760
    %v3950 = vsub.f32 %v3948, %v3949
    %v3951 = vand.u32 %v3950, 4294901760
    %3952 = vmatprep.subr.mxu0 %v3951
    %v3953 = vand.u32 %v149, 4294901760
    %v3954 = vsub.f32 %v149, %v3953
    %v3955 = vand.u32 %v3954, 4294901760
    %v3956 = vsub.f32 %v3954, %v3955
    %v3957 = vand.u32 %v3956, 4294901760
    %3958 = vmatpush1.msra.mxu0 %v3957
    %v3959 = vand.u32 %v133, 4294901760
    %v3960 = vsub.f32 %v133, %v3959
    %v3961 = vand.u32 %v3960, 4294901760
    %v3962 = vsub.f32 %v3960, %v3961
    %v3963 = vand.u32 %v3962, 4294901760
    %3964 = vmatprep.subr.mxu0 %v3963
    %v3965 = vand.u32 %v132, 4294901760
    %v3966 = vsub.f32 %v132, %v3965
    %v3967 = vand.u32 %v3966, 4294901760
    %v3968 = vsub.f32 %v3966, %v3967
    %v3969 = vand.u32 %v3968, 4294901760
    %3970 = vmatpush1.msra.mxu0 %v3969
    %v3971 = vand.u32 %v116, 4294901760
    %v3972 = vsub.f32 %v116, %v3971
    %v3973 = vand.u32 %v3972, 4294901760
    %v3974 = vsub.f32 %v3972, %v3973
    %v3975 = vand.u32 %v3974, 4294901760
    %3976 = vmatprep.subr.mxu0 %v3975
    %v3977 = vand.u32 %v115, 4294901760
    %v3978 = vsub.f32 %v115, %v3977
    %v3979 = vand.u32 %v3978, 4294901760
    %v3980 = vsub.f32 %v3978, %v3979
    %v3981 = vand.u32 %v3980, 4294901760
    %3982 = vmatpush1.msra.mxu0 %v3981
    %v3983 = vand.u32 %v99, 4294901760
    %v3984 = vsub.f32 %v99, %v3983
    %v3985 = vand.u32 %v3984, 4294901760
    %v3986 = vsub.f32 %v3984, %v3985
    %v3987 = vand.u32 %v3986, 4294901760
    %3988 = vmatprep.subr.mxu0 %v3987
    %v3989 = vand.u32 %v98, 4294901760
    %v3990 = vsub.f32 %v98, %v3989
    %v3991 = vand.u32 %v3990, 4294901760
    %v3992 = vsub.f32 %v3990, %v3991
    %v3993 = vand.u32 %v3992, 4294901760
    %3994 = vmatpush1.msra.mxu0 %v3993
    %v3995 = vand.u32 %v82, 4294901760
    %v3996 = vsub.f32 %v82, %v3995
    %v3997 = vand.u32 %v3996, 4294901760
    %v3998 = vsub.f32 %v3996, %v3997
    %v3999 = vand.u32 %v3998, 4294901760
    %4000 = vmatprep.subr.mxu0 %v3999
    %v4001 = vand.u32 %v81, 4294901760
    %v4002 = vsub.f32 %v81, %v4001
    %v4003 = vand.u32 %v4002, 4294901760
    %v4004 = vsub.f32 %v4002, %v4003
    %v4005 = vand.u32 %v4004, 4294901760
    %4006 = vmatpush1.msra.mxu0 %v4005
    %v4007 = vand.u32 %v65, 4294901760
    %v4008 = vsub.f32 %v65, %v4007
    %v4009 = vand.u32 %v4008, 4294901760
    %v4010 = vsub.f32 %v4008, %v4009
    %v4011 = vand.u32 %v4010, 4294901760
    %4012 = vmatprep.subr.mxu0 %v4011
    %v4013 = vand.u32 %v64, 4294901760
    %v4014 = vsub.f32 %v64, %v4013
    %v4015 = vand.u32 %v4014, 4294901760
    %v4016 = vsub.f32 %v4014, %v4015
    %v4017 = vand.u32 %v4016, 4294901760
    %4018 = vmatpush1.msra.mxu0 %v4017
    %v4019 = vand.u32 %v48, 4294901760
    %v4020 = vsub.f32 %v48, %v4019
    %v4021 = vand.u32 %v4020, 4294901760
    %v4022 = vsub.f32 %v4020, %v4021
    %v4023 = vand.u32 %v4022, 4294901760
    %4024 = vmatprep.subr.mxu0 %v4023
    %v4025 = vand.u32 %v47, 4294901760
    %v4026 = vsub.f32 %v47, %v4025
    %v4027 = vand.u32 %v4026, 4294901760
    %v4028 = vsub.f32 %v4026, %v4027
    %v4029 = vand.u32 %v4028, 4294901760
    %4030 = vmatpush1.msra.mxu0 %v4029
    %4031 = vmatprep.subr.mxu0 0.0
    %4032 = vmatpush2.msra.mxu0 0.0
    %4033 = vmatprep.subr.mxu0 0.0
    %4034 = vmatpush2.msra.mxu0 0.0
    %4035 = vmatprep.subr.mxu0 0.0
    %4036 = vmatpush2.msra.mxu0 0.0
    %4037 = vmatprep.subr.mxu0 0.0
    %4038 = vmatpush2.msra.mxu0 0.0
    %4039 = vmatprep.subr.mxu0 0.0
    %4040 = vmatpush2.msra.mxu0 0.0
    %4041 = vmatprep.subr.mxu0 0.0
    %4042 = vmatpush2.msra.mxu0 0.0
    %4043 = vmatprep.subr.mxu0 0.0
    %4044 = vmatpush2.msra.mxu0 0.0
    %4045 = vmatprep.subr.mxu0 0.0
    %4046 = vmatpush2.msra.mxu0 0.0
    %4047 = vmatprep.subr.mxu0 0.0
    %4048 = vmatpush2.msra.mxu0 0.0
    %4049 = vmatprep.subr.mxu0 0.0
    %4050 = vmatpush2.msra.mxu0 0.0
    %4051 = vmatprep.subr.mxu0 0.0
    %4052 = vmatpush2.msra.mxu0 0.0
    %4053 = vmatprep.subr.mxu0 0.0
    %4054 = vmatpush2.msra.mxu0 0.0
    %4055 = vmatprep.subr.mxu0 0.0
    %4056 = vmatpush2.msra.mxu0 0.0
    %4057 = vmatprep.subr.mxu0 0.0
    %4058 = vmatpush2.msra.mxu0 0.0
    %4059 = vmatprep.subr.mxu0 0.0
    %4060 = vmatpush2.msra.mxu0 0.0
    %4061 = vmatprep.subr.mxu0 0.0
    %4062 = vmatpush2.msra.mxu0 0.0
    %4063 = vmatprep.mubr.f32.mxu0 0.0
    %v4064 = vand.u32 %v38, 4294901760
    %4065 = vmatmul.mubr.f32.gmra.mxu0 %v4064
    %v4066 = vpop.f32.mrf.mxu0
    %v4067 = vadd.f32 %v3835, %v4066
    %v4068 = vpop.f32.mrf.mxu0
    %v4069 = vadd.f32 %v3837, %v4068
    %4070 = vdwg.mxu0
    %v4071 = vand.u32 %v303, 4294901760
    %v4072 = vsub.f32 %v303, %v4071
    %4073 = vmatprep.subr.mxu0 %v4072
    %v4074 = vand.u32 %v302, 4294901760
    %v4075 = vsub.f32 %v302, %v4074
    %4076 = vmatpush1.msra.mxu0 %v4075
    %v4077 = vand.u32 %v286, 4294901760
    %v4078 = vsub.f32 %v286, %v4077
    %4079 = vmatprep.subr.mxu0 %v4078
    %v4080 = vand.u32 %v285, 4294901760
    %v4081 = vsub.f32 %v285, %v4080
    %4082 = vmatpush1.msra.mxu0 %v4081
    %v4083 = vand.u32 %v269, 4294901760
    %v4084 = vsub.f32 %v269, %v4083
    %4085 = vmatprep.subr.mxu0 %v4084
    %v4086 = vand.u32 %v268, 4294901760
    %v4087 = vsub.f32 %v268, %v4086
    %4088 = vmatpush1.msra.mxu0 %v4087
    %v4089 = vand.u32 %v252, 4294901760
    %v4090 = vsub.f32 %v252, %v4089
    %4091 = vmatprep.subr.mxu0 %v4090
    %v4092 = vand.u32 %v251, 4294901760
    %v4093 = vsub.f32 %v251, %v4092
    %4094 = vmatpush1.msra.mxu0 %v4093
    %v4095 = vand.u32 %v235, 4294901760
    %v4096 = vsub.f32 %v235, %v4095
    %4097 = vmatprep.subr.mxu0 %v4096
    %v4098 = vand.u32 %v234, 4294901760
    %v4099 = vsub.f32 %v234, %v4098
    %4100 = vmatpush1.msra.mxu0 %v4099
    %v4101 = vand.u32 %v218, 4294901760
    %v4102 = vsub.f32 %v218, %v4101
    %4103 = vmatprep.subr.mxu0 %v4102
    %v4104 = vand.u32 %v217, 4294901760
    %v4105 = vsub.f32 %v217, %v4104
    %4106 = vmatpush1.msra.mxu0 %v4105
    %v4107 = vand.u32 %v201, 4294901760
    %v4108 = vsub.f32 %v201, %v4107
    %4109 = vmatprep.subr.mxu0 %v4108
    %v4110 = vand.u32 %v200, 4294901760
    %v4111 = vsub.f32 %v200, %v4110
    %4112 = vmatpush1.msra.mxu0 %v4111
    %v4113 = vand.u32 %v184, 4294901760
    %v4114 = vsub.f32 %v184, %v4113
    %4115 = vmatprep.subr.mxu0 %v4114
    %v4116 = vand.u32 %v183, 4294901760
    %v4117 = vsub.f32 %v183, %v4116
    %4118 = vmatpush1.msra.mxu0 %v4117
    %v4119 = vand.u32 %v167, 4294901760
    %v4120 = vsub.f32 %v167, %v4119
    %4121 = vmatprep.subr.mxu0 %v4120
    %v4122 = vand.u32 %v166, 4294901760
    %v4123 = vsub.f32 %v166, %v4122
    %4124 = vmatpush1.msra.mxu0 %v4123
    %v4125 = vand.u32 %v150, 4294901760
    %v4126 = vsub.f32 %v150, %v4125
    %4127 = vmatprep.subr.mxu0 %v4126
    %v4128 = vand.u32 %v149, 4294901760
    %v4129 = vsub.f32 %v149, %v4128
    %4130 = vmatpush1.msra.mxu0 %v4129
    %v4131 = vand.u32 %v133, 4294901760
    %v4132 = vsub.f32 %v133, %v4131
    %4133 = vmatprep.subr.mxu0 %v4132
    %v4134 = vand.u32 %v132, 4294901760
    %v4135 = vsub.f32 %v132, %v4134
    %4136 = vmatpush1.msra.mxu0 %v4135
    %v4137 = vand.u32 %v116, 4294901760
    %v4138 = vsub.f32 %v116, %v4137
    %4139 = vmatprep.subr.mxu0 %v4138
    %v4140 = vand.u32 %v115, 4294901760
    %v4141 = vsub.f32 %v115, %v4140
    %4142 = vmatpush1.msra.mxu0 %v4141
    %v4143 = vand.u32 %v99, 4294901760
    %v4144 = vsub.f32 %v99, %v4143
    %4145 = vmatprep.subr.mxu0 %v4144
    %v4146 = vand.u32 %v98, 4294901760
    %v4147 = vsub.f32 %v98, %v4146
    %4148 = vmatpush1.msra.mxu0 %v4147
    %v4149 = vand.u32 %v82, 4294901760
    %v4150 = vsub.f32 %v82, %v4149
    %4151 = vmatprep.subr.mxu0 %v4150
    %v4152 = vand.u32 %v81, 4294901760
    %v4153 = vsub.f32 %v81, %v4152
    %4154 = vmatpush1.msra.mxu0 %v4153
    %v4155 = vand.u32 %v65, 4294901760
    %v4156 = vsub.f32 %v65, %v4155
    %4157 = vmatprep.subr.mxu0 %v4156
    %v4158 = vand.u32 %v64, 4294901760
    %v4159 = vsub.f32 %v64, %v4158
    %4160 = vmatpush1.msra.mxu0 %v4159
    %v4161 = vand.u32 %v48, 4294901760
    %v4162 = vsub.f32 %v48, %v4161
    %4163 = vmatprep.subr.mxu0 %v4162
    %v4164 = vand.u32 %v47, 4294901760
    %v4165 = vsub.f32 %v47, %v4164
    %4166 = vmatpush1.msra.mxu0 %v4165
    %4167 = vmatprep.subr.mxu0 0.0
    %4168 = vmatpush2.msra.mxu0 0.0
    %4169 = vmatprep.subr.mxu0 0.0
    %4170 = vmatpush2.msra.mxu0 0.0
    %4171 = vmatprep.subr.mxu0 0.0
    %4172 = vmatpush2.msra.mxu0 0.0
    %4173 = vmatprep.subr.mxu0 0.0
    %4174 = vmatpush2.msra.mxu0 0.0
    %4175 = vmatprep.subr.mxu0 0.0
    %4176 = vmatpush2.msra.mxu0 0.0
    %4177 = vmatprep.subr.mxu0 0.0
    %4178 = vmatpush2.msra.mxu0 0.0
    %4179 = vmatprep.subr.mxu0 0.0
    %4180 = vmatpush2.msra.mxu0 0.0
    %4181 = vmatprep.subr.mxu0 0.0
    %4182 = vmatpush2.msra.mxu0 0.0
    %4183 = vmatprep.subr.mxu0 0.0
    %4184 = vmatpush2.msra.mxu0 0.0
    %4185 = vmatprep.subr.mxu0 0.0
    %4186 = vmatpush2.msra.mxu0 0.0
    %4187 = vmatprep.subr.mxu0 0.0
    %4188 = vmatpush2.msra.mxu0 0.0
    %4189 = vmatprep.subr.mxu0 0.0
    %4190 = vmatpush2.msra.mxu0 0.0
    %4191 = vmatprep.subr.mxu0 0.0
    %4192 = vmatpush2.msra.mxu0 0.0
    %4193 = vmatprep.subr.mxu0 0.0
    %4194 = vmatpush2.msra.mxu0 0.0
    %4195 = vmatprep.subr.mxu0 0.0
    %4196 = vmatpush2.msra.mxu0 0.0
    %4197 = vmatprep.subr.mxu0 0.0
    %4198 = vmatpush2.msra.mxu0 0.0
    %4199 = vmatprep.mubr.f32.mxu0 0.0
    %v4200 = vand.u32 %v38, 4294901760
    %v4201 = vsub.f32 %v38, %v4200
    %4202 = vmatmul.mubr.f32.gmra.mxu0 %v4201
    %v4203 = vpop.f32.mrf.mxu0
    %v4204 = vadd.f32 %v4067, %v4203
    %v4205 = vpop.f32.mrf.mxu0
    %v4206 = vadd.f32 %v4069, %v4205
    %4207 = vdwg.mxu0
    %v4208 = vand.u32 %v303, 4294901760
    %4209 = vmatprep.subr.mxu0 %v4208
    %v4210 = vand.u32 %v302, 4294901760
    %4211 = vmatpush1.msra.mxu0 %v4210
    %v4212 = vand.u32 %v286, 4294901760
    %4213 = vmatprep.subr.mxu0 %v4212
    %v4214 = vand.u32 %v285, 4294901760
    %4215 = vmatpush1.msra.mxu0 %v4214
    %v4216 = vand.u32 %v269, 4294901760
    %4217 = vmatprep.subr.mxu0 %v4216
    %v4218 = vand.u32 %v268, 4294901760
    %4219 = vmatpush1.msra.mxu0 %v4218
    %v4220 = vand.u32 %v252, 4294901760
    %4221 = vmatprep.subr.mxu0 %v4220
    %v4222 = vand.u32 %v251, 4294901760
    %4223 = vmatpush1.msra.mxu0 %v4222
    %v4224 = vand.u32 %v235, 4294901760
    %4225 = vmatprep.subr.mxu0 %v4224
    %v4226 = vand.u32 %v234, 4294901760
    %4227 = vmatpush1.msra.mxu0 %v4226
    %v4228 = vand.u32 %v218, 4294901760
    %4229 = vmatprep.subr.mxu0 %v4228
    %v4230 = vand.u32 %v217, 4294901760
    %4231 = vmatpush1.msra.mxu0 %v4230
    %v4232 = vand.u32 %v201, 4294901760
    %4233 = vmatprep.subr.mxu0 %v4232
    %v4234 = vand.u32 %v200, 4294901760
    %4235 = vmatpush1.msra.mxu0 %v4234
    %v4236 = vand.u32 %v184, 4294901760
    %4237 = vmatprep.subr.mxu0 %v4236
    %v4238 = vand.u32 %v183, 4294901760
    %4239 = vmatpush1.msra.mxu0 %v4238
    %v4240 = vand.u32 %v167, 4294901760
    %4241 = vmatprep.subr.mxu0 %v4240
    %v4242 = vand.u32 %v166, 4294901760
    %4243 = vmatpush1.msra.mxu0 %v4242
    %v4244 = vand.u32 %v150, 4294901760
    %4245 = vmatprep.subr.mxu0 %v4244
    %v4246 = vand.u32 %v149, 4294901760
    %4247 = vmatpush1.msra.mxu0 %v4246
    %v4248 = vand.u32 %v133, 4294901760
    %4249 = vmatprep.subr.mxu0 %v4248
    %v4250 = vand.u32 %v132, 4294901760
    %4251 = vmatpush1.msra.mxu0 %v4250
    %v4252 = vand.u32 %v116, 4294901760
    %4253 = vmatprep.subr.mxu0 %v4252
    %v4254 = vand.u32 %v115, 4294901760
    %4255 = vmatpush1.msra.mxu0 %v4254
    %v4256 = vand.u32 %v99, 4294901760
    %4257 = vmatprep.subr.mxu0 %v4256
    %v4258 = vand.u32 %v98, 4294901760
    %4259 = vmatpush1.msra.mxu0 %v4258
    %v4260 = vand.u32 %v82, 4294901760
    %4261 = vmatprep.subr.mxu0 %v4260
    %v4262 = vand.u32 %v81, 4294901760
    %4263 = vmatpush1.msra.mxu0 %v4262
    %v4264 = vand.u32 %v65, 4294901760
    %4265 = vmatprep.subr.mxu0 %v4264
    %v4266 = vand.u32 %v64, 4294901760
    %4267 = vmatpush1.msra.mxu0 %v4266
    %v4268 = vand.u32 %v48, 4294901760
    %4269 = vmatprep.subr.mxu0 %v4268
    %v4270 = vand.u32 %v47, 4294901760
    %4271 = vmatpush1.msra.mxu0 %v4270
    %4272 = vmatprep.subr.mxu0 0.0
    %4273 = vmatpush2.msra.mxu0 0.0
    %4274 = vmatprep.subr.mxu0 0.0
    %4275 = vmatpush2.msra.mxu0 0.0
    %4276 = vmatprep.subr.mxu0 0.0
    %4277 = vmatpush2.msra.mxu0 0.0
    %4278 = vmatprep.subr.mxu0 0.0
    %4279 = vmatpush2.msra.mxu0 0.0
    %4280 = vmatprep.subr.mxu0 0.0
    %4281 = vmatpush2.msra.mxu0 0.0
    %4282 = vmatprep.subr.mxu0 0.0
    %4283 = vmatpush2.msra.mxu0 0.0
    %4284 = vmatprep.subr.mxu0 0.0
    %4285 = vmatpush2.msra.mxu0 0.0
    %4286 = vmatprep.subr.mxu0 0.0
    %4287 = vmatpush2.msra.mxu0 0.0
    %4288 = vmatprep.subr.mxu0 0.0
    %4289 = vmatpush2.msra.mxu0 0.0
    %4290 = vmatprep.subr.mxu0 0.0
    %4291 = vmatpush2.msra.mxu0 0.0
    %4292 = vmatprep.subr.mxu0 0.0
    %4293 = vmatpush2.msra.mxu0 0.0
    %4294 = vmatprep.subr.mxu0 0.0
    %4295 = vmatpush2.msra.mxu0 0.0
    %4296 = vmatprep.subr.mxu0 0.0
    %4297 = vmatpush2.msra.mxu0 0.0
    %4298 = vmatprep.subr.mxu0 0.0
    %4299 = vmatpush2.msra.mxu0 0.0
    %4300 = vmatprep.subr.mxu0 0.0
    %4301 = vmatpush2.msra.mxu0 0.0
    %4302 = vmatprep.subr.mxu0 0.0
    %4303 = vmatpush2.msra.mxu0 0.0
    %4304 = vmatprep.mubr.f32.mxu0 0.0
    %v4305 = vand.u32 %v38, 4294901760
    %v4306 = vsub.f32 %v38, %v4305
    %v4307 = vand.u32 %v4306, 4294901760
    %4308 = vmatmul.mubr.f32.gmra.mxu0 %v4307
    %v4309 = vpop.f32.mrf.mxu0
    %v4310 = vadd.f32 %v4204, %v4309
    %v4311 = vpop.f32.mrf.mxu0
    %v4312 = vadd.f32 %v4206, %v4311
    %4313 = vdwg.mxu0
    %v4314 = vand.u32 %v303, 4294901760
    %v4315 = vsub.f32 %v303, %v4314
    %v4316 = vand.u32 %v4315, 4294901760
    %4317 = vmatprep.subr.mxu0 %v4316
    %v4318 = vand.u32 %v302, 4294901760
    %v4319 = vsub.f32 %v302, %v4318
    %v4320 = vand.u32 %v4319, 4294901760
    %4321 = vmatpush1.msra.mxu0 %v4320
    %v4322 = vand.u32 %v286, 4294901760
    %v4323 = vsub.f32 %v286, %v4322
    %v4324 = vand.u32 %v4323, 4294901760
    %4325 = vmatprep.subr.mxu0 %v4324
    %v4326 = vand.u32 %v285, 4294901760
    %v4327 = vsub.f32 %v285, %v4326
    %v4328 = vand.u32 %v4327, 4294901760
    %4329 = vmatpush1.msra.mxu0 %v4328
    %v4330 = vand.u32 %v269, 4294901760
    %v4331 = vsub.f32 %v269, %v4330
    %v4332 = vand.u32 %v4331, 4294901760
    %4333 = vmatprep.subr.mxu0 %v4332
    %v4334 = vand.u32 %v268, 4294901760
    %v4335 = vsub.f32 %v268, %v4334
    %v4336 = vand.u32 %v4335, 4294901760
    %4337 = vmatpush1.msra.mxu0 %v4336
    %v4338 = vand.u32 %v252, 4294901760
    %v4339 = vsub.f32 %v252, %v4338
    %v4340 = vand.u32 %v4339, 4294901760
    %4341 = vmatprep.subr.mxu0 %v4340
    %v4342 = vand.u32 %v251, 4294901760
    %v4343 = vsub.f32 %v251, %v4342
    %v4344 = vand.u32 %v4343, 4294901760
    %4345 = vmatpush1.msra.mxu0 %v4344
    %v4346 = vand.u32 %v235, 4294901760
    %v4347 = vsub.f32 %v235, %v4346
    %v4348 = vand.u32 %v4347, 4294901760
    %4349 = vmatprep.subr.mxu0 %v4348
    %v4350 = vand.u32 %v234, 4294901760
    %v4351 = vsub.f32 %v234, %v4350
    %v4352 = vand.u32 %v4351, 4294901760
    %4353 = vmatpush1.msra.mxu0 %v4352
    %v4354 = vand.u32 %v218, 4294901760
    %v4355 = vsub.f32 %v218, %v4354
    %v4356 = vand.u32 %v4355, 4294901760
    %4357 = vmatprep.subr.mxu0 %v4356
    %v4358 = vand.u32 %v217, 4294901760
    %v4359 = vsub.f32 %v217, %v4358
    %v4360 = vand.u32 %v4359, 4294901760
    %4361 = vmatpush1.msra.mxu0 %v4360
    %v4362 = vand.u32 %v201, 4294901760
    %v4363 = vsub.f32 %v201, %v4362
    %v4364 = vand.u32 %v4363, 4294901760
    %4365 = vmatprep.subr.mxu0 %v4364
    %v4366 = vand.u32 %v200, 4294901760
    %v4367 = vsub.f32 %v200, %v4366
    %v4368 = vand.u32 %v4367, 4294901760
    %4369 = vmatpush1.msra.mxu0 %v4368
    %v4370 = vand.u32 %v184, 4294901760
    %v4371 = vsub.f32 %v184, %v4370
    %v4372 = vand.u32 %v4371, 4294901760
    %4373 = vmatprep.subr.mxu0 %v4372
    %v4374 = vand.u32 %v183, 4294901760
    %v4375 = vsub.f32 %v183, %v4374
    %v4376 = vand.u32 %v4375, 4294901760
    %4377 = vmatpush1.msra.mxu0 %v4376
    %v4378 = vand.u32 %v167, 4294901760
    %v4379 = vsub.f32 %v167, %v4378
    %v4380 = vand.u32 %v4379, 4294901760
    %4381 = vmatprep.subr.mxu0 %v4380
    %v4382 = vand.u32 %v166, 4294901760
    %v4383 = vsub.f32 %v166, %v4382
    %v4384 = vand.u32 %v4383, 4294901760
    %4385 = vmatpush1.msra.mxu0 %v4384
    %v4386 = vand.u32 %v150, 4294901760
    %v4387 = vsub.f32 %v150, %v4386
    %v4388 = vand.u32 %v4387, 4294901760
    %4389 = vmatprep.subr.mxu0 %v4388
    %v4390 = vand.u32 %v149, 4294901760
    %v4391 = vsub.f32 %v149, %v4390
    %v4392 = vand.u32 %v4391, 4294901760
    %4393 = vmatpush1.msra.mxu0 %v4392
    %v4394 = vand.u32 %v133, 4294901760
    %v4395 = vsub.f32 %v133, %v4394
    %v4396 = vand.u32 %v4395, 4294901760
    %4397 = vmatprep.subr.mxu0 %v4396
    %v4398 = vand.u32 %v132, 4294901760
    %v4399 = vsub.f32 %v132, %v4398
    %v4400 = vand.u32 %v4399, 4294901760
    %4401 = vmatpush1.msra.mxu0 %v4400
    %v4402 = vand.u32 %v116, 4294901760
    %v4403 = vsub.f32 %v116, %v4402
    %v4404 = vand.u32 %v4403, 4294901760
    %4405 = vmatprep.subr.mxu0 %v4404
    %v4406 = vand.u32 %v115, 4294901760
    %v4407 = vsub.f32 %v115, %v4406
    %v4408 = vand.u32 %v4407, 4294901760
    %4409 = vmatpush1.msra.mxu0 %v4408
    %v4410 = vand.u32 %v99, 4294901760
    %v4411 = vsub.f32 %v99, %v4410
    %v4412 = vand.u32 %v4411, 4294901760
    %4413 = vmatprep.subr.mxu0 %v4412
    %v4414 = vand.u32 %v98, 4294901760
    %v4415 = vsub.f32 %v98, %v4414
    %v4416 = vand.u32 %v4415, 4294901760
    %4417 = vmatpush1.msra.mxu0 %v4416
    %v4418 = vand.u32 %v82, 4294901760
    %v4419 = vsub.f32 %v82, %v4418
    %v4420 = vand.u32 %v4419, 4294901760
    %4421 = vmatprep.subr.mxu0 %v4420
    %v4422 = vand.u32 %v81, 4294901760
    %v4423 = vsub.f32 %v81, %v4422
    %v4424 = vand.u32 %v4423, 4294901760
    %4425 = vmatpush1.msra.mxu0 %v4424
    %v4426 = vand.u32 %v65, 4294901760
    %v4427 = vsub.f32 %v65, %v4426
    %v4428 = vand.u32 %v4427, 4294901760
    %4429 = vmatprep.subr.mxu0 %v4428
    %v4430 = vand.u32 %v64, 4294901760
    %v4431 = vsub.f32 %v64, %v4430
    %v4432 = vand.u32 %v4431, 4294901760
    %4433 = vmatpush1.msra.mxu0 %v4432
    %v4434 = vand.u32 %v48, 4294901760
    %v4435 = vsub.f32 %v48, %v4434
    %v4436 = vand.u32 %v4435, 4294901760
    %4437 = vmatprep.subr.mxu0 %v4436
    %v4438 = vand.u32 %v47, 4294901760
    %v4439 = vsub.f32 %v47, %v4438
    %v4440 = vand.u32 %v4439, 4294901760
    %4441 = vmatpush1.msra.mxu0 %v4440
    %4442 = vmatprep.subr.mxu0 0.0
    %4443 = vmatpush2.msra.mxu0 0.0
    %4444 = vmatprep.subr.mxu0 0.0
    %4445 = vmatpush2.msra.mxu0 0.0
    %4446 = vmatprep.subr.mxu0 0.0
    %4447 = vmatpush2.msra.mxu0 0.0
    %4448 = vmatprep.subr.mxu0 0.0
    %4449 = vmatpush2.msra.mxu0 0.0
    %4450 = vmatprep.subr.mxu0 0.0
    %4451 = vmatpush2.msra.mxu0 0.0
    %4452 = vmatprep.subr.mxu0 0.0
    %4453 = vmatpush2.msra.mxu0 0.0
    %4454 = vmatprep.subr.mxu0 0.0
    %4455 = vmatpush2.msra.mxu0 0.0
    %4456 = vmatprep.subr.mxu0 0.0
    %4457 = vmatpush2.msra.mxu0 0.0
    %4458 = vmatprep.subr.mxu0 0.0
    %4459 = vmatpush2.msra.mxu0 0.0
    %4460 = vmatprep.subr.mxu0 0.0
    %4461 = vmatpush2.msra.mxu0 0.0
    %4462 = vmatprep.subr.mxu0 0.0
    %4463 = vmatpush2.msra.mxu0 0.0
    %4464 = vmatprep.subr.mxu0 0.0
    %4465 = vmatpush2.msra.mxu0 0.0
    %4466 = vmatprep.subr.mxu0 0.0
    %4467 = vmatpush2.msra.mxu0 0.0
    %4468 = vmatprep.subr.mxu0 0.0
    %4469 = vmatpush2.msra.mxu0 0.0
    %4470 = vmatprep.subr.mxu0 0.0
    %4471 = vmatpush2.msra.mxu0 0.0
    %4472 = vmatprep.subr.mxu0 0.0
    %4473 = vmatpush2.msra.mxu0 0.0
    %4474 = vmatprep.mubr.f32.mxu0 0.0
    %v4475 = vand.u32 %v38, 4294901760
    %4476 = vmatmul.mubr.f32.gmra.mxu0 %v4475
    %v4477 = vpop.f32.mrf.mxu0
    %v4478 = vadd.f32 %v4310, %v4477
    %v4479 = vpop.f32.mrf.mxu0
    %v4480 = vadd.f32 %v4312, %v4479
    %4481 = vdwg.mxu0
    %v4482 = vand.u32 %v303, 4294901760
    %4483 = vmatprep.subr.mxu0 %v4482
    %v4484 = vand.u32 %v302, 4294901760
    %4485 = vmatpush1.msra.mxu0 %v4484
    %v4486 = vand.u32 %v286, 4294901760
    %4487 = vmatprep.subr.mxu0 %v4486
    %v4488 = vand.u32 %v285, 4294901760
    %4489 = vmatpush1.msra.mxu0 %v4488
    %v4490 = vand.u32 %v269, 4294901760
    %4491 = vmatprep.subr.mxu0 %v4490
    %v4492 = vand.u32 %v268, 4294901760
    %4493 = vmatpush1.msra.mxu0 %v4492
    %v4494 = vand.u32 %v252, 4294901760
    %4495 = vmatprep.subr.mxu0 %v4494
    %v4496 = vand.u32 %v251, 4294901760
    %4497 = vmatpush1.msra.mxu0 %v4496
    %v4498 = vand.u32 %v235, 4294901760
    %4499 = vmatprep.subr.mxu0 %v4498
    %v4500 = vand.u32 %v234, 4294901760
    %4501 = vmatpush1.msra.mxu0 %v4500
    %v4502 = vand.u32 %v218, 4294901760
    %4503 = vmatprep.subr.mxu0 %v4502
    %v4504 = vand.u32 %v217, 4294901760
    %4505 = vmatpush1.msra.mxu0 %v4504
    %v4506 = vand.u32 %v201, 4294901760
    %4507 = vmatprep.subr.mxu0 %v4506
    %v4508 = vand.u32 %v200, 4294901760
    %4509 = vmatpush1.msra.mxu0 %v4508
    %v4510 = vand.u32 %v184, 4294901760
    %4511 = vmatprep.subr.mxu0 %v4510
    %v4512 = vand.u32 %v183, 4294901760
    %4513 = vmatpush1.msra.mxu0 %v4512
    %v4514 = vand.u32 %v167, 4294901760
    %4515 = vmatprep.subr.mxu0 %v4514
    %v4516 = vand.u32 %v166, 4294901760
    %4517 = vmatpush1.msra.mxu0 %v4516
    %v4518 = vand.u32 %v150, 4294901760
    %4519 = vmatprep.subr.mxu0 %v4518
    %v4520 = vand.u32 %v149, 4294901760
    %4521 = vmatpush1.msra.mxu0 %v4520
    %v4522 = vand.u32 %v133, 4294901760
    %4523 = vmatprep.subr.mxu0 %v4522
    %v4524 = vand.u32 %v132, 4294901760
    %4525 = vmatpush1.msra.mxu0 %v4524
    %v4526 = vand.u32 %v116, 4294901760
    %4527 = vmatprep.subr.mxu0 %v4526
    %v4528 = vand.u32 %v115, 4294901760
    %4529 = vmatpush1.msra.mxu0 %v4528
    %v4530 = vand.u32 %v99, 4294901760
    %4531 = vmatprep.subr.mxu0 %v4530
    %v4532 = vand.u32 %v98, 4294901760
    %4533 = vmatpush1.msra.mxu0 %v4532
    %v4534 = vand.u32 %v82, 4294901760
    %4535 = vmatprep.subr.mxu0 %v4534
    %v4536 = vand.u32 %v81, 4294901760
    %4537 = vmatpush1.msra.mxu0 %v4536
    %v4538 = vand.u32 %v65, 4294901760
    %4539 = vmatprep.subr.mxu0 %v4538
    %v4540 = vand.u32 %v64, 4294901760
    %4541 = vmatpush1.msra.mxu0 %v4540
    %v4542 = vand.u32 %v48, 4294901760
    %4543 = vmatprep.subr.mxu0 %v4542
    %v4544 = vand.u32 %v47, 4294901760
    %4545 = vmatpush1.msra.mxu0 %v4544
    %4546 = vmatprep.subr.mxu0 0.0
    %4547 = vmatpush2.msra.mxu0 0.0
    %4548 = vmatprep.subr.mxu0 0.0
    %4549 = vmatpush2.msra.mxu0 0.0
    %4550 = vmatprep.subr.mxu0 0.0
    %4551 = vmatpush2.msra.mxu0 0.0
    %4552 = vmatprep.subr.mxu0 0.0
    %4553 = vmatpush2.msra.mxu0 0.0
    %4554 = vmatprep.subr.mxu0 0.0
    %4555 = vmatpush2.msra.mxu0 0.0
    %4556 = vmatprep.subr.mxu0 0.0
    %4557 = vmatpush2.msra.mxu0 0.0
    %4558 = vmatprep.subr.mxu0 0.0
    %4559 = vmatpush2.msra.mxu0 0.0
    %4560 = vmatprep.subr.mxu0 0.0
    %4561 = vmatpush2.msra.mxu0 0.0
    %4562 = vmatprep.subr.mxu0 0.0
    %4563 = vmatpush2.msra.mxu0 0.0
    %4564 = vmatprep.subr.mxu0 0.0
    %4565 = vmatpush2.msra.mxu0 0.0
    %4566 = vmatprep.subr.mxu0 0.0
    %4567 = vmatpush2.msra.mxu0 0.0
    %4568 = vmatprep.subr.mxu0 0.0
    %4569 = vmatpush2.msra.mxu0 0.0
    %4570 = vmatprep.subr.mxu0 0.0
    %4571 = vmatpush2.msra.mxu0 0.0
    %4572 = vmatprep.subr.mxu0 0.0
    %4573 = vmatpush2.msra.mxu0 0.0
    %4574 = vmatprep.subr.mxu0 0.0
    %4575 = vmatpush2.msra.mxu0 0.0
    %4576 = vmatprep.subr.mxu0 0.0
    %4577 = vmatpush2.msra.mxu0 0.0
    %4578 = vmatprep.mubr.f32.mxu0 0.0
    %v4579 = vand.u32 %v38, 4294901760
    %4580 = vmatmul.mubr.f32.gmra.mxu0 %v4579
    %v4581 = vpop.f32.mrf.mxu0
    %v4582 = vadd.f32 %v4478, %v4581
    %v4583 = vpop.f32.mrf.mxu0
    %v4584 = vadd.f32 %v4480, %v4583
    %4585 = vdwg.mxu0
    %v4586 = vand.u32 %v305, 4294901760
    %4587 = vmatprep.subr.mxu0 %v4586
    %v4588 = vand.u32 %v304, 4294901760
    %4589 = vmatpush1.msra.mxu0 %v4588
    %v4590 = vand.u32 %v288, 4294901760
    %4591 = vmatprep.subr.mxu0 %v4590
    %v4592 = vand.u32 %v287, 4294901760
    %4593 = vmatpush1.msra.mxu0 %v4592
    %v4594 = vand.u32 %v271, 4294901760
    %4595 = vmatprep.subr.mxu0 %v4594
    %v4596 = vand.u32 %v270, 4294901760
    %4597 = vmatpush1.msra.mxu0 %v4596
    %v4598 = vand.u32 %v254, 4294901760
    %4599 = vmatprep.subr.mxu0 %v4598
    %v4600 = vand.u32 %v253, 4294901760
    %4601 = vmatpush1.msra.mxu0 %v4600
    %v4602 = vand.u32 %v237, 4294901760
    %4603 = vmatprep.subr.mxu0 %v4602
    %v4604 = vand.u32 %v236, 4294901760
    %4605 = vmatpush1.msra.mxu0 %v4604
    %v4606 = vand.u32 %v220, 4294901760
    %4607 = vmatprep.subr.mxu0 %v4606
    %v4608 = vand.u32 %v219, 4294901760
    %4609 = vmatpush1.msra.mxu0 %v4608
    %v4610 = vand.u32 %v203, 4294901760
    %4611 = vmatprep.subr.mxu0 %v4610
    %v4612 = vand.u32 %v202, 4294901760
    %4613 = vmatpush1.msra.mxu0 %v4612
    %v4614 = vand.u32 %v186, 4294901760
    %4615 = vmatprep.subr.mxu0 %v4614
    %v4616 = vand.u32 %v185, 4294901760
    %4617 = vmatpush1.msra.mxu0 %v4616
    %v4618 = vand.u32 %v169, 4294901760
    %4619 = vmatprep.subr.mxu0 %v4618
    %v4620 = vand.u32 %v168, 4294901760
    %4621 = vmatpush1.msra.mxu0 %v4620
    %v4622 = vand.u32 %v152, 4294901760
    %4623 = vmatprep.subr.mxu0 %v4622
    %v4624 = vand.u32 %v151, 4294901760
    %4625 = vmatpush1.msra.mxu0 %v4624
    %v4626 = vand.u32 %v135, 4294901760
    %4627 = vmatprep.subr.mxu0 %v4626
    %v4628 = vand.u32 %v134, 4294901760
    %4629 = vmatpush1.msra.mxu0 %v4628
    %v4630 = vand.u32 %v118, 4294901760
    %4631 = vmatprep.subr.mxu0 %v4630
    %v4632 = vand.u32 %v117, 4294901760
    %4633 = vmatpush1.msra.mxu0 %v4632
    %v4634 = vand.u32 %v101, 4294901760
    %4635 = vmatprep.subr.mxu0 %v4634
    %v4636 = vand.u32 %v100, 4294901760
    %4637 = vmatpush1.msra.mxu0 %v4636
    %v4638 = vand.u32 %v84, 4294901760
    %4639 = vmatprep.subr.mxu0 %v4638
    %v4640 = vand.u32 %v83, 4294901760
    %4641 = vmatpush1.msra.mxu0 %v4640
    %v4642 = vand.u32 %v67, 4294901760
    %4643 = vmatprep.subr.mxu0 %v4642
    %v4644 = vand.u32 %v66, 4294901760
    %4645 = vmatpush1.msra.mxu0 %v4644
    %v4646 = vand.u32 %v50, 4294901760
    %4647 = vmatprep.subr.mxu0 %v4646
    %v4648 = vand.u32 %v49, 4294901760
    %4649 = vmatpush1.msra.mxu0 %v4648
    %4650 = vmatprep.subr.mxu0 0.0
    %4651 = vmatpush2.msra.mxu0 0.0
    %4652 = vmatprep.subr.mxu0 0.0
    %4653 = vmatpush2.msra.mxu0 0.0
    %4654 = vmatprep.subr.mxu0 0.0
    %4655 = vmatpush2.msra.mxu0 0.0
    %4656 = vmatprep.subr.mxu0 0.0
    %4657 = vmatpush2.msra.mxu0 0.0
    %4658 = vmatprep.subr.mxu0 0.0
    %4659 = vmatpush2.msra.mxu0 0.0
    %4660 = vmatprep.subr.mxu0 0.0
    %4661 = vmatpush2.msra.mxu0 0.0
    %4662 = vmatprep.subr.mxu0 0.0
    %4663 = vmatpush2.msra.mxu0 0.0
    %4664 = vmatprep.subr.mxu0 0.0
    %4665 = vmatpush2.msra.mxu0 0.0
    %4666 = vmatprep.subr.mxu0 0.0
    %4667 = vmatpush2.msra.mxu0 0.0
    %4668 = vmatprep.subr.mxu0 0.0
    %4669 = vmatpush2.msra.mxu0 0.0
    %4670 = vmatprep.subr.mxu0 0.0
    %4671 = vmatpush2.msra.mxu0 0.0
    %4672 = vmatprep.subr.mxu0 0.0
    %4673 = vmatpush2.msra.mxu0 0.0
    %4674 = vmatprep.subr.mxu0 0.0
    %4675 = vmatpush2.msra.mxu0 0.0
    %4676 = vmatprep.subr.mxu0 0.0
    %4677 = vmatpush2.msra.mxu0 0.0
    %4678 = vmatprep.subr.mxu0 0.0
    %4679 = vmatpush2.msra.mxu0 0.0
    %4680 = vmatprep.subr.mxu0 0.0
    %4681 = vmatpush2.msra.mxu0 0.0
    %4682 = vmatprep.mubr.f32.mxu0 0.0
    %v4683 = vand.u32 %v38, 4294901760
    %v4684 = vsub.f32 %v38, %v4683
    %v4685 = vand.u32 %v4684, 4294901760
    %v4686 = vsub.f32 %v4684, %v4685
    %v4687 = vand.u32 %v4686, 4294901760
    %4688 = vmatmul.mubr.f32.gmra.mxu0 %v4687
    %v4689 = vpop.f32.mrf.mxu0
    %v4690 = vadd.f32 0.0, %v4689
    %v4691 = vpop.f32.mrf.mxu0
    %v4692 = vadd.f32 0.0, %v4691
    %4693 = vdwg.mxu0
    %v4694 = vand.u32 %v305, 4294901760
    %v4695 = vsub.f32 %v305, %v4694
    %v4696 = vand.u32 %v4695, 4294901760
    %v4697 = vsub.f32 %v4695, %v4696
    %v4698 = vand.u32 %v4697, 4294901760
    %4699 = vmatprep.subr.mxu0 %v4698
    %v4700 = vand.u32 %v304, 4294901760
    %v4701 = vsub.f32 %v304, %v4700
    %v4702 = vand.u32 %v4701, 4294901760
    %v4703 = vsub.f32 %v4701, %v4702
    %v4704 = vand.u32 %v4703, 4294901760
    %4705 = vmatpush1.msra.mxu0 %v4704
    %v4706 = vand.u32 %v288, 4294901760
    %v4707 = vsub.f32 %v288, %v4706
    %v4708 = vand.u32 %v4707, 4294901760
    %v4709 = vsub.f32 %v4707, %v4708
    %v4710 = vand.u32 %v4709, 4294901760
    %4711 = vmatprep.subr.mxu0 %v4710
    %v4712 = vand.u32 %v287, 4294901760
    %v4713 = vsub.f32 %v287, %v4712
    %v4714 = vand.u32 %v4713, 4294901760
    %v4715 = vsub.f32 %v4713, %v4714
    %v4716 = vand.u32 %v4715, 4294901760
    %4717 = vmatpush1.msra.mxu0 %v4716
    %v4718 = vand.u32 %v271, 4294901760
    %v4719 = vsub.f32 %v271, %v4718
    %v4720 = vand.u32 %v4719, 4294901760
    %v4721 = vsub.f32 %v4719, %v4720
    %v4722 = vand.u32 %v4721, 4294901760
    %4723 = vmatprep.subr.mxu0 %v4722
    %v4724 = vand.u32 %v270, 4294901760
    %v4725 = vsub.f32 %v270, %v4724
    %v4726 = vand.u32 %v4725, 4294901760
    %v4727 = vsub.f32 %v4725, %v4726
    %v4728 = vand.u32 %v4727, 4294901760
    %4729 = vmatpush1.msra.mxu0 %v4728
    %v4730 = vand.u32 %v254, 4294901760
    %v4731 = vsub.f32 %v254, %v4730
    %v4732 = vand.u32 %v4731, 4294901760
    %v4733 = vsub.f32 %v4731, %v4732
    %v4734 = vand.u32 %v4733, 4294901760
    %4735 = vmatprep.subr.mxu0 %v4734
    %v4736 = vand.u32 %v253, 4294901760
    %v4737 = vsub.f32 %v253, %v4736
    %v4738 = vand.u32 %v4737, 4294901760
    %v4739 = vsub.f32 %v4737, %v4738
    %v4740 = vand.u32 %v4739, 4294901760
    %4741 = vmatpush1.msra.mxu0 %v4740
    %v4742 = vand.u32 %v237, 4294901760
    %v4743 = vsub.f32 %v237, %v4742
    %v4744 = vand.u32 %v4743, 4294901760
    %v4745 = vsub.f32 %v4743, %v4744
    %v4746 = vand.u32 %v4745, 4294901760
    %4747 = vmatprep.subr.mxu0 %v4746
    %v4748 = vand.u32 %v236, 4294901760
    %v4749 = vsub.f32 %v236, %v4748
    %v4750 = vand.u32 %v4749, 4294901760
    %v4751 = vsub.f32 %v4749, %v4750
    %v4752 = vand.u32 %v4751, 4294901760
    %4753 = vmatpush1.msra.mxu0 %v4752
    %v4754 = vand.u32 %v220, 4294901760
    %v4755 = vsub.f32 %v220, %v4754
    %v4756 = vand.u32 %v4755, 4294901760
    %v4757 = vsub.f32 %v4755, %v4756
    %v4758 = vand.u32 %v4757, 4294901760
    %4759 = vmatprep.subr.mxu0 %v4758
    %v4760 = vand.u32 %v219, 4294901760
    %v4761 = vsub.f32 %v219, %v4760
    %v4762 = vand.u32 %v4761, 4294901760
    %v4763 = vsub.f32 %v4761, %v4762
    %v4764 = vand.u32 %v4763, 4294901760
    %4765 = vmatpush1.msra.mxu0 %v4764
    %v4766 = vand.u32 %v203, 4294901760
    %v4767 = vsub.f32 %v203, %v4766
    %v4768 = vand.u32 %v4767, 4294901760
    %v4769 = vsub.f32 %v4767, %v4768
    %v4770 = vand.u32 %v4769, 4294901760
    %4771 = vmatprep.subr.mxu0 %v4770
    %v4772 = vand.u32 %v202, 4294901760
    %v4773 = vsub.f32 %v202, %v4772
    %v4774 = vand.u32 %v4773, 4294901760
    %v4775 = vsub.f32 %v4773, %v4774
    %v4776 = vand.u32 %v4775, 4294901760
    %4777 = vmatpush1.msra.mxu0 %v4776
    %v4778 = vand.u32 %v186, 4294901760
    %v4779 = vsub.f32 %v186, %v4778
    %v4780 = vand.u32 %v4779, 4294901760
    %v4781 = vsub.f32 %v4779, %v4780
    %v4782 = vand.u32 %v4781, 4294901760
    %4783 = vmatprep.subr.mxu0 %v4782
    %v4784 = vand.u32 %v185, 4294901760
    %v4785 = vsub.f32 %v185, %v4784
    %v4786 = vand.u32 %v4785, 4294901760
    %v4787 = vsub.f32 %v4785, %v4786
    %v4788 = vand.u32 %v4787, 4294901760
    %4789 = vmatpush1.msra.mxu0 %v4788
    %v4790 = vand.u32 %v169, 4294901760
    %v4791 = vsub.f32 %v169, %v4790
    %v4792 = vand.u32 %v4791, 4294901760
    %v4793 = vsub.f32 %v4791, %v4792
    %v4794 = vand.u32 %v4793, 4294901760
    %4795 = vmatprep.subr.mxu0 %v4794
    %v4796 = vand.u32 %v168, 4294901760
    %v4797 = vsub.f32 %v168, %v4796
    %v4798 = vand.u32 %v4797, 4294901760
    %v4799 = vsub.f32 %v4797, %v4798
    %v4800 = vand.u32 %v4799, 4294901760
    %4801 = vmatpush1.msra.mxu0 %v4800
    %v4802 = vand.u32 %v152, 4294901760
    %v4803 = vsub.f32 %v152, %v4802
    %v4804 = vand.u32 %v4803, 4294901760
    %v4805 = vsub.f32 %v4803, %v4804
    %v4806 = vand.u32 %v4805, 4294901760
    %4807 = vmatprep.subr.mxu0 %v4806
    %v4808 = vand.u32 %v151, 4294901760
    %v4809 = vsub.f32 %v151, %v4808
    %v4810 = vand.u32 %v4809, 4294901760
    %v4811 = vsub.f32 %v4809, %v4810
    %v4812 = vand.u32 %v4811, 4294901760
    %4813 = vmatpush1.msra.mxu0 %v4812
    %v4814 = vand.u32 %v135, 4294901760
    %v4815 = vsub.f32 %v135, %v4814
    %v4816 = vand.u32 %v4815, 4294901760
    %v4817 = vsub.f32 %v4815, %v4816
    %v4818 = vand.u32 %v4817, 4294901760
    %4819 = vmatprep.subr.mxu0 %v4818
    %v4820 = vand.u32 %v134, 4294901760
    %v4821 = vsub.f32 %v134, %v4820
    %v4822 = vand.u32 %v4821, 4294901760
    %v4823 = vsub.f32 %v4821, %v4822
    %v4824 = vand.u32 %v4823, 4294901760
    %4825 = vmatpush1.msra.mxu0 %v4824
    %v4826 = vand.u32 %v118, 4294901760
    %v4827 = vsub.f32 %v118, %v4826
    %v4828 = vand.u32 %v4827, 4294901760
    %v4829 = vsub.f32 %v4827, %v4828
    %v4830 = vand.u32 %v4829, 4294901760
    %4831 = vmatprep.subr.mxu0 %v4830
    %v4832 = vand.u32 %v117, 4294901760
    %v4833 = vsub.f32 %v117, %v4832
    %v4834 = vand.u32 %v4833, 4294901760
    %v4835 = vsub.f32 %v4833, %v4834
    %v4836 = vand.u32 %v4835, 4294901760
    %4837 = vmatpush1.msra.mxu0 %v4836
    %v4838 = vand.u32 %v101, 4294901760
    %v4839 = vsub.f32 %v101, %v4838
    %v4840 = vand.u32 %v4839, 4294901760
    %v4841 = vsub.f32 %v4839, %v4840
    %v4842 = vand.u32 %v4841, 4294901760
    %4843 = vmatprep.subr.mxu0 %v4842
    %v4844 = vand.u32 %v100, 4294901760
    %v4845 = vsub.f32 %v100, %v4844
    %v4846 = vand.u32 %v4845, 4294901760
    %v4847 = vsub.f32 %v4845, %v4846
    %v4848 = vand.u32 %v4847, 4294901760
    %4849 = vmatpush1.msra.mxu0 %v4848
    %v4850 = vand.u32 %v84, 4294901760
    %v4851 = vsub.f32 %v84, %v4850
    %v4852 = vand.u32 %v4851, 4294901760
    %v4853 = vsub.f32 %v4851, %v4852
    %v4854 = vand.u32 %v4853, 4294901760
    %4855 = vmatprep.subr.mxu0 %v4854
    %v4856 = vand.u32 %v83, 4294901760
    %v4857 = vsub.f32 %v83, %v4856
    %v4858 = vand.u32 %v4857, 4294901760
    %v4859 = vsub.f32 %v4857, %v4858
    %v4860 = vand.u32 %v4859, 4294901760
    %4861 = vmatpush1.msra.mxu0 %v4860
    %v4862 = vand.u32 %v67, 4294901760
    %v4863 = vsub.f32 %v67, %v4862
    %v4864 = vand.u32 %v4863, 4294901760
    %v4865 = vsub.f32 %v4863, %v4864
    %v4866 = vand.u32 %v4865, 4294901760
    %4867 = vmatprep.subr.mxu0 %v4866
    %v4868 = vand.u32 %v66, 4294901760
    %v4869 = vsub.f32 %v66, %v4868
    %v4870 = vand.u32 %v4869, 4294901760
    %v4871 = vsub.f32 %v4869, %v4870
    %v4872 = vand.u32 %v4871, 4294901760
    %4873 = vmatpush1.msra.mxu0 %v4872
    %v4874 = vand.u32 %v50, 4294901760
    %v4875 = vsub.f32 %v50, %v4874
    %v4876 = vand.u32 %v4875, 4294901760
    %v4877 = vsub.f32 %v4875, %v4876
    %v4878 = vand.u32 %v4877, 4294901760
    %4879 = vmatprep.subr.mxu0 %v4878
    %v4880 = vand.u32 %v49, 4294901760
    %v4881 = vsub.f32 %v49, %v4880
    %v4882 = vand.u32 %v4881, 4294901760
    %v4883 = vsub.f32 %v4881, %v4882
    %v4884 = vand.u32 %v4883, 4294901760
    %4885 = vmatpush1.msra.mxu0 %v4884
    %4886 = vmatprep.subr.mxu0 0.0
    %4887 = vmatpush2.msra.mxu0 0.0
    %4888 = vmatprep.subr.mxu0 0.0
    %4889 = vmatpush2.msra.mxu0 0.0
    %4890 = vmatprep.subr.mxu0 0.0
    %4891 = vmatpush2.msra.mxu0 0.0
    %4892 = vmatprep.subr.mxu0 0.0
    %4893 = vmatpush2.msra.mxu0 0.0
    %4894 = vmatprep.subr.mxu0 0.0
    %4895 = vmatpush2.msra.mxu0 0.0
    %4896 = vmatprep.subr.mxu0 0.0
    %4897 = vmatpush2.msra.mxu0 0.0
    %4898 = vmatprep.subr.mxu0 0.0
    %4899 = vmatpush2.msra.mxu0 0.0
    %4900 = vmatprep.subr.mxu0 0.0
    %4901 = vmatpush2.msra.mxu0 0.0
    %4902 = vmatprep.subr.mxu0 0.0
    %4903 = vmatpush2.msra.mxu0 0.0
    %4904 = vmatprep.subr.mxu0 0.0
    %4905 = vmatpush2.msra.mxu0 0.0
    %4906 = vmatprep.subr.mxu0 0.0
    %4907 = vmatpush2.msra.mxu0 0.0
    %4908 = vmatprep.subr.mxu0 0.0
    %4909 = vmatpush2.msra.mxu0 0.0
    %4910 = vmatprep.subr.mxu0 0.0
    %4911 = vmatpush2.msra.mxu0 0.0
    %4912 = vmatprep.subr.mxu0 0.0
    %4913 = vmatpush2.msra.mxu0 0.0
    %4914 = vmatprep.subr.mxu0 0.0
    %4915 = vmatpush2.msra.mxu0 0.0
    %4916 = vmatprep.subr.mxu0 0.0
    %4917 = vmatpush2.msra.mxu0 0.0
    %4918 = vmatprep.mubr.f32.mxu0 0.0
    %v4919 = vand.u32 %v38, 4294901760
    %4920 = vmatmul.mubr.f32.gmra.mxu0 %v4919
    %v4921 = vpop.f32.mrf.mxu0
    %v4922 = vadd.f32 %v4690, %v4921
    %v4923 = vpop.f32.mrf.mxu0
    %v4924 = vadd.f32 %v4692, %v4923
    %4925 = vdwg.mxu0
    %v4926 = vand.u32 %v305, 4294901760
    %v4927 = vsub.f32 %v305, %v4926
    %4928 = vmatprep.subr.mxu0 %v4927
    %v4929 = vand.u32 %v304, 4294901760
    %v4930 = vsub.f32 %v304, %v4929
    %4931 = vmatpush1.msra.mxu0 %v4930
    %v4932 = vand.u32 %v288, 4294901760
    %v4933 = vsub.f32 %v288, %v4932
    %4934 = vmatprep.subr.mxu0 %v4933
    %v4935 = vand.u32 %v287, 4294901760
    %v4936 = vsub.f32 %v287, %v4935
    %4937 = vmatpush1.msra.mxu0 %v4936
    %v4938 = vand.u32 %v271, 4294901760
    %v4939 = vsub.f32 %v271, %v4938
    %4940 = vmatprep.subr.mxu0 %v4939
    %v4941 = vand.u32 %v270, 4294901760
    %v4942 = vsub.f32 %v270, %v4941
    %4943 = vmatpush1.msra.mxu0 %v4942
    %v4944 = vand.u32 %v254, 4294901760
    %v4945 = vsub.f32 %v254, %v4944
    %4946 = vmatprep.subr.mxu0 %v4945
    %v4947 = vand.u32 %v253, 4294901760
    %v4948 = vsub.f32 %v253, %v4947
    %4949 = vmatpush1.msra.mxu0 %v4948
    %v4950 = vand.u32 %v237, 4294901760
    %v4951 = vsub.f32 %v237, %v4950
    %4952 = vmatprep.subr.mxu0 %v4951
    %v4953 = vand.u32 %v236, 4294901760
    %v4954 = vsub.f32 %v236, %v4953
    %4955 = vmatpush1.msra.mxu0 %v4954
    %v4956 = vand.u32 %v220, 4294901760
    %v4957 = vsub.f32 %v220, %v4956
    %4958 = vmatprep.subr.mxu0 %v4957
    %v4959 = vand.u32 %v219, 4294901760
    %v4960 = vsub.f32 %v219, %v4959
    %4961 = vmatpush1.msra.mxu0 %v4960
    %v4962 = vand.u32 %v203, 4294901760
    %v4963 = vsub.f32 %v203, %v4962
    %4964 = vmatprep.subr.mxu0 %v4963
    %v4965 = vand.u32 %v202, 4294901760
    %v4966 = vsub.f32 %v202, %v4965
    %4967 = vmatpush1.msra.mxu0 %v4966
    %v4968 = vand.u32 %v186, 4294901760
    %v4969 = vsub.f32 %v186, %v4968
    %4970 = vmatprep.subr.mxu0 %v4969
    %v4971 = vand.u32 %v185, 4294901760
    %v4972 = vsub.f32 %v185, %v4971
    %4973 = vmatpush1.msra.mxu0 %v4972
    %v4974 = vand.u32 %v169, 4294901760
    %v4975 = vsub.f32 %v169, %v4974
    %4976 = vmatprep.subr.mxu0 %v4975
    %v4977 = vand.u32 %v168, 4294901760
    %v4978 = vsub.f32 %v168, %v4977
    %4979 = vmatpush1.msra.mxu0 %v4978
    %v4980 = vand.u32 %v152, 4294901760
    %v4981 = vsub.f32 %v152, %v4980
    %4982 = vmatprep.subr.mxu0 %v4981
    %v4983 = vand.u32 %v151, 4294901760
    %v4984 = vsub.f32 %v151, %v4983
    %4985 = vmatpush1.msra.mxu0 %v4984
    %v4986 = vand.u32 %v135, 4294901760
    %v4987 = vsub.f32 %v135, %v4986
    %4988 = vmatprep.subr.mxu0 %v4987
    %v4989 = vand.u32 %v134, 4294901760
    %v4990 = vsub.f32 %v134, %v4989
    %4991 = vmatpush1.msra.mxu0 %v4990
    %v4992 = vand.u32 %v118, 4294901760
    %v4993 = vsub.f32 %v118, %v4992
    %4994 = vmatprep.subr.mxu0 %v4993
    %v4995 = vand.u32 %v117, 4294901760
    %v4996 = vsub.f32 %v117, %v4995
    %4997 = vmatpush1.msra.mxu0 %v4996
    %v4998 = vand.u32 %v101, 4294901760
    %v4999 = vsub.f32 %v101, %v4998
    %5000 = vmatprep.subr.mxu0 %v4999
    %v5001 = vand.u32 %v100, 4294901760
    %v5002 = vsub.f32 %v100, %v5001
    %5003 = vmatpush1.msra.mxu0 %v5002
    %v5004 = vand.u32 %v84, 4294901760
    %v5005 = vsub.f32 %v84, %v5004
    %5006 = vmatprep.subr.mxu0 %v5005
    %v5007 = vand.u32 %v83, 4294901760
    %v5008 = vsub.f32 %v83, %v5007
    %5009 = vmatpush1.msra.mxu0 %v5008
    %v5010 = vand.u32 %v67, 4294901760
    %v5011 = vsub.f32 %v67, %v5010
    %5012 = vmatprep.subr.mxu0 %v5011
    %v5013 = vand.u32 %v66, 4294901760
    %v5014 = vsub.f32 %v66, %v5013
    %5015 = vmatpush1.msra.mxu0 %v5014
    %v5016 = vand.u32 %v50, 4294901760
    %v5017 = vsub.f32 %v50, %v5016
    %5018 = vmatprep.subr.mxu0 %v5017
    %v5019 = vand.u32 %v49, 4294901760
    %v5020 = vsub.f32 %v49, %v5019
    %5021 = vmatpush1.msra.mxu0 %v5020
    %5022 = vmatprep.subr.mxu0 0.0
    %5023 = vmatpush2.msra.mxu0 0.0
    %5024 = vmatprep.subr.mxu0 0.0
    %5025 = vmatpush2.msra.mxu0 0.0
    %5026 = vmatprep.subr.mxu0 0.0
    %5027 = vmatpush2.msra.mxu0 0.0
    %5028 = vmatprep.subr.mxu0 0.0
    %5029 = vmatpush2.msra.mxu0 0.0
    %5030 = vmatprep.subr.mxu0 0.0
    %5031 = vmatpush2.msra.mxu0 0.0
    %5032 = vmatprep.subr.mxu0 0.0
    %5033 = vmatpush2.msra.mxu0 0.0
    %5034 = vmatprep.subr.mxu0 0.0
    %5035 = vmatpush2.msra.mxu0 0.0
    %5036 = vmatprep.subr.mxu0 0.0
    %5037 = vmatpush2.msra.mxu0 0.0
    %5038 = vmatprep.subr.mxu0 0.0
    %5039 = vmatpush2.msra.mxu0 0.0
    %5040 = vmatprep.subr.mxu0 0.0
    %5041 = vmatpush2.msra.mxu0 0.0
    %5042 = vmatprep.subr.mxu0 0.0
    %5043 = vmatpush2.msra.mxu0 0.0
    %5044 = vmatprep.subr.mxu0 0.0
    %5045 = vmatpush2.msra.mxu0 0.0
    %5046 = vmatprep.subr.mxu0 0.0
    %5047 = vmatpush2.msra.mxu0 0.0
    %5048 = vmatprep.subr.mxu0 0.0
    %5049 = vmatpush2.msra.mxu0 0.0
    %5050 = vmatprep.subr.mxu0 0.0
    %5051 = vmatpush2.msra.mxu0 0.0
    %5052 = vmatprep.subr.mxu0 0.0
    %5053 = vmatpush2.msra.mxu0 0.0
    %5054 = vmatprep.mubr.f32.mxu0 0.0
    %v5055 = vand.u32 %v38, 4294901760
    %v5056 = vsub.f32 %v38, %v5055
    %5057 = vmatmul.mubr.f32.gmra.mxu0 %v5056
    %v5058 = vpop.f32.mrf.mxu0
    %v5059 = vadd.f32 %v4922, %v5058
    %v5060 = vpop.f32.mrf.mxu0
    %v5061 = vadd.f32 %v4924, %v5060
    %5062 = vdwg.mxu0
    %v5063 = vand.u32 %v305, 4294901760
    %5064 = vmatprep.subr.mxu0 %v5063
    %v5065 = vand.u32 %v304, 4294901760
    %5066 = vmatpush1.msra.mxu0 %v5065
    %v5067 = vand.u32 %v288, 4294901760
    %5068 = vmatprep.subr.mxu0 %v5067
    %v5069 = vand.u32 %v287, 4294901760
    %5070 = vmatpush1.msra.mxu0 %v5069
    %v5071 = vand.u32 %v271, 4294901760
    %5072 = vmatprep.subr.mxu0 %v5071
    %v5073 = vand.u32 %v270, 4294901760
    %5074 = vmatpush1.msra.mxu0 %v5073
    %v5075 = vand.u32 %v254, 4294901760
    %5076 = vmatprep.subr.mxu0 %v5075
    %v5077 = vand.u32 %v253, 4294901760
    %5078 = vmatpush1.msra.mxu0 %v5077
    %v5079 = vand.u32 %v237, 4294901760
    %5080 = vmatprep.subr.mxu0 %v5079
    %v5081 = vand.u32 %v236, 4294901760
    %5082 = vmatpush1.msra.mxu0 %v5081
    %v5083 = vand.u32 %v220, 4294901760
    %5084 = vmatprep.subr.mxu0 %v5083
    %v5085 = vand.u32 %v219, 4294901760
    %5086 = vmatpush1.msra.mxu0 %v5085
    %v5087 = vand.u32 %v203, 4294901760
    %5088 = vmatprep.subr.mxu0 %v5087
    %v5089 = vand.u32 %v202, 4294901760
    %5090 = vmatpush1.msra.mxu0 %v5089
    %v5091 = vand.u32 %v186, 4294901760
    %5092 = vmatprep.subr.mxu0 %v5091
    %v5093 = vand.u32 %v185, 4294901760
    %5094 = vmatpush1.msra.mxu0 %v5093
    %v5095 = vand.u32 %v169, 4294901760
    %5096 = vmatprep.subr.mxu0 %v5095
    %v5097 = vand.u32 %v168, 4294901760
    %5098 = vmatpush1.msra.mxu0 %v5097
    %v5099 = vand.u32 %v152, 4294901760
    %5100 = vmatprep.subr.mxu0 %v5099
    %v5101 = vand.u32 %v151, 4294901760
    %5102 = vmatpush1.msra.mxu0 %v5101
    %v5103 = vand.u32 %v135, 4294901760
    %5104 = vmatprep.subr.mxu0 %v5103
    %v5105 = vand.u32 %v134, 4294901760
    %5106 = vmatpush1.msra.mxu0 %v5105
    %v5107 = vand.u32 %v118, 4294901760
    %5108 = vmatprep.subr.mxu0 %v5107
    %v5109 = vand.u32 %v117, 4294901760
    %5110 = vmatpush1.msra.mxu0 %v5109
    %v5111 = vand.u32 %v101, 4294901760
    %5112 = vmatprep.subr.mxu0 %v5111
    %v5113 = vand.u32 %v100, 4294901760
    %5114 = vmatpush1.msra.mxu0 %v5113
    %v5115 = vand.u32 %v84, 4294901760
    %5116 = vmatprep.subr.mxu0 %v5115
    %v5117 = vand.u32 %v83, 4294901760
    %5118 = vmatpush1.msra.mxu0 %v5117
    %v5119 = vand.u32 %v67, 4294901760
    %5120 = vmatprep.subr.mxu0 %v5119
    %v5121 = vand.u32 %v66, 4294901760
    %5122 = vmatpush1.msra.mxu0 %v5121
    %v5123 = vand.u32 %v50, 4294901760
    %5124 = vmatprep.subr.mxu0 %v5123
    %v5125 = vand.u32 %v49, 4294901760
    %5126 = vmatpush1.msra.mxu0 %v5125
    %5127 = vmatprep.subr.mxu0 0.0
    %5128 = vmatpush2.msra.mxu0 0.0
    %5129 = vmatprep.subr.mxu0 0.0
    %5130 = vmatpush2.msra.mxu0 0.0
    %5131 = vmatprep.subr.mxu0 0.0
    %5132 = vmatpush2.msra.mxu0 0.0
    %5133 = vmatprep.subr.mxu0 0.0
    %5134 = vmatpush2.msra.mxu0 0.0
    %5135 = vmatprep.subr.mxu0 0.0
    %5136 = vmatpush2.msra.mxu0 0.0
    %5137 = vmatprep.subr.mxu0 0.0
    %5138 = vmatpush2.msra.mxu0 0.0
    %5139 = vmatprep.subr.mxu0 0.0
    %5140 = vmatpush2.msra.mxu0 0.0
    %5141 = vmatprep.subr.mxu0 0.0
    %5142 = vmatpush2.msra.mxu0 0.0
    %5143 = vmatprep.subr.mxu0 0.0
    %5144 = vmatpush2.msra.mxu0 0.0
    %5145 = vmatprep.subr.mxu0 0.0
    %5146 = vmatpush2.msra.mxu0 0.0
    %5147 = vmatprep.subr.mxu0 0.0
    %5148 = vmatpush2.msra.mxu0 0.0
    %5149 = vmatprep.subr.mxu0 0.0
    %5150 = vmatpush2.msra.mxu0 0.0
    %5151 = vmatprep.subr.mxu0 0.0
    %5152 = vmatpush2.msra.mxu0 0.0
    %5153 = vmatprep.subr.mxu0 0.0
    %5154 = vmatpush2.msra.mxu0 0.0
    %5155 = vmatprep.subr.mxu0 0.0
    %5156 = vmatpush2.msra.mxu0 0.0
    %5157 = vmatprep.subr.mxu0 0.0
    %5158 = vmatpush2.msra.mxu0 0.0
    %5159 = vmatprep.mubr.f32.mxu0 0.0
    %v5160 = vand.u32 %v38, 4294901760
    %v5161 = vsub.f32 %v38, %v5160
    %v5162 = vand.u32 %v5161, 4294901760
    %5163 = vmatmul.mubr.f32.gmra.mxu0 %v5162
    %v5164 = vpop.f32.mrf.mxu0
    %v5165 = vadd.f32 %v5059, %v5164
    %v5166 = vpop.f32.mrf.mxu0
    %v5167 = vadd.f32 %v5061, %v5166
    %5168 = vdwg.mxu0
    %v5169 = vand.u32 %v305, 4294901760
    %v5170 = vsub.f32 %v305, %v5169
    %v5171 = vand.u32 %v5170, 4294901760
    %5172 = vmatprep.subr.mxu0 %v5171
    %v5173 = vand.u32 %v304, 4294901760
    %v5174 = vsub.f32 %v304, %v5173
    %v5175 = vand.u32 %v5174, 4294901760
    %5176 = vmatpush1.msra.mxu0 %v5175
    %v5177 = vand.u32 %v288, 4294901760
    %v5178 = vsub.f32 %v288, %v5177
    %v5179 = vand.u32 %v5178, 4294901760
    %5180 = vmatprep.subr.mxu0 %v5179
    %v5181 = vand.u32 %v287, 4294901760
    %v5182 = vsub.f32 %v287, %v5181
    %v5183 = vand.u32 %v5182, 4294901760
    %5184 = vmatpush1.msra.mxu0 %v5183
    %v5185 = vand.u32 %v271, 4294901760
    %v5186 = vsub.f32 %v271, %v5185
    %v5187 = vand.u32 %v5186, 4294901760
    %5188 = vmatprep.subr.mxu0 %v5187
    %v5189 = vand.u32 %v270, 4294901760
    %v5190 = vsub.f32 %v270, %v5189
    %v5191 = vand.u32 %v5190, 4294901760
    %5192 = vmatpush1.msra.mxu0 %v5191
    %v5193 = vand.u32 %v254, 4294901760
    %v5194 = vsub.f32 %v254, %v5193
    %v5195 = vand.u32 %v5194, 4294901760
    %5196 = vmatprep.subr.mxu0 %v5195
    %v5197 = vand.u32 %v253, 4294901760
    %v5198 = vsub.f32 %v253, %v5197
    %v5199 = vand.u32 %v5198, 4294901760
    %5200 = vmatpush1.msra.mxu0 %v5199
    %v5201 = vand.u32 %v237, 4294901760
    %v5202 = vsub.f32 %v237, %v5201
    %v5203 = vand.u32 %v5202, 4294901760
    %5204 = vmatprep.subr.mxu0 %v5203
    %v5205 = vand.u32 %v236, 4294901760
    %v5206 = vsub.f32 %v236, %v5205
    %v5207 = vand.u32 %v5206, 4294901760
    %5208 = vmatpush1.msra.mxu0 %v5207
    %v5209 = vand.u32 %v220, 4294901760
    %v5210 = vsub.f32 %v220, %v5209
    %v5211 = vand.u32 %v5210, 4294901760
    %5212 = vmatprep.subr.mxu0 %v5211
    %v5213 = vand.u32 %v219, 4294901760
    %v5214 = vsub.f32 %v219, %v5213
    %v5215 = vand.u32 %v5214, 4294901760
    %5216 = vmatpush1.msra.mxu0 %v5215
    %v5217 = vand.u32 %v203, 4294901760
    %v5218 = vsub.f32 %v203, %v5217
    %v5219 = vand.u32 %v5218, 4294901760
    %5220 = vmatprep.subr.mxu0 %v5219
    %v5221 = vand.u32 %v202, 4294901760
    %v5222 = vsub.f32 %v202, %v5221
    %v5223 = vand.u32 %v5222, 4294901760
    %5224 = vmatpush1.msra.mxu0 %v5223
    %v5225 = vand.u32 %v186, 4294901760
    %v5226 = vsub.f32 %v186, %v5225
    %v5227 = vand.u32 %v5226, 4294901760
    %5228 = vmatprep.subr.mxu0 %v5227
    %v5229 = vand.u32 %v185, 4294901760
    %v5230 = vsub.f32 %v185, %v5229
    %v5231 = vand.u32 %v5230, 4294901760
    %5232 = vmatpush1.msra.mxu0 %v5231
    %v5233 = vand.u32 %v169, 4294901760
    %v5234 = vsub.f32 %v169, %v5233
    %v5235 = vand.u32 %v5234, 4294901760
    %5236 = vmatprep.subr.mxu0 %v5235
    %v5237 = vand.u32 %v168, 4294901760
    %v5238 = vsub.f32 %v168, %v5237
    %v5239 = vand.u32 %v5238, 4294901760
    %5240 = vmatpush1.msra.mxu0 %v5239
    %v5241 = vand.u32 %v152, 4294901760
    %v5242 = vsub.f32 %v152, %v5241
    %v5243 = vand.u32 %v5242, 4294901760
    %5244 = vmatprep.subr.mxu0 %v5243
    %v5245 = vand.u32 %v151, 4294901760
    %v5246 = vsub.f32 %v151, %v5245
    %v5247 = vand.u32 %v5246, 4294901760
    %5248 = vmatpush1.msra.mxu0 %v5247
    %v5249 = vand.u32 %v135, 4294901760
    %v5250 = vsub.f32 %v135, %v5249
    %v5251 = vand.u32 %v5250, 4294901760
    %5252 = vmatprep.subr.mxu0 %v5251
    %v5253 = vand.u32 %v134, 4294901760
    %v5254 = vsub.f32 %v134, %v5253
    %v5255 = vand.u32 %v5254, 4294901760
    %5256 = vmatpush1.msra.mxu0 %v5255
    %v5257 = vand.u32 %v118, 4294901760
    %v5258 = vsub.f32 %v118, %v5257
    %v5259 = vand.u32 %v5258, 4294901760
    %5260 = vmatprep.subr.mxu0 %v5259
    %v5261 = vand.u32 %v117, 4294901760
    %v5262 = vsub.f32 %v117, %v5261
    %v5263 = vand.u32 %v5262, 4294901760
    %5264 = vmatpush1.msra.mxu0 %v5263
    %v5265 = vand.u32 %v101, 4294901760
    %v5266 = vsub.f32 %v101, %v5265
    %v5267 = vand.u32 %v5266, 4294901760
    %5268 = vmatprep.subr.mxu0 %v5267
    %v5269 = vand.u32 %v100, 4294901760
    %v5270 = vsub.f32 %v100, %v5269
    %v5271 = vand.u32 %v5270, 4294901760
    %5272 = vmatpush1.msra.mxu0 %v5271
    %v5273 = vand.u32 %v84, 4294901760
    %v5274 = vsub.f32 %v84, %v5273
    %v5275 = vand.u32 %v5274, 4294901760
    %5276 = vmatprep.subr.mxu0 %v5275
    %v5277 = vand.u32 %v83, 4294901760
    %v5278 = vsub.f32 %v83, %v5277
    %v5279 = vand.u32 %v5278, 4294901760
    %5280 = vmatpush1.msra.mxu0 %v5279
    %v5281 = vand.u32 %v67, 4294901760
    %v5282 = vsub.f32 %v67, %v5281
    %v5283 = vand.u32 %v5282, 4294901760
    %5284 = vmatprep.subr.mxu0 %v5283
    %v5285 = vand.u32 %v66, 4294901760
    %v5286 = vsub.f32 %v66, %v5285
    %v5287 = vand.u32 %v5286, 4294901760
    %5288 = vmatpush1.msra.mxu0 %v5287
    %v5289 = vand.u32 %v50, 4294901760
    %v5290 = vsub.f32 %v50, %v5289
    %v5291 = vand.u32 %v5290, 4294901760
    %5292 = vmatprep.subr.mxu0 %v5291
    %v5293 = vand.u32 %v49, 4294901760
    %v5294 = vsub.f32 %v49, %v5293
    %v5295 = vand.u32 %v5294, 4294901760
    %5296 = vmatpush1.msra.mxu0 %v5295
    %5297 = vmatprep.subr.mxu0 0.0
    %5298 = vmatpush2.msra.mxu0 0.0
    %5299 = vmatprep.subr.mxu0 0.0
    %5300 = vmatpush2.msra.mxu0 0.0
    %5301 = vmatprep.subr.mxu0 0.0
    %5302 = vmatpush2.msra.mxu0 0.0
    %5303 = vmatprep.subr.mxu0 0.0
    %5304 = vmatpush2.msra.mxu0 0.0
    %5305 = vmatprep.subr.mxu0 0.0
    %5306 = vmatpush2.msra.mxu0 0.0
    %5307 = vmatprep.subr.mxu0 0.0
    %5308 = vmatpush2.msra.mxu0 0.0
    %5309 = vmatprep.subr.mxu0 0.0
    %5310 = vmatpush2.msra.mxu0 0.0
    %5311 = vmatprep.subr.mxu0 0.0
    %5312 = vmatpush2.msra.mxu0 0.0
    %5313 = vmatprep.subr.mxu0 0.0
    %5314 = vmatpush2.msra.mxu0 0.0
    %5315 = vmatprep.subr.mxu0 0.0
    %5316 = vmatpush2.msra.mxu0 0.0
    %5317 = vmatprep.subr.mxu0 0.0
    %5318 = vmatpush2.msra.mxu0 0.0
    %5319 = vmatprep.subr.mxu0 0.0
    %5320 = vmatpush2.msra.mxu0 0.0
    %5321 = vmatprep.subr.mxu0 0.0
    %5322 = vmatpush2.msra.mxu0 0.0
    %5323 = vmatprep.subr.mxu0 0.0
    %5324 = vmatpush2.msra.mxu0 0.0
    %5325 = vmatprep.subr.mxu0 0.0
    %5326 = vmatpush2.msra.mxu0 0.0
    %5327 = vmatprep.subr.mxu0 0.0
    %5328 = vmatpush2.msra.mxu0 0.0
    %5329 = vmatprep.mubr.f32.mxu0 0.0
    %v5330 = vand.u32 %v38, 4294901760
    %5331 = vmatmul.mubr.f32.gmra.mxu0 %v5330
    %v5332 = vpop.f32.mrf.mxu0
    %v5333 = vadd.f32 %v5165, %v5332
    %v5334 = vpop.f32.mrf.mxu0
    %v5335 = vadd.f32 %v5167, %v5334
    %5336 = vdwg.mxu0
    %v5337 = vand.u32 %v305, 4294901760
    %5338 = vmatprep.subr.mxu0 %v5337
    %v5339 = vand.u32 %v304, 4294901760
    %5340 = vmatpush1.msra.mxu0 %v5339
    %v5341 = vand.u32 %v288, 4294901760
    %5342 = vmatprep.subr.mxu0 %v5341
    %v5343 = vand.u32 %v287, 4294901760
    %5344 = vmatpush1.msra.mxu0 %v5343
    %v5345 = vand.u32 %v271, 4294901760
    %5346 = vmatprep.subr.mxu0 %v5345
    %v5347 = vand.u32 %v270, 4294901760
    %5348 = vmatpush1.msra.mxu0 %v5347
    %v5349 = vand.u32 %v254, 4294901760
    %5350 = vmatprep.subr.mxu0 %v5349
    %v5351 = vand.u32 %v253, 4294901760
    %5352 = vmatpush1.msra.mxu0 %v5351
    %v5353 = vand.u32 %v237, 4294901760
    %5354 = vmatprep.subr.mxu0 %v5353
    %v5355 = vand.u32 %v236, 4294901760
    %5356 = vmatpush1.msra.mxu0 %v5355
    %v5357 = vand.u32 %v220, 4294901760
    %5358 = vmatprep.subr.mxu0 %v5357
    %v5359 = vand.u32 %v219, 4294901760
    %5360 = vmatpush1.msra.mxu0 %v5359
    %v5361 = vand.u32 %v203, 4294901760
    %5362 = vmatprep.subr.mxu0 %v5361
    %v5363 = vand.u32 %v202, 4294901760
    %5364 = vmatpush1.msra.mxu0 %v5363
    %v5365 = vand.u32 %v186, 4294901760
    %5366 = vmatprep.subr.mxu0 %v5365
    %v5367 = vand.u32 %v185, 4294901760
    %5368 = vmatpush1.msra.mxu0 %v5367
    %v5369 = vand.u32 %v169, 4294901760
    %5370 = vmatprep.subr.mxu0 %v5369
    %v5371 = vand.u32 %v168, 4294901760
    %5372 = vmatpush1.msra.mxu0 %v5371
    %v5373 = vand.u32 %v152, 4294901760
    %5374 = vmatprep.subr.mxu0 %v5373
    %v5375 = vand.u32 %v151, 4294901760
    %5376 = vmatpush1.msra.mxu0 %v5375
    %v5377 = vand.u32 %v135, 4294901760
    %5378 = vmatprep.subr.mxu0 %v5377
    %v5379 = vand.u32 %v134, 4294901760
    %5380 = vmatpush1.msra.mxu0 %v5379
    %v5381 = vand.u32 %v118, 4294901760
    %5382 = vmatprep.subr.mxu0 %v5381
    %v5383 = vand.u32 %v117, 4294901760
    %5384 = vmatpush1.msra.mxu0 %v5383
    %v5385 = vand.u32 %v101, 4294901760
    %5386 = vmatprep.subr.mxu0 %v5385
    %v5387 = vand.u32 %v100, 4294901760
    %5388 = vmatpush1.msra.mxu0 %v5387
    %v5389 = vand.u32 %v84, 4294901760
    %5390 = vmatprep.subr.mxu0 %v5389
    %v5391 = vand.u32 %v83, 4294901760
    %5392 = vmatpush1.msra.mxu0 %v5391
    %v5393 = vand.u32 %v67, 4294901760
    %5394 = vmatprep.subr.mxu0 %v5393
    %v5395 = vand.u32 %v66, 4294901760
    %5396 = vmatpush1.msra.mxu0 %v5395
    %v5397 = vand.u32 %v50, 4294901760
    %5398 = vmatprep.subr.mxu0 %v5397
    %v5399 = vand.u32 %v49, 4294901760
    %5400 = vmatpush1.msra.mxu0 %v5399
    %5401 = vmatprep.subr.mxu0 0.0
    %5402 = vmatpush2.msra.mxu0 0.0
    %5403 = vmatprep.subr.mxu0 0.0
    %5404 = vmatpush2.msra.mxu0 0.0
    %5405 = vmatprep.subr.mxu0 0.0
    %5406 = vmatpush2.msra.mxu0 0.0
    %5407 = vmatprep.subr.mxu0 0.0
    %5408 = vmatpush2.msra.mxu0 0.0
    %5409 = vmatprep.subr.mxu0 0.0
    %5410 = vmatpush2.msra.mxu0 0.0
    %5411 = vmatprep.subr.mxu0 0.0
    %5412 = vmatpush2.msra.mxu0 0.0
    %5413 = vmatprep.subr.mxu0 0.0
    %5414 = vmatpush2.msra.mxu0 0.0
    %5415 = vmatprep.subr.mxu0 0.0
    %5416 = vmatpush2.msra.mxu0 0.0
    %5417 = vmatprep.subr.mxu0 0.0
    %5418 = vmatpush2.msra.mxu0 0.0
    %5419 = vmatprep.subr.mxu0 0.0
    %5420 = vmatpush2.msra.mxu0 0.0
    %5421 = vmatprep.subr.mxu0 0.0
    %5422 = vmatpush2.msra.mxu0 0.0
    %5423 = vmatprep.subr.mxu0 0.0
    %5424 = vmatpush2.msra.mxu0 0.0
    %5425 = vmatprep.subr.mxu0 0.0
    %5426 = vmatpush2.msra.mxu0 0.0
    %5427 = vmatprep.subr.mxu0 0.0
    %5428 = vmatpush2.msra.mxu0 0.0
    %5429 = vmatprep.subr.mxu0 0.0
    %5430 = vmatpush2.msra.mxu0 0.0
    %5431 = vmatprep.subr.mxu0 0.0
    %5432 = vmatpush2.msra.mxu0 0.0
    %5433 = vmatprep.mubr.f32.mxu0 0.0
    %v5434 = vand.u32 %v38, 4294901760
    %5435 = vmatmul.mubr.f32.gmra.mxu0 %v5434
    %v5436 = vpop.f32.mrf.mxu0
    %v5437 = vadd.f32 %v5333, %v5436
    %v5438 = vpop.f32.mrf.mxu0
    %v5439 = vadd.f32 %v5335, %v5438
    %5440 = vdwg.mxu0
    %v5441 = vand.u32 %v307, 4294901760
    %5442 = vmatprep.subr.mxu0 %v5441
    %v5443 = vand.u32 %v306, 4294901760
    %5444 = vmatpush1.msra.mxu0 %v5443
    %v5445 = vand.u32 %v290, 4294901760
    %5446 = vmatprep.subr.mxu0 %v5445
    %v5447 = vand.u32 %v289, 4294901760
    %5448 = vmatpush1.msra.mxu0 %v5447
    %v5449 = vand.u32 %v273, 4294901760
    %5450 = vmatprep.subr.mxu0 %v5449
    %v5451 = vand.u32 %v272, 4294901760
    %5452 = vmatpush1.msra.mxu0 %v5451
    %v5453 = vand.u32 %v256, 4294901760
    %5454 = vmatprep.subr.mxu0 %v5453
    %v5455 = vand.u32 %v255, 4294901760
    %5456 = vmatpush1.msra.mxu0 %v5455
    %v5457 = vand.u32 %v239, 4294901760
    %5458 = vmatprep.subr.mxu0 %v5457
    %v5459 = vand.u32 %v238, 4294901760
    %5460 = vmatpush1.msra.mxu0 %v5459
    %v5461 = vand.u32 %v222, 4294901760
    %5462 = vmatprep.subr.mxu0 %v5461
    %v5463 = vand.u32 %v221, 4294901760
    %5464 = vmatpush1.msra.mxu0 %v5463
    %v5465 = vand.u32 %v205, 4294901760
    %5466 = vmatprep.subr.mxu0 %v5465
    %v5467 = vand.u32 %v204, 4294901760
    %5468 = vmatpush1.msra.mxu0 %v5467
    %v5469 = vand.u32 %v188, 4294901760
    %5470 = vmatprep.subr.mxu0 %v5469
    %v5471 = vand.u32 %v187, 4294901760
    %5472 = vmatpush1.msra.mxu0 %v5471
    %v5473 = vand.u32 %v171, 4294901760
    %5474 = vmatprep.subr.mxu0 %v5473
    %v5475 = vand.u32 %v170, 4294901760
    %5476 = vmatpush1.msra.mxu0 %v5475
    %v5477 = vand.u32 %v154, 4294901760
    %5478 = vmatprep.subr.mxu0 %v5477
    %v5479 = vand.u32 %v153, 4294901760
    %5480 = vmatpush1.msra.mxu0 %v5479
    %v5481 = vand.u32 %v137, 4294901760
    %5482 = vmatprep.subr.mxu0 %v5481
    %v5483 = vand.u32 %v136, 4294901760
    %5484 = vmatpush1.msra.mxu0 %v5483
    %v5485 = vand.u32 %v120, 4294901760
    %5486 = vmatprep.subr.mxu0 %v5485
    %v5487 = vand.u32 %v119, 4294901760
    %5488 = vmatpush1.msra.mxu0 %v5487
    %v5489 = vand.u32 %v103, 4294901760
    %5490 = vmatprep.subr.mxu0 %v5489
    %v5491 = vand.u32 %v102, 4294901760
    %5492 = vmatpush1.msra.mxu0 %v5491
    %v5493 = vand.u32 %v86, 4294901760
    %5494 = vmatprep.subr.mxu0 %v5493
    %v5495 = vand.u32 %v85, 4294901760
    %5496 = vmatpush1.msra.mxu0 %v5495
    %v5497 = vand.u32 %v69, 4294901760
    %5498 = vmatprep.subr.mxu0 %v5497
    %v5499 = vand.u32 %v68, 4294901760
    %5500 = vmatpush1.msra.mxu0 %v5499
    %v5501 = vand.u32 %v52, 4294901760
    %5502 = vmatprep.subr.mxu0 %v5501
    %v5503 = vand.u32 %v51, 4294901760
    %5504 = vmatpush1.msra.mxu0 %v5503
    %5505 = vmatprep.subr.mxu0 0.0
    %5506 = vmatpush2.msra.mxu0 0.0
    %5507 = vmatprep.subr.mxu0 0.0
    %5508 = vmatpush2.msra.mxu0 0.0
    %5509 = vmatprep.subr.mxu0 0.0
    %5510 = vmatpush2.msra.mxu0 0.0
    %5511 = vmatprep.subr.mxu0 0.0
    %5512 = vmatpush2.msra.mxu0 0.0
    %5513 = vmatprep.subr.mxu0 0.0
    %5514 = vmatpush2.msra.mxu0 0.0
    %5515 = vmatprep.subr.mxu0 0.0
    %5516 = vmatpush2.msra.mxu0 0.0
    %5517 = vmatprep.subr.mxu0 0.0
    %5518 = vmatpush2.msra.mxu0 0.0
    %5519 = vmatprep.subr.mxu0 0.0
    %5520 = vmatpush2.msra.mxu0 0.0
    %5521 = vmatprep.subr.mxu0 0.0
    %5522 = vmatpush2.msra.mxu0 0.0
    %5523 = vmatprep.subr.mxu0 0.0
    %5524 = vmatpush2.msra.mxu0 0.0
    %5525 = vmatprep.subr.mxu0 0.0
    %5526 = vmatpush2.msra.mxu0 0.0
    %5527 = vmatprep.subr.mxu0 0.0
    %5528 = vmatpush2.msra.mxu0 0.0
    %5529 = vmatprep.subr.mxu0 0.0
    %5530 = vmatpush2.msra.mxu0 0.0
    %5531 = vmatprep.subr.mxu0 0.0
    %5532 = vmatpush2.msra.mxu0 0.0
    %5533 = vmatprep.subr.mxu0 0.0
    %5534 = vmatpush2.msra.mxu0 0.0
    %5535 = vmatprep.subr.mxu0 0.0
    %5536 = vmatpush2.msra.mxu0 0.0
    %5537 = vmatprep.mubr.f32.mxu0 0.0
    %v5538 = vand.u32 %v38, 4294901760
    %v5539 = vsub.f32 %v38, %v5538
    %v5540 = vand.u32 %v5539, 4294901760
    %v5541 = vsub.f32 %v5539, %v5540
    %v5542 = vand.u32 %v5541, 4294901760
    %5543 = vmatmul.mubr.f32.gmra.mxu0 %v5542
    %v5544 = vpop.f32.mrf.mxu0
    %v5545 = vadd.f32 0.0, %v5544
    %v5546 = vpop.f32.mrf.mxu0
    %v5547 = vadd.f32 0.0, %v5546
    %5548 = vdwg.mxu0
    %v5549 = vand.u32 %v307, 4294901760
    %v5550 = vsub.f32 %v307, %v5549
    %v5551 = vand.u32 %v5550, 4294901760
    %v5552 = vsub.f32 %v5550, %v5551
    %v5553 = vand.u32 %v5552, 4294901760
    %5554 = vmatprep.subr.mxu0 %v5553
    %v5555 = vand.u32 %v306, 4294901760
    %v5556 = vsub.f32 %v306, %v5555
    %v5557 = vand.u32 %v5556, 4294901760
    %v5558 = vsub.f32 %v5556, %v5557
    %v5559 = vand.u32 %v5558, 4294901760
    %5560 = vmatpush1.msra.mxu0 %v5559
    %v5561 = vand.u32 %v290, 4294901760
    %v5562 = vsub.f32 %v290, %v5561
    %v5563 = vand.u32 %v5562, 4294901760
    %v5564 = vsub.f32 %v5562, %v5563
    %v5565 = vand.u32 %v5564, 4294901760
    %5566 = vmatprep.subr.mxu0 %v5565
    %v5567 = vand.u32 %v289, 4294901760
    %v5568 = vsub.f32 %v289, %v5567
    %v5569 = vand.u32 %v5568, 4294901760
    %v5570 = vsub.f32 %v5568, %v5569
    %v5571 = vand.u32 %v5570, 4294901760
    %5572 = vmatpush1.msra.mxu0 %v5571
    %v5573 = vand.u32 %v273, 4294901760
    %v5574 = vsub.f32 %v273, %v5573
    %v5575 = vand.u32 %v5574, 4294901760
    %v5576 = vsub.f32 %v5574, %v5575
    %v5577 = vand.u32 %v5576, 4294901760
    %5578 = vmatprep.subr.mxu0 %v5577
    %v5579 = vand.u32 %v272, 4294901760
    %v5580 = vsub.f32 %v272, %v5579
    %v5581 = vand.u32 %v5580, 4294901760
    %v5582 = vsub.f32 %v5580, %v5581
    %v5583 = vand.u32 %v5582, 4294901760
    %5584 = vmatpush1.msra.mxu0 %v5583
    %v5585 = vand.u32 %v256, 4294901760
    %v5586 = vsub.f32 %v256, %v5585
    %v5587 = vand.u32 %v5586, 4294901760
    %v5588 = vsub.f32 %v5586, %v5587
    %v5589 = vand.u32 %v5588, 4294901760
    %5590 = vmatprep.subr.mxu0 %v5589
    %v5591 = vand.u32 %v255, 4294901760
    %v5592 = vsub.f32 %v255, %v5591
    %v5593 = vand.u32 %v5592, 4294901760
    %v5594 = vsub.f32 %v5592, %v5593
    %v5595 = vand.u32 %v5594, 4294901760
    %5596 = vmatpush1.msra.mxu0 %v5595
    %v5597 = vand.u32 %v239, 4294901760
    %v5598 = vsub.f32 %v239, %v5597
    %v5599 = vand.u32 %v5598, 4294901760
    %v5600 = vsub.f32 %v5598, %v5599
    %v5601 = vand.u32 %v5600, 4294901760
    %5602 = vmatprep.subr.mxu0 %v5601
    %v5603 = vand.u32 %v238, 4294901760
    %v5604 = vsub.f32 %v238, %v5603
    %v5605 = vand.u32 %v5604, 4294901760
    %v5606 = vsub.f32 %v5604, %v5605
    %v5607 = vand.u32 %v5606, 4294901760
    %5608 = vmatpush1.msra.mxu0 %v5607
    %v5609 = vand.u32 %v222, 4294901760
    %v5610 = vsub.f32 %v222, %v5609
    %v5611 = vand.u32 %v5610, 4294901760
    %v5612 = vsub.f32 %v5610, %v5611
    %v5613 = vand.u32 %v5612, 4294901760
    %5614 = vmatprep.subr.mxu0 %v5613
    %v5615 = vand.u32 %v221, 4294901760
    %v5616 = vsub.f32 %v221, %v5615
    %v5617 = vand.u32 %v5616, 4294901760
    %v5618 = vsub.f32 %v5616, %v5617
    %v5619 = vand.u32 %v5618, 4294901760
    %5620 = vmatpush1.msra.mxu0 %v5619
    %v5621 = vand.u32 %v205, 4294901760
    %v5622 = vsub.f32 %v205, %v5621
    %v5623 = vand.u32 %v5622, 4294901760
    %v5624 = vsub.f32 %v5622, %v5623
    %v5625 = vand.u32 %v5624, 4294901760
    %5626 = vmatprep.subr.mxu0 %v5625
    %v5627 = vand.u32 %v204, 4294901760
    %v5628 = vsub.f32 %v204, %v5627
    %v5629 = vand.u32 %v5628, 4294901760
    %v5630 = vsub.f32 %v5628, %v5629
    %v5631 = vand.u32 %v5630, 4294901760
    %5632 = vmatpush1.msra.mxu0 %v5631
    %v5633 = vand.u32 %v188, 4294901760
    %v5634 = vsub.f32 %v188, %v5633
    %v5635 = vand.u32 %v5634, 4294901760
    %v5636 = vsub.f32 %v5634, %v5635
    %v5637 = vand.u32 %v5636, 4294901760
    %5638 = vmatprep.subr.mxu0 %v5637
    %v5639 = vand.u32 %v187, 4294901760
    %v5640 = vsub.f32 %v187, %v5639
    %v5641 = vand.u32 %v5640, 4294901760
    %v5642 = vsub.f32 %v5640, %v5641
    %v5643 = vand.u32 %v5642, 4294901760
    %5644 = vmatpush1.msra.mxu0 %v5643
    %v5645 = vand.u32 %v171, 4294901760
    %v5646 = vsub.f32 %v171, %v5645
    %v5647 = vand.u32 %v5646, 4294901760
    %v5648 = vsub.f32 %v5646, %v5647
    %v5649 = vand.u32 %v5648, 4294901760
    %5650 = vmatprep.subr.mxu0 %v5649
    %v5651 = vand.u32 %v170, 4294901760
    %v5652 = vsub.f32 %v170, %v5651
    %v5653 = vand.u32 %v5652, 4294901760
    %v5654 = vsub.f32 %v5652, %v5653
    %v5655 = vand.u32 %v5654, 4294901760
    %5656 = vmatpush1.msra.mxu0 %v5655
    %v5657 = vand.u32 %v154, 4294901760
    %v5658 = vsub.f32 %v154, %v5657
    %v5659 = vand.u32 %v5658, 4294901760
    %v5660 = vsub.f32 %v5658, %v5659
    %v5661 = vand.u32 %v5660, 4294901760
    %5662 = vmatprep.subr.mxu0 %v5661
    %v5663 = vand.u32 %v153, 4294901760
    %v5664 = vsub.f32 %v153, %v5663
    %v5665 = vand.u32 %v5664, 4294901760
    %v5666 = vsub.f32 %v5664, %v5665
    %v5667 = vand.u32 %v5666, 4294901760
    %5668 = vmatpush1.msra.mxu0 %v5667
    %v5669 = vand.u32 %v137, 4294901760
    %v5670 = vsub.f32 %v137, %v5669
    %v5671 = vand.u32 %v5670, 4294901760
    %v5672 = vsub.f32 %v5670, %v5671
    %v5673 = vand.u32 %v5672, 4294901760
    %5674 = vmatprep.subr.mxu0 %v5673
    %v5675 = vand.u32 %v136, 4294901760
    %v5676 = vsub.f32 %v136, %v5675
    %v5677 = vand.u32 %v5676, 4294901760
    %v5678 = vsub.f32 %v5676, %v5677
    %v5679 = vand.u32 %v5678, 4294901760
    %5680 = vmatpush1.msra.mxu0 %v5679
    %v5681 = vand.u32 %v120, 4294901760
    %v5682 = vsub.f32 %v120, %v5681
    %v5683 = vand.u32 %v5682, 4294901760
    %v5684 = vsub.f32 %v5682, %v5683
    %v5685 = vand.u32 %v5684, 4294901760
    %5686 = vmatprep.subr.mxu0 %v5685
    %v5687 = vand.u32 %v119, 4294901760
    %v5688 = vsub.f32 %v119, %v5687
    %v5689 = vand.u32 %v5688, 4294901760
    %v5690 = vsub.f32 %v5688, %v5689
    %v5691 = vand.u32 %v5690, 4294901760
    %5692 = vmatpush1.msra.mxu0 %v5691
    %v5693 = vand.u32 %v103, 4294901760
    %v5694 = vsub.f32 %v103, %v5693
    %v5695 = vand.u32 %v5694, 4294901760
    %v5696 = vsub.f32 %v5694, %v5695
    %v5697 = vand.u32 %v5696, 4294901760
    %5698 = vmatprep.subr.mxu0 %v5697
    %v5699 = vand.u32 %v102, 4294901760
    %v5700 = vsub.f32 %v102, %v5699
    %v5701 = vand.u32 %v5700, 4294901760
    %v5702 = vsub.f32 %v5700, %v5701
    %v5703 = vand.u32 %v5702, 4294901760
    %5704 = vmatpush1.msra.mxu0 %v5703
    %v5705 = vand.u32 %v86, 4294901760
    %v5706 = vsub.f32 %v86, %v5705
    %v5707 = vand.u32 %v5706, 4294901760
    %v5708 = vsub.f32 %v5706, %v5707
    %v5709 = vand.u32 %v5708, 4294901760
    %5710 = vmatprep.subr.mxu0 %v5709
    %v5711 = vand.u32 %v85, 4294901760
    %v5712 = vsub.f32 %v85, %v5711
    %v5713 = vand.u32 %v5712, 4294901760
    %v5714 = vsub.f32 %v5712, %v5713
    %v5715 = vand.u32 %v5714, 4294901760
    %5716 = vmatpush1.msra.mxu0 %v5715
    %v5717 = vand.u32 %v69, 4294901760
    %v5718 = vsub.f32 %v69, %v5717
    %v5719 = vand.u32 %v5718, 4294901760
    %v5720 = vsub.f32 %v5718, %v5719
    %v5721 = vand.u32 %v5720, 4294901760
    %5722 = vmatprep.subr.mxu0 %v5721
    %v5723 = vand.u32 %v68, 4294901760
    %v5724 = vsub.f32 %v68, %v5723
    %v5725 = vand.u32 %v5724, 4294901760
    %v5726 = vsub.f32 %v5724, %v5725
    %v5727 = vand.u32 %v5726, 4294901760
    %5728 = vmatpush1.msra.mxu0 %v5727
    %v5729 = vand.u32 %v52, 4294901760
    %v5730 = vsub.f32 %v52, %v5729
    %v5731 = vand.u32 %v5730, 4294901760
    %v5732 = vsub.f32 %v5730, %v5731
    %v5733 = vand.u32 %v5732, 4294901760
    %5734 = vmatprep.subr.mxu0 %v5733
    %v5735 = vand.u32 %v51, 4294901760
    %v5736 = vsub.f32 %v51, %v5735
    %v5737 = vand.u32 %v5736, 4294901760
    %v5738 = vsub.f32 %v5736, %v5737
    %v5739 = vand.u32 %v5738, 4294901760
    %5740 = vmatpush1.msra.mxu0 %v5739
    %5741 = vmatprep.subr.mxu0 0.0
    %5742 = vmatpush2.msra.mxu0 0.0
    %5743 = vmatprep.subr.mxu0 0.0
    %5744 = vmatpush2.msra.mxu0 0.0
    %5745 = vmatprep.subr.mxu0 0.0
    %5746 = vmatpush2.msra.mxu0 0.0
    %5747 = vmatprep.subr.mxu0 0.0
    %5748 = vmatpush2.msra.mxu0 0.0
    %5749 = vmatprep.subr.mxu0 0.0
    %5750 = vmatpush2.msra.mxu0 0.0
    %5751 = vmatprep.subr.mxu0 0.0
    %5752 = vmatpush2.msra.mxu0 0.0
    %5753 = vmatprep.subr.mxu0 0.0
    %5754 = vmatpush2.msra.mxu0 0.0
    %5755 = vmatprep.subr.mxu0 0.0
    %5756 = vmatpush2.msra.mxu0 0.0
    %5757 = vmatprep.subr.mxu0 0.0
    %5758 = vmatpush2.msra.mxu0 0.0
    %5759 = vmatprep.subr.mxu0 0.0
    %5760 = vmatpush2.msra.mxu0 0.0
    %5761 = vmatprep.subr.mxu0 0.0
    %5762 = vmatpush2.msra.mxu0 0.0
    %5763 = vmatprep.subr.mxu0 0.0
    %5764 = vmatpush2.msra.mxu0 0.0
    %5765 = vmatprep.subr.mxu0 0.0
    %5766 = vmatpush2.msra.mxu0 0.0
    %5767 = vmatprep.subr.mxu0 0.0
    %5768 = vmatpush2.msra.mxu0 0.0
    %5769 = vmatprep.subr.mxu0 0.0
    %5770 = vmatpush2.msra.mxu0 0.0
    %5771 = vmatprep.subr.mxu0 0.0
    %5772 = vmatpush2.msra.mxu0 0.0
    %5773 = vmatprep.mubr.f32.mxu0 0.0
    %v5774 = vand.u32 %v38, 4294901760
    %5775 = vmatmul.mubr.f32.gmra.mxu0 %v5774
    %v5776 = vpop.f32.mrf.mxu0
    %v5777 = vadd.f32 %v5545, %v5776
    %v5778 = vpop.f32.mrf.mxu0
    %v5779 = vadd.f32 %v5547, %v5778
    %5780 = vdwg.mxu0
    %v5781 = vand.u32 %v307, 4294901760
    %v5782 = vsub.f32 %v307, %v5781
    %5783 = vmatprep.subr.mxu0 %v5782
    %v5784 = vand.u32 %v306, 4294901760
    %v5785 = vsub.f32 %v306, %v5784
    %5786 = vmatpush1.msra.mxu0 %v5785
    %v5787 = vand.u32 %v290, 4294901760
    %v5788 = vsub.f32 %v290, %v5787
    %5789 = vmatprep.subr.mxu0 %v5788
    %v5790 = vand.u32 %v289, 4294901760
    %v5791 = vsub.f32 %v289, %v5790
    %5792 = vmatpush1.msra.mxu0 %v5791
    %v5793 = vand.u32 %v273, 4294901760
    %v5794 = vsub.f32 %v273, %v5793
    %5795 = vmatprep.subr.mxu0 %v5794
    %v5796 = vand.u32 %v272, 4294901760
    %v5797 = vsub.f32 %v272, %v5796
    %5798 = vmatpush1.msra.mxu0 %v5797
    %v5799 = vand.u32 %v256, 4294901760
    %v5800 = vsub.f32 %v256, %v5799
    %5801 = vmatprep.subr.mxu0 %v5800
    %v5802 = vand.u32 %v255, 4294901760
    %v5803 = vsub.f32 %v255, %v5802
    %5804 = vmatpush1.msra.mxu0 %v5803
    %v5805 = vand.u32 %v239, 4294901760
    %v5806 = vsub.f32 %v239, %v5805
    %5807 = vmatprep.subr.mxu0 %v5806
    %v5808 = vand.u32 %v238, 4294901760
    %v5809 = vsub.f32 %v238, %v5808
    %5810 = vmatpush1.msra.mxu0 %v5809
    %v5811 = vand.u32 %v222, 4294901760
    %v5812 = vsub.f32 %v222, %v5811
    %5813 = vmatprep.subr.mxu0 %v5812
    %v5814 = vand.u32 %v221, 4294901760
    %v5815 = vsub.f32 %v221, %v5814
    %5816 = vmatpush1.msra.mxu0 %v5815
    %v5817 = vand.u32 %v205, 4294901760
    %v5818 = vsub.f32 %v205, %v5817
    %5819 = vmatprep.subr.mxu0 %v5818
    %v5820 = vand.u32 %v204, 4294901760
    %v5821 = vsub.f32 %v204, %v5820
    %5822 = vmatpush1.msra.mxu0 %v5821
    %v5823 = vand.u32 %v188, 4294901760
    %v5824 = vsub.f32 %v188, %v5823
    %5825 = vmatprep.subr.mxu0 %v5824
    %v5826 = vand.u32 %v187, 4294901760
    %v5827 = vsub.f32 %v187, %v5826
    %5828 = vmatpush1.msra.mxu0 %v5827
    %v5829 = vand.u32 %v171, 4294901760
    %v5830 = vsub.f32 %v171, %v5829
    %5831 = vmatprep.subr.mxu0 %v5830
    %v5832 = vand.u32 %v170, 4294901760
    %v5833 = vsub.f32 %v170, %v5832
    %5834 = vmatpush1.msra.mxu0 %v5833
    %v5835 = vand.u32 %v154, 4294901760
    %v5836 = vsub.f32 %v154, %v5835
    %5837 = vmatprep.subr.mxu0 %v5836
    %v5838 = vand.u32 %v153, 4294901760
    %v5839 = vsub.f32 %v153, %v5838
    %5840 = vmatpush1.msra.mxu0 %v5839
    %v5841 = vand.u32 %v137, 4294901760
    %v5842 = vsub.f32 %v137, %v5841
    %5843 = vmatprep.subr.mxu0 %v5842
    %v5844 = vand.u32 %v136, 4294901760
    %v5845 = vsub.f32 %v136, %v5844
    %5846 = vmatpush1.msra.mxu0 %v5845
    %v5847 = vand.u32 %v120, 4294901760
    %v5848 = vsub.f32 %v120, %v5847
    %5849 = vmatprep.subr.mxu0 %v5848
    %v5850 = vand.u32 %v119, 4294901760
    %v5851 = vsub.f32 %v119, %v5850
    %5852 = vmatpush1.msra.mxu0 %v5851
    %v5853 = vand.u32 %v103, 4294901760
    %v5854 = vsub.f32 %v103, %v5853
    %5855 = vmatprep.subr.mxu0 %v5854
    %v5856 = vand.u32 %v102, 4294901760
    %v5857 = vsub.f32 %v102, %v5856
    %5858 = vmatpush1.msra.mxu0 %v5857
    %v5859 = vand.u32 %v86, 4294901760
    %v5860 = vsub.f32 %v86, %v5859
    %5861 = vmatprep.subr.mxu0 %v5860
    %v5862 = vand.u32 %v85, 4294901760
    %v5863 = vsub.f32 %v85, %v5862
    %5864 = vmatpush1.msra.mxu0 %v5863
    %v5865 = vand.u32 %v69, 4294901760
    %v5866 = vsub.f32 %v69, %v5865
    %5867 = vmatprep.subr.mxu0 %v5866
    %v5868 = vand.u32 %v68, 4294901760
    %v5869 = vsub.f32 %v68, %v5868
    %5870 = vmatpush1.msra.mxu0 %v5869
    %v5871 = vand.u32 %v52, 4294901760
    %v5872 = vsub.f32 %v52, %v5871
    %5873 = vmatprep.subr.mxu0 %v5872
    %v5874 = vand.u32 %v51, 4294901760
    %v5875 = vsub.f32 %v51, %v5874
    %5876 = vmatpush1.msra.mxu0 %v5875
    %5877 = vmatprep.subr.mxu0 0.0
    %5878 = vmatpush2.msra.mxu0 0.0
    %5879 = vmatprep.subr.mxu0 0.0
    %5880 = vmatpush2.msra.mxu0 0.0
    %5881 = vmatprep.subr.mxu0 0.0
    %5882 = vmatpush2.msra.mxu0 0.0
    %5883 = vmatprep.subr.mxu0 0.0
    %5884 = vmatpush2.msra.mxu0 0.0
    %5885 = vmatprep.subr.mxu0 0.0
    %5886 = vmatpush2.msra.mxu0 0.0
    %5887 = vmatprep.subr.mxu0 0.0
    %5888 = vmatpush2.msra.mxu0 0.0
    %5889 = vmatprep.subr.mxu0 0.0
    %5890 = vmatpush2.msra.mxu0 0.0
    %5891 = vmatprep.subr.mxu0 0.0
    %5892 = vmatpush2.msra.mxu0 0.0
    %5893 = vmatprep.subr.mxu0 0.0
    %5894 = vmatpush2.msra.mxu0 0.0
    %5895 = vmatprep.subr.mxu0 0.0
    %5896 = vmatpush2.msra.mxu0 0.0
    %5897 = vmatprep.subr.mxu0 0.0
    %5898 = vmatpush2.msra.mxu0 0.0
    %5899 = vmatprep.subr.mxu0 0.0
    %5900 = vmatpush2.msra.mxu0 0.0
    %5901 = vmatprep.subr.mxu0 0.0
    %5902 = vmatpush2.msra.mxu0 0.0
    %5903 = vmatprep.subr.mxu0 0.0
    %5904 = vmatpush2.msra.mxu0 0.0
    %5905 = vmatprep.subr.mxu0 0.0
    %5906 = vmatpush2.msra.mxu0 0.0
    %5907 = vmatprep.subr.mxu0 0.0
    %5908 = vmatpush2.msra.mxu0 0.0
    %5909 = vmatprep.mubr.f32.mxu0 0.0
    %v5910 = vand.u32 %v38, 4294901760
    %v5911 = vsub.f32 %v38, %v5910
    %5912 = vmatmul.mubr.f32.gmra.mxu0 %v5911
    %v5913 = vpop.f32.mrf.mxu0
    %v5914 = vadd.f32 %v5777, %v5913
    %v5915 = vpop.f32.mrf.mxu0
    %v5916 = vadd.f32 %v5779, %v5915
    %5917 = vdwg.mxu0
    %v5918 = vand.u32 %v307, 4294901760
    %5919 = vmatprep.subr.mxu0 %v5918
    %v5920 = vand.u32 %v306, 4294901760
    %5921 = vmatpush1.msra.mxu0 %v5920
    %v5922 = vand.u32 %v290, 4294901760
    %5923 = vmatprep.subr.mxu0 %v5922
    %v5924 = vand.u32 %v289, 4294901760
    %5925 = vmatpush1.msra.mxu0 %v5924
    %v5926 = vand.u32 %v273, 4294901760
    %5927 = vmatprep.subr.mxu0 %v5926
    %v5928 = vand.u32 %v272, 4294901760
    %5929 = vmatpush1.msra.mxu0 %v5928
    %v5930 = vand.u32 %v256, 4294901760
    %5931 = vmatprep.subr.mxu0 %v5930
    %v5932 = vand.u32 %v255, 4294901760
    %5933 = vmatpush1.msra.mxu0 %v5932
    %v5934 = vand.u32 %v239, 4294901760
    %5935 = vmatprep.subr.mxu0 %v5934
    %v5936 = vand.u32 %v238, 4294901760
    %5937 = vmatpush1.msra.mxu0 %v5936
    %v5938 = vand.u32 %v222, 4294901760
    %5939 = vmatprep.subr.mxu0 %v5938
    %v5940 = vand.u32 %v221, 4294901760
    %5941 = vmatpush1.msra.mxu0 %v5940
    %v5942 = vand.u32 %v205, 4294901760
    %5943 = vmatprep.subr.mxu0 %v5942
    %v5944 = vand.u32 %v204, 4294901760
    %5945 = vmatpush1.msra.mxu0 %v5944
    %v5946 = vand.u32 %v188, 4294901760
    %5947 = vmatprep.subr.mxu0 %v5946
    %v5948 = vand.u32 %v187, 4294901760
    %5949 = vmatpush1.msra.mxu0 %v5948
    %v5950 = vand.u32 %v171, 4294901760
    %5951 = vmatprep.subr.mxu0 %v5950
    %v5952 = vand.u32 %v170, 4294901760
    %5953 = vmatpush1.msra.mxu0 %v5952
    %v5954 = vand.u32 %v154, 4294901760
    %5955 = vmatprep.subr.mxu0 %v5954
    %v5956 = vand.u32 %v153, 4294901760
    %5957 = vmatpush1.msra.mxu0 %v5956
    %v5958 = vand.u32 %v137, 4294901760
    %5959 = vmatprep.subr.mxu0 %v5958
    %v5960 = vand.u32 %v136, 4294901760
    %5961 = vmatpush1.msra.mxu0 %v5960
    %v5962 = vand.u32 %v120, 4294901760
    %5963 = vmatprep.subr.mxu0 %v5962
    %v5964 = vand.u32 %v119, 4294901760
    %5965 = vmatpush1.msra.mxu0 %v5964
    %v5966 = vand.u32 %v103, 4294901760
    %5967 = vmatprep.subr.mxu0 %v5966
    %v5968 = vand.u32 %v102, 4294901760
    %5969 = vmatpush1.msra.mxu0 %v5968
    %v5970 = vand.u32 %v86, 4294901760
    %5971 = vmatprep.subr.mxu0 %v5970
    %v5972 = vand.u32 %v85, 4294901760
    %5973 = vmatpush1.msra.mxu0 %v5972
    %v5974 = vand.u32 %v69, 4294901760
    %5975 = vmatprep.subr.mxu0 %v5974
    %v5976 = vand.u32 %v68, 4294901760
    %5977 = vmatpush1.msra.mxu0 %v5976
    %v5978 = vand.u32 %v52, 4294901760
    %5979 = vmatprep.subr.mxu0 %v5978
    %v5980 = vand.u32 %v51, 4294901760
    %5981 = vmatpush1.msra.mxu0 %v5980
    %5982 = vmatprep.subr.mxu0 0.0
    %5983 = vmatpush2.msra.mxu0 0.0
    %5984 = vmatprep.subr.mxu0 0.0
    %5985 = vmatpush2.msra.mxu0 0.0
    %5986 = vmatprep.subr.mxu0 0.0
    %5987 = vmatpush2.msra.mxu0 0.0
    %5988 = vmatprep.subr.mxu0 0.0
    %5989 = vmatpush2.msra.mxu0 0.0
    %5990 = vmatprep.subr.mxu0 0.0
    %5991 = vmatpush2.msra.mxu0 0.0
    %5992 = vmatprep.subr.mxu0 0.0
    %5993 = vmatpush2.msra.mxu0 0.0
    %5994 = vmatprep.subr.mxu0 0.0
    %5995 = vmatpush2.msra.mxu0 0.0
    %5996 = vmatprep.subr.mxu0 0.0
    %5997 = vmatpush2.msra.mxu0 0.0
    %5998 = vmatprep.subr.mxu0 0.0
    %5999 = vmatpush2.msra.mxu0 0.0
    %6000 = vmatprep.subr.mxu0 0.0
    %6001 = vmatpush2.msra.mxu0 0.0
    %6002 = vmatprep.subr.mxu0 0.0
    %6003 = vmatpush2.msra.mxu0 0.0
    %6004 = vmatprep.subr.mxu0 0.0
    %6005 = vmatpush2.msra.mxu0 0.0
    %6006 = vmatprep.subr.mxu0 0.0
    %6007 = vmatpush2.msra.mxu0 0.0
    %6008 = vmatprep.subr.mxu0 0.0
    %6009 = vmatpush2.msra.mxu0 0.0
    %6010 = vmatprep.subr.mxu0 0.0
    %6011 = vmatpush2.msra.mxu0 0.0
    %6012 = vmatprep.subr.mxu0 0.0
    %6013 = vmatpush2.msra.mxu0 0.0
    %6014 = vmatprep.mubr.f32.mxu0 0.0
    %v6015 = vand.u32 %v38, 4294901760
    %v6016 = vsub.f32 %v38, %v6015
    %v6017 = vand.u32 %v6016, 4294901760
    %6018 = vmatmul.mubr.f32.gmra.mxu0 %v6017
    %v6019 = vpop.f32.mrf.mxu0
    %v6020 = vadd.f32 %v5914, %v6019
    %v6021 = vpop.f32.mrf.mxu0
    %v6022 = vadd.f32 %v5916, %v6021
    %6023 = vdwg.mxu0
    %v6024 = vand.u32 %v307, 4294901760
    %v6025 = vsub.f32 %v307, %v6024
    %v6026 = vand.u32 %v6025, 4294901760
    %6027 = vmatprep.subr.mxu0 %v6026
    %v6028 = vand.u32 %v306, 4294901760
    %v6029 = vsub.f32 %v306, %v6028
    %v6030 = vand.u32 %v6029, 4294901760
    %6031 = vmatpush1.msra.mxu0 %v6030
    %v6032 = vand.u32 %v290, 4294901760
    %v6033 = vsub.f32 %v290, %v6032
    %v6034 = vand.u32 %v6033, 4294901760
    %6035 = vmatprep.subr.mxu0 %v6034
    %v6036 = vand.u32 %v289, 4294901760
    %v6037 = vsub.f32 %v289, %v6036
    %v6038 = vand.u32 %v6037, 4294901760
    %6039 = vmatpush1.msra.mxu0 %v6038
    %v6040 = vand.u32 %v273, 4294901760
    %v6041 = vsub.f32 %v273, %v6040
    %v6042 = vand.u32 %v6041, 4294901760
    %6043 = vmatprep.subr.mxu0 %v6042
    %v6044 = vand.u32 %v272, 4294901760
    %v6045 = vsub.f32 %v272, %v6044
    %v6046 = vand.u32 %v6045, 4294901760
    %6047 = vmatpush1.msra.mxu0 %v6046
    %v6048 = vand.u32 %v256, 4294901760
    %v6049 = vsub.f32 %v256, %v6048
    %v6050 = vand.u32 %v6049, 4294901760
    %6051 = vmatprep.subr.mxu0 %v6050
    %v6052 = vand.u32 %v255, 4294901760
    %v6053 = vsub.f32 %v255, %v6052
    %v6054 = vand.u32 %v6053, 4294901760
    %6055 = vmatpush1.msra.mxu0 %v6054
    %v6056 = vand.u32 %v239, 4294901760
    %v6057 = vsub.f32 %v239, %v6056
    %v6058 = vand.u32 %v6057, 4294901760
    %6059 = vmatprep.subr.mxu0 %v6058
    %v6060 = vand.u32 %v238, 4294901760
    %v6061 = vsub.f32 %v238, %v6060
    %v6062 = vand.u32 %v6061, 4294901760
    %6063 = vmatpush1.msra.mxu0 %v6062
    %v6064 = vand.u32 %v222, 4294901760
    %v6065 = vsub.f32 %v222, %v6064
    %v6066 = vand.u32 %v6065, 4294901760
    %6067 = vmatprep.subr.mxu0 %v6066
    %v6068 = vand.u32 %v221, 4294901760
    %v6069 = vsub.f32 %v221, %v6068
    %v6070 = vand.u32 %v6069, 4294901760
    %6071 = vmatpush1.msra.mxu0 %v6070
    %v6072 = vand.u32 %v205, 4294901760
    %v6073 = vsub.f32 %v205, %v6072
    %v6074 = vand.u32 %v6073, 4294901760
    %6075 = vmatprep.subr.mxu0 %v6074
    %v6076 = vand.u32 %v204, 4294901760
    %v6077 = vsub.f32 %v204, %v6076
    %v6078 = vand.u32 %v6077, 4294901760
    %6079 = vmatpush1.msra.mxu0 %v6078
    %v6080 = vand.u32 %v188, 4294901760
    %v6081 = vsub.f32 %v188, %v6080
    %v6082 = vand.u32 %v6081, 4294901760
    %6083 = vmatprep.subr.mxu0 %v6082
    %v6084 = vand.u32 %v187, 4294901760
    %v6085 = vsub.f32 %v187, %v6084
    %v6086 = vand.u32 %v6085, 4294901760
    %6087 = vmatpush1.msra.mxu0 %v6086
    %v6088 = vand.u32 %v171, 4294901760
    %v6089 = vsub.f32 %v171, %v6088
    %v6090 = vand.u32 %v6089, 4294901760
    %6091 = vmatprep.subr.mxu0 %v6090
    %v6092 = vand.u32 %v170, 4294901760
    %v6093 = vsub.f32 %v170, %v6092
    %v6094 = vand.u32 %v6093, 4294901760
    %6095 = vmatpush1.msra.mxu0 %v6094
    %v6096 = vand.u32 %v154, 4294901760
    %v6097 = vsub.f32 %v154, %v6096
    %v6098 = vand.u32 %v6097, 4294901760
    %6099 = vmatprep.subr.mxu0 %v6098
    %v6100 = vand.u32 %v153, 4294901760
    %v6101 = vsub.f32 %v153, %v6100
    %v6102 = vand.u32 %v6101, 4294901760
    %6103 = vmatpush1.msra.mxu0 %v6102
    %v6104 = vand.u32 %v137, 4294901760
    %v6105 = vsub.f32 %v137, %v6104
    %v6106 = vand.u32 %v6105, 4294901760
    %6107 = vmatprep.subr.mxu0 %v6106
    %v6108 = vand.u32 %v136, 4294901760
    %v6109 = vsub.f32 %v136, %v6108
    %v6110 = vand.u32 %v6109, 4294901760
    %6111 = vmatpush1.msra.mxu0 %v6110
    %v6112 = vand.u32 %v120, 4294901760
    %v6113 = vsub.f32 %v120, %v6112
    %v6114 = vand.u32 %v6113, 4294901760
    %6115 = vmatprep.subr.mxu0 %v6114
    %v6116 = vand.u32 %v119, 4294901760
    %v6117 = vsub.f32 %v119, %v6116
    %v6118 = vand.u32 %v6117, 4294901760
    %6119 = vmatpush1.msra.mxu0 %v6118
    %v6120 = vand.u32 %v103, 4294901760
    %v6121 = vsub.f32 %v103, %v6120
    %v6122 = vand.u32 %v6121, 4294901760
    %6123 = vmatprep.subr.mxu0 %v6122
    %v6124 = vand.u32 %v102, 4294901760
    %v6125 = vsub.f32 %v102, %v6124
    %v6126 = vand.u32 %v6125, 4294901760
    %6127 = vmatpush1.msra.mxu0 %v6126
    %v6128 = vand.u32 %v86, 4294901760
    %v6129 = vsub.f32 %v86, %v6128
    %v6130 = vand.u32 %v6129, 4294901760
    %6131 = vmatprep.subr.mxu0 %v6130
    %v6132 = vand.u32 %v85, 4294901760
    %v6133 = vsub.f32 %v85, %v6132
    %v6134 = vand.u32 %v6133, 4294901760
    %6135 = vmatpush1.msra.mxu0 %v6134
    %v6136 = vand.u32 %v69, 4294901760
    %v6137 = vsub.f32 %v69, %v6136
    %v6138 = vand.u32 %v6137, 4294901760
    %6139 = vmatprep.subr.mxu0 %v6138
    %v6140 = vand.u32 %v68, 4294901760
    %v6141 = vsub.f32 %v68, %v6140
    %v6142 = vand.u32 %v6141, 4294901760
    %6143 = vmatpush1.msra.mxu0 %v6142
    %v6144 = vand.u32 %v52, 4294901760
    %v6145 = vsub.f32 %v52, %v6144
    %v6146 = vand.u32 %v6145, 4294901760
    %6147 = vmatprep.subr.mxu0 %v6146
    %v6148 = vand.u32 %v51, 4294901760
    %v6149 = vsub.f32 %v51, %v6148
    %v6150 = vand.u32 %v6149, 4294901760
    %6151 = vmatpush1.msra.mxu0 %v6150
    %6152 = vmatprep.subr.mxu0 0.0
    %6153 = vmatpush2.msra.mxu0 0.0
    %6154 = vmatprep.subr.mxu0 0.0
    %6155 = vmatpush2.msra.mxu0 0.0
    %6156 = vmatprep.subr.mxu0 0.0
    %6157 = vmatpush2.msra.mxu0 0.0
    %6158 = vmatprep.subr.mxu0 0.0
    %6159 = vmatpush2.msra.mxu0 0.0
    %6160 = vmatprep.subr.mxu0 0.0
    %6161 = vmatpush2.msra.mxu0 0.0
    %6162 = vmatprep.subr.mxu0 0.0
    %6163 = vmatpush2.msra.mxu0 0.0
    %6164 = vmatprep.subr.mxu0 0.0
    %6165 = vmatpush2.msra.mxu0 0.0
    %6166 = vmatprep.subr.mxu0 0.0
    %6167 = vmatpush2.msra.mxu0 0.0
    %6168 = vmatprep.subr.mxu0 0.0
    %6169 = vmatpush2.msra.mxu0 0.0
    %6170 = vmatprep.subr.mxu0 0.0
    %6171 = vmatpush2.msra.mxu0 0.0
    %6172 = vmatprep.subr.mxu0 0.0
    %6173 = vmatpush2.msra.mxu0 0.0
    %6174 = vmatprep.subr.mxu0 0.0
    %6175 = vmatpush2.msra.mxu0 0.0
    %6176 = vmatprep.subr.mxu0 0.0
    %6177 = vmatpush2.msra.mxu0 0.0
    %6178 = vmatprep.subr.mxu0 0.0
    %6179 = vmatpush2.msra.mxu0 0.0
    %6180 = vmatprep.subr.mxu0 0.0
    %6181 = vmatpush2.msra.mxu0 0.0
    %6182 = vmatprep.subr.mxu0 0.0
    %6183 = vmatpush2.msra.mxu0 0.0
    %6184 = vmatprep.mubr.f32.mxu0 0.0
    %v6185 = vand.u32 %v38, 4294901760
    %6186 = vmatmul.mubr.f32.gmra.mxu0 %v6185
    %v6187 = vpop.f32.mrf.mxu0
    %v6188 = vadd.f32 %v6020, %v6187
    %v6189 = vpop.f32.mrf.mxu0
    %v6190 = vadd.f32 %v6022, %v6189
    %6191 = vdwg.mxu0
    %v6192 = vand.u32 %v307, 4294901760
    %6193 = vmatprep.subr.mxu0 %v6192
    %v6194 = vand.u32 %v306, 4294901760
    %6195 = vmatpush1.msra.mxu0 %v6194
    %v6196 = vand.u32 %v290, 4294901760
    %6197 = vmatprep.subr.mxu0 %v6196
    %v6198 = vand.u32 %v289, 4294901760
    %6199 = vmatpush1.msra.mxu0 %v6198
    %v6200 = vand.u32 %v273, 4294901760
    %6201 = vmatprep.subr.mxu0 %v6200
    %v6202 = vand.u32 %v272, 4294901760
    %6203 = vmatpush1.msra.mxu0 %v6202
    %v6204 = vand.u32 %v256, 4294901760
    %6205 = vmatprep.subr.mxu0 %v6204
    %v6206 = vand.u32 %v255, 4294901760
    %6207 = vmatpush1.msra.mxu0 %v6206
    %v6208 = vand.u32 %v239, 4294901760
    %6209 = vmatprep.subr.mxu0 %v6208
    %v6210 = vand.u32 %v238, 4294901760
    %6211 = vmatpush1.msra.mxu0 %v6210
    %v6212 = vand.u32 %v222, 4294901760
    %6213 = vmatprep.subr.mxu0 %v6212
    %v6214 = vand.u32 %v221, 4294901760
    %6215 = vmatpush1.msra.mxu0 %v6214
    %v6216 = vand.u32 %v205, 4294901760
    %6217 = vmatprep.subr.mxu0 %v6216
    %v6218 = vand.u32 %v204, 4294901760
    %6219 = vmatpush1.msra.mxu0 %v6218
    %v6220 = vand.u32 %v188, 4294901760
    %6221 = vmatprep.subr.mxu0 %v6220
    %v6222 = vand.u32 %v187, 4294901760
    %6223 = vmatpush1.msra.mxu0 %v6222
    %v6224 = vand.u32 %v171, 4294901760
    %6225 = vmatprep.subr.mxu0 %v6224
    %v6226 = vand.u32 %v170, 4294901760
    %6227 = vmatpush1.msra.mxu0 %v6226
    %v6228 = vand.u32 %v154, 4294901760
    %6229 = vmatprep.subr.mxu0 %v6228
    %v6230 = vand.u32 %v153, 4294901760
    %6231 = vmatpush1.msra.mxu0 %v6230
    %v6232 = vand.u32 %v137, 4294901760
    %6233 = vmatprep.subr.mxu0 %v6232
    %v6234 = vand.u32 %v136, 4294901760
    %6235 = vmatpush1.msra.mxu0 %v6234
    %v6236 = vand.u32 %v120, 4294901760
    %6237 = vmatprep.subr.mxu0 %v6236
    %v6238 = vand.u32 %v119, 4294901760
    %6239 = vmatpush1.msra.mxu0 %v6238
    %v6240 = vand.u32 %v103, 4294901760
    %6241 = vmatprep.subr.mxu0 %v6240
    %v6242 = vand.u32 %v102, 4294901760
    %6243 = vmatpush1.msra.mxu0 %v6242
    %v6244 = vand.u32 %v86, 4294901760
    %6245 = vmatprep.subr.mxu0 %v6244
    %v6246 = vand.u32 %v85, 4294901760
    %6247 = vmatpush1.msra.mxu0 %v6246
    %v6248 = vand.u32 %v69, 4294901760
    %6249 = vmatprep.subr.mxu0 %v6248
    %v6250 = vand.u32 %v68, 4294901760
    %6251 = vmatpush1.msra.mxu0 %v6250
    %v6252 = vand.u32 %v52, 4294901760
    %6253 = vmatprep.subr.mxu0 %v6252
    %v6254 = vand.u32 %v51, 4294901760
    %6255 = vmatpush1.msra.mxu0 %v6254
    %6256 = vmatprep.subr.mxu0 0.0
    %6257 = vmatpush2.msra.mxu0 0.0
    %6258 = vmatprep.subr.mxu0 0.0
    %6259 = vmatpush2.msra.mxu0 0.0
    %6260 = vmatprep.subr.mxu0 0.0
    %6261 = vmatpush2.msra.mxu0 0.0
    %6262 = vmatprep.subr.mxu0 0.0
    %6263 = vmatpush2.msra.mxu0 0.0
    %6264 = vmatprep.subr.mxu0 0.0
    %6265 = vmatpush2.msra.mxu0 0.0
    %6266 = vmatprep.subr.mxu0 0.0
    %6267 = vmatpush2.msra.mxu0 0.0
    %6268 = vmatprep.subr.mxu0 0.0
    %6269 = vmatpush2.msra.mxu0 0.0
    %6270 = vmatprep.subr.mxu0 0.0
    %6271 = vmatpush2.msra.mxu0 0.0
    %6272 = vmatprep.subr.mxu0 0.0
    %6273 = vmatpush2.msra.mxu0 0.0
    %6274 = vmatprep.subr.mxu0 0.0
    %6275 = vmatpush2.msra.mxu0 0.0
    %6276 = vmatprep.subr.mxu0 0.0
    %6277 = vmatpush2.msra.mxu0 0.0
    %6278 = vmatprep.subr.mxu0 0.0
    %6279 = vmatpush2.msra.mxu0 0.0
    %6280 = vmatprep.subr.mxu0 0.0
    %6281 = vmatpush2.msra.mxu0 0.0
    %6282 = vmatprep.subr.mxu0 0.0
    %6283 = vmatpush2.msra.mxu0 0.0
    %6284 = vmatprep.subr.mxu0 0.0
    %6285 = vmatpush2.msra.mxu0 0.0
    %6286 = vmatprep.subr.mxu0 0.0
    %6287 = vmatpush2.msra.mxu0 0.0
    %6288 = vmatprep.mubr.f32.mxu0 0.0
    %v6289 = vand.u32 %v38, 4294901760
    %6290 = vmatmul.mubr.f32.gmra.mxu0 %v6289
    %v6291 = vpop.f32.mrf.mxu0
    %v6292 = vadd.f32 %v6188, %v6291
    %v6293 = vpop.f32.mrf.mxu0
    %v6294 = vadd.f32 %v6190, %v6293
    %6295 = vdwg.mxu0
    %v6296 = vand.u32 %v309, 4294901760
    %6297 = vmatprep.subr.mxu0 %v6296
    %v6298 = vand.u32 %v308, 4294901760
    %6299 = vmatpush1.msra.mxu0 %v6298
    %v6300 = vand.u32 %v292, 4294901760
    %6301 = vmatprep.subr.mxu0 %v6300
    %v6302 = vand.u32 %v291, 4294901760
    %6303 = vmatpush1.msra.mxu0 %v6302
    %v6304 = vand.u32 %v275, 4294901760
    %6305 = vmatprep.subr.mxu0 %v6304
    %v6306 = vand.u32 %v274, 4294901760
    %6307 = vmatpush1.msra.mxu0 %v6306
    %v6308 = vand.u32 %v258, 4294901760
    %6309 = vmatprep.subr.mxu0 %v6308
    %v6310 = vand.u32 %v257, 4294901760
    %6311 = vmatpush1.msra.mxu0 %v6310
    %v6312 = vand.u32 %v241, 4294901760
    %6313 = vmatprep.subr.mxu0 %v6312
    %v6314 = vand.u32 %v240, 4294901760
    %6315 = vmatpush1.msra.mxu0 %v6314
    %v6316 = vand.u32 %v224, 4294901760
    %6317 = vmatprep.subr.mxu0 %v6316
    %v6318 = vand.u32 %v223, 4294901760
    %6319 = vmatpush1.msra.mxu0 %v6318
    %v6320 = vand.u32 %v207, 4294901760
    %6321 = vmatprep.subr.mxu0 %v6320
    %v6322 = vand.u32 %v206, 4294901760
    %6323 = vmatpush1.msra.mxu0 %v6322
    %v6324 = vand.u32 %v190, 4294901760
    %6325 = vmatprep.subr.mxu0 %v6324
    %v6326 = vand.u32 %v189, 4294901760
    %6327 = vmatpush1.msra.mxu0 %v6326
    %v6328 = vand.u32 %v173, 4294901760
    %6329 = vmatprep.subr.mxu0 %v6328
    %v6330 = vand.u32 %v172, 4294901760
    %6331 = vmatpush1.msra.mxu0 %v6330
    %v6332 = vand.u32 %v156, 4294901760
    %6333 = vmatprep.subr.mxu0 %v6332
    %v6334 = vand.u32 %v155, 4294901760
    %6335 = vmatpush1.msra.mxu0 %v6334
    %v6336 = vand.u32 %v139, 4294901760
    %6337 = vmatprep.subr.mxu0 %v6336
    %v6338 = vand.u32 %v138, 4294901760
    %6339 = vmatpush1.msra.mxu0 %v6338
    %v6340 = vand.u32 %v122, 4294901760
    %6341 = vmatprep.subr.mxu0 %v6340
    %v6342 = vand.u32 %v121, 4294901760
    %6343 = vmatpush1.msra.mxu0 %v6342
    %v6344 = vand.u32 %v105, 4294901760
    %6345 = vmatprep.subr.mxu0 %v6344
    %v6346 = vand.u32 %v104, 4294901760
    %6347 = vmatpush1.msra.mxu0 %v6346
    %v6348 = vand.u32 %v88, 4294901760
    %6349 = vmatprep.subr.mxu0 %v6348
    %v6350 = vand.u32 %v87, 4294901760
    %6351 = vmatpush1.msra.mxu0 %v6350
    %v6352 = vand.u32 %v71, 4294901760
    %6353 = vmatprep.subr.mxu0 %v6352
    %v6354 = vand.u32 %v70, 4294901760
    %6355 = vmatpush1.msra.mxu0 %v6354
    %v6356 = vand.u32 %v54, 4294901760
    %6357 = vmatprep.subr.mxu0 %v6356
    %v6358 = vand.u32 %v53, 4294901760
    %6359 = vmatpush1.msra.mxu0 %v6358
    %6360 = vmatprep.subr.mxu0 0.0
    %6361 = vmatpush2.msra.mxu0 0.0
    %6362 = vmatprep.subr.mxu0 0.0
    %6363 = vmatpush2.msra.mxu0 0.0
    %6364 = vmatprep.subr.mxu0 0.0
    %6365 = vmatpush2.msra.mxu0 0.0
    %6366 = vmatprep.subr.mxu0 0.0
    %6367 = vmatpush2.msra.mxu0 0.0
    %6368 = vmatprep.subr.mxu0 0.0
    %6369 = vmatpush2.msra.mxu0 0.0
    %6370 = vmatprep.subr.mxu0 0.0
    %6371 = vmatpush2.msra.mxu0 0.0
    %6372 = vmatprep.subr.mxu0 0.0
    %6373 = vmatpush2.msra.mxu0 0.0
    %6374 = vmatprep.subr.mxu0 0.0
    %6375 = vmatpush2.msra.mxu0 0.0
    %6376 = vmatprep.subr.mxu0 0.0
    %6377 = vmatpush2.msra.mxu0 0.0
    %6378 = vmatprep.subr.mxu0 0.0
    %6379 = vmatpush2.msra.mxu0 0.0
    %6380 = vmatprep.subr.mxu0 0.0
    %6381 = vmatpush2.msra.mxu0 0.0
    %6382 = vmatprep.subr.mxu0 0.0
    %6383 = vmatpush2.msra.mxu0 0.0
    %6384 = vmatprep.subr.mxu0 0.0
    %6385 = vmatpush2.msra.mxu0 0.0
    %6386 = vmatprep.subr.mxu0 0.0
    %6387 = vmatpush2.msra.mxu0 0.0
    %6388 = vmatprep.subr.mxu0 0.0
    %6389 = vmatpush2.msra.mxu0 0.0
    %6390 = vmatprep.subr.mxu0 0.0
    %6391 = vmatpush2.msra.mxu0 0.0
    %6392 = vmatprep.mubr.f32.mxu0 0.0
    %v6393 = vand.u32 %v38, 4294901760
    %v6394 = vsub.f32 %v38, %v6393
    %v6395 = vand.u32 %v6394, 4294901760
    %v6396 = vsub.f32 %v6394, %v6395
    %v6397 = vand.u32 %v6396, 4294901760
    %6398 = vmatmul.mubr.f32.gmra.mxu0 %v6397
    %v6399 = vpop.f32.mrf.mxu0
    %v6400 = vadd.f32 0.0, %v6399
    %v6401 = vpop.f32.mrf.mxu0
    %v6402 = vadd.f32 0.0, %v6401
    %6403 = vdwg.mxu0
    %v6404 = vand.u32 %v309, 4294901760
    %v6405 = vsub.f32 %v309, %v6404
    %v6406 = vand.u32 %v6405, 4294901760
    %v6407 = vsub.f32 %v6405, %v6406
    %v6408 = vand.u32 %v6407, 4294901760
    %6409 = vmatprep.subr.mxu0 %v6408
    %v6410 = vand.u32 %v308, 4294901760
    %v6411 = vsub.f32 %v308, %v6410
    %v6412 = vand.u32 %v6411, 4294901760
    %v6413 = vsub.f32 %v6411, %v6412
    %v6414 = vand.u32 %v6413, 4294901760
    %6415 = vmatpush1.msra.mxu0 %v6414
    %v6416 = vand.u32 %v292, 4294901760
    %v6417 = vsub.f32 %v292, %v6416
    %v6418 = vand.u32 %v6417, 4294901760
    %v6419 = vsub.f32 %v6417, %v6418
    %v6420 = vand.u32 %v6419, 4294901760
    %6421 = vmatprep.subr.mxu0 %v6420
    %v6422 = vand.u32 %v291, 4294901760
    %v6423 = vsub.f32 %v291, %v6422
    %v6424 = vand.u32 %v6423, 4294901760
    %v6425 = vsub.f32 %v6423, %v6424
    %v6426 = vand.u32 %v6425, 4294901760
    %6427 = vmatpush1.msra.mxu0 %v6426
    %v6428 = vand.u32 %v275, 4294901760
    %v6429 = vsub.f32 %v275, %v6428
    %v6430 = vand.u32 %v6429, 4294901760
    %v6431 = vsub.f32 %v6429, %v6430
    %v6432 = vand.u32 %v6431, 4294901760
    %6433 = vmatprep.subr.mxu0 %v6432
    %v6434 = vand.u32 %v274, 4294901760
    %v6435 = vsub.f32 %v274, %v6434
    %v6436 = vand.u32 %v6435, 4294901760
    %v6437 = vsub.f32 %v6435, %v6436
    %v6438 = vand.u32 %v6437, 4294901760
    %6439 = vmatpush1.msra.mxu0 %v6438
    %v6440 = vand.u32 %v258, 4294901760
    %v6441 = vsub.f32 %v258, %v6440
    %v6442 = vand.u32 %v6441, 4294901760
    %v6443 = vsub.f32 %v6441, %v6442
    %v6444 = vand.u32 %v6443, 4294901760
    %6445 = vmatprep.subr.mxu0 %v6444
    %v6446 = vand.u32 %v257, 4294901760
    %v6447 = vsub.f32 %v257, %v6446
    %v6448 = vand.u32 %v6447, 4294901760
    %v6449 = vsub.f32 %v6447, %v6448
    %v6450 = vand.u32 %v6449, 4294901760
    %6451 = vmatpush1.msra.mxu0 %v6450
    %v6452 = vand.u32 %v241, 4294901760
    %v6453 = vsub.f32 %v241, %v6452
    %v6454 = vand.u32 %v6453, 4294901760
    %v6455 = vsub.f32 %v6453, %v6454
    %v6456 = vand.u32 %v6455, 4294901760
    %6457 = vmatprep.subr.mxu0 %v6456
    %v6458 = vand.u32 %v240, 4294901760
    %v6459 = vsub.f32 %v240, %v6458
    %v6460 = vand.u32 %v6459, 4294901760
    %v6461 = vsub.f32 %v6459, %v6460
    %v6462 = vand.u32 %v6461, 4294901760
    %6463 = vmatpush1.msra.mxu0 %v6462
    %v6464 = vand.u32 %v224, 4294901760
    %v6465 = vsub.f32 %v224, %v6464
    %v6466 = vand.u32 %v6465, 4294901760
    %v6467 = vsub.f32 %v6465, %v6466
    %v6468 = vand.u32 %v6467, 4294901760
    %6469 = vmatprep.subr.mxu0 %v6468
    %v6470 = vand.u32 %v223, 4294901760
    %v6471 = vsub.f32 %v223, %v6470
    %v6472 = vand.u32 %v6471, 4294901760
    %v6473 = vsub.f32 %v6471, %v6472
    %v6474 = vand.u32 %v6473, 4294901760
    %6475 = vmatpush1.msra.mxu0 %v6474
    %v6476 = vand.u32 %v207, 4294901760
    %v6477 = vsub.f32 %v207, %v6476
    %v6478 = vand.u32 %v6477, 4294901760
    %v6479 = vsub.f32 %v6477, %v6478
    %v6480 = vand.u32 %v6479, 4294901760
    %6481 = vmatprep.subr.mxu0 %v6480
    %v6482 = vand.u32 %v206, 4294901760
    %v6483 = vsub.f32 %v206, %v6482
    %v6484 = vand.u32 %v6483, 4294901760
    %v6485 = vsub.f32 %v6483, %v6484
    %v6486 = vand.u32 %v6485, 4294901760
    %6487 = vmatpush1.msra.mxu0 %v6486
    %v6488 = vand.u32 %v190, 4294901760
    %v6489 = vsub.f32 %v190, %v6488
    %v6490 = vand.u32 %v6489, 4294901760
    %v6491 = vsub.f32 %v6489, %v6490
    %v6492 = vand.u32 %v6491, 4294901760
    %6493 = vmatprep.subr.mxu0 %v6492
    %v6494 = vand.u32 %v189, 4294901760
    %v6495 = vsub.f32 %v189, %v6494
    %v6496 = vand.u32 %v6495, 4294901760
    %v6497 = vsub.f32 %v6495, %v6496
    %v6498 = vand.u32 %v6497, 4294901760
    %6499 = vmatpush1.msra.mxu0 %v6498
    %v6500 = vand.u32 %v173, 4294901760
    %v6501 = vsub.f32 %v173, %v6500
    %v6502 = vand.u32 %v6501, 4294901760
    %v6503 = vsub.f32 %v6501, %v6502
    %v6504 = vand.u32 %v6503, 4294901760
    %6505 = vmatprep.subr.mxu0 %v6504
    %v6506 = vand.u32 %v172, 4294901760
    %v6507 = vsub.f32 %v172, %v6506
    %v6508 = vand.u32 %v6507, 4294901760
    %v6509 = vsub.f32 %v6507, %v6508
    %v6510 = vand.u32 %v6509, 4294901760
    %6511 = vmatpush1.msra.mxu0 %v6510
    %v6512 = vand.u32 %v156, 4294901760
    %v6513 = vsub.f32 %v156, %v6512
    %v6514 = vand.u32 %v6513, 4294901760
    %v6515 = vsub.f32 %v6513, %v6514
    %v6516 = vand.u32 %v6515, 4294901760
    %6517 = vmatprep.subr.mxu0 %v6516
    %v6518 = vand.u32 %v155, 4294901760
    %v6519 = vsub.f32 %v155, %v6518
    %v6520 = vand.u32 %v6519, 4294901760
    %v6521 = vsub.f32 %v6519, %v6520
    %v6522 = vand.u32 %v6521, 4294901760
    %6523 = vmatpush1.msra.mxu0 %v6522
    %v6524 = vand.u32 %v139, 4294901760
    %v6525 = vsub.f32 %v139, %v6524
    %v6526 = vand.u32 %v6525, 4294901760
    %v6527 = vsub.f32 %v6525, %v6526
    %v6528 = vand.u32 %v6527, 4294901760
    %6529 = vmatprep.subr.mxu0 %v6528
    %v6530 = vand.u32 %v138, 4294901760
    %v6531 = vsub.f32 %v138, %v6530
    %v6532 = vand.u32 %v6531, 4294901760
    %v6533 = vsub.f32 %v6531, %v6532
    %v6534 = vand.u32 %v6533, 4294901760
    %6535 = vmatpush1.msra.mxu0 %v6534
    %v6536 = vand.u32 %v122, 4294901760
    %v6537 = vsub.f32 %v122, %v6536
    %v6538 = vand.u32 %v6537, 4294901760
    %v6539 = vsub.f32 %v6537, %v6538
    %v6540 = vand.u32 %v6539, 4294901760
    %6541 = vmatprep.subr.mxu0 %v6540
    %v6542 = vand.u32 %v121, 4294901760
    %v6543 = vsub.f32 %v121, %v6542
    %v6544 = vand.u32 %v6543, 4294901760
    %v6545 = vsub.f32 %v6543, %v6544
    %v6546 = vand.u32 %v6545, 4294901760
    %6547 = vmatpush1.msra.mxu0 %v6546
    %v6548 = vand.u32 %v105, 4294901760
    %v6549 = vsub.f32 %v105, %v6548
    %v6550 = vand.u32 %v6549, 4294901760
    %v6551 = vsub.f32 %v6549, %v6550
    %v6552 = vand.u32 %v6551, 4294901760
    %6553 = vmatprep.subr.mxu0 %v6552
    %v6554 = vand.u32 %v104, 4294901760
    %v6555 = vsub.f32 %v104, %v6554
    %v6556 = vand.u32 %v6555, 4294901760
    %v6557 = vsub.f32 %v6555, %v6556
    %v6558 = vand.u32 %v6557, 4294901760
    %6559 = vmatpush1.msra.mxu0 %v6558
    %v6560 = vand.u32 %v88, 4294901760
    %v6561 = vsub.f32 %v88, %v6560
    %v6562 = vand.u32 %v6561, 4294901760
    %v6563 = vsub.f32 %v6561, %v6562
    %v6564 = vand.u32 %v6563, 4294901760
    %6565 = vmatprep.subr.mxu0 %v6564
    %v6566 = vand.u32 %v87, 4294901760
    %v6567 = vsub.f32 %v87, %v6566
    %v6568 = vand.u32 %v6567, 4294901760
    %v6569 = vsub.f32 %v6567, %v6568
    %v6570 = vand.u32 %v6569, 4294901760
    %6571 = vmatpush1.msra.mxu0 %v6570
    %v6572 = vand.u32 %v71, 4294901760
    %v6573 = vsub.f32 %v71, %v6572
    %v6574 = vand.u32 %v6573, 4294901760
    %v6575 = vsub.f32 %v6573, %v6574
    %v6576 = vand.u32 %v6575, 4294901760
    %6577 = vmatprep.subr.mxu0 %v6576
    %v6578 = vand.u32 %v70, 4294901760
    %v6579 = vsub.f32 %v70, %v6578
    %v6580 = vand.u32 %v6579, 4294901760
    %v6581 = vsub.f32 %v6579, %v6580
    %v6582 = vand.u32 %v6581, 4294901760
    %6583 = vmatpush1.msra.mxu0 %v6582
    %v6584 = vand.u32 %v54, 4294901760
    %v6585 = vsub.f32 %v54, %v6584
    %v6586 = vand.u32 %v6585, 4294901760
    %v6587 = vsub.f32 %v6585, %v6586
    %v6588 = vand.u32 %v6587, 4294901760
    %6589 = vmatprep.subr.mxu0 %v6588
    %v6590 = vand.u32 %v53, 4294901760
    %v6591 = vsub.f32 %v53, %v6590
    %v6592 = vand.u32 %v6591, 4294901760
    %v6593 = vsub.f32 %v6591, %v6592
    %v6594 = vand.u32 %v6593, 4294901760
    %6595 = vmatpush1.msra.mxu0 %v6594
    %6596 = vmatprep.subr.mxu0 0.0
    %6597 = vmatpush2.msra.mxu0 0.0
    %6598 = vmatprep.subr.mxu0 0.0
    %6599 = vmatpush2.msra.mxu0 0.0
    %6600 = vmatprep.subr.mxu0 0.0
    %6601 = vmatpush2.msra.mxu0 0.0
    %6602 = vmatprep.subr.mxu0 0.0
    %6603 = vmatpush2.msra.mxu0 0.0
    %6604 = vmatprep.subr.mxu0 0.0
    %6605 = vmatpush2.msra.mxu0 0.0
    %6606 = vmatprep.subr.mxu0 0.0
    %6607 = vmatpush2.msra.mxu0 0.0
    %6608 = vmatprep.subr.mxu0 0.0
    %6609 = vmatpush2.msra.mxu0 0.0
    %6610 = vmatprep.subr.mxu0 0.0
    %6611 = vmatpush2.msra.mxu0 0.0
    %6612 = vmatprep.subr.mxu0 0.0
    %6613 = vmatpush2.msra.mxu0 0.0
    %6614 = vmatprep.subr.mxu0 0.0
    %6615 = vmatpush2.msra.mxu0 0.0
    %6616 = vmatprep.subr.mxu0 0.0
    %6617 = vmatpush2.msra.mxu0 0.0
    %6618 = vmatprep.subr.mxu0 0.0
    %6619 = vmatpush2.msra.mxu0 0.0
    %6620 = vmatprep.subr.mxu0 0.0
    %6621 = vmatpush2.msra.mxu0 0.0
    %6622 = vmatprep.subr.mxu0 0.0
    %6623 = vmatpush2.msra.mxu0 0.0
    %6624 = vmatprep.subr.mxu0 0.0
    %6625 = vmatpush2.msra.mxu0 0.0
    %6626 = vmatprep.subr.mxu0 0.0
    %6627 = vmatpush2.msra.mxu0 0.0
    %6628 = vmatprep.mubr.f32.mxu0 0.0
    %v6629 = vand.u32 %v38, 4294901760
    %6630 = vmatmul.mubr.f32.gmra.mxu0 %v6629
    %v6631 = vpop.f32.mrf.mxu0
    %v6632 = vadd.f32 %v6400, %v6631
    %v6633 = vpop.f32.mrf.mxu0
    %v6634 = vadd.f32 %v6402, %v6633
    %6635 = vdwg.mxu0
    %v6636 = vand.u32 %v309, 4294901760
    %v6637 = vsub.f32 %v309, %v6636
    %6638 = vmatprep.subr.mxu0 %v6637
    %v6639 = vand.u32 %v308, 4294901760
    %v6640 = vsub.f32 %v308, %v6639
    %6641 = vmatpush1.msra.mxu0 %v6640
    %v6642 = vand.u32 %v292, 4294901760
    %v6643 = vsub.f32 %v292, %v6642
    %6644 = vmatprep.subr.mxu0 %v6643
    %v6645 = vand.u32 %v291, 4294901760
    %v6646 = vsub.f32 %v291, %v6645
    %6647 = vmatpush1.msra.mxu0 %v6646
    %v6648 = vand.u32 %v275, 4294901760
    %v6649 = vsub.f32 %v275, %v6648
    %6650 = vmatprep.subr.mxu0 %v6649
    %v6651 = vand.u32 %v274, 4294901760
    %v6652 = vsub.f32 %v274, %v6651
    %6653 = vmatpush1.msra.mxu0 %v6652
    %v6654 = vand.u32 %v258, 4294901760
    %v6655 = vsub.f32 %v258, %v6654
    %6656 = vmatprep.subr.mxu0 %v6655
    %v6657 = vand.u32 %v257, 4294901760
    %v6658 = vsub.f32 %v257, %v6657
    %6659 = vmatpush1.msra.mxu0 %v6658
    %v6660 = vand.u32 %v241, 4294901760
    %v6661 = vsub.f32 %v241, %v6660
    %6662 = vmatprep.subr.mxu0 %v6661
    %v6663 = vand.u32 %v240, 4294901760
    %v6664 = vsub.f32 %v240, %v6663
    %6665 = vmatpush1.msra.mxu0 %v6664
    %v6666 = vand.u32 %v224, 4294901760
    %v6667 = vsub.f32 %v224, %v6666
    %6668 = vmatprep.subr.mxu0 %v6667
    %v6669 = vand.u32 %v223, 4294901760
    %v6670 = vsub.f32 %v223, %v6669
    %6671 = vmatpush1.msra.mxu0 %v6670
    %v6672 = vand.u32 %v207, 4294901760
    %v6673 = vsub.f32 %v207, %v6672
    %6674 = vmatprep.subr.mxu0 %v6673
    %v6675 = vand.u32 %v206, 4294901760
    %v6676 = vsub.f32 %v206, %v6675
    %6677 = vmatpush1.msra.mxu0 %v6676
    %v6678 = vand.u32 %v190, 4294901760
    %v6679 = vsub.f32 %v190, %v6678
    %6680 = vmatprep.subr.mxu0 %v6679
    %v6681 = vand.u32 %v189, 4294901760
    %v6682 = vsub.f32 %v189, %v6681
    %6683 = vmatpush1.msra.mxu0 %v6682
    %v6684 = vand.u32 %v173, 4294901760
    %v6685 = vsub.f32 %v173, %v6684
    %6686 = vmatprep.subr.mxu0 %v6685
    %v6687 = vand.u32 %v172, 4294901760
    %v6688 = vsub.f32 %v172, %v6687
    %6689 = vmatpush1.msra.mxu0 %v6688
    %v6690 = vand.u32 %v156, 4294901760
    %v6691 = vsub.f32 %v156, %v6690
    %6692 = vmatprep.subr.mxu0 %v6691
    %v6693 = vand.u32 %v155, 4294901760
    %v6694 = vsub.f32 %v155, %v6693
    %6695 = vmatpush1.msra.mxu0 %v6694
    %v6696 = vand.u32 %v139, 4294901760
    %v6697 = vsub.f32 %v139, %v6696
    %6698 = vmatprep.subr.mxu0 %v6697
    %v6699 = vand.u32 %v138, 4294901760
    %v6700 = vsub.f32 %v138, %v6699
    %6701 = vmatpush1.msra.mxu0 %v6700
    %v6702 = vand.u32 %v122, 4294901760
    %v6703 = vsub.f32 %v122, %v6702
    %6704 = vmatprep.subr.mxu0 %v6703
    %v6705 = vand.u32 %v121, 4294901760
    %v6706 = vsub.f32 %v121, %v6705
    %6707 = vmatpush1.msra.mxu0 %v6706
    %v6708 = vand.u32 %v105, 4294901760
    %v6709 = vsub.f32 %v105, %v6708
    %6710 = vmatprep.subr.mxu0 %v6709
    %v6711 = vand.u32 %v104, 4294901760
    %v6712 = vsub.f32 %v104, %v6711
    %6713 = vmatpush1.msra.mxu0 %v6712
    %v6714 = vand.u32 %v88, 4294901760
    %v6715 = vsub.f32 %v88, %v6714
    %6716 = vmatprep.subr.mxu0 %v6715
    %v6717 = vand.u32 %v87, 4294901760
    %v6718 = vsub.f32 %v87, %v6717
    %6719 = vmatpush1.msra.mxu0 %v6718
    %v6720 = vand.u32 %v71, 4294901760
    %v6721 = vsub.f32 %v71, %v6720
    %6722 = vmatprep.subr.mxu0 %v6721
    %v6723 = vand.u32 %v70, 4294901760
    %v6724 = vsub.f32 %v70, %v6723
    %6725 = vmatpush1.msra.mxu0 %v6724
    %v6726 = vand.u32 %v54, 4294901760
    %v6727 = vsub.f32 %v54, %v6726
    %6728 = vmatprep.subr.mxu0 %v6727
    %v6729 = vand.u32 %v53, 4294901760
    %v6730 = vsub.f32 %v53, %v6729
    %6731 = vmatpush1.msra.mxu0 %v6730
    %6732 = vmatprep.subr.mxu0 0.0
    %6733 = vmatpush2.msra.mxu0 0.0
    %6734 = vmatprep.subr.mxu0 0.0
    %6735 = vmatpush2.msra.mxu0 0.0
    %6736 = vmatprep.subr.mxu0 0.0
    %6737 = vmatpush2.msra.mxu0 0.0
    %6738 = vmatprep.subr.mxu0 0.0
    %6739 = vmatpush2.msra.mxu0 0.0
    %6740 = vmatprep.subr.mxu0 0.0
    %6741 = vmatpush2.msra.mxu0 0.0
    %6742 = vmatprep.subr.mxu0 0.0
    %6743 = vmatpush2.msra.mxu0 0.0
    %6744 = vmatprep.subr.mxu0 0.0
    %6745 = vmatpush2.msra.mxu0 0.0
    %6746 = vmatprep.subr.mxu0 0.0
    %6747 = vmatpush2.msra.mxu0 0.0
    %6748 = vmatprep.subr.mxu0 0.0
    %6749 = vmatpush2.msra.mxu0 0.0
    %6750 = vmatprep.subr.mxu0 0.0
    %6751 = vmatpush2.msra.mxu0 0.0
    %6752 = vmatprep.subr.mxu0 0.0
    %6753 = vmatpush2.msra.mxu0 0.0
    %6754 = vmatprep.subr.mxu0 0.0
    %6755 = vmatpush2.msra.mxu0 0.0
    %6756 = vmatprep.subr.mxu0 0.0
    %6757 = vmatpush2.msra.mxu0 0.0
    %6758 = vmatprep.subr.mxu0 0.0
    %6759 = vmatpush2.msra.mxu0 0.0
    %6760 = vmatprep.subr.mxu0 0.0
    %6761 = vmatpush2.msra.mxu0 0.0
    %6762 = vmatprep.subr.mxu0 0.0
    %6763 = vmatpush2.msra.mxu0 0.0
    %6764 = vmatprep.mubr.f32.mxu0 0.0
    %v6765 = vand.u32 %v38, 4294901760
    %v6766 = vsub.f32 %v38, %v6765
    %6767 = vmatmul.mubr.f32.gmra.mxu0 %v6766
    %v6768 = vpop.f32.mrf.mxu0
    %v6769 = vadd.f32 %v6632, %v6768
    %v6770 = vpop.f32.mrf.mxu0
    %v6771 = vadd.f32 %v6634, %v6770
    %6772 = vdwg.mxu0
    %v6773 = vand.u32 %v309, 4294901760
    %6774 = vmatprep.subr.mxu0 %v6773
    %v6775 = vand.u32 %v308, 4294901760
    %6776 = vmatpush1.msra.mxu0 %v6775
    %v6777 = vand.u32 %v292, 4294901760
    %6778 = vmatprep.subr.mxu0 %v6777
    %v6779 = vand.u32 %v291, 4294901760
    %6780 = vmatpush1.msra.mxu0 %v6779
    %v6781 = vand.u32 %v275, 4294901760
    %6782 = vmatprep.subr.mxu0 %v6781
    %v6783 = vand.u32 %v274, 4294901760
    %6784 = vmatpush1.msra.mxu0 %v6783
    %v6785 = vand.u32 %v258, 4294901760
    %6786 = vmatprep.subr.mxu0 %v6785
    %v6787 = vand.u32 %v257, 4294901760
    %6788 = vmatpush1.msra.mxu0 %v6787
    %v6789 = vand.u32 %v241, 4294901760
    %6790 = vmatprep.subr.mxu0 %v6789
    %v6791 = vand.u32 %v240, 4294901760
    %6792 = vmatpush1.msra.mxu0 %v6791
    %v6793 = vand.u32 %v224, 4294901760
    %6794 = vmatprep.subr.mxu0 %v6793
    %v6795 = vand.u32 %v223, 4294901760
    %6796 = vmatpush1.msra.mxu0 %v6795
    %v6797 = vand.u32 %v207, 4294901760
    %6798 = vmatprep.subr.mxu0 %v6797
    %v6799 = vand.u32 %v206, 4294901760
    %6800 = vmatpush1.msra.mxu0 %v6799
    %v6801 = vand.u32 %v190, 4294901760
    %6802 = vmatprep.subr.mxu0 %v6801
    %v6803 = vand.u32 %v189, 4294901760
    %6804 = vmatpush1.msra.mxu0 %v6803
    %v6805 = vand.u32 %v173, 4294901760
    %6806 = vmatprep.subr.mxu0 %v6805
    %v6807 = vand.u32 %v172, 4294901760
    %6808 = vmatpush1.msra.mxu0 %v6807
    %v6809 = vand.u32 %v156, 4294901760
    %6810 = vmatprep.subr.mxu0 %v6809
    %v6811 = vand.u32 %v155, 4294901760
    %6812 = vmatpush1.msra.mxu0 %v6811
    %v6813 = vand.u32 %v139, 4294901760
    %6814 = vmatprep.subr.mxu0 %v6813
    %v6815 = vand.u32 %v138, 4294901760
    %6816 = vmatpush1.msra.mxu0 %v6815
    %v6817 = vand.u32 %v122, 4294901760
    %6818 = vmatprep.subr.mxu0 %v6817
    %v6819 = vand.u32 %v121, 4294901760
    %6820 = vmatpush1.msra.mxu0 %v6819
    %v6821 = vand.u32 %v105, 4294901760
    %6822 = vmatprep.subr.mxu0 %v6821
    %v6823 = vand.u32 %v104, 4294901760
    %6824 = vmatpush1.msra.mxu0 %v6823
    %v6825 = vand.u32 %v88, 4294901760
    %6826 = vmatprep.subr.mxu0 %v6825
    %v6827 = vand.u32 %v87, 4294901760
    %6828 = vmatpush1.msra.mxu0 %v6827
    %v6829 = vand.u32 %v71, 4294901760
    %6830 = vmatprep.subr.mxu0 %v6829
    %v6831 = vand.u32 %v70, 4294901760
    %6832 = vmatpush1.msra.mxu0 %v6831
    %v6833 = vand.u32 %v54, 4294901760
    %6834 = vmatprep.subr.mxu0 %v6833
    %v6835 = vand.u32 %v53, 4294901760
    %6836 = vmatpush1.msra.mxu0 %v6835
    %6837 = vmatprep.subr.mxu0 0.0
    %6838 = vmatpush2.msra.mxu0 0.0
    %6839 = vmatprep.subr.mxu0 0.0
    %6840 = vmatpush2.msra.mxu0 0.0
    %6841 = vmatprep.subr.mxu0 0.0
    %6842 = vmatpush2.msra.mxu0 0.0
    %6843 = vmatprep.subr.mxu0 0.0
    %6844 = vmatpush2.msra.mxu0 0.0
    %6845 = vmatprep.subr.mxu0 0.0
    %6846 = vmatpush2.msra.mxu0 0.0
    %6847 = vmatprep.subr.mxu0 0.0
    %6848 = vmatpush2.msra.mxu0 0.0
    %6849 = vmatprep.subr.mxu0 0.0
    %6850 = vmatpush2.msra.mxu0 0.0
    %6851 = vmatprep.subr.mxu0 0.0
    %6852 = vmatpush2.msra.mxu0 0.0
    %6853 = vmatprep.subr.mxu0 0.0
    %6854 = vmatpush2.msra.mxu0 0.0
    %6855 = vmatprep.subr.mxu0 0.0
    %6856 = vmatpush2.msra.mxu0 0.0
    %6857 = vmatprep.subr.mxu0 0.0
    %6858 = vmatpush2.msra.mxu0 0.0
    %6859 = vmatprep.subr.mxu0 0.0
    %6860 = vmatpush2.msra.mxu0 0.0
    %6861 = vmatprep.subr.mxu0 0.0
    %6862 = vmatpush2.msra.mxu0 0.0
    %6863 = vmatprep.subr.mxu0 0.0
    %6864 = vmatpush2.msra.mxu0 0.0
    %6865 = vmatprep.subr.mxu0 0.0
    %6866 = vmatpush2.msra.mxu0 0.0
    %6867 = vmatprep.subr.mxu0 0.0
    %6868 = vmatpush2.msra.mxu0 0.0
    %6869 = vmatprep.mubr.f32.mxu0 0.0
    %v6870 = vand.u32 %v38, 4294901760
    %v6871 = vsub.f32 %v38, %v6870
    %v6872 = vand.u32 %v6871, 4294901760
    %6873 = vmatmul.mubr.f32.gmra.mxu0 %v6872
    %v6874 = vpop.f32.mrf.mxu0
    %v6875 = vadd.f32 %v6769, %v6874
    %v6876 = vpop.f32.mrf.mxu0
    %v6877 = vadd.f32 %v6771, %v6876
    %6878 = vdwg.mxu0
    %v6879 = vand.u32 %v309, 4294901760
    %v6880 = vsub.f32 %v309, %v6879
    %v6881 = vand.u32 %v6880, 4294901760
    %6882 = vmatprep.subr.mxu0 %v6881
    %v6883 = vand.u32 %v308, 4294901760
    %v6884 = vsub.f32 %v308, %v6883
    %v6885 = vand.u32 %v6884, 4294901760
    %6886 = vmatpush1.msra.mxu0 %v6885
    %v6887 = vand.u32 %v292, 4294901760
    %v6888 = vsub.f32 %v292, %v6887
    %v6889 = vand.u32 %v6888, 4294901760
    %6890 = vmatprep.subr.mxu0 %v6889
    %v6891 = vand.u32 %v291, 4294901760
    %v6892 = vsub.f32 %v291, %v6891
    %v6893 = vand.u32 %v6892, 4294901760
    %6894 = vmatpush1.msra.mxu0 %v6893
    %v6895 = vand.u32 %v275, 4294901760
    %v6896 = vsub.f32 %v275, %v6895
    %v6897 = vand.u32 %v6896, 4294901760
    %6898 = vmatprep.subr.mxu0 %v6897
    %v6899 = vand.u32 %v274, 4294901760
    %v6900 = vsub.f32 %v274, %v6899
    %v6901 = vand.u32 %v6900, 4294901760
    %6902 = vmatpush1.msra.mxu0 %v6901
    %v6903 = vand.u32 %v258, 4294901760
    %v6904 = vsub.f32 %v258, %v6903
    %v6905 = vand.u32 %v6904, 4294901760
    %6906 = vmatprep.subr.mxu0 %v6905
    %v6907 = vand.u32 %v257, 4294901760
    %v6908 = vsub.f32 %v257, %v6907
    %v6909 = vand.u32 %v6908, 4294901760
    %6910 = vmatpush1.msra.mxu0 %v6909
    %v6911 = vand.u32 %v241, 4294901760
    %v6912 = vsub.f32 %v241, %v6911
    %v6913 = vand.u32 %v6912, 4294901760
    %6914 = vmatprep.subr.mxu0 %v6913
    %v6915 = vand.u32 %v240, 4294901760
    %v6916 = vsub.f32 %v240, %v6915
    %v6917 = vand.u32 %v6916, 4294901760
    %6918 = vmatpush1.msra.mxu0 %v6917
    %v6919 = vand.u32 %v224, 4294901760
    %v6920 = vsub.f32 %v224, %v6919
    %v6921 = vand.u32 %v6920, 4294901760
    %6922 = vmatprep.subr.mxu0 %v6921
    %v6923 = vand.u32 %v223, 4294901760
    %v6924 = vsub.f32 %v223, %v6923
    %v6925 = vand.u32 %v6924, 4294901760
    %6926 = vmatpush1.msra.mxu0 %v6925
    %v6927 = vand.u32 %v207, 4294901760
    %v6928 = vsub.f32 %v207, %v6927
    %v6929 = vand.u32 %v6928, 4294901760
    %6930 = vmatprep.subr.mxu0 %v6929
    %v6931 = vand.u32 %v206, 4294901760
    %v6932 = vsub.f32 %v206, %v6931
    %v6933 = vand.u32 %v6932, 4294901760
    %6934 = vmatpush1.msra.mxu0 %v6933
    %v6935 = vand.u32 %v190, 4294901760
    %v6936 = vsub.f32 %v190, %v6935
    %v6937 = vand.u32 %v6936, 4294901760
    %6938 = vmatprep.subr.mxu0 %v6937
    %v6939 = vand.u32 %v189, 4294901760
    %v6940 = vsub.f32 %v189, %v6939
    %v6941 = vand.u32 %v6940, 4294901760
    %6942 = vmatpush1.msra.mxu0 %v6941
    %v6943 = vand.u32 %v173, 4294901760
    %v6944 = vsub.f32 %v173, %v6943
    %v6945 = vand.u32 %v6944, 4294901760
    %6946 = vmatprep.subr.mxu0 %v6945
    %v6947 = vand.u32 %v172, 4294901760
    %v6948 = vsub.f32 %v172, %v6947
    %v6949 = vand.u32 %v6948, 4294901760
    %6950 = vmatpush1.msra.mxu0 %v6949
    %v6951 = vand.u32 %v156, 4294901760
    %v6952 = vsub.f32 %v156, %v6951
    %v6953 = vand.u32 %v6952, 4294901760
    %6954 = vmatprep.subr.mxu0 %v6953
    %v6955 = vand.u32 %v155, 4294901760
    %v6956 = vsub.f32 %v155, %v6955
    %v6957 = vand.u32 %v6956, 4294901760
    %6958 = vmatpush1.msra.mxu0 %v6957
    %v6959 = vand.u32 %v139, 4294901760
    %v6960 = vsub.f32 %v139, %v6959
    %v6961 = vand.u32 %v6960, 4294901760
    %6962 = vmatprep.subr.mxu0 %v6961
    %v6963 = vand.u32 %v138, 4294901760
    %v6964 = vsub.f32 %v138, %v6963
    %v6965 = vand.u32 %v6964, 4294901760
    %6966 = vmatpush1.msra.mxu0 %v6965
    %v6967 = vand.u32 %v122, 4294901760
    %v6968 = vsub.f32 %v122, %v6967
    %v6969 = vand.u32 %v6968, 4294901760
    %6970 = vmatprep.subr.mxu0 %v6969
    %v6971 = vand.u32 %v121, 4294901760
    %v6972 = vsub.f32 %v121, %v6971
    %v6973 = vand.u32 %v6972, 4294901760
    %6974 = vmatpush1.msra.mxu0 %v6973
    %v6975 = vand.u32 %v105, 4294901760
    %v6976 = vsub.f32 %v105, %v6975
    %v6977 = vand.u32 %v6976, 4294901760
    %6978 = vmatprep.subr.mxu0 %v6977
    %v6979 = vand.u32 %v104, 4294901760
    %v6980 = vsub.f32 %v104, %v6979
    %v6981 = vand.u32 %v6980, 4294901760
    %6982 = vmatpush1.msra.mxu0 %v6981
    %v6983 = vand.u32 %v88, 4294901760
    %v6984 = vsub.f32 %v88, %v6983
    %v6985 = vand.u32 %v6984, 4294901760
    %6986 = vmatprep.subr.mxu0 %v6985
    %v6987 = vand.u32 %v87, 4294901760
    %v6988 = vsub.f32 %v87, %v6987
    %v6989 = vand.u32 %v6988, 4294901760
    %6990 = vmatpush1.msra.mxu0 %v6989
    %v6991 = vand.u32 %v71, 4294901760
    %v6992 = vsub.f32 %v71, %v6991
    %v6993 = vand.u32 %v6992, 4294901760
    %6994 = vmatprep.subr.mxu0 %v6993
    %v6995 = vand.u32 %v70, 4294901760
    %v6996 = vsub.f32 %v70, %v6995
    %v6997 = vand.u32 %v6996, 4294901760
    %6998 = vmatpush1.msra.mxu0 %v6997
    %v6999 = vand.u32 %v54, 4294901760
    %v7000 = vsub.f32 %v54, %v6999
    %v7001 = vand.u32 %v7000, 4294901760
    %7002 = vmatprep.subr.mxu0 %v7001
    %v7003 = vand.u32 %v53, 4294901760
    %v7004 = vsub.f32 %v53, %v7003
    %v7005 = vand.u32 %v7004, 4294901760
    %7006 = vmatpush1.msra.mxu0 %v7005
    %7007 = vmatprep.subr.mxu0 0.0
    %7008 = vmatpush2.msra.mxu0 0.0
    %7009 = vmatprep.subr.mxu0 0.0
    %7010 = vmatpush2.msra.mxu0 0.0
    %7011 = vmatprep.subr.mxu0 0.0
    %7012 = vmatpush2.msra.mxu0 0.0
    %7013 = vmatprep.subr.mxu0 0.0
    %7014 = vmatpush2.msra.mxu0 0.0
    %7015 = vmatprep.subr.mxu0 0.0
    %7016 = vmatpush2.msra.mxu0 0.0
    %7017 = vmatprep.subr.mxu0 0.0
    %7018 = vmatpush2.msra.mxu0 0.0
    %7019 = vmatprep.subr.mxu0 0.0
    %7020 = vmatpush2.msra.mxu0 0.0
    %7021 = vmatprep.subr.mxu0 0.0
    %7022 = vmatpush2.msra.mxu0 0.0
    %7023 = vmatprep.subr.mxu0 0.0
    %7024 = vmatpush2.msra.mxu0 0.0
    %7025 = vmatprep.subr.mxu0 0.0
    %7026 = vmatpush2.msra.mxu0 0.0
    %7027 = vmatprep.subr.mxu0 0.0
    %7028 = vmatpush2.msra.mxu0 0.0
    %7029 = vmatprep.subr.mxu0 0.0
    %7030 = vmatpush2.msra.mxu0 0.0
    %7031 = vmatprep.subr.mxu0 0.0
    %7032 = vmatpush2.msra.mxu0 0.0
    %7033 = vmatprep.subr.mxu0 0.0
    %7034 = vmatpush2.msra.mxu0 0.0
    %7035 = vmatprep.subr.mxu0 0.0
    %7036 = vmatpush2.msra.mxu0 0.0
    %7037 = vmatprep.subr.mxu0 0.0
    %7038 = vmatpush2.msra.mxu0 0.0
    %7039 = vmatprep.mubr.f32.mxu0 0.0
    %v7040 = vand.u32 %v38, 4294901760
    %7041 = vmatmul.mubr.f32.gmra.mxu0 %v7040
    %v7042 = vpop.f32.mrf.mxu0
    %v7043 = vadd.f32 %v6875, %v7042
    %v7044 = vpop.f32.mrf.mxu0
    %v7045 = vadd.f32 %v6877, %v7044
    %7046 = vdwg.mxu0
    %v7047 = vand.u32 %v309, 4294901760
    %7048 = vmatprep.subr.mxu0 %v7047
    %v7049 = vand.u32 %v308, 4294901760
    %7050 = vmatpush1.msra.mxu0 %v7049
    %v7051 = vand.u32 %v292, 4294901760
    %7052 = vmatprep.subr.mxu0 %v7051
    %v7053 = vand.u32 %v291, 4294901760
    %7054 = vmatpush1.msra.mxu0 %v7053
    %v7055 = vand.u32 %v275, 4294901760
    %7056 = vmatprep.subr.mxu0 %v7055
    %v7057 = vand.u32 %v274, 4294901760
    %7058 = vmatpush1.msra.mxu0 %v7057
    %v7059 = vand.u32 %v258, 4294901760
    %7060 = vmatprep.subr.mxu0 %v7059
    %v7061 = vand.u32 %v257, 4294901760
    %7062 = vmatpush1.msra.mxu0 %v7061
    %v7063 = vand.u32 %v241, 4294901760
    %7064 = vmatprep.subr.mxu0 %v7063
    %v7065 = vand.u32 %v240, 4294901760
    %7066 = vmatpush1.msra.mxu0 %v7065
    %v7067 = vand.u32 %v224, 4294901760
    %7068 = vmatprep.subr.mxu0 %v7067
    %v7069 = vand.u32 %v223, 4294901760
    %7070 = vmatpush1.msra.mxu0 %v7069
    %v7071 = vand.u32 %v207, 4294901760
    %7072 = vmatprep.subr.mxu0 %v7071
    %v7073 = vand.u32 %v206, 4294901760
    %7074 = vmatpush1.msra.mxu0 %v7073
    %v7075 = vand.u32 %v190, 4294901760
    %7076 = vmatprep.subr.mxu0 %v7075
    %v7077 = vand.u32 %v189, 4294901760
    %7078 = vmatpush1.msra.mxu0 %v7077
    %v7079 = vand.u32 %v173, 4294901760
    %7080 = vmatprep.subr.mxu0 %v7079
    %v7081 = vand.u32 %v172, 4294901760
    %7082 = vmatpush1.msra.mxu0 %v7081
    %v7083 = vand.u32 %v156, 4294901760
    %7084 = vmatprep.subr.mxu0 %v7083
    %v7085 = vand.u32 %v155, 4294901760
    %7086 = vmatpush1.msra.mxu0 %v7085
    %v7087 = vand.u32 %v139, 4294901760
    %7088 = vmatprep.subr.mxu0 %v7087
    %v7089 = vand.u32 %v138, 4294901760
    %7090 = vmatpush1.msra.mxu0 %v7089
    %v7091 = vand.u32 %v122, 4294901760
    %7092 = vmatprep.subr.mxu0 %v7091
    %v7093 = vand.u32 %v121, 4294901760
    %7094 = vmatpush1.msra.mxu0 %v7093
    %v7095 = vand.u32 %v105, 4294901760
    %7096 = vmatprep.subr.mxu0 %v7095
    %v7097 = vand.u32 %v104, 4294901760
    %7098 = vmatpush1.msra.mxu0 %v7097
    %v7099 = vand.u32 %v88, 4294901760
    %7100 = vmatprep.subr.mxu0 %v7099
    %v7101 = vand.u32 %v87, 4294901760
    %7102 = vmatpush1.msra.mxu0 %v7101
    %v7103 = vand.u32 %v71, 4294901760
    %7104 = vmatprep.subr.mxu0 %v7103
    %v7105 = vand.u32 %v70, 4294901760
    %7106 = vmatpush1.msra.mxu0 %v7105
    %v7107 = vand.u32 %v54, 4294901760
    %7108 = vmatprep.subr.mxu0 %v7107
    %v7109 = vand.u32 %v53, 4294901760
    %7110 = vmatpush1.msra.mxu0 %v7109
    %7111 = vmatprep.subr.mxu0 0.0
    %7112 = vmatpush2.msra.mxu0 0.0
    %7113 = vmatprep.subr.mxu0 0.0
    %7114 = vmatpush2.msra.mxu0 0.0
    %7115 = vmatprep.subr.mxu0 0.0
    %7116 = vmatpush2.msra.mxu0 0.0
    %7117 = vmatprep.subr.mxu0 0.0
    %7118 = vmatpush2.msra.mxu0 0.0
    %7119 = vmatprep.subr.mxu0 0.0
    %7120 = vmatpush2.msra.mxu0 0.0
    %7121 = vmatprep.subr.mxu0 0.0
    %7122 = vmatpush2.msra.mxu0 0.0
    %7123 = vmatprep.subr.mxu0 0.0
    %7124 = vmatpush2.msra.mxu0 0.0
    %7125 = vmatprep.subr.mxu0 0.0
    %7126 = vmatpush2.msra.mxu0 0.0
    %7127 = vmatprep.subr.mxu0 0.0
    %7128 = vmatpush2.msra.mxu0 0.0
    %7129 = vmatprep.subr.mxu0 0.0
    %7130 = vmatpush2.msra.mxu0 0.0
    %7131 = vmatprep.subr.mxu0 0.0
    %7132 = vmatpush2.msra.mxu0 0.0
    %7133 = vmatprep.subr.mxu0 0.0
    %7134 = vmatpush2.msra.mxu0 0.0
    %7135 = vmatprep.subr.mxu0 0.0
    %7136 = vmatpush2.msra.mxu0 0.0
    %7137 = vmatprep.subr.mxu0 0.0
    %7138 = vmatpush2.msra.mxu0 0.0
    %7139 = vmatprep.subr.mxu0 0.0
    %7140 = vmatpush2.msra.mxu0 0.0
    %7141 = vmatprep.subr.mxu0 0.0
    %7142 = vmatpush2.msra.mxu0 0.0
    %7143 = vmatprep.mubr.f32.mxu0 0.0
    %v7144 = vand.u32 %v38, 4294901760
    %7145 = vmatmul.mubr.f32.gmra.mxu0 %v7144
    %v7146 = vpop.f32.mrf.mxu0
    %v7147 = vadd.f32 %v7043, %v7146
    %v7148 = vpop.f32.mrf.mxu0
    %v7149 = vadd.f32 %v7045, %v7148
    %7150 = vdwg.mxu0
    %7151 = vmatprep.subr.mxu0 0.0
    %v7152 = vand.u32 %v310, 4294901760
    %7153 = vmatpush1.msra.mxu0 %v7152
    %7154 = vmatprep.subr.mxu0 0.0
    %v7155 = vand.u32 %v293, 4294901760
    %7156 = vmatpush1.msra.mxu0 %v7155
    %7157 = vmatprep.subr.mxu0 0.0
    %v7158 = vand.u32 %v276, 4294901760
    %7159 = vmatpush1.msra.mxu0 %v7158
    %7160 = vmatprep.subr.mxu0 0.0
    %v7161 = vand.u32 %v259, 4294901760
    %7162 = vmatpush1.msra.mxu0 %v7161
    %7163 = vmatprep.subr.mxu0 0.0
    %v7164 = vand.u32 %v242, 4294901760
    %7165 = vmatpush1.msra.mxu0 %v7164
    %7166 = vmatprep.subr.mxu0 0.0
    %v7167 = vand.u32 %v225, 4294901760
    %7168 = vmatpush1.msra.mxu0 %v7167
    %7169 = vmatprep.subr.mxu0 0.0
    %v7170 = vand.u32 %v208, 4294901760
    %7171 = vmatpush1.msra.mxu0 %v7170
    %7172 = vmatprep.subr.mxu0 0.0
    %v7173 = vand.u32 %v191, 4294901760
    %7174 = vmatpush1.msra.mxu0 %v7173
    %7175 = vmatprep.subr.mxu0 0.0
    %v7176 = vand.u32 %v174, 4294901760
    %7177 = vmatpush1.msra.mxu0 %v7176
    %7178 = vmatprep.subr.mxu0 0.0
    %v7179 = vand.u32 %v157, 4294901760
    %7180 = vmatpush1.msra.mxu0 %v7179
    %7181 = vmatprep.subr.mxu0 0.0
    %v7182 = vand.u32 %v140, 4294901760
    %7183 = vmatpush1.msra.mxu0 %v7182
    %7184 = vmatprep.subr.mxu0 0.0
    %v7185 = vand.u32 %v123, 4294901760
    %7186 = vmatpush1.msra.mxu0 %v7185
    %7187 = vmatprep.subr.mxu0 0.0
    %v7188 = vand.u32 %v106, 4294901760
    %7189 = vmatpush1.msra.mxu0 %v7188
    %7190 = vmatprep.subr.mxu0 0.0
    %v7191 = vand.u32 %v89, 4294901760
    %7192 = vmatpush1.msra.mxu0 %v7191
    %7193 = vmatprep.subr.mxu0 0.0
    %v7194 = vand.u32 %v72, 4294901760
    %7195 = vmatpush1.msra.mxu0 %v7194
    %7196 = vmatprep.subr.mxu0 0.0
    %v7197 = vand.u32 %v55, 4294901760
    %7198 = vmatpush1.msra.mxu0 %v7197
    %7199 = vmatprep.subr.mxu0 0.0
    %7200 = vmatpush2.msra.mxu0 0.0
    %7201 = vmatprep.subr.mxu0 0.0
    %7202 = vmatpush2.msra.mxu0 0.0
    %7203 = vmatprep.subr.mxu0 0.0
    %7204 = vmatpush2.msra.mxu0 0.0
    %7205 = vmatprep.subr.mxu0 0.0
    %7206 = vmatpush2.msra.mxu0 0.0
    %7207 = vmatprep.subr.mxu0 0.0
    %7208 = vmatpush2.msra.mxu0 0.0
    %7209 = vmatprep.subr.mxu0 0.0
    %7210 = vmatpush2.msra.mxu0 0.0
    %7211 = vmatprep.subr.mxu0 0.0
    %7212 = vmatpush2.msra.mxu0 0.0
    %7213 = vmatprep.subr.mxu0 0.0
    %7214 = vmatpush2.msra.mxu0 0.0
    %7215 = vmatprep.subr.mxu0 0.0
    %7216 = vmatpush2.msra.mxu0 0.0
    %7217 = vmatprep.subr.mxu0 0.0
    %7218 = vmatpush2.msra.mxu0 0.0
    %7219 = vmatprep.subr.mxu0 0.0
    %7220 = vmatpush2.msra.mxu0 0.0
    %7221 = vmatprep.subr.mxu0 0.0
    %7222 = vmatpush2.msra.mxu0 0.0
    %7223 = vmatprep.subr.mxu0 0.0
    %7224 = vmatpush2.msra.mxu0 0.0
    %7225 = vmatprep.subr.mxu0 0.0
    %7226 = vmatpush2.msra.mxu0 0.0
    %7227 = vmatprep.subr.mxu0 0.0
    %7228 = vmatpush2.msra.mxu0 0.0
    %7229 = vmatprep.subr.mxu0 0.0
    %7230 = vmatpush2.msra.mxu0 0.0
    %7231 = vmatprep.mubr.f32.mxu0 0.0
    %v7232 = vand.u32 %v38, 4294901760
    %v7233 = vsub.f32 %v38, %v7232
    %v7234 = vand.u32 %v7233, 4294901760
    %v7235 = vsub.f32 %v7233, %v7234
    %v7236 = vand.u32 %v7235, 4294901760
    %7237 = vmatmul.mubr.f32.gmra.mxu0 %v7236
    %v7238 = vpop.f32.mrf.mxu0
    %v7239 = vadd.f32 0.0, %v7238
    %v7240 = vpop.f32.mrf.mxu0
    %7241 = vdwg.mxu0
    %7242 = vmatprep.subr.mxu0 0.0
    %v7243 = vand.u32 %v310, 4294901760
    %v7244 = vsub.f32 %v310, %v7243
    %v7245 = vand.u32 %v7244, 4294901760
    %v7246 = vsub.f32 %v7244, %v7245
    %v7247 = vand.u32 %v7246, 4294901760
    %7248 = vmatpush1.msra.mxu0 %v7247
    %7249 = vmatprep.subr.mxu0 0.0
    %v7250 = vand.u32 %v293, 4294901760
    %v7251 = vsub.f32 %v293, %v7250
    %v7252 = vand.u32 %v7251, 4294901760
    %v7253 = vsub.f32 %v7251, %v7252
    %v7254 = vand.u32 %v7253, 4294901760
    %7255 = vmatpush1.msra.mxu0 %v7254
    %7256 = vmatprep.subr.mxu0 0.0
    %v7257 = vand.u32 %v276, 4294901760
    %v7258 = vsub.f32 %v276, %v7257
    %v7259 = vand.u32 %v7258, 4294901760
    %v7260 = vsub.f32 %v7258, %v7259
    %v7261 = vand.u32 %v7260, 4294901760
    %7262 = vmatpush1.msra.mxu0 %v7261
    %7263 = vmatprep.subr.mxu0 0.0
    %v7264 = vand.u32 %v259, 4294901760
    %v7265 = vsub.f32 %v259, %v7264
    %v7266 = vand.u32 %v7265, 4294901760
    %v7267 = vsub.f32 %v7265, %v7266
    %v7268 = vand.u32 %v7267, 4294901760
    %7269 = vmatpush1.msra.mxu0 %v7268
    %7270 = vmatprep.subr.mxu0 0.0
    %v7271 = vand.u32 %v242, 4294901760
    %v7272 = vsub.f32 %v242, %v7271
    %v7273 = vand.u32 %v7272, 4294901760
    %v7274 = vsub.f32 %v7272, %v7273
    %v7275 = vand.u32 %v7274, 4294901760
    %7276 = vmatpush1.msra.mxu0 %v7275
    %7277 = vmatprep.subr.mxu0 0.0
    %v7278 = vand.u32 %v225, 4294901760
    %v7279 = vsub.f32 %v225, %v7278
    %v7280 = vand.u32 %v7279, 4294901760
    %v7281 = vsub.f32 %v7279, %v7280
    %v7282 = vand.u32 %v7281, 4294901760
    %7283 = vmatpush1.msra.mxu0 %v7282
    %7284 = vmatprep.subr.mxu0 0.0
    %v7285 = vand.u32 %v208, 4294901760
    %v7286 = vsub.f32 %v208, %v7285
    %v7287 = vand.u32 %v7286, 4294901760
    %v7288 = vsub.f32 %v7286, %v7287
    %v7289 = vand.u32 %v7288, 4294901760
    %7290 = vmatpush1.msra.mxu0 %v7289
    %7291 = vmatprep.subr.mxu0 0.0
    %v7292 = vand.u32 %v191, 4294901760
    %v7293 = vsub.f32 %v191, %v7292
    %v7294 = vand.u32 %v7293, 4294901760
    %v7295 = vsub.f32 %v7293, %v7294
    %v7296 = vand.u32 %v7295, 4294901760
    %7297 = vmatpush1.msra.mxu0 %v7296
    %7298 = vmatprep.subr.mxu0 0.0
    %v7299 = vand.u32 %v174, 4294901760
    %v7300 = vsub.f32 %v174, %v7299
    %v7301 = vand.u32 %v7300, 4294901760
    %v7302 = vsub.f32 %v7300, %v7301
    %v7303 = vand.u32 %v7302, 4294901760
    %7304 = vmatpush1.msra.mxu0 %v7303
    %7305 = vmatprep.subr.mxu0 0.0
    %v7306 = vand.u32 %v157, 4294901760
    %v7307 = vsub.f32 %v157, %v7306
    %v7308 = vand.u32 %v7307, 4294901760
    %v7309 = vsub.f32 %v7307, %v7308
    %v7310 = vand.u32 %v7309, 4294901760
    %7311 = vmatpush1.msra.mxu0 %v7310
    %7312 = vmatprep.subr.mxu0 0.0
    %v7313 = vand.u32 %v140, 4294901760
    %v7314 = vsub.f32 %v140, %v7313
    %v7315 = vand.u32 %v7314, 4294901760
    %v7316 = vsub.f32 %v7314, %v7315
    %v7317 = vand.u32 %v7316, 4294901760
    %7318 = vmatpush1.msra.mxu0 %v7317
    %7319 = vmatprep.subr.mxu0 0.0
    %v7320 = vand.u32 %v123, 4294901760
    %v7321 = vsub.f32 %v123, %v7320
    %v7322 = vand.u32 %v7321, 4294901760
    %v7323 = vsub.f32 %v7321, %v7322
    %v7324 = vand.u32 %v7323, 4294901760
    %7325 = vmatpush1.msra.mxu0 %v7324
    %7326 = vmatprep.subr.mxu0 0.0
    %v7327 = vand.u32 %v106, 4294901760
    %v7328 = vsub.f32 %v106, %v7327
    %v7329 = vand.u32 %v7328, 4294901760
    %v7330 = vsub.f32 %v7328, %v7329
    %v7331 = vand.u32 %v7330, 4294901760
    %7332 = vmatpush1.msra.mxu0 %v7331
    %7333 = vmatprep.subr.mxu0 0.0
    %v7334 = vand.u32 %v89, 4294901760
    %v7335 = vsub.f32 %v89, %v7334
    %v7336 = vand.u32 %v7335, 4294901760
    %v7337 = vsub.f32 %v7335, %v7336
    %v7338 = vand.u32 %v7337, 4294901760
    %7339 = vmatpush1.msra.mxu0 %v7338
    %7340 = vmatprep.subr.mxu0 0.0
    %v7341 = vand.u32 %v72, 4294901760
    %v7342 = vsub.f32 %v72, %v7341
    %v7343 = vand.u32 %v7342, 4294901760
    %v7344 = vsub.f32 %v7342, %v7343
    %v7345 = vand.u32 %v7344, 4294901760
    %7346 = vmatpush1.msra.mxu0 %v7345
    %7347 = vmatprep.subr.mxu0 0.0
    %v7348 = vand.u32 %v55, 4294901760
    %v7349 = vsub.f32 %v55, %v7348
    %v7350 = vand.u32 %v7349, 4294901760
    %v7351 = vsub.f32 %v7349, %v7350
    %v7352 = vand.u32 %v7351, 4294901760
    %7353 = vmatpush1.msra.mxu0 %v7352
    %7354 = vmatprep.subr.mxu0 0.0
    %7355 = vmatpush2.msra.mxu0 0.0
    %7356 = vmatprep.subr.mxu0 0.0
    %7357 = vmatpush2.msra.mxu0 0.0
    %7358 = vmatprep.subr.mxu0 0.0
    %7359 = vmatpush2.msra.mxu0 0.0
    %7360 = vmatprep.subr.mxu0 0.0
    %7361 = vmatpush2.msra.mxu0 0.0
    %7362 = vmatprep.subr.mxu0 0.0
    %7363 = vmatpush2.msra.mxu0 0.0
    %7364 = vmatprep.subr.mxu0 0.0
    %7365 = vmatpush2.msra.mxu0 0.0
    %7366 = vmatprep.subr.mxu0 0.0
    %7367 = vmatpush2.msra.mxu0 0.0
    %7368 = vmatprep.subr.mxu0 0.0
    %7369 = vmatpush2.msra.mxu0 0.0
    %7370 = vmatprep.subr.mxu0 0.0
    %7371 = vmatpush2.msra.mxu0 0.0
    %7372 = vmatprep.subr.mxu0 0.0
    %7373 = vmatpush2.msra.mxu0 0.0
    %7374 = vmatprep.subr.mxu0 0.0
    %7375 = vmatpush2.msra.mxu0 0.0
    %7376 = vmatprep.subr.mxu0 0.0
    %7377 = vmatpush2.msra.mxu0 0.0
    %7378 = vmatprep.subr.mxu0 0.0
    %7379 = vmatpush2.msra.mxu0 0.0
    %7380 = vmatprep.subr.mxu0 0.0
    %7381 = vmatpush2.msra.mxu0 0.0
    %7382 = vmatprep.subr.mxu0 0.0
    %7383 = vmatpush2.msra.mxu0 0.0
    %7384 = vmatprep.subr.mxu0 0.0
    %7385 = vmatpush2.msra.mxu0 0.0
    %7386 = vmatprep.mubr.f32.mxu0 0.0
    %v7387 = vand.u32 %v38, 4294901760
    %7388 = vmatmul.mubr.f32.gmra.mxu0 %v7387
    %v7389 = vpop.f32.mrf.mxu0
    %v7390 = vadd.f32 %v7239, %v7389
    %v7391 = vpop.f32.mrf.mxu0
    %7392 = vdwg.mxu0
    %7393 = vmatprep.subr.mxu0 0.0
    %v7394 = vand.u32 %v310, 4294901760
    %v7395 = vsub.f32 %v310, %v7394
    %7396 = vmatpush1.msra.mxu0 %v7395
    %7397 = vmatprep.subr.mxu0 0.0
    %v7398 = vand.u32 %v293, 4294901760
    %v7399 = vsub.f32 %v293, %v7398
    %7400 = vmatpush1.msra.mxu0 %v7399
    %7401 = vmatprep.subr.mxu0 0.0
    %v7402 = vand.u32 %v276, 4294901760
    %v7403 = vsub.f32 %v276, %v7402
    %7404 = vmatpush1.msra.mxu0 %v7403
    %7405 = vmatprep.subr.mxu0 0.0
    %v7406 = vand.u32 %v259, 4294901760
    %v7407 = vsub.f32 %v259, %v7406
    %7408 = vmatpush1.msra.mxu0 %v7407
    %7409 = vmatprep.subr.mxu0 0.0
    %v7410 = vand.u32 %v242, 4294901760
    %v7411 = vsub.f32 %v242, %v7410
    %7412 = vmatpush1.msra.mxu0 %v7411
    %7413 = vmatprep.subr.mxu0 0.0
    %v7414 = vand.u32 %v225, 4294901760
    %v7415 = vsub.f32 %v225, %v7414
    %7416 = vmatpush1.msra.mxu0 %v7415
    %7417 = vmatprep.subr.mxu0 0.0
    %v7418 = vand.u32 %v208, 4294901760
    %v7419 = vsub.f32 %v208, %v7418
    %7420 = vmatpush1.msra.mxu0 %v7419
    %7421 = vmatprep.subr.mxu0 0.0
    %v7422 = vand.u32 %v191, 4294901760
    %v7423 = vsub.f32 %v191, %v7422
    %7424 = vmatpush1.msra.mxu0 %v7423
    %7425 = vmatprep.subr.mxu0 0.0
    %v7426 = vand.u32 %v174, 4294901760
    %v7427 = vsub.f32 %v174, %v7426
    %7428 = vmatpush1.msra.mxu0 %v7427
    %7429 = vmatprep.subr.mxu0 0.0
    %v7430 = vand.u32 %v157, 4294901760
    %v7431 = vsub.f32 %v157, %v7430
    %7432 = vmatpush1.msra.mxu0 %v7431
    %7433 = vmatprep.subr.mxu0 0.0
    %v7434 = vand.u32 %v140, 4294901760
    %v7435 = vsub.f32 %v140, %v7434
    %7436 = vmatpush1.msra.mxu0 %v7435
    %7437 = vmatprep.subr.mxu0 0.0
    %v7438 = vand.u32 %v123, 4294901760
    %v7439 = vsub.f32 %v123, %v7438
    %7440 = vmatpush1.msra.mxu0 %v7439
    %7441 = vmatprep.subr.mxu0 0.0
    %v7442 = vand.u32 %v106, 4294901760
    %v7443 = vsub.f32 %v106, %v7442
    %7444 = vmatpush1.msra.mxu0 %v7443
    %7445 = vmatprep.subr.mxu0 0.0
    %v7446 = vand.u32 %v89, 4294901760
    %v7447 = vsub.f32 %v89, %v7446
    %7448 = vmatpush1.msra.mxu0 %v7447
    %7449 = vmatprep.subr.mxu0 0.0
    %v7450 = vand.u32 %v72, 4294901760
    %v7451 = vsub.f32 %v72, %v7450
    %7452 = vmatpush1.msra.mxu0 %v7451
    %7453 = vmatprep.subr.mxu0 0.0
    %v7454 = vand.u32 %v55, 4294901760
    %v7455 = vsub.f32 %v55, %v7454
    %7456 = vmatpush1.msra.mxu0 %v7455
    %7457 = vmatprep.subr.mxu0 0.0
    %7458 = vmatpush2.msra.mxu0 0.0
    %7459 = vmatprep.subr.mxu0 0.0
    %7460 = vmatpush2.msra.mxu0 0.0
    %7461 = vmatprep.subr.mxu0 0.0
    %7462 = vmatpush2.msra.mxu0 0.0
    %7463 = vmatprep.subr.mxu0 0.0
    %7464 = vmatpush2.msra.mxu0 0.0
    %7465 = vmatprep.subr.mxu0 0.0
    %7466 = vmatpush2.msra.mxu0 0.0
    %7467 = vmatprep.subr.mxu0 0.0
    %7468 = vmatpush2.msra.mxu0 0.0
    %7469 = vmatprep.subr.mxu0 0.0
    %7470 = vmatpush2.msra.mxu0 0.0
    %7471 = vmatprep.subr.mxu0 0.0
    %7472 = vmatpush2.msra.mxu0 0.0
    %7473 = vmatprep.subr.mxu0 0.0
    %7474 = vmatpush2.msra.mxu0 0.0
    %7475 = vmatprep.subr.mxu0 0.0
    %7476 = vmatpush2.msra.mxu0 0.0
    %7477 = vmatprep.subr.mxu0 0.0
    %7478 = vmatpush2.msra.mxu0 0.0
    %7479 = vmatprep.subr.mxu0 0.0
    %7480 = vmatpush2.msra.mxu0 0.0
    %7481 = vmatprep.subr.mxu0 0.0
    %7482 = vmatpush2.msra.mxu0 0.0
    %7483 = vmatprep.subr.mxu0 0.0
    %7484 = vmatpush2.msra.mxu0 0.0
    %7485 = vmatprep.subr.mxu0 0.0
    %7486 = vmatpush2.msra.mxu0 0.0
    %7487 = vmatprep.subr.mxu0 0.0
    %7488 = vmatpush2.msra.mxu0 0.0
    %7489 = vmatprep.mubr.f32.mxu0 0.0
    %v7490 = vand.u32 %v38, 4294901760
    %v7491 = vsub.f32 %v38, %v7490
    %7492 = vmatmul.mubr.f32.gmra.mxu0 %v7491
    %v7493 = vpop.f32.mrf.mxu0
    %v7494 = vadd.f32 %v7390, %v7493
    %v7495 = vpop.f32.mrf.mxu0
    %7496 = vdwg.mxu0
    %7497 = vmatprep.subr.mxu0 0.0
    %v7498 = vand.u32 %v310, 4294901760
    %7499 = vmatpush1.msra.mxu0 %v7498
    %7500 = vmatprep.subr.mxu0 0.0
    %v7501 = vand.u32 %v293, 4294901760
    %7502 = vmatpush1.msra.mxu0 %v7501
    %7503 = vmatprep.subr.mxu0 0.0
    %v7504 = vand.u32 %v276, 4294901760
    %7505 = vmatpush1.msra.mxu0 %v7504
    %7506 = vmatprep.subr.mxu0 0.0
    %v7507 = vand.u32 %v259, 4294901760
    %7508 = vmatpush1.msra.mxu0 %v7507
    %7509 = vmatprep.subr.mxu0 0.0
    %v7510 = vand.u32 %v242, 4294901760
    %7511 = vmatpush1.msra.mxu0 %v7510
    %7512 = vmatprep.subr.mxu0 0.0
    %v7513 = vand.u32 %v225, 4294901760
    %7514 = vmatpush1.msra.mxu0 %v7513
    %7515 = vmatprep.subr.mxu0 0.0
    %v7516 = vand.u32 %v208, 4294901760
    %7517 = vmatpush1.msra.mxu0 %v7516
    %7518 = vmatprep.subr.mxu0 0.0
    %v7519 = vand.u32 %v191, 4294901760
    %7520 = vmatpush1.msra.mxu0 %v7519
    %7521 = vmatprep.subr.mxu0 0.0
    %v7522 = vand.u32 %v174, 4294901760
    %7523 = vmatpush1.msra.mxu0 %v7522
    %7524 = vmatprep.subr.mxu0 0.0
    %v7525 = vand.u32 %v157, 4294901760
    %7526 = vmatpush1.msra.mxu0 %v7525
    %7527 = vmatprep.subr.mxu0 0.0
    %v7528 = vand.u32 %v140, 4294901760
    %7529 = vmatpush1.msra.mxu0 %v7528
    %7530 = vmatprep.subr.mxu0 0.0
    %v7531 = vand.u32 %v123, 4294901760
    %7532 = vmatpush1.msra.mxu0 %v7531
    %7533 = vmatprep.subr.mxu0 0.0
    %v7534 = vand.u32 %v106, 4294901760
    %7535 = vmatpush1.msra.mxu0 %v7534
    %7536 = vmatprep.subr.mxu0 0.0
    %v7537 = vand.u32 %v89, 4294901760
    %7538 = vmatpush1.msra.mxu0 %v7537
    %7539 = vmatprep.subr.mxu0 0.0
    %v7540 = vand.u32 %v72, 4294901760
    %7541 = vmatpush1.msra.mxu0 %v7540
    %7542 = vmatprep.subr.mxu0 0.0
    %v7543 = vand.u32 %v55, 4294901760
    %7544 = vmatpush1.msra.mxu0 %v7543
    %7545 = vmatprep.subr.mxu0 0.0
    %7546 = vmatpush2.msra.mxu0 0.0
    %7547 = vmatprep.subr.mxu0 0.0
    %7548 = vmatpush2.msra.mxu0 0.0
    %7549 = vmatprep.subr.mxu0 0.0
    %7550 = vmatpush2.msra.mxu0 0.0
    %7551 = vmatprep.subr.mxu0 0.0
    %7552 = vmatpush2.msra.mxu0 0.0
    %7553 = vmatprep.subr.mxu0 0.0
    %7554 = vmatpush2.msra.mxu0 0.0
    %7555 = vmatprep.subr.mxu0 0.0
    %7556 = vmatpush2.msra.mxu0 0.0
    %7557 = vmatprep.subr.mxu0 0.0
    %7558 = vmatpush2.msra.mxu0 0.0
    %7559 = vmatprep.subr.mxu0 0.0
    %7560 = vmatpush2.msra.mxu0 0.0
    %7561 = vmatprep.subr.mxu0 0.0
    %7562 = vmatpush2.msra.mxu0 0.0
    %7563 = vmatprep.subr.mxu0 0.0
    %7564 = vmatpush2.msra.mxu0 0.0
    %7565 = vmatprep.subr.mxu0 0.0
    %7566 = vmatpush2.msra.mxu0 0.0
    %7567 = vmatprep.subr.mxu0 0.0
    %7568 = vmatpush2.msra.mxu0 0.0
    %7569 = vmatprep.subr.mxu0 0.0
    %7570 = vmatpush2.msra.mxu0 0.0
    %7571 = vmatprep.subr.mxu0 0.0
    %7572 = vmatpush2.msra.mxu0 0.0
    %7573 = vmatprep.subr.mxu0 0.0
    %7574 = vmatpush2.msra.mxu0 0.0
    %7575 = vmatprep.subr.mxu0 0.0
    %7576 = vmatpush2.msra.mxu0 0.0
    %7577 = vmatprep.mubr.f32.mxu0 0.0
    %v7578 = vand.u32 %v38, 4294901760
    %v7579 = vsub.f32 %v38, %v7578
    %v7580 = vand.u32 %v7579, 4294901760
    %7581 = vmatmul.mubr.f32.gmra.mxu0 %v7580
    %v7582 = vpop.f32.mrf.mxu0
    %v7583 = vadd.f32 %v7494, %v7582
    %v7584 = vpop.f32.mrf.mxu0
    %7585 = vdwg.mxu0
    %7586 = vmatprep.subr.mxu0 0.0
    %v7587 = vand.u32 %v310, 4294901760
    %v7588 = vsub.f32 %v310, %v7587
    %v7589 = vand.u32 %v7588, 4294901760
    %7590 = vmatpush1.msra.mxu0 %v7589
    %7591 = vmatprep.subr.mxu0 0.0
    %v7592 = vand.u32 %v293, 4294901760
    %v7593 = vsub.f32 %v293, %v7592
    %v7594 = vand.u32 %v7593, 4294901760
    %7595 = vmatpush1.msra.mxu0 %v7594
    %7596 = vmatprep.subr.mxu0 0.0
    %v7597 = vand.u32 %v276, 4294901760
    %v7598 = vsub.f32 %v276, %v7597
    %v7599 = vand.u32 %v7598, 4294901760
    %7600 = vmatpush1.msra.mxu0 %v7599
    %7601 = vmatprep.subr.mxu0 0.0
    %v7602 = vand.u32 %v259, 4294901760
    %v7603 = vsub.f32 %v259, %v7602
    %v7604 = vand.u32 %v7603, 4294901760
    %7605 = vmatpush1.msra.mxu0 %v7604
    %7606 = vmatprep.subr.mxu0 0.0
    %v7607 = vand.u32 %v242, 4294901760
    %v7608 = vsub.f32 %v242, %v7607
    %v7609 = vand.u32 %v7608, 4294901760
    %7610 = vmatpush1.msra.mxu0 %v7609
    %7611 = vmatprep.subr.mxu0 0.0
    %v7612 = vand.u32 %v225, 4294901760
    %v7613 = vsub.f32 %v225, %v7612
    %v7614 = vand.u32 %v7613, 4294901760
    %7615 = vmatpush1.msra.mxu0 %v7614
    %7616 = vmatprep.subr.mxu0 0.0
    %v7617 = vand.u32 %v208, 4294901760
    %v7618 = vsub.f32 %v208, %v7617
    %v7619 = vand.u32 %v7618, 4294901760
    %7620 = vmatpush1.msra.mxu0 %v7619
    %7621 = vmatprep.subr.mxu0 0.0
    %v7622 = vand.u32 %v191, 4294901760
    %v7623 = vsub.f32 %v191, %v7622
    %v7624 = vand.u32 %v7623, 4294901760
    %7625 = vmatpush1.msra.mxu0 %v7624
    %7626 = vmatprep.subr.mxu0 0.0
    %v7627 = vand.u32 %v174, 4294901760
    %v7628 = vsub.f32 %v174, %v7627
    %v7629 = vand.u32 %v7628, 4294901760
    %7630 = vmatpush1.msra.mxu0 %v7629
    %7631 = vmatprep.subr.mxu0 0.0
    %v7632 = vand.u32 %v157, 4294901760
    %v7633 = vsub.f32 %v157, %v7632
    %v7634 = vand.u32 %v7633, 4294901760
    %7635 = vmatpush1.msra.mxu0 %v7634
    %7636 = vmatprep.subr.mxu0 0.0
    %v7637 = vand.u32 %v140, 4294901760
    %v7638 = vsub.f32 %v140, %v7637
    %v7639 = vand.u32 %v7638, 4294901760
    %7640 = vmatpush1.msra.mxu0 %v7639
    %7641 = vmatprep.subr.mxu0 0.0
    %v7642 = vand.u32 %v123, 4294901760
    %v7643 = vsub.f32 %v123, %v7642
    %v7644 = vand.u32 %v7643, 4294901760
    %7645 = vmatpush1.msra.mxu0 %v7644
    %7646 = vmatprep.subr.mxu0 0.0
    %v7647 = vand.u32 %v106, 4294901760
    %v7648 = vsub.f32 %v106, %v7647
    %v7649 = vand.u32 %v7648, 4294901760
    %7650 = vmatpush1.msra.mxu0 %v7649
    %7651 = vmatprep.subr.mxu0 0.0
    %v7652 = vand.u32 %v89, 4294901760
    %v7653 = vsub.f32 %v89, %v7652
    %v7654 = vand.u32 %v7653, 4294901760
    %7655 = vmatpush1.msra.mxu0 %v7654
    %7656 = vmatprep.subr.mxu0 0.0
    %v7657 = vand.u32 %v72, 4294901760
    %v7658 = vsub.f32 %v72, %v7657
    %v7659 = vand.u32 %v7658, 4294901760
    %7660 = vmatpush1.msra.mxu0 %v7659
    %7661 = vmatprep.subr.mxu0 0.0
    %v7662 = vand.u32 %v55, 4294901760
    %v7663 = vsub.f32 %v55, %v7662
    %v7664 = vand.u32 %v7663, 4294901760
    %7665 = vmatpush1.msra.mxu0 %v7664
    %7666 = vmatprep.subr.mxu0 0.0
    %7667 = vmatpush2.msra.mxu0 0.0
    %7668 = vmatprep.subr.mxu0 0.0
    %7669 = vmatpush2.msra.mxu0 0.0
    %7670 = vmatprep.subr.mxu0 0.0
    %7671 = vmatpush2.msra.mxu0 0.0
    %7672 = vmatprep.subr.mxu0 0.0
    %7673 = vmatpush2.msra.mxu0 0.0
    %7674 = vmatprep.subr.mxu0 0.0
    %7675 = vmatpush2.msra.mxu0 0.0
    %7676 = vmatprep.subr.mxu0 0.0
    %7677 = vmatpush2.msra.mxu0 0.0
    %7678 = vmatprep.subr.mxu0 0.0
    %7679 = vmatpush2.msra.mxu0 0.0
    %7680 = vmatprep.subr.mxu0 0.0
    %7681 = vmatpush2.msra.mxu0 0.0
    %7682 = vmatprep.subr.mxu0 0.0
    %7683 = vmatpush2.msra.mxu0 0.0
    %7684 = vmatprep.subr.mxu0 0.0
    %7685 = vmatpush2.msra.mxu0 0.0
    %7686 = vmatprep.subr.mxu0 0.0
    %7687 = vmatpush2.msra.mxu0 0.0
    %7688 = vmatprep.subr.mxu0 0.0
    %7689 = vmatpush2.msra.mxu0 0.0
    %7690 = vmatprep.subr.mxu0 0.0
    %7691 = vmatpush2.msra.mxu0 0.0
    %7692 = vmatprep.subr.mxu0 0.0
    %7693 = vmatpush2.msra.mxu0 0.0
    %7694 = vmatprep.subr.mxu0 0.0
    %7695 = vmatpush2.msra.mxu0 0.0
    %7696 = vmatprep.subr.mxu0 0.0
    %7697 = vmatpush2.msra.mxu0 0.0
    %7698 = vmatprep.mubr.f32.mxu0 0.0
    %v7699 = vand.u32 %v38, 4294901760
    %7700 = vmatmul.mubr.f32.gmra.mxu0 %v7699
    %v7701 = vpop.f32.mrf.mxu0
    %v7702 = vadd.f32 %v7583, %v7701
    %v7703 = vpop.f32.mrf.mxu0
    %7704 = vdwg.mxu0
    %7705 = vmatprep.subr.mxu0 0.0
    %v7706 = vand.u32 %v310, 4294901760
    %7707 = vmatpush1.msra.mxu0 %v7706
    %7708 = vmatprep.subr.mxu0 0.0
    %v7709 = vand.u32 %v293, 4294901760
    %7710 = vmatpush1.msra.mxu0 %v7709
    %7711 = vmatprep.subr.mxu0 0.0
    %v7712 = vand.u32 %v276, 4294901760
    %7713 = vmatpush1.msra.mxu0 %v7712
    %7714 = vmatprep.subr.mxu0 0.0
    %v7715 = vand.u32 %v259, 4294901760
    %7716 = vmatpush1.msra.mxu0 %v7715
    %7717 = vmatprep.subr.mxu0 0.0
    %v7718 = vand.u32 %v242, 4294901760
    %7719 = vmatpush1.msra.mxu0 %v7718
    %7720 = vmatprep.subr.mxu0 0.0
    %v7721 = vand.u32 %v225, 4294901760
    %7722 = vmatpush1.msra.mxu0 %v7721
    %7723 = vmatprep.subr.mxu0 0.0
    %v7724 = vand.u32 %v208, 4294901760
    %7725 = vmatpush1.msra.mxu0 %v7724
    %7726 = vmatprep.subr.mxu0 0.0
    %v7727 = vand.u32 %v191, 4294901760
    %7728 = vmatpush1.msra.mxu0 %v7727
    %7729 = vmatprep.subr.mxu0 0.0
    %v7730 = vand.u32 %v174, 4294901760
    %7731 = vmatpush1.msra.mxu0 %v7730
    %7732 = vmatprep.subr.mxu0 0.0
    %v7733 = vand.u32 %v157, 4294901760
    %7734 = vmatpush1.msra.mxu0 %v7733
    %7735 = vmatprep.subr.mxu0 0.0
    %v7736 = vand.u32 %v140, 4294901760
    %7737 = vmatpush1.msra.mxu0 %v7736
    %7738 = vmatprep.subr.mxu0 0.0
    %v7739 = vand.u32 %v123, 4294901760
    %7740 = vmatpush1.msra.mxu0 %v7739
    %7741 = vmatprep.subr.mxu0 0.0
    %v7742 = vand.u32 %v106, 4294901760
    %7743 = vmatpush1.msra.mxu0 %v7742
    %7744 = vmatprep.subr.mxu0 0.0
    %v7745 = vand.u32 %v89, 4294901760
    %7746 = vmatpush1.msra.mxu0 %v7745
    %7747 = vmatprep.subr.mxu0 0.0
    %v7748 = vand.u32 %v72, 4294901760
    %7749 = vmatpush1.msra.mxu0 %v7748
    %7750 = vmatprep.subr.mxu0 0.0
    %v7751 = vand.u32 %v55, 4294901760
    %7752 = vmatpush1.msra.mxu0 %v7751
    %7753 = vmatprep.subr.mxu0 0.0
    %7754 = vmatpush2.msra.mxu0 0.0
    %7755 = vmatprep.subr.mxu0 0.0
    %7756 = vmatpush2.msra.mxu0 0.0
    %7757 = vmatprep.subr.mxu0 0.0
    %7758 = vmatpush2.msra.mxu0 0.0
    %7759 = vmatprep.subr.mxu0 0.0
    %7760 = vmatpush2.msra.mxu0 0.0
    %7761 = vmatprep.subr.mxu0 0.0
    %7762 = vmatpush2.msra.mxu0 0.0
    %7763 = vmatprep.subr.mxu0 0.0
    %7764 = vmatpush2.msra.mxu0 0.0
    %7765 = vmatprep.subr.mxu0 0.0
    %7766 = vmatpush2.msra.mxu0 0.0
    %7767 = vmatprep.subr.mxu0 0.0
    %7768 = vmatpush2.msra.mxu0 0.0
    %7769 = vmatprep.subr.mxu0 0.0
    %7770 = vmatpush2.msra.mxu0 0.0
    %7771 = vmatprep.subr.mxu0 0.0
    %7772 = vmatpush2.msra.mxu0 0.0
    %7773 = vmatprep.subr.mxu0 0.0
    %7774 = vmatpush2.msra.mxu0 0.0
    %7775 = vmatprep.subr.mxu0 0.0
    %7776 = vmatpush2.msra.mxu0 0.0
    %7777 = vmatprep.subr.mxu0 0.0
    %7778 = vmatpush2.msra.mxu0 0.0
    %7779 = vmatprep.subr.mxu0 0.0
    %7780 = vmatpush2.msra.mxu0 0.0
    %7781 = vmatprep.subr.mxu0 0.0
    %7782 = vmatpush2.msra.mxu0 0.0
    %7783 = vmatprep.subr.mxu0 0.0
    %7784 = vmatpush2.msra.mxu0 0.0
    %7785 = vmatprep.mubr.f32.mxu0 0.0
    %v7786 = vand.u32 %v38, 4294901760
    %7787 = vmatmul.mubr.f32.gmra.mxu0 %v7786
    %v7788 = vpop.f32.mrf.mxu0
    %v7789 = vadd.f32 %v7702, %v7788
    %v7790 = vpop.f32.mrf.mxu0
    %7791 = vdwg.mxu0
    %v7792 = vmul.f32 %v1162, %v2872
    %v7793 = vmul.f32 %v1164, %v2874
    %v7794 = vsub.f32 %v7792, %v7793
    %v7795 = vmul.f32 %v1162, %v2874
    %v7796 = vmul.f32 %v1164, %v2872
    %v7797 = vadd.f32 %v7795, %v7796
    %v7798 = vmul.f32 %v2017, %v3727
    %v7799 = vmul.f32 %v2019, %v3729
    %v7800 = vsub.f32 %v7798, %v7799
    %v7801 = vmul.f32 %v2017, %v3729
    %v7802 = vmul.f32 %v2019, %v3727
    %v7803 = vadd.f32 %v7801, %v7802
    %7805 = vrot.lane.b32.xlu0 %v7789, 126
    %v7806 = vpop.permute.xlu0 %7805
    %v7808 = vmul.f32 %v7789, %v7806
    %v7809 = vmul.f32 %v7794, %v4582
    %v7810 = vmul.f32 %v7797, %v4584
    %v7811 = vsub.f32 %v7809, %v7810
    %v7812 = vmul.f32 %v7794, %v4584
    %v7813 = vmul.f32 %v7797, %v4582
    %v7814 = vadd.f32 %v7812, %v7813
    %v7815 = vmul.f32 %v7800, %v5437
    %v7816 = vmul.f32 %v7803, %v5439
    %v7817 = vsub.f32 %v7815, %v7816
    %v7818 = vmul.f32 %v7800, %v5439
    %v7819 = vmul.f32 %v7803, %v5437
    %v7820 = vadd.f32 %v7818, %v7819
    %7821 = vrot.lane.b32.xlu0 %v7789, 124
    %v7822 = vpop.permute.xlu0 %7821
    %v7824 = vmul.f32 %v7808, %v7822
    %v7825 = vmul.f32 %v7811, %v6292
    %v7826 = vmul.f32 %v7814, %v6294
    %v7827 = vsub.f32 %v7825, %v7826
    %v7828 = vmul.f32 %v7811, %v6294
    %v7829 = vmul.f32 %v7814, %v6292
    %v7830 = vadd.f32 %v7828, %v7829
    %v7831 = vmul.f32 %v7817, %v7147
    %v7832 = vmul.f32 %v7820, %v7149
    %v7833 = vsub.f32 %v7831, %v7832
    %v7834 = vmul.f32 %v7817, %v7149
    %v7835 = vmul.f32 %v7820, %v7147
    %v7836 = vadd.f32 %v7834, %v7835
    %7837 = vrot.lane.b32.xlu0 %v7789, 122
    %v7838 = vpop.permute.xlu0 %7837
    %v7840 = vmul.f32 %v7824, %v7838
    %v7841 = vmul.f32 %v7833, %v7833
    %v7842 = vmul.f32 %v7836, %v7836
    %v7843 = vadd.f32 %v7841, %v7842
    %v7844 = vrcp.pop %v7843
    %v7845 = vmul.f32 %v7843, %v7844
    %v7846 = vsub.f32 2.0, %v7845
    %v7847 = vmul.f32 %v7844, %v7846
    %v7848 = vmul.f32 %v7827, %v7833
    %v7849 = vmul.f32 %v7830, %v7836
    %v7850 = vadd.f32 %v7848, %v7849
    %v7851 = vmul.f32 %v7850, %v7847
    %v7852 = vmul.f32 %v7830, %v7833
    %v7853 = vmul.f32 %v7827, %v7836
    %v7854 = vsub.f32 %v7852, %v7853
    %v7855 = vmul.f32 %v7854, %v7847
    %7857 = vrot.lane.b32.xlu0 %v7840, 127
    %v7858 = vpop.permute.xlu0 %7857
    %v7860 = vrcp.pop %v7858
    %v7861 = vmul.f32 %v7840, %v7860
    %v7863 = vrot.slane %v7851, 4
    %v7865 = vsub.f32 %v7851, %v7863
    %v7867 = vrot.slane %v7855, 4
    %v7869 = vsub.f32 %v7855, %v7867
    %v7871 = vrot.slane %v7861, 4
    %v7873 = vsub.f32 %v7861, %v7871
    %v7874 = vmul.f32 %v7865, %v7865
    %v7875 = vmul.f32 %v7869, %v7869
    %v7876 = vadd.f32 %v7874, %v7875
    %vm7877 = vcmask 1043456
    %v7878 = vsel %vm7877, %v7876, 0.0
    %7879 = vadd.xlane.f32.xlu0 %v7878
    %v7880 = vpop.xlane.xlu0 %7879
    %v7881 = vrot.slane %v7880, 4
    %v7882 = vadd.f32 %v7880, %v7881
    %v7883 = vrot.slane %v7882, 2
    %v7884 = vadd.f32 %v7882, %v7883
    %v7885 = vrot.slane %v7884, 1
    %v7886 = vadd.f32 %v7884, %v7885
    %s7887 = vtos %v7886
    %v7888 = vmul.f32 %v7873, %v7873
    %vm7889 = vcmask 3072
    %v7890 = vsel %vm7889, %v7888, 0.0
    %7891 = vadd.xlane.f32.xlu0 %v7890
    %v7892 = vpop.xlane.xlu0 %7891
    %v7893 = vrot.slane %v7892, 4
    %v7894 = vadd.f32 %v7892, %v7893
    %v7895 = vrot.slane %v7894, 2
    %v7896 = vadd.f32 %v7894, %v7895
    %v7897 = vrot.slane %v7896, 1
    %v7898 = vadd.f32 %v7896, %v7897
    %s7899 = vtos %v7898
    %s7900 = smul.f32 %s7899, 0.5
    %s7901 = sadd.f32 %s7887, %s7900
    %s7902 = smul.f32 %s7901, 0.0019455253
    %s7903 = scalar_lea.smem [#allocation7], 0
    %7904 = sst [smem:[%s7903]] %s7902
    // Predicated region
    $region18: #{tpu_custom_call.1} parent=1 // pred_check
      _
    $region19: #{tpu_custom_call.1} parent=1 // pred_check_branch
      %7906 = sbr.rel (0) target = $region21
    $region20: #{tpu_custom_call.1} parent=1 // pred_region
      %s7908 = ssub.s32 16, 16
      %7909 = vsyncadd [#allocation4], %s7908
      %7912 = dma.smem_to_hbm [#allocation7], 16, %s2, [#allocation4]
    $region21: #{tpu_custom_call.1} parent=1 // pred_fallthru
      _
    // Predicated region
    $region22: #{tpu_custom_call.1} parent=1 // pred_check
      _
    $region23: #{tpu_custom_call.1} parent=1 // pred_check_branch
      %7914 = sbr.rel (0) target = $region25
    $region24: #{tpu_custom_call.1} parent=1 // pred_region
      %7915 = dma.done [#allocation4], 16
    $region25: #{tpu_custom_call.1} parent=1 // pred_fallthru
      _
    %7916 = sfence
    %7917 = vsyncpa [#allocation3], 1
    %7918 = vsyncpa [#allocation6], 1
    %7919 = vsyncpa [#allocation4], 1

</llo_original>
